<compile_context>
chip_gen: v7x
topology: tpu7x:2x2x1
jax: 0.10.0
libtpu: 0.0.40
codegen_flags: <defaults>
</compile_context>

<pallas_src>
import jax
import jax.numpy as jnp
from jax.experimental import pallas as pl
from jax.experimental.pallas import tpu as pltpu

LEAKY_SLOPE = 0.01          # PyTorch nn.LeakyReLU() default negative_slope
BN_EPS = 1e-5
LANE = 128
DEFAULT_TILE_M = 512        # rows of (N*H*W) per grid step; multiple of 8


def _round_up(x, m):
    return (x + m - 1) // m * m


# ----------------------------------------------------------------------------
# Pallas kernel: packed-K 3x3 conv (single MXU matmul) + folded BN + LeakyReLU
# ----------------------------------------------------------------------------
def conv_bn_lrelu_kernel(p_ref, w_ref, scale_ref, shift_ref, o_ref):
    # p_ref:     (TILE_M, K)      bf16 im2col rows (N and H*W folded into M)
    # w_ref:     (K, Coutp)       bf16 packed per-tap weights, Cout padded
    # scale_ref: (1, Coutp)       f32 BN scale   (gamma / sqrt(var+eps))
    # shift_ref: (1, Coutp)       f32 BN shift   (beta + scale*(bias-mean))
    # o_ref:     (TILE_M, Coutp)  f32
    acc = jnp.dot(p_ref[...], w_ref[...], preferred_element_type=jnp.float32)
    y = acc * scale_ref[...] + shift_ref[...]
    o_ref[...] = jnp.where(y >= 0.0, y, LEAKY_SLOPE * y)


def conv3x3_bn_lrelu(x, w_hwio, bias, gamma, beta, mean, var, stride=1):
    """x: (N,H,W,Cin) f32; w_hwio: (3,3,Cin,Cout). Returns (N,H_out,W_out,Cout)."""
    N, H, W, Cin = x.shape
    Cout = w_hwio.shape[-1]
    H_out = (H + 2 - 3) // stride + 1
    W_out = (W + 2 - 3) // stride + 1
    K = 9 * Cin
    Coutp = _round_up(Cout, LANE)

    # --- Glue: pad + strided im2col taps, packed along the K (channel) axis.
    x_pad = jnp.pad(x, ((0, 0), (1, 1), (1, 1), (0, 0)))
    taps = []
    for kh in range(3):
        for kw in range(3):
            t = x_pad[:, kh: kh + stride * (H_out - 1) + 1: stride,
                         kw: kw + stride * (W_out - 1) + 1: stride, :]
            taps.append(t.reshape(N, H_out * W_out, Cin))
    patches = jnp.concatenate(taps, axis=-1)                 # (N, HWo, 9*Cin)
    patches = patches.reshape(N * H_out * W_out, K).astype(jnp.bfloat16)

    # --- Pack tap weights along K; fold conv bias + BN into scale/shift.
    w_packed = w_hwio.reshape(K, Cout)
    scale = gamma / jnp.sqrt(var + BN_EPS)
    shift = beta + scale * (bias - mean)
    if Coutp != Cout:                     # lane-dense (unmasked) output stores
        w_packed = jnp.pad(w_packed, ((0, 0), (0, Coutp - Cout)))
        scale = jnp.pad(scale, (0, Coutp - Cout))
        shift = jnp.pad(shift, (0, Coutp - Cout))
    w_packed = w_packed.astype(jnp.bfloat16)

    # --- Tile M (= N*H_out*W_out); pad rows up to a whole number of tiles.
    M = N * H_out * W_out
    if M <= DEFAULT_TILE_M:
        tile_m = _round_up(M, 8)
        m_pad = tile_m
    else:
        tile_m = DEFAULT_TILE_M
        m_pad = _round_up(M, tile_m)
    if m_pad != M:
        patches = jnp.pad(patches, ((0, m_pad - M), (0, 0)))
    grid_m = m_pad // tile_m

    cost = pl.CostEstimate(
        flops=2 * m_pad * K * Coutp,
        transcendentals=0,
        bytes_accessed=(m_pad * K * 2 + K * Coutp * 2
                        + 2 * Coutp * 4 + m_pad * Coutp * 4),
    )

    out = pl.pallas_call(
        conv_bn_lrelu_kernel,
        out_shape=jax.ShapeDtypeStruct((m_pad, Coutp), jnp.float32),
        grid_spec=pltpu.PrefetchScalarGridSpec(
            num_scalar_prefetch=0,
            grid=(grid_m,),
            in_specs=[
                pl.BlockSpec((tile_m, K), lambda m: (m, 0)),
                pl.BlockSpec((K, Coutp), lambda m: (0, 0)),
                pl.BlockSpec((1, Coutp), lambda m: (0, 0)),
                pl.BlockSpec((1, Coutp), lambda m: (0, 0)),
            ],
            out_specs=pl.BlockSpec((tile_m, Coutp), lambda m: (m, 0)),
        ),
        compiler_params=pltpu.CompilerParams(
            dimension_semantics=("parallel",),        # shards across v7x TCs
            vmem_limit_bytes=32 * 1024 * 1024,        # safe on v5e/v6e/v7x
        ),
        cost_estimate=cost,
    )(patches, w_packed, scale.reshape(1, Coutp), shift.reshape(1, Coutp))

    out = out[:M, :Cout].reshape(N, H_out, W_out, Cout)
    return out


# ----------------------------------------------------------------------------
# Glue ops
# ----------------------------------------------------------------------------
def upsample_bilinear_2x(x):
    """PyTorch nn.Upsample(scale_factor=2, mode='bilinear', align_corners=False)."""
    N, H, W, C = x.shape

    def src_idx(out_size, in_size):
        i = jnp.arange(out_size, dtype=jnp.float32)
        src = (i + 0.5) / 2.0 - 0.5
        src = jnp.clip(src, 0.0, float(in_size - 1))
        i0 = jnp.floor(src).astype(jnp.int32)
        i1 = jnp.minimum(i0 + 1, in_size - 1)
        frac = src - i0.astype(jnp.float32)
        return i0, i1, frac

    h0, h1, fh = src_idx(2 * H, H)
    w0, w1, fw = src_idx(2 * W, W)
    xr = (x[:, h0] * (1.0 - fh)[None, :, None, None]
          + x[:, h1] * fh[None, :, None, None])
    out = (xr[:, :, w0] * (1.0 - fw)[None, None, :, None]
           + xr[:, :, w1] * fw[None, None, :, None])
    return out


def conv_oihw_to_hwio(w):
    # PyTorch Conv2d weight (Cout, Cin, kh, kw) -> (kh, kw, Cin, Cout)
    return jnp.transpose(w, (2, 3, 1, 0))


def convT_iohw_to_hwio(w):
    # PyTorch ConvTranspose2d weight (Cin, Cout, kh, kw), stride=1, pad=1
    # equivalent "same" conv weight: flip spatially, swap channel axes.
    return jnp.transpose(jnp.flip(w, axis=(2, 3)), (2, 3, 0, 1))


# ----------------------------------------------------------------------------
# Parameters (deterministic synthetic init, PyTorch-shaped)
# ----------------------------------------------------------------------------
LAYER_SPECS = [
    # (name, kind, cin, cout, stride)
    ("d1a", "conv", 3, 32, 1), ("d1b", "conv", 32, 32, 2),
    ("d2a", "conv", 32, 64, 1), ("d2b", "conv", 64, 64, 2),
    ("d3a", "conv", 64, 128, 1), ("d3b", "conv", 128, 128, 2),
    ("d4a", "conv", 128, 256, 1), ("d4b", "conv", 256, 256, 1),
    ("u1a", "convT", 256, 256, 1), ("u1b", "convT", 256, 128, 1),
    ("u2a", "convT", 128, 128, 1), ("u2b", "convT", 128, 64, 1),
    ("u3a", "convT", 64, 64, 1), ("u3b", "convT", 64, 32, 1),
    ("u4a", "convT", 32, 32, 1), ("u4b", "convT", 32, 3, 1),
]


def init_params(key):
    params = {}
    for name, kind, cin, cout, _stride in LAYER_SPECS:
        key, kw, kb = jax.random.split(key, 3)
        if kind == "conv":
            w = jax.random.normal(kw, (cout, cin, 3, 3), jnp.float32) * 0.05
            w_hwio = conv_oihw_to_hwio(w)
        else:  # convT
            w = jax.random.normal(kw, (cin, cout, 3, 3), jnp.float32) * 0.05
            w_hwio = convT_iohw_to_hwio(w)
        b = jax.random.normal(kb, (cout,), jnp.float32) * 0.05
        params[name] = dict(
            w=w_hwio, b=b,
            gamma=jnp.ones((cout,), jnp.float32),
            beta=jnp.zeros((cout,), jnp.float32),
            mean=jnp.zeros((cout,), jnp.float32),
            var=jnp.ones((cout,), jnp.float32),
        )
    return params


def apply_block(x, p, stride):
    return conv3x3_bn_lrelu(x, p["w"], p["b"], p["gamma"], p["beta"],
                            p["mean"], p["var"], stride=stride)


# ----------------------------------------------------------------------------
# Full forward pass (matches featExtractionNets.forward)
# ----------------------------------------------------------------------------
def feat_extraction_forward(params, x_nchw):
    x = jnp.transpose(x_nchw, (0, 2, 3, 1)).astype(jnp.float32)   # NCHW -> NHWC

    # downsample1..4
    x = apply_block(x, params["d1a"], 1); x = apply_block(x, params["d1b"], 2)
    x = apply_block(x, params["d2a"], 1); x = apply_block(x, params["d2b"], 2)
    x = apply_block(x, params["d3a"], 1); x = apply_block(x, params["d3b"], 2)
    x = apply_block(x, params["d4a"], 1); x = apply_block(x, params["d4b"], 1)
    f = x

    # upsample1 (no spatial upsampling)
    x = apply_block(x, params["u1a"], 1); x = apply_block(x, params["u1b"], 1)
    # upsample2..4 (bilinear 2x then two convT blocks)
    x = upsample_bilinear_2x(x)
    x = apply_block(x, params["u2a"], 1); x = apply_block(x, params["u2b"], 1)
    x = upsample_bilinear_2x(x)
    x = apply_block(x, params["u3a"], 1); x = apply_block(x, params["u3b"], 1)
    x = upsample_bilinear_2x(x)
    x = apply_block(x, params["u4a"], 1); x = apply_block(x, params["u4b"], 1)

    # back to NCHW like the PyTorch module
    x_out = jnp.transpose(x, (0, 3, 1, 2))
    f_out = jnp.transpose(f, (0, 3, 1, 2))
    return x_out, f_out


if __name__ == "__main__":
    key = jax.random.PRNGKey(0)
    key, kx, kp = jax.random.split(key, 3)

    # Small NCHW input consistent with the module (3 input channels, 16x16).
    x = jax.random.normal(kx, (2, 3, 16, 16), jnp.float32)
    params = init_params(kp)

    fwd = jax.jit(feat_extraction_forward)
    out, feat = fwd(params, x)
    jax.block_until_ready((out, feat))

    assert out.shape == (2, 3, 16, 16), out.shape
    assert feat.shape == (2, 256, 2, 2), feat.shape
    assert jnp.all(jnp.isfinite(out)) and jnp.all(jnp.isfinite(feat))
    print("KERNEL_OK")
</pallas_src>

<mosaic_0001>
module attributes {stable_mosaic.version = 11 : i64} {
  func.func @conv_bn_lrelu_kernel(%arg0: i32, %arg1: memref<512x27xbf16, #tpu.memory_space<vmem>>, %arg2: memref<27x128xbf16, #tpu.memory_space<vmem>>, %arg3: memref<1x128xf32, #tpu.memory_space<vmem>>, %arg4: memref<1x128xf32, #tpu.memory_space<vmem>>, %arg5: memref<512x128xf32, #tpu.memory_space<vmem>>) attributes {dimension_semantics = [#tpu.dimension_semantics<parallel>], iteration_bounds = array<i64: 1>, scalar_prefetch = 0 : i64, scratch_operands = 0 : i64, tpu.core_type = #tpu.core_type<tc>, window_params = [{transform_indices = @transform_0, window_bounds = array<i64: 512, 27>}, {pipeline_mode = #tpu.pipeline_mode<synchronous>, transform_indices = @transform_1, window_bounds = array<i64: 27, 128>}, {pipeline_mode = #tpu.pipeline_mode<synchronous>, transform_indices = @transform_2, window_bounds = array<i64: 1, 128>}, {pipeline_mode = #tpu.pipeline_mode<synchronous>, transform_indices = @transform_3, window_bounds = array<i64: 1, 128>}, {transform_indices = @transform_4, window_bounds = array<i64: 512, 128>}]} {
    %c0 = arith.constant 0 : index
    %c0_0 = arith.constant 0 : index
    %0 = vector.load %arg1[%c0, %c0_0] : memref<512x27xbf16, #tpu.memory_space<vmem>>, vector<512x27xbf16>
    %c0_1 = arith.constant 0 : index
    %c0_2 = arith.constant 0 : index
    %1 = vector.load %arg2[%c0_1, %c0_2] : memref<27x128xbf16, #tpu.memory_space<vmem>>, vector<27x128xbf16>
    %cst = arith.constant dense<0.000000e+00> : vector<512x128xf32>
    %2 = tpu.matmul %0, %1, %cst {dimension_numbers = #tpu.dot_dimension_numbers<[1], [0], [0], [1], [0, 0, 1, 1], [], []>} : vector<512x27xbf16>, vector<27x128xbf16>, vector<512x128xf32> -> vector<512x128xf32>
    %c0_3 = arith.constant 0 : index
    %c0_4 = arith.constant 0 : index
    %3 = vector.load %arg3[%c0_3, %c0_4] : memref<1x128xf32, #tpu.memory_space<vmem>>, vector<1x128xf32>
    %4 = vector.broadcast %3 : vector<1x128xf32> to vector<512x128xf32>
    %5 = arith.mulf %2, %4 : vector<512x128xf32>
    %c0_5 = arith.constant 0 : index
    %c0_6 = arith.constant 0 : index
    %6 = vector.load %arg4[%c0_5, %c0_6] : memref<1x128xf32, #tpu.memory_space<vmem>>, vector<1x128xf32>
    %7 = vector.broadcast %6 : vector<1x128xf32> to vector<512x128xf32>
    %8 = arith.addf %5, %7 : vector<512x128xf32>
    %cst_7 = arith.constant 0.000000e+00 : f32
    %9 = vector.broadcast %cst_7 : f32 to vector<512x128xf32>
    %10 = arith.cmpf oge, %8, %9 : vector<512x128xf32>
    %cst_8 = arith.constant 0.00999999977 : f32
    %11 = vector.broadcast %cst_8 : f32 to vector<512x128xf32>
    %12 = arith.mulf %11, %8 : vector<512x128xf32>
    %13 = arith.select %10, %8, %12 : vector<512x128xi1>, vector<512x128xf32>
    %c0_9 = arith.constant 0 : index
    %c0_10 = arith.constant 0 : index
    %14 = vector.load %arg5[%c0_9, %c0_10] : memref<512x128xf32, #tpu.memory_space<vmem>>, vector<512x128xf32>
    tpu.vector_store %arg5[%c0_9, %c0_10], %13 {strides = array<i32>} : memref<512x128xf32, #tpu.memory_space<vmem>>, vector<512x128xf32>,
    return
  }
  func.func @transform_0(%arg0: i32) -> (i32, i32) {
    %c0_i32 = arith.constant 0 : i32
    %c0_i32_0 = arith.constant 0 : i32
    return %arg0, %c0_i32 : i32, i32
  }
  func.func @transform_1(%arg0: i32) -> (i32, i32) {
    %c0_i32 = arith.constant 0 : i32
    %c0_i32_0 = arith.constant 0 : i32
    %c0_i32_1 = arith.constant 0 : i32
    return %c0_i32, %c0_i32_0 : i32, i32
  }
  func.func @transform_2(%arg0: i32) -> (i32, i32) {
    %c0_i32 = arith.constant 0 : i32
    %c0_i32_0 = arith.constant 0 : i32
    %c0_i32_1 = arith.constant 0 : i32
    return %c0_i32, %c0_i32_0 : i32, i32
  }
  func.func @transform_3(%arg0: i32) -> (i32, i32) {
    %c0_i32 = arith.constant 0 : i32
    %c0_i32_0 = arith.constant 0 : i32
    %c0_i32_1 = arith.constant 0 : i32
    return %c0_i32, %c0_i32_0 : i32, i32
  }
  func.func @transform_4(%arg0: i32) -> (i32, i32) {
    %c0_i32 = arith.constant 0 : i32
    %c0_i32_0 = arith.constant 0 : i32
    return %arg0, %c0_i32 : i32, i32
  }
}

module attributes {stable_mosaic.version = 11 : i64} {
  func.func @conv_bn_lrelu_kernel(%arg0: i32, %arg1: memref<128x288xbf16, #tpu.memory_space<vmem>>, %arg2: memref<288x128xbf16, #tpu.memory_space<vmem>>, %arg3: memref<1x128xf32, #tpu.memory_space<vmem>>, %arg4: memref<1x128xf32, #tpu.memory_space<vmem>>, %arg5: memref<128x128xf32, #tpu.memory_space<vmem>>) attributes {dimension_semantics = [#tpu.dimension_semantics<parallel>], iteration_bounds = array<i64: 1>, scalar_prefetch = 0 : i64, scratch_operands = 0 : i64, tpu.core_type = #tpu.core_type<tc>, window_params = [{transform_indices = @transform_0, window_bounds = array<i64: 128, 288>}, {pipeline_mode = #tpu.pipeline_mode<synchronous>, transform_indices = @transform_1, window_bounds = array<i64: 288, 128>}, {pipeline_mode = #tpu.pipeline_mode<synchronous>, transform_indices = @transform_2, window_bounds = array<i64: 1, 128>}, {pipeline_mode = #tpu.pipeline_mode<synchronous>, transform_indices = @transform_3, window_bounds = array<i64: 1, 128>}, {transform_indices = @transform_4, window_bounds = array<i64: 128, 128>}]} {
    %c0 = arith.constant 0 : index
    %c0_0 = arith.constant 0 : index
    %0 = vector.load %arg1[%c0, %c0_0] : memref<128x288xbf16, #tpu.memory_space<vmem>>, vector<128x288xbf16>
    %c0_1 = arith.constant 0 : index
    %c0_2 = arith.constant 0 : index
    %1 = vector.load %arg2[%c0_1, %c0_2] : memref<288x128xbf16, #tpu.memory_space<vmem>>, vector<288x128xbf16>
    %cst = arith.constant dense<0.000000e+00> : vector<128x128xf32>
    %2 = tpu.matmul %0, %1, %cst {dimension_numbers = #tpu.dot_dimension_numbers<[1], [0], [0], [1], [0, 0, 1, 1], [], []>} : vector<128x288xbf16>, vector<288x128xbf16>, vector<128x128xf32> -> vector<128x128xf32>
    %c0_3 = arith.constant 0 : index
    %c0_4 = arith.constant 0 : index
    %3 = vector.load %arg3[%c0_3, %c0_4] : memref<1x128xf32, #tpu.memory_space<vmem>>, vector<1x128xf32>
    %4 = vector.broadcast %3 : vector<1x128xf32> to vector<128x128xf32>
    %5 = arith.mulf %2, %4 : vector<128x128xf32>
    %c0_5 = arith.constant 0 : index
    %c0_6 = arith.constant 0 : index
    %6 = vector.load %arg4[%c0_5, %c0_6] : memref<1x128xf32, #tpu.memory_space<vmem>>, vector<1x128xf32>
    %7 = vector.broadcast %6 : vector<1x128xf32> to vector<128x128xf32>
    %8 = arith.addf %5, %7 : vector<128x128xf32>
    %cst_7 = arith.constant 0.000000e+00 : f32
    %9 = vector.broadcast %cst_7 : f32 to vector<128x128xf32>
    %10 = arith.cmpf oge, %8, %9 : vector<128x128xf32>
    %cst_8 = arith.constant 0.00999999977 : f32
    %11 = vector.broadcast %cst_8 : f32 to vector<128x128xf32>
    %12 = arith.mulf %11, %8 : vector<128x128xf32>
    %13 = arith.select %10, %8, %12 : vector<128x128xi1>, vector<128x128xf32>
    %c0_9 = arith.constant 0 : index
    %c0_10 = arith.constant 0 : index
    %14 = vector.load %arg5[%c0_9, %c0_10] : memref<128x128xf32, #tpu.memory_space<vmem>>, vector<128x128xf32>
    tpu.vector_store %arg5[%c0_9, %c0_10], %13 {strides = array<i32>} : memref<128x128xf32, #tpu.memory_space<vmem>>, vector<128x128xf32>,
    return
  }
  func.func @transform_0(%arg0: i32) -> (i32, i32) {
    %c0_i32 = arith.constant 0 : i32
    %c0_i32_0 = arith.constant 0 : i32
    return %arg0, %c0_i32 : i32, i32
  }
  func.func @transform_1(%arg0: i32) -> (i32, i32) {
    %c0_i32 = arith.constant 0 : i32
    %c0_i32_0 = arith.constant 0 : i32
    %c0_i32_1 = arith.constant 0 : i32
    return %c0_i32, %c0_i32_0 : i32, i32
  }
  func.func @transform_2(%arg0: i32) -> (i32, i32) {
    %c0_i32 = arith.constant 0 : i32
    %c0_i32_0 = arith.constant 0 : i32
    %c0_i32_1 = arith.constant 0 : i32
    return %c0_i32, %c0_i32_0 : i32, i32
  }
  func.func @transform_3(%arg0: i32) -> (i32, i32) {
    %c0_i32 = arith.constant 0 : i32
    %c0_i32_0 = arith.constant 0 : i32
    %c0_i32_1 = arith.constant 0 : i32
    return %c0_i32, %c0_i32_0 : i32, i32
  }
  func.func @transform_4(%arg0: i32) -> (i32, i32) {
    %c0_i32 = arith.constant 0 : i32
    %c0_i32_0 = arith.constant 0 : i32
    return %arg0, %c0_i32 : i32, i32
  }
}

module attributes {stable_mosaic.version = 11 : i64} {
  func.func @conv_bn_lrelu_kernel(%arg0: i32, %arg1: memref<32x576xbf16, #tpu.memory_space<vmem>>, %arg2: memref<576x128xbf16, #tpu.memory_space<vmem>>, %arg3: memref<1x128xf32, #tpu.memory_space<vmem>>, %arg4: memref<1x128xf32, #tpu.memory_space<vmem>>, %arg5: memref<32x128xf32, #tpu.memory_space<vmem>>) attributes {dimension_semantics = [#tpu.dimension_semantics<parallel>], iteration_bounds = array<i64: 1>, scalar_prefetch = 0 : i64, scratch_operands = 0 : i64, tpu.core_type = #tpu.core_type<tc>, window_params = [{transform_indices = @transform_0, window_bounds = array<i64: 32, 576>}, {pipeline_mode = #tpu.pipeline_mode<synchronous>, transform_indices = @transform_1, window_bounds = array<i64: 576, 128>}, {pipeline_mode = #tpu.pipeline_mode<synchronous>, transform_indices = @transform_2, window_bounds = array<i64: 1, 128>}, {pipeline_mode = #tpu.pipeline_mode<synchronous>, transform_indices = @transform_3, window_bounds = array<i64: 1, 128>}, {transform_indices = @transform_4, window_bounds = array<i64: 32, 128>}]} {
    %c0 = arith.constant 0 : index
    %c0_0 = arith.constant 0 : index
    %0 = vector.load %arg1[%c0, %c0_0] : memref<32x576xbf16, #tpu.memory_space<vmem>>, vector<32x576xbf16>
    %c0_1 = arith.constant 0 : index
    %c0_2 = arith.constant 0 : index
    %1 = vector.load %arg2[%c0_1, %c0_2] : memref<576x128xbf16, #tpu.memory_space<vmem>>, vector<576x128xbf16>
    %cst = arith.constant dense<0.000000e+00> : vector<32x128xf32>
    %2 = tpu.matmul %0, %1, %cst {dimension_numbers = #tpu.dot_dimension_numbers<[1], [0], [0], [1], [0, 0, 1, 1], [], []>} : vector<32x576xbf16>, vector<576x128xbf16>, vector<32x128xf32> -> vector<32x128xf32>
    %c0_3 = arith.constant 0 : index
    %c0_4 = arith.constant 0 : index
    %3 = vector.load %arg3[%c0_3, %c0_4] : memref<1x128xf32, #tpu.memory_space<vmem>>, vector<1x128xf32>
    %4 = vector.broadcast %3 : vector<1x128xf32> to vector<32x128xf32>
    %5 = arith.mulf %2, %4 : vector<32x128xf32>
    %c0_5 = arith.constant 0 : index
    %c0_6 = arith.constant 0 : index
    %6 = vector.load %arg4[%c0_5, %c0_6] : memref<1x128xf32, #tpu.memory_space<vmem>>, vector<1x128xf32>
    %7 = vector.broadcast %6 : vector<1x128xf32> to vector<32x128xf32>
    %8 = arith.addf %5, %7 : vector<32x128xf32>
    %cst_7 = arith.constant 0.000000e+00 : f32
    %9 = vector.broadcast %cst_7 : f32 to vector<32x128xf32>
    %10 = arith.cmpf oge, %8, %9 : vector<32x128xf32>
    %cst_8 = arith.constant 0.00999999977 : f32
    %11 = vector.broadcast %cst_8 : f32 to vector<32x128xf32>
    %12 = arith.mulf %11, %8 : vector<32x128xf32>
    %13 = arith.select %10, %8, %12 : vector<32x128xi1>, vector<32x128xf32>
    %c0_9 = arith.constant 0 : index
    %c0_10 = arith.constant 0 : index
    %14 = vector.load %arg5[%c0_9, %c0_10] : memref<32x128xf32, #tpu.memory_space<vmem>>, vector<32x128xf32>
    tpu.vector_store %arg5[%c0_9, %c0_10], %13 {strides = array<i32>} : memref<32x128xf32, #tpu.memory_space<vmem>>, vector<32x128xf32>,
    return
  }
  func.func @transform_0(%arg0: i32) -> (i32, i32) {
    %c0_i32 = arith.constant 0 : i32
    %c0_i32_0 = arith.constant 0 : i32
    return %arg0, %c0_i32 : i32, i32
  }
  func.func @transform_1(%arg0: i32) -> (i32, i32) {
    %c0_i32 = arith.constant 0 : i32
    %c0_i32_0 = arith.constant 0 : i32
    %c0_i32_1 = arith.constant 0 : i32
    return %c0_i32, %c0_i32_0 : i32, i32
  }
  func.func @transform_2(%arg0: i32) -> (i32, i32) {
    %c0_i32 = arith.constant 0 : i32
    %c0_i32_0 = arith.constant 0 : i32
    %c0_i32_1 = arith.constant 0 : i32
    return %c0_i32, %c0_i32_0 : i32, i32
  }
  func.func @transform_3(%arg0: i32) -> (i32, i32) {
    %c0_i32 = arith.constant 0 : i32
    %c0_i32_0 = arith.constant 0 : i32
    %c0_i32_1 = arith.constant 0 : i32
    return %c0_i32, %c0_i32_0 : i32, i32
  }
  func.func @transform_4(%arg0: i32) -> (i32, i32) {
    %c0_i32 = arith.constant 0 : i32
    %c0_i32_0 = arith.constant 0 : i32
    return %arg0, %c0_i32 : i32, i32
  }
}

module attributes {stable_mosaic.version = 11 : i64} {
  func.func @conv_bn_lrelu_kernel(%arg0: i32, %arg1: memref<8x1152xbf16, #tpu.memory_space<vmem>>, %arg2: memref<1152x128xbf16, #tpu.memory_space<vmem>>, %arg3: memref<1x128xf32, #tpu.memory_space<vmem>>, %arg4: memref<1x128xf32, #tpu.memory_space<vmem>>, %arg5: memref<8x128xf32, #tpu.memory_space<vmem>>) attributes {dimension_semantics = [#tpu.dimension_semantics<parallel>], iteration_bounds = array<i64: 1>, scalar_prefetch = 0 : i64, scratch_operands = 0 : i64, tpu.core_type = #tpu.core_type<tc>, window_params = [{transform_indices = @transform_0, window_bounds = array<i64: 8, 1152>}, {pipeline_mode = #tpu.pipeline_mode<synchronous>, transform_indices = @transform_1, window_bounds = array<i64: 1152, 128>}, {pipeline_mode = #tpu.pipeline_mode<synchronous>, transform_indices = @transform_2, window_bounds = array<i64: 1, 128>}, {pipeline_mode = #tpu.pipeline_mode<synchronous>, transform_indices = @transform_3, window_bounds = array<i64: 1, 128>}, {transform_indices = @transform_4, window_bounds = array<i64: 8, 128>}]} {
    %c0 = arith.constant 0 : index
    %c0_0 = arith.constant 0 : index
    %0 = vector.load %arg1[%c0, %c0_0] : memref<8x1152xbf16, #tpu.memory_space<vmem>>, vector<8x1152xbf16>
    %c0_1 = arith.constant 0 : index
    %c0_2 = arith.constant 0 : index
    %1 = vector.load %arg2[%c0_1, %c0_2] : memref<1152x128xbf16, #tpu.memory_space<vmem>>, vector<1152x128xbf16>
    %cst = arith.constant dense<0.000000e+00> : vector<8x128xf32>
    %2 = tpu.matmul %0, %1, %cst {dimension_numbers = #tpu.dot_dimension_numbers<[1], [0], [0], [1], [0, 0, 1, 1], [], []>} : vector<8x1152xbf16>, vector<1152x128xbf16>, vector<8x128xf32> -> vector<8x128xf32>
    %c0_3 = arith.constant 0 : index
    %c0_4 = arith.constant 0 : index
    %3 = vector.load %arg3[%c0_3, %c0_4] : memref<1x128xf32, #tpu.memory_space<vmem>>, vector<1x128xf32>
    %4 = vector.broadcast %3 : vector<1x128xf32> to vector<8x128xf32>
    %5 = arith.mulf %2, %4 : vector<8x128xf32>
    %c0_5 = arith.constant 0 : index
    %c0_6 = arith.constant 0 : index
    %6 = vector.load %arg4[%c0_5, %c0_6] : memref<1x128xf32, #tpu.memory_space<vmem>>, vector<1x128xf32>
    %7 = vector.broadcast %6 : vector<1x128xf32> to vector<8x128xf32>
    %8 = arith.addf %5, %7 : vector<8x128xf32>
    %cst_7 = arith.constant 0.000000e+00 : f32
    %9 = vector.broadcast %cst_7 : f32 to vector<8x128xf32>
    %10 = arith.cmpf oge, %8, %9 : vector<8x128xf32>
    %cst_8 = arith.constant 0.00999999977 : f32
    %11 = vector.broadcast %cst_8 : f32 to vector<8x128xf32>
    %12 = arith.mulf %11, %8 : vector<8x128xf32>
    %13 = arith.select %10, %8, %12 : vector<8x128xi1>, vector<8x128xf32>
    %c0_9 = arith.constant 0 : index
    %c0_10 = arith.constant 0 : index
    %14 = vector.load %arg5[%c0_9, %c0_10] : memref<8x128xf32, #tpu.memory_space<vmem>>, vector<8x128xf32>
    tpu.vector_store %arg5[%c0_9, %c0_10], %13 {strides = array<i32>} : memref<8x128xf32, #tpu.memory_space<vmem>>, vector<8x128xf32>,
    return
  }
  func.func @transform_0(%arg0: i32) -> (i32, i32) {
    %c0_i32 = arith.constant 0 : i32
    %c0_i32_0 = arith.constant 0 : i32
    return %arg0, %c0_i32 : i32, i32
  }
  func.func @transform_1(%arg0: i32) -> (i32, i32) {
    %c0_i32 = arith.constant 0 : i32
    %c0_i32_0 = arith.constant 0 : i32
    %c0_i32_1 = arith.constant 0 : i32
    return %c0_i32, %c0_i32_0 : i32, i32
  }
  func.func @transform_2(%arg0: i32) -> (i32, i32) {
    %c0_i32 = arith.constant 0 : i32
    %c0_i32_0 = arith.constant 0 : i32
    %c0_i32_1 = arith.constant 0 : i32
    return %c0_i32, %c0_i32_0 : i32, i32
  }
  func.func @transform_3(%arg0: i32) -> (i32, i32) {
    %c0_i32 = arith.constant 0 : i32
    %c0_i32_0 = arith.constant 0 : i32
    %c0_i32_1 = arith.constant 0 : i32
    return %c0_i32, %c0_i32_0 : i32, i32
  }
  func.func @transform_4(%arg0: i32) -> (i32, i32) {
    %c0_i32 = arith.constant 0 : i32
    %c0_i32_0 = arith.constant 0 : i32
    return %arg0, %c0_i32 : i32, i32
  }
}

module attributes {stable_mosaic.version = 11 : i64} {
  func.func @conv_bn_lrelu_kernel(%arg0: i32, %arg1: memref<8x1152xbf16, #tpu.memory_space<vmem>>, %arg2: memref<1152x256xbf16, #tpu.memory_space<vmem>>, %arg3: memref<1x256xf32, #tpu.memory_space<vmem>>, %arg4: memref<1x256xf32, #tpu.memory_space<vmem>>, %arg5: memref<8x256xf32, #tpu.memory_space<vmem>>) attributes {dimension_semantics = [#tpu.dimension_semantics<parallel>], iteration_bounds = array<i64: 1>, scalar_prefetch = 0 : i64, scratch_operands = 0 : i64, tpu.core_type = #tpu.core_type<tc>, window_params = [{transform_indices = @transform_0, window_bounds = array<i64: 8, 1152>}, {pipeline_mode = #tpu.pipeline_mode<synchronous>, transform_indices = @transform_1, window_bounds = array<i64: 1152, 256>}, {pipeline_mode = #tpu.pipeline_mode<synchronous>, transform_indices = @transform_2, window_bounds = array<i64: 1, 256>}, {pipeline_mode = #tpu.pipeline_mode<synchronous>, transform_indices = @transform_3, window_bounds = array<i64: 1, 256>}, {transform_indices = @transform_4, window_bounds = array<i64: 8, 256>}]} {
    %c0 = arith.constant 0 : index
    %c0_0 = arith.constant 0 : index
    %0 = vector.load %arg1[%c0, %c0_0] : memref<8x1152xbf16, #tpu.memory_space<vmem>>, vector<8x1152xbf16>
    %c0_1 = arith.constant 0 : index
    %c0_2 = arith.constant 0 : index
    %1 = vector.load %arg2[%c0_1, %c0_2] : memref<1152x256xbf16, #tpu.memory_space<vmem>>, vector<1152x256xbf16>
    %cst = arith.constant dense<0.000000e+00> : vector<8x256xf32>
    %2 = tpu.matmul %0, %1, %cst {dimension_numbers = #tpu.dot_dimension_numbers<[1], [0], [0], [1], [0, 0, 1, 1], [], []>} : vector<8x1152xbf16>, vector<1152x256xbf16>, vector<8x256xf32> -> vector<8x256xf32>
    %c0_3 = arith.constant 0 : index
    %c0_4 = arith.constant 0 : index
    %3 = vector.load %arg3[%c0_3, %c0_4] : memref<1x256xf32, #tpu.memory_space<vmem>>, vector<1x256xf32>
    %4 = vector.broadcast %3 : vector<1x256xf32> to vector<8x256xf32>
    %5 = arith.mulf %2, %4 : vector<8x256xf32>
    %c0_5 = arith.constant 0 : index
    %c0_6 = arith.constant 0 : index
    %6 = vector.load %arg4[%c0_5, %c0_6] : memref<1x256xf32, #tpu.memory_space<vmem>>, vector<1x256xf32>
    %7 = vector.broadcast %6 : vector<1x256xf32> to vector<8x256xf32>
    %8 = arith.addf %5, %7 : vector<8x256xf32>
    %cst_7 = arith.constant 0.000000e+00 : f32
    %9 = vector.broadcast %cst_7 : f32 to vector<8x256xf32>
    %10 = arith.cmpf oge, %8, %9 : vector<8x256xf32>
    %cst_8 = arith.constant 0.00999999977 : f32
    %11 = vector.broadcast %cst_8 : f32 to vector<8x256xf32>
    %12 = arith.mulf %11, %8 : vector<8x256xf32>
    %13 = arith.select %10, %8, %12 : vector<8x256xi1>, vector<8x256xf32>
    %c0_9 = arith.constant 0 : index
    %c0_10 = arith.constant 0 : index
    %14 = vector.load %arg5[%c0_9, %c0_10] : memref<8x256xf32, #tpu.memory_space<vmem>>, vector<8x256xf32>
    tpu.vector_store %arg5[%c0_9, %c0_10], %13 {strides = array<i32>} : memref<8x256xf32, #tpu.memory_space<vmem>>, vector<8x256xf32>,
    return
  }
  func.func @transform_0(%arg0: i32) -> (i32, i32) {
    %c0_i32 = arith.constant 0 : i32
    %c0_i32_0 = arith.constant 0 : i32
    return %arg0, %c0_i32 : i32, i32
  }
  func.func @transform_1(%arg0: i32) -> (i32, i32) {
    %c0_i32 = arith.constant 0 : i32
    %c0_i32_0 = arith.constant 0 : i32
    %c0_i32_1 = arith.constant 0 : i32
    return %c0_i32, %c0_i32_0 : i32, i32
  }
  func.func @transform_2(%arg0: i32) -> (i32, i32) {
    %c0_i32 = arith.constant 0 : i32
    %c0_i32_0 = arith.constant 0 : i32
    %c0_i32_1 = arith.constant 0 : i32
    return %c0_i32, %c0_i32_0 : i32, i32
  }
  func.func @transform_3(%arg0: i32) -> (i32, i32) {
    %c0_i32 = arith.constant 0 : i32
    %c0_i32_0 = arith.constant 0 : i32
    %c0_i32_1 = arith.constant 0 : i32
    return %c0_i32, %c0_i32_0 : i32, i32
  }
  func.func @transform_4(%arg0: i32) -> (i32, i32) {
    %c0_i32 = arith.constant 0 : i32
    %c0_i32_0 = arith.constant 0 : i32
    return %arg0, %c0_i32 : i32, i32
  }
}

module attributes {stable_mosaic.version = 11 : i64} {
  func.func @conv_bn_lrelu_kernel(%arg0: i32, %arg1: memref<8x2304xbf16, #tpu.memory_space<vmem>>, %arg2: memref<2304x256xbf16, #tpu.memory_space<vmem>>, %arg3: memref<1x256xf32, #tpu.memory_space<vmem>>, %arg4: memref<1x256xf32, #tpu.memory_space<vmem>>, %arg5: memref<8x256xf32, #tpu.memory_space<vmem>>) attributes {dimension_semantics = [#tpu.dimension_semantics<parallel>], iteration_bounds = array<i64: 1>, scalar_prefetch = 0 : i64, scratch_operands = 0 : i64, tpu.core_type = #tpu.core_type<tc>, window_params = [{transform_indices = @transform_0, window_bounds = array<i64: 8, 2304>}, {pipeline_mode = #tpu.pipeline_mode<synchronous>, transform_indices = @transform_1, window_bounds = array<i64: 2304, 256>}, {pipeline_mode = #tpu.pipeline_mode<synchronous>, transform_indices = @transform_2, window_bounds = array<i64: 1, 256>}, {pipeline_mode = #tpu.pipeline_mode<synchronous>, transform_indices = @transform_3, window_bounds = array<i64: 1, 256>}, {transform_indices = @transform_4, window_bounds = array<i64: 8, 256>}]} {
    %c0 = arith.constant 0 : index
    %c0_0 = arith.constant 0 : index
    %0 = vector.load %arg1[%c0, %c0_0] : memref<8x2304xbf16, #tpu.memory_space<vmem>>, vector<8x2304xbf16>
    %c0_1 = arith.constant 0 : index
    %c0_2 = arith.constant 0 : index
    %1 = vector.load %arg2[%c0_1, %c0_2] : memref<2304x256xbf16, #tpu.memory_space<vmem>>, vector<2304x256xbf16>
    %cst = arith.constant dense<0.000000e+00> : vector<8x256xf32>
    %2 = tpu.matmul %0, %1, %cst {dimension_numbers = #tpu.dot_dimension_numbers<[1], [0], [0], [1], [0, 0, 1, 1], [], []>} : vector<8x2304xbf16>, vector<2304x256xbf16>, vector<8x256xf32> -> vector<8x256xf32>
    %c0_3 = arith.constant 0 : index
    %c0_4 = arith.constant 0 : index
    %3 = vector.load %arg3[%c0_3, %c0_4] : memref<1x256xf32, #tpu.memory_space<vmem>>, vector<1x256xf32>
    %4 = vector.broadcast %3 : vector<1x256xf32> to vector<8x256xf32>
    %5 = arith.mulf %2, %4 : vector<8x256xf32>
    %c0_5 = arith.constant 0 : index
    %c0_6 = arith.constant 0 : index
    %6 = vector.load %arg4[%c0_5, %c0_6] : memref<1x256xf32, #tpu.memory_space<vmem>>, vector<1x256xf32>
    %7 = vector.broadcast %6 : vector<1x256xf32> to vector<8x256xf32>
    %8 = arith.addf %5, %7 : vector<8x256xf32>
    %cst_7 = arith.constant 0.000000e+00 : f32
    %9 = vector.broadcast %cst_7 : f32 to vector<8x256xf32>
    %10 = arith.cmpf oge, %8, %9 : vector<8x256xf32>
    %cst_8 = arith.constant 0.00999999977 : f32
    %11 = vector.broadcast %cst_8 : f32 to vector<8x256xf32>
    %12 = arith.mulf %11, %8 : vector<8x256xf32>
    %13 = arith.select %10, %8, %12 : vector<8x256xi1>, vector<8x256xf32>
    %c0_9 = arith.constant 0 : index
    %c0_10 = arith.constant 0 : index
    %14 = vector.load %arg5[%c0_9, %c0_10] : memref<8x256xf32, #tpu.memory_space<vmem>>, vector<8x256xf32>
    tpu.vector_store %arg5[%c0_9, %c0_10], %13 {strides = array<i32>} : memref<8x256xf32, #tpu.memory_space<vmem>>, vector<8x256xf32>,
    return
  }
  func.func @transform_0(%arg0: i32) -> (i32, i32) {
    %c0_i32 = arith.constant 0 : i32
    %c0_i32_0 = arith.constant 0 : i32
    return %arg0, %c0_i32 : i32, i32
  }
  func.func @transform_1(%arg0: i32) -> (i32, i32) {
    %c0_i32 = arith.constant 0 : i32
    %c0_i32_0 = arith.constant 0 : i32
    %c0_i32_1 = arith.constant 0 : i32
    return %c0_i32, %c0_i32_0 : i32, i32
  }
  func.func @transform_2(%arg0: i32) -> (i32, i32) {
    %c0_i32 = arith.constant 0 : i32
    %c0_i32_0 = arith.constant 0 : i32
    %c0_i32_1 = arith.constant 0 : i32
    return %c0_i32, %c0_i32_0 : i32, i32
  }
  func.func @transform_3(%arg0: i32) -> (i32, i32) {
    %c0_i32 = arith.constant 0 : i32
    %c0_i32_0 = arith.constant 0 : i32
    %c0_i32_1 = arith.constant 0 : i32
    return %c0_i32, %c0_i32_0 : i32, i32
  }
  func.func @transform_4(%arg0: i32) -> (i32, i32) {
    %c0_i32 = arith.constant 0 : i32
    %c0_i32_0 = arith.constant 0 : i32
    return %arg0, %c0_i32 : i32, i32
  }
}

module attributes {stable_mosaic.version = 11 : i64} {
  func.func @conv_bn_lrelu_kernel(%arg0: i32, %arg1: memref<8x2304xbf16, #tpu.memory_space<vmem>>, %arg2: memref<2304x128xbf16, #tpu.memory_space<vmem>>, %arg3: memref<1x128xf32, #tpu.memory_space<vmem>>, %arg4: memref<1x128xf32, #tpu.memory_space<vmem>>, %arg5: memref<8x128xf32, #tpu.memory_space<vmem>>) attributes {dimension_semantics = [#tpu.dimension_semantics<parallel>], iteration_bounds = array<i64: 1>, scalar_prefetch = 0 : i64, scratch_operands = 0 : i64, tpu.core_type = #tpu.core_type<tc>, window_params = [{transform_indices = @transform_0, window_bounds = array<i64: 8, 2304>}, {pipeline_mode = #tpu.pipeline_mode<synchronous>, transform_indices = @transform_1, window_bounds = array<i64: 2304, 128>}, {pipeline_mode = #tpu.pipeline_mode<synchronous>, transform_indices = @transform_2, window_bounds = array<i64: 1, 128>}, {pipeline_mode = #tpu.pipeline_mode<synchronous>, transform_indices = @transform_3, window_bounds = array<i64: 1, 128>}, {transform_indices = @transform_4, window_bounds = array<i64: 8, 128>}]} {
    %c0 = arith.constant 0 : index
    %c0_0 = arith.constant 0 : index
    %0 = vector.load %arg1[%c0, %c0_0] : memref<8x2304xbf16, #tpu.memory_space<vmem>>, vector<8x2304xbf16>
    %c0_1 = arith.constant 0 : index
    %c0_2 = arith.constant 0 : index
    %1 = vector.load %arg2[%c0_1, %c0_2] : memref<2304x128xbf16, #tpu.memory_space<vmem>>, vector<2304x128xbf16>
    %cst = arith.constant dense<0.000000e+00> : vector<8x128xf32>
    %2 = tpu.matmul %0, %1, %cst {dimension_numbers = #tpu.dot_dimension_numbers<[1], [0], [0], [1], [0, 0, 1, 1], [], []>} : vector<8x2304xbf16>, vector<2304x128xbf16>, vector<8x128xf32> -> vector<8x128xf32>
    %c0_3 = arith.constant 0 : index
    %c0_4 = arith.constant 0 : index
    %3 = vector.load %arg3[%c0_3, %c0_4] : memref<1x128xf32, #tpu.memory_space<vmem>>, vector<1x128xf32>
    %4 = vector.broadcast %3 : vector<1x128xf32> to vector<8x128xf32>
    %5 = arith.mulf %2, %4 : vector<8x128xf32>
    %c0_5 = arith.constant 0 : index
    %c0_6 = arith.constant 0 : index
    %6 = vector.load %arg4[%c0_5, %c0_6] : memref<1x128xf32, #tpu.memory_space<vmem>>, vector<1x128xf32>
    %7 = vector.broadcast %6 : vector<1x128xf32> to vector<8x128xf32>
    %8 = arith.addf %5, %7 : vector<8x128xf32>
    %cst_7 = arith.constant 0.000000e+00 : f32
    %9 = vector.broadcast %cst_7 : f32 to vector<8x128xf32>
    %10 = arith.cmpf oge, %8, %9 : vector<8x128xf32>
    %cst_8 = arith.constant 0.00999999977 : f32
    %11 = vector.broadcast %cst_8 : f32 to vector<8x128xf32>
    %12 = arith.mulf %11, %8 : vector<8x128xf32>
    %13 = arith.select %10, %8, %12 : vector<8x128xi1>, vector<8x128xf32>
    %c0_9 = arith.constant 0 : index
    %c0_10 = arith.constant 0 : index
    %14 = vector.load %arg5[%c0_9, %c0_10] : memref<8x128xf32, #tpu.memory_space<vmem>>, vector<8x128xf32>
    tpu.vector_store %arg5[%c0_9, %c0_10], %13 {strides = array<i32>} : memref<8x128xf32, #tpu.memory_space<vmem>>, vector<8x128xf32>,
    return
  }
  func.func @transform_0(%arg0: i32) -> (i32, i32) {
    %c0_i32 = arith.constant 0 : i32
    %c0_i32_0 = arith.constant 0 : i32
    return %arg0, %c0_i32 : i32, i32
  }
  func.func @transform_1(%arg0: i32) -> (i32, i32) {
    %c0_i32 = arith.constant 0 : i32
    %c0_i32_0 = arith.constant 0 : i32
    %c0_i32_1 = arith.constant 0 : i32
    return %c0_i32, %c0_i32_0 : i32, i32
  }
  func.func @transform_2(%arg0: i32) -> (i32, i32) {
    %c0_i32 = arith.constant 0 : i32
    %c0_i32_0 = arith.constant 0 : i32
    %c0_i32_1 = arith.constant 0 : i32
    return %c0_i32, %c0_i32_0 : i32, i32
  }
  func.func @transform_3(%arg0: i32) -> (i32, i32) {
    %c0_i32 = arith.constant 0 : i32
    %c0_i32_0 = arith.constant 0 : i32
    %c0_i32_1 = arith.constant 0 : i32
    return %c0_i32, %c0_i32_0 : i32, i32
  }
  func.func @transform_4(%arg0: i32) -> (i32, i32) {
    %c0_i32 = arith.constant 0 : i32
    %c0_i32_0 = arith.constant 0 : i32
    return %arg0, %c0_i32 : i32, i32
  }
}

module attributes {stable_mosaic.version = 11 : i64} {
  func.func @conv_bn_lrelu_kernel(%arg0: i32, %arg1: memref<32x1152xbf16, #tpu.memory_space<vmem>>, %arg2: memref<1152x128xbf16, #tpu.memory_space<vmem>>, %arg3: memref<1x128xf32, #tpu.memory_space<vmem>>, %arg4: memref<1x128xf32, #tpu.memory_space<vmem>>, %arg5: memref<32x128xf32, #tpu.memory_space<vmem>>) attributes {dimension_semantics = [#tpu.dimension_semantics<parallel>], iteration_bounds = array<i64: 1>, scalar_prefetch = 0 : i64, scratch_operands = 0 : i64, tpu.core_type = #tpu.core_type<tc>, window_params = [{transform_indices = @transform_0, window_bounds = array<i64: 32, 1152>}, {pipeline_mode = #tpu.pipeline_mode<synchronous>, transform_indices = @transform_1, window_bounds = array<i64: 1152, 128>}, {pipeline_mode = #tpu.pipeline_mode<synchronous>, transform_indices = @transform_2, window_bounds = array<i64: 1, 128>}, {pipeline_mode = #tpu.pipeline_mode<synchronous>, transform_indices = @transform_3, window_bounds = array<i64: 1, 128>}, {transform_indices = @transform_4, window_bounds = array<i64: 32, 128>}]} {
    %c0 = arith.constant 0 : index
    %c0_0 = arith.constant 0 : index
    %0 = vector.load %arg1[%c0, %c0_0] : memref<32x1152xbf16, #tpu.memory_space<vmem>>, vector<32x1152xbf16>
    %c0_1 = arith.constant 0 : index
    %c0_2 = arith.constant 0 : index
    %1 = vector.load %arg2[%c0_1, %c0_2] : memref<1152x128xbf16, #tpu.memory_space<vmem>>, vector<1152x128xbf16>
    %cst = arith.constant dense<0.000000e+00> : vector<32x128xf32>
    %2 = tpu.matmul %0, %1, %cst {dimension_numbers = #tpu.dot_dimension_numbers<[1], [0], [0], [1], [0, 0, 1, 1], [], []>} : vector<32x1152xbf16>, vector<1152x128xbf16>, vector<32x128xf32> -> vector<32x128xf32>
    %c0_3 = arith.constant 0 : index
    %c0_4 = arith.constant 0 : index
    %3 = vector.load %arg3[%c0_3, %c0_4] : memref<1x128xf32, #tpu.memory_space<vmem>>, vector<1x128xf32>
    %4 = vector.broadcast %3 : vector<1x128xf32> to vector<32x128xf32>
    %5 = arith.mulf %2, %4 : vector<32x128xf32>
    %c0_5 = arith.constant 0 : index
    %c0_6 = arith.constant 0 : index
    %6 = vector.load %arg4[%c0_5, %c0_6] : memref<1x128xf32, #tpu.memory_space<vmem>>, vector<1x128xf32>
    %7 = vector.broadcast %6 : vector<1x128xf32> to vector<32x128xf32>
    %8 = arith.addf %5, %7 : vector<32x128xf32>
    %cst_7 = arith.constant 0.000000e+00 : f32
    %9 = vector.broadcast %cst_7 : f32 to vector<32x128xf32>
    %10 = arith.cmpf oge, %8, %9 : vector<32x128xf32>
    %cst_8 = arith.constant 0.00999999977 : f32
    %11 = vector.broadcast %cst_8 : f32 to vector<32x128xf32>
    %12 = arith.mulf %11, %8 : vector<32x128xf32>
    %13 = arith.select %10, %8, %12 : vector<32x128xi1>, vector<32x128xf32>
    %c0_9 = arith.constant 0 : index
    %c0_10 = arith.constant 0 : index
    %14 = vector.load %arg5[%c0_9, %c0_10] : memref<32x128xf32, #tpu.memory_space<vmem>>, vector<32x128xf32>
    tpu.vector_store %arg5[%c0_9, %c0_10], %13 {strides = array<i32>} : memref<32x128xf32, #tpu.memory_space<vmem>>, vector<32x128xf32>,
    return
  }
  func.func @transform_0(%arg0: i32) -> (i32, i32) {
    %c0_i32 = arith.constant 0 : i32
    %c0_i32_0 = arith.constant 0 : i32
    return %arg0, %c0_i32 : i32, i32
  }
  func.func @transform_1(%arg0: i32) -> (i32, i32) {
    %c0_i32 = arith.constant 0 : i32
    %c0_i32_0 = arith.constant 0 : i32
    %c0_i32_1 = arith.constant 0 : i32
    return %c0_i32, %c0_i32_0 : i32, i32
  }
  func.func @transform_2(%arg0: i32) -> (i32, i32) {
    %c0_i32 = arith.constant 0 : i32
    %c0_i32_0 = arith.constant 0 : i32
    %c0_i32_1 = arith.constant 0 : i32
    return %c0_i32, %c0_i32_0 : i32, i32
  }
  func.func @transform_3(%arg0: i32) -> (i32, i32) {
    %c0_i32 = arith.constant 0 : i32
    %c0_i32_0 = arith.constant 0 : i32
    %c0_i32_1 = arith.constant 0 : i32
    return %c0_i32, %c0_i32_0 : i32, i32
  }
  func.func @transform_4(%arg0: i32) -> (i32, i32) {
    %c0_i32 = arith.constant 0 : i32
    %c0_i32_0 = arith.constant 0 : i32
    return %arg0, %c0_i32 : i32, i32
  }
}

module attributes {stable_mosaic.version = 11 : i64} {
  func.func @conv_bn_lrelu_kernel(%arg0: i32, %arg1: memref<128x576xbf16, #tpu.memory_space<vmem>>, %arg2: memref<576x128xbf16, #tpu.memory_space<vmem>>, %arg3: memref<1x128xf32, #tpu.memory_space<vmem>>, %arg4: memref<1x128xf32, #tpu.memory_space<vmem>>, %arg5: memref<128x128xf32, #tpu.memory_space<vmem>>) attributes {dimension_semantics = [#tpu.dimension_semantics<parallel>], iteration_bounds = array<i64: 1>, scalar_prefetch = 0 : i64, scratch_operands = 0 : i64, tpu.core_type = #tpu.core_type<tc>, window_params = [{transform_indices = @transform_0, window_bounds = array<i64: 128, 576>}, {pipeline_mode = #tpu.pipeline_mode<synchronous>, transform_indices = @transform_1, window_bounds = array<i64: 576, 128>}, {pipeline_mode = #tpu.pipeline_mode<synchronous>, transform_indices = @transform_2, window_bounds = array<i64: 1, 128>}, {pipeline_mode = #tpu.pipeline_mode<synchronous>, transform_indices = @transform_3, window_bounds = array<i64: 1, 128>}, {transform_indices = @transform_4, window_bounds = array<i64: 128, 128>}]} {
    %c0 = arith.constant 0 : index
    %c0_0 = arith.constant 0 : index
    %0 = vector.load %arg1[%c0, %c0_0] : memref<128x576xbf16, #tpu.memory_space<vmem>>, vector<128x576xbf16>
    %c0_1 = arith.constant 0 : index
    %c0_2 = arith.constant 0 : index
    %1 = vector.load %arg2[%c0_1, %c0_2] : memref<576x128xbf16, #tpu.memory_space<vmem>>, vector<576x128xbf16>
    %cst = arith.constant dense<0.000000e+00> : vector<128x128xf32>
    %2 = tpu.matmul %0, %1, %cst {dimension_numbers = #tpu.dot_dimension_numbers<[1], [0], [0], [1], [0, 0, 1, 1], [], []>} : vector<128x576xbf16>, vector<576x128xbf16>, vector<128x128xf32> -> vector<128x128xf32>
    %c0_3 = arith.constant 0 : index
    %c0_4 = arith.constant 0 : index
    %3 = vector.load %arg3[%c0_3, %c0_4] : memref<1x128xf32, #tpu.memory_space<vmem>>, vector<1x128xf32>
    %4 = vector.broadcast %3 : vector<1x128xf32> to vector<128x128xf32>
    %5 = arith.mulf %2, %4 : vector<128x128xf32>
    %c0_5 = arith.constant 0 : index
    %c0_6 = arith.constant 0 : index
    %6 = vector.load %arg4[%c0_5, %c0_6] : memref<1x128xf32, #tpu.memory_space<vmem>>, vector<1x128xf32>
    %7 = vector.broadcast %6 : vector<1x128xf32> to vector<128x128xf32>
    %8 = arith.addf %5, %7 : vector<128x128xf32>
    %cst_7 = arith.constant 0.000000e+00 : f32
    %9 = vector.broadcast %cst_7 : f32 to vector<128x128xf32>
    %10 = arith.cmpf oge, %8, %9 : vector<128x128xf32>
    %cst_8 = arith.constant 0.00999999977 : f32
    %11 = vector.broadcast %cst_8 : f32 to vector<128x128xf32>
    %12 = arith.mulf %11, %8 : vector<128x128xf32>
    %13 = arith.select %10, %8, %12 : vector<128x128xi1>, vector<128x128xf32>
    %c0_9 = arith.constant 0 : index
    %c0_10 = arith.constant 0 : index
    %14 = vector.load %arg5[%c0_9, %c0_10] : memref<128x128xf32, #tpu.memory_space<vmem>>, vector<128x128xf32>
    tpu.vector_store %arg5[%c0_9, %c0_10], %13 {strides = array<i32>} : memref<128x128xf32, #tpu.memory_space<vmem>>, vector<128x128xf32>,
    return
  }
  func.func @transform_0(%arg0: i32) -> (i32, i32) {
    %c0_i32 = arith.constant 0 : i32
    %c0_i32_0 = arith.constant 0 : i32
    return %arg0, %c0_i32 : i32, i32
  }
  func.func @transform_1(%arg0: i32) -> (i32, i32) {
    %c0_i32 = arith.constant 0 : i32
    %c0_i32_0 = arith.constant 0 : i32
    %c0_i32_1 = arith.constant 0 : i32
    return %c0_i32, %c0_i32_0 : i32, i32
  }
  func.func @transform_2(%arg0: i32) -> (i32, i32) {
    %c0_i32 = arith.constant 0 : i32
    %c0_i32_0 = arith.constant 0 : i32
    %c0_i32_1 = arith.constant 0 : i32
    return %c0_i32, %c0_i32_0 : i32, i32
  }
  func.func @transform_3(%arg0: i32) -> (i32, i32) {
    %c0_i32 = arith.constant 0 : i32
    %c0_i32_0 = arith.constant 0 : i32
    %c0_i32_1 = arith.constant 0 : i32
    return %c0_i32, %c0_i32_0 : i32, i32
  }
  func.func @transform_4(%arg0: i32) -> (i32, i32) {
    %c0_i32 = arith.constant 0 : i32
    %c0_i32_0 = arith.constant 0 : i32
    return %arg0, %c0_i32 : i32, i32
  }
}

module attributes {stable_mosaic.version = 11 : i64} {
  func.func @conv_bn_lrelu_kernel(%arg0: i32, %arg1: memref<512x288xbf16, #tpu.memory_space<vmem>>, %arg2: memref<288x128xbf16, #tpu.memory_space<vmem>>, %arg3: memref<1x128xf32, #tpu.memory_space<vmem>>, %arg4: memref<1x128xf32, #tpu.memory_space<vmem>>, %arg5: memref<512x128xf32, #tpu.memory_space<vmem>>) attributes {dimension_semantics = [#tpu.dimension_semantics<parallel>], iteration_bounds = array<i64: 1>, scalar_prefetch = 0 : i64, scratch_operands = 0 : i64, tpu.core_type = #tpu.core_type<tc>, window_params = [{transform_indices = @transform_0, window_bounds = array<i64: 512, 288>}, {pipeline_mode = #tpu.pipeline_mode<synchronous>, transform_indices = @transform_1, window_bounds = array<i64: 288, 128>}, {pipeline_mode = #tpu.pipeline_mode<synchronous>, transform_indices = @transform_2, window_bounds = array<i64: 1, 128>}, {pipeline_mode = #tpu.pipeline_mode<synchronous>, transform_indices = @transform_3, window_bounds = array<i64: 1, 128>}, {transform_indices = @transform_4, window_bounds = array<i64: 512, 128>}]} {
    %c0 = arith.constant 0 : index
    %c0_0 = arith.constant 0 : index
    %0 = vector.load %arg1[%c0, %c0_0] : memref<512x288xbf16, #tpu.memory_space<vmem>>, vector<512x288xbf16>
    %c0_1 = arith.constant 0 : index
    %c0_2 = arith.constant 0 : index
    %1 = vector.load %arg2[%c0_1, %c0_2] : memref<288x128xbf16, #tpu.memory_space<vmem>>, vector<288x128xbf16>
    %cst = arith.constant dense<0.000000e+00> : vector<512x128xf32>
    %2 = tpu.matmul %0, %1, %cst {dimension_numbers = #tpu.dot_dimension_numbers<[1], [0], [0], [1], [0, 0, 1, 1], [], []>} : vector<512x288xbf16>, vector<288x128xbf16>, vector<512x128xf32> -> vector<512x128xf32>
    %c0_3 = arith.constant 0 : index
    %c0_4 = arith.constant 0 : index
    %3 = vector.load %arg3[%c0_3, %c0_4] : memref<1x128xf32, #tpu.memory_space<vmem>>, vector<1x128xf32>
    %4 = vector.broadcast %3 : vector<1x128xf32> to vector<512x128xf32>
    %5 = arith.mulf %2, %4 : vector<512x128xf32>
    %c0_5 = arith.constant 0 : index
    %c0_6 = arith.constant 0 : index
    %6 = vector.load %arg4[%c0_5, %c0_6] : memref<1x128xf32, #tpu.memory_space<vmem>>, vector<1x128xf32>
    %7 = vector.broadcast %6 : vector<1x128xf32> to vector<512x128xf32>
    %8 = arith.addf %5, %7 : vector<512x128xf32>
    %cst_7 = arith.constant 0.000000e+00 : f32
    %9 = vector.broadcast %cst_7 : f32 to vector<512x128xf32>
    %10 = arith.cmpf oge, %8, %9 : vector<512x128xf32>
    %cst_8 = arith.constant 0.00999999977 : f32
    %11 = vector.broadcast %cst_8 : f32 to vector<512x128xf32>
    %12 = arith.mulf %11, %8 : vector<512x128xf32>
    %13 = arith.select %10, %8, %12 : vector<512x128xi1>, vector<512x128xf32>
    %c0_9 = arith.constant 0 : index
    %c0_10 = arith.constant 0 : index
    %14 = vector.load %arg5[%c0_9, %c0_10] : memref<512x128xf32, #tpu.memory_space<vmem>>, vector<512x128xf32>
    tpu.vector_store %arg5[%c0_9, %c0_10], %13 {strides = array<i32>} : memref<512x128xf32, #tpu.memory_space<vmem>>, vector<512x128xf32>,
    return
  }
  func.func @transform_0(%arg0: i32) -> (i32, i32) {
    %c0_i32 = arith.constant 0 : i32
    %c0_i32_0 = arith.constant 0 : i32
    return %arg0, %c0_i32 : i32, i32
  }
  func.func @transform_1(%arg0: i32) -> (i32, i32) {
    %c0_i32 = arith.constant 0 : i32
    %c0_i32_0 = arith.constant 0 : i32
    %c0_i32_1 = arith.constant 0 : i32
    return %c0_i32, %c0_i32_0 : i32, i32
  }
  func.func @transform_2(%arg0: i32) -> (i32, i32) {
    %c0_i32 = arith.constant 0 : i32
    %c0_i32_0 = arith.constant 0 : i32
    %c0_i32_1 = arith.constant 0 : i32
    return %c0_i32, %c0_i32_0 : i32, i32
  }
  func.func @transform_3(%arg0: i32) -> (i32, i32) {
    %c0_i32 = arith.constant 0 : i32
    %c0_i32_0 = arith.constant 0 : i32
    %c0_i32_1 = arith.constant 0 : i32
    return %c0_i32, %c0_i32_0 : i32, i32
  }
  func.func @transform_4(%arg0: i32) -> (i32, i32) {
    %c0_i32 = arith.constant 0 : i32
    %c0_i32_0 = arith.constant 0 : i32
    return %arg0, %c0_i32 : i32, i32
  }
}

</mosaic_0001>

<llo_original>
// kernel: feat_extraction_forward.17
$region0: #{feat_extraction_forward.17}
  #allocation0 [shape = 'u32[]', space=smem, size = 0x4, offset = 0x4, fixed_abs, tag = 'smem constant byte address 0x4 - core index']
  #allocation1 [shape = 'u32[144,128]{1,0:T(1,128)}', space=vmem, size = 0x12000, scoped, tag = 'internal scratch']
  %s0 = inlined_call_operand.vmem [shape: bf16[128,288], index: 0, kind: input, shape index: {}]
  %s1 = inlined_call_operand.vmem [shape: bf16[288,128], index: 1, kind: input, shape index: {}]
  %s2 = inlined_call_operand.vmem [shape: f32[1,128], index: 2, kind: input, shape index: {}]
  %s3 = inlined_call_operand.vmem [shape: f32[1,128], index: 3, kind: input, shape index: {}]
  %s4 = inlined_call_operand.vmem [shape: f32[128,128], index: 4, kind: output, shape index: {}]
  %s5 = sld [smem:[#allocation0]]
  $region26: #{feat_extraction_forward.17} parent=0
    _
  %s7 = ssub.s32 1, %s5
  %s8 = scalar_select 0, %s7, %s5
  // Predicated region
  $region2: #{feat_extraction_forward.17} parent=0 // pred_check
    _
  $region3: #{feat_extraction_forward.17} parent=0 // pred_check_branch
    %10 = sbr.rel (0) target = $region5
  $region4: #{feat_extraction_forward.17} parent=0 // pred_region
    _
  $region5: #{feat_extraction_forward.17} parent=0 // pred_fallthru
    _
  // Predicated region
  $region6: #{feat_extraction_forward.17} parent=0 // pred_check
    _
  $region7: #{feat_extraction_forward.17} parent=0 // pred_check_branch
    %12 = sbr.rel (0) target = $region9
  $region8: #{feat_extraction_forward.17} parent=0 // pred_region
    _
  $region9: #{feat_extraction_forward.17} parent=0 // pred_fallthru
    _
  // Predicated region
  $region10: #{feat_extraction_forward.17} parent=0 // pred_check
    _
  $region11: #{feat_extraction_forward.17} parent=0 // pred_check_branch
    %14 = sbr.rel (0) target = $region13
  $region12: #{feat_extraction_forward.17} parent=0 // pred_region
    _
  $region13: #{feat_extraction_forward.17} parent=0 // pred_fallthru
    _
  // Predicated region
  $region14: #{feat_extraction_forward.17} parent=0 // pred_check
    _
  $region15: #{feat_extraction_forward.17} parent=0 // pred_check_branch
    %16 = sbr.rel (0) target = $region17
  $region16: #{feat_extraction_forward.17} parent=0 // pred_region
    _
  $region17: #{feat_extraction_forward.17} parent=0 // pred_fallthru
    _
  %v18 = vld [vmem:[%s0] sm:$0xff]
  %v19 = vld [vmem:[%s0 + $0x8] sm:$0xf]
  %v20 = vld [vmem:[%s0 + $0xc] sm:$0xff]
  %v21 = vld [vmem:[%s0 + $0x14] sm:$0xf]
  %v22 = vld [vmem:[%s0 + $0x18] sm:$0xff]
  %v23 = vld [vmem:[%s0 + $0x20] sm:$0xf]
  %v24 = vld [vmem:[%s0 + $0x24] sm:$0xff]
  %v25 = vld [vmem:[%s0 + $0x2c] sm:$0xf]
  %v26 = vld [vmem:[%s0 + $0x30] sm:$0xff]
  %v27 = vld [vmem:[%s0 + $0x38] sm:$0xf]
  %v28 = vld [vmem:[%s0 + $0x3c] sm:$0xff]
  %v29 = vld [vmem:[%s0 + $0x44] sm:$0xf]
  %v30 = vld [vmem:[%s0 + $0x48] sm:$0xff]
  %v31 = vld [vmem:[%s0 + $0x50] sm:$0xf]
  %v32 = vld [vmem:[%s0 + $0x54] sm:$0xff]
  %v33 = vld [vmem:[%s0 + $0x5c] sm:$0xf]
  %v34 = vld [vmem:[%s0 + $0x60] sm:$0xff]
  %v35 = vld [vmem:[%s0 + $0x68] sm:$0xf]
  %v36 = vld [vmem:[%s0 + $0x6c] sm:$0xff]
  %v37 = vld [vmem:[%s0 + $0x74] sm:$0xf]
  %v38 = vld [vmem:[%s0 + $0x78] sm:$0xff]
  %v39 = vld [vmem:[%s0 + $0x80] sm:$0xf]
  %v40 = vld [vmem:[%s0 + $0x84] sm:$0xff]
  %v41 = vld [vmem:[%s0 + $0x8c] sm:$0xf]
  %v42 = vld [vmem:[%s0 + $0x90] sm:$0xff]
  %v43 = vld [vmem:[%s0 + $0x98] sm:$0xf]
  %v44 = vld [vmem:[%s0 + $0x9c] sm:$0xff]
  %v45 = vld [vmem:[%s0 + $0xa4] sm:$0xf]
  %v46 = vld [vmem:[%s0 + $0xa8] sm:$0xff]
  %v47 = vld [vmem:[%s0 + $0xb0] sm:$0xf]
  %v48 = vld [vmem:[%s0 + $0xb4] sm:$0xff]
  %v49 = vld [vmem:[%s0 + $0xbc] sm:$0xf]
  %v50 = vld [vmem:[%s1] sm:$0xf]
  %v51 = vld [vmem:[%s1 + $0x4] sm:$0xf]
  %v52 = vld [vmem:[%s1 + $0x8] sm:$0xf]
  %v53 = vld [vmem:[%s1 + $0xc] sm:$0xf]
  %v54 = vld [vmem:[%s1 + $0x10] sm:$0xf]
  %v55 = vld [vmem:[%s1 + $0x14] sm:$0xf]
  %v56 = vld [vmem:[%s1 + $0x18] sm:$0xf]
  %v57 = vld [vmem:[%s1 + $0x1c] sm:$0xf]
  %v58 = vld [vmem:[%s1 + $0x20] sm:$0xf]
  %v59 = vld [vmem:[%s1 + $0x24] sm:$0xf]
  %v60 = vld [vmem:[%s1 + $0x28] sm:$0xf]
  %v61 = vld [vmem:[%s1 + $0x2c] sm:$0xf]
  %v62 = vld [vmem:[%s1 + $0x30] sm:$0xf]
  %v63 = vld [vmem:[%s1 + $0x34] sm:$0xf]
  %v64 = vld [vmem:[%s1 + $0x38] sm:$0xf]
  %v65 = vld [vmem:[%s1 + $0x3c] sm:$0xf]
  %v66 = vld [vmem:[%s1 + $0x40] sm:$0xf]
  %v67 = vld [vmem:[%s1 + $0x44] sm:$0xf]
  %v68 = vld [vmem:[%s1 + $0x48] sm:$0xf]
  %v69 = vld [vmem:[%s1 + $0x4c] sm:$0xf]
  %v70 = vld [vmem:[%s1 + $0x50] sm:$0xf]
  %v71 = vld [vmem:[%s1 + $0x54] sm:$0xf]
  %v72 = vld [vmem:[%s1 + $0x58] sm:$0xf]
  %v73 = vld [vmem:[%s1 + $0x5c] sm:$0xf]
  %v74 = vld [vmem:[%s1 + $0x60] sm:$0xf]
  %v75 = vld [vmem:[%s1 + $0x64] sm:$0xf]
  %v76 = vld [vmem:[%s1 + $0x68] sm:$0xf]
  %v77 = vld [vmem:[%s1 + $0x6c] sm:$0xf]
  %v78 = vld [vmem:[%s1 + $0x70] sm:$0xf]
  %v79 = vld [vmem:[%s1 + $0x74] sm:$0xf]
  %v80 = vld [vmem:[%s1 + $0x78] sm:$0xf]
  %v81 = vld [vmem:[%s1 + $0x7c] sm:$0xf]
  %v82 = vld [vmem:[%s1 + $0x80] sm:$0xf]
  %v83 = vld [vmem:[%s1 + $0x84] sm:$0xf]
  %v84 = vld [vmem:[%s1 + $0x88] sm:$0xf]
  %v85 = vld [vmem:[%s1 + $0x8c] sm:$0xf]
  %v118 = vunpack.c.l.b16 %v18
  %v119 = vunpack.c.h.b16 %v18
  %v120 = vunpack.c.l.b16 %v19
  %v121 = vunpack.c.l.b16 %v20
  %v122 = vunpack.c.h.b16 %v20
  %v123 = vunpack.c.l.b16 %v21
  %v124 = vunpack.c.l.b16 %v22
  %v125 = vunpack.c.h.b16 %v22
  %v126 = vunpack.c.l.b16 %v23
  %v127 = vunpack.c.l.b16 %v24
  %v128 = vunpack.c.h.b16 %v24
  %v129 = vunpack.c.l.b16 %v25
  %v130 = vunpack.c.l.b16 %v26
  %v131 = vunpack.c.h.b16 %v26
  %v132 = vunpack.c.l.b16 %v27
  %v133 = vunpack.c.l.b16 %v28
  %v134 = vunpack.c.h.b16 %v28
  %v135 = vunpack.c.l.b16 %v29
  %v136 = vunpack.c.l.b16 %v30
  %v137 = vunpack.c.h.b16 %v30
  %v138 = vunpack.c.l.b16 %v31
  %v139 = vunpack.c.l.b16 %v32
  %v140 = vunpack.c.h.b16 %v32
  %v141 = vunpack.c.l.b16 %v33
  %v142 = vunpack.c.l.b16 %v34
  %v143 = vunpack.c.h.b16 %v34
  %v144 = vunpack.c.l.b16 %v35
  %v145 = vunpack.c.l.b16 %v36
  %v146 = vunpack.c.h.b16 %v36
  %v147 = vunpack.c.l.b16 %v37
  %v148 = vunpack.c.l.b16 %v38
  %v149 = vunpack.c.h.b16 %v38
  %v150 = vunpack.c.l.b16 %v39
  %v151 = vunpack.c.l.b16 %v40
  %v152 = vunpack.c.h.b16 %v40
  %v153 = vunpack.c.l.b16 %v41
  %v154 = vunpack.c.l.b16 %v42
  %v155 = vunpack.c.h.b16 %v42
  %v156 = vunpack.c.l.b16 %v43
  %v157 = vunpack.c.l.b16 %v44
  %v158 = vunpack.c.h.b16 %v44
  %v159 = vunpack.c.l.b16 %v45
  %v160 = vunpack.c.l.b16 %v46
  %v161 = vunpack.c.h.b16 %v46
  %v162 = vunpack.c.l.b16 %v47
  %v163 = vunpack.c.l.b16 %v48
  %v164 = vunpack.c.h.b16 %v48
  %v165 = vunpack.c.l.b16 %v49
  %v166 = vpack.c.b16 %v121, %v118
  %v167 = vpack.c.b16 %v122, %v119
  %v168 = vpack.c.b16 %v123, %v120
  %v169 = vpack.c.b16 %v127, %v124
  %v170 = vpack.c.b16 %v128, %v125
  %v171 = vpack.c.b16 %v129, %v126
  %v172 = vpack.c.b16 %v133, %v130
  %v173 = vpack.c.b16 %v134, %v131
  %v174 = vpack.c.b16 %v135, %v132
  %v175 = vpack.c.b16 %v139, %v136
  %v176 = vpack.c.b16 %v140, %v137
  %v177 = vpack.c.b16 %v141, %v138
  %v178 = vpack.c.b16 %v145, %v142
  %v179 = vpack.c.b16 %v146, %v143
  %v180 = vpack.c.b16 %v147, %v144
  %v181 = vpack.c.b16 %v151, %v148
  %v182 = vpack.c.b16 %v152, %v149
  %v183 = vpack.c.b16 %v153, %v150
  %v184 = vpack.c.b16 %v157, %v154
  %v185 = vpack.c.b16 %v158, %v155
  %v186 = vpack.c.b16 %v159, %v156
  %v187 = vpack.c.b16 %v163, %v160
  %v188 = vpack.c.b16 %v164, %v161
  %v189 = vpack.c.b16 %v165, %v162
  %v242 = vunpack.c.l.b16 %v50
  %v243 = vunpack.c.l.b16 %v51
  %v244 = vunpack.c.l.b16 %v52
  %v245 = vunpack.c.l.b16 %v53
  %v246 = vunpack.c.l.b16 %v54
  %v247 = vunpack.c.l.b16 %v55
  %v248 = vunpack.c.l.b16 %v56
  %v249 = vunpack.c.l.b16 %v57
  %v250 = vunpack.c.l.b16 %v58
  %v251 = vunpack.c.l.b16 %v59
  %v252 = vunpack.c.l.b16 %v60
  %v253 = vunpack.c.l.b16 %v61
  %v254 = vunpack.c.l.b16 %v62
  %v255 = vunpack.c.l.b16 %v63
  %v256 = vunpack.c.l.b16 %v64
  %v257 = vunpack.c.l.b16 %v65
  %v258 = vunpack.c.l.b16 %v66
  %v259 = vunpack.c.l.b16 %v67
  %v260 = vunpack.c.l.b16 %v68
  %v261 = vunpack.c.l.b16 %v69
  %v262 = vunpack.c.l.b16 %v70
  %v263 = vunpack.c.l.b16 %v71
  %v264 = vunpack.c.l.b16 %v72
  %v265 = vunpack.c.l.b16 %v73
  %v266 = vunpack.c.l.b16 %v74
  %v267 = vunpack.c.l.b16 %v75
  %v268 = vunpack.c.l.b16 %v76
  %v269 = vunpack.c.l.b16 %v77
  %v270 = vunpack.c.l.b16 %v78
  %v271 = vunpack.c.l.b16 %v79
  %v272 = vunpack.c.l.b16 %v80
  %v273 = vunpack.c.l.b16 %v81
  %v274 = vunpack.c.l.b16 %v82
  %v275 = vunpack.c.l.b16 %v83
  %v276 = vunpack.c.l.b16 %v84
  %v277 = vunpack.c.l.b16 %v85
  %v278 = vpack.c.b16 %v243, %v242
  %v279 = vpack.c.b16 %v245, %v244
  %v280 = vpack.c.b16 %v247, %v246
  %v281 = vpack.c.b16 %v249, %v248
  %v282 = vpack.c.b16 %v251, %v250
  %v283 = vpack.c.b16 %v253, %v252
  %v284 = vpack.c.b16 %v255, %v254
  %v285 = vpack.c.b16 %v257, %v256
  %v286 = vpack.c.b16 %v259, %v258
  %v287 = vpack.c.b16 %v261, %v260
  %v288 = vpack.c.b16 %v263, %v262
  %v289 = vpack.c.b16 %v265, %v264
  %v290 = vpack.c.b16 %v267, %v266
  %v291 = vpack.c.b16 %v269, %v268
  %v292 = vpack.c.b16 %v271, %v270
  %v293 = vpack.c.b16 %v273, %v272
  %v294 = vpack.c.b16 %v275, %v274
  %v295 = vpack.c.b16 %v277, %v276
  %vm314 = vcmask 261120
  %v316 = vsel %vm314, %v168, 0
  %v319 = vsel %vm314, %v171, 0
  %v322 = vsel %vm314, %v174, 0
  %v325 = vsel %vm314, %v177, 0
  %v328 = vsel %vm314, %v180, 0
  %v331 = vsel %vm314, %v183, 0
  %v334 = vsel %vm314, %v186, 0
  %v337 = vsel %vm314, %v189, 0
  %339 = vmatprep.subr.bf16.mxu0 0
  %340 = vmatpush1.bf16.msra.mxu0 %v278
  %341 = vmatprep.subr.bf16.mxu0 0
  %342 = vmatpush1.bf16.msra.mxu0 %v279
  %343 = vmatprep.subr.bf16.mxu0 0
  %344 = vmatpush1.bf16.msra.mxu0 %v280
  %345 = vmatprep.subr.bf16.mxu0 0
  %346 = vmatpush1.bf16.msra.mxu0 %v281
  %347 = vmatprep.subr.bf16.mxu0 0
  %348 = vmatpush1.bf16.msra.mxu0 %v282
  %349 = vmatprep.subr.bf16.mxu0 0
  %350 = vmatpush1.bf16.msra.mxu0 %v283
  %351 = vmatprep.subr.bf16.mxu0 0
  %352 = vmatpush1.bf16.msra.mxu0 %v284
  %353 = vmatprep.subr.bf16.mxu0 0
  %354 = vmatpush1.bf16.msra.mxu0 %v285
  %355 = vmatprep.subr.bf16.mxu0 0
  %356 = vmatpush1.bf16.msra.mxu0 %v286
  %357 = vmatprep.subr.bf16.mxu0 0
  %358 = vmatpush1.bf16.msra.mxu0 %v287
  %359 = vmatprep.subr.bf16.mxu0 0
  %360 = vmatpush1.bf16.msra.mxu0 %v288
  %361 = vmatprep.subr.bf16.mxu0 0
  %362 = vmatpush1.bf16.msra.mxu0 %v289
  %363 = vmatprep.subr.bf16.mxu0 0
  %364 = vmatpush1.bf16.msra.mxu0 %v290
  %365 = vmatprep.subr.bf16.mxu0 0
  %366 = vmatpush1.bf16.msra.mxu0 %v291
  %367 = vmatprep.subr.bf16.mxu0 0
  %368 = vmatpush1.bf16.msra.mxu0 %v292
  %369 = vmatprep.subr.bf16.mxu0 0
  %370 = vmatpush1.bf16.msra.mxu0 %v293
  %371 = vmatprep.mubr.bf16.mxu0 %v167
  %372 = vmatmul.mubr.bf16.gmra.mrb[0].mxu0 %v166
  %v373 = vpop.f32.mrb[0].mxu0
  %v374 = vadd.f32 0.0, %v373
  %v375 = vpop.f32.mrb[0].mxu0
  %v376 = vpop.f32.mrb[0].mxu0
  %v377 = vadd.f32 0.0, %v376
  %v378 = vpop.f32.mrb[0].mxu0
  %379 = vmatprep.mubr.bf16.mxu0 %v170
  %380 = vmatmul.mubr.bf16.gmra.mrb[0].mxu0 %v169
  %v381 = vpop.f32.mrb[0].mxu0
  %v382 = vadd.f32 0.0, %v381
  %v383 = vpop.f32.mrb[0].mxu0
  %v384 = vpop.f32.mrb[0].mxu0
  %v385 = vadd.f32 0.0, %v384
  %v386 = vpop.f32.mrb[0].mxu0
  %387 = vmatprep.mubr.bf16.mxu0 %v173
  %388 = vmatmul.mubr.bf16.gmra.mrb[0].mxu0 %v172
  %v389 = vpop.f32.mrb[0].mxu0
  %v390 = vadd.f32 0.0, %v389
  %v391 = vpop.f32.mrb[0].mxu0
  %v392 = vpop.f32.mrb[0].mxu0
  %v393 = vadd.f32 0.0, %v392
  %v394 = vpop.f32.mrb[0].mxu0
  %395 = vmatprep.mubr.bf16.mxu0 %v176
  %396 = vmatmul.mubr.bf16.gmra.mrb[0].mxu0 %v175
  %v397 = vpop.f32.mrb[0].mxu0
  %v398 = vadd.f32 0.0, %v397
  %v399 = vpop.f32.mrb[0].mxu0
  %v400 = vpop.f32.mrb[0].mxu0
  %v401 = vadd.f32 0.0, %v400
  %v402 = vpop.f32.mrb[0].mxu0
  %403 = vmatprep.mubr.bf16.mxu0 %v179
  %404 = vmatmul.mubr.bf16.gmra.mrb[0].mxu0 %v178
  %v405 = vpop.f32.mrb[0].mxu0
  %v406 = vadd.f32 0.0, %v405
  %v407 = vpop.f32.mrb[0].mxu0
  %v408 = vpop.f32.mrb[0].mxu0
  %v409 = vadd.f32 0.0, %v408
  %v410 = vpop.f32.mrb[0].mxu0
  %411 = vmatprep.mubr.bf16.mxu0 %v182
  %412 = vmatmul.mubr.bf16.gmra.mrb[0].mxu0 %v181
  %v413 = vpop.f32.mrb[0].mxu0
  %v414 = vadd.f32 0.0, %v413
  %v415 = vpop.f32.mrb[0].mxu0
  %v416 = vpop.f32.mrb[0].mxu0
  %v417 = vadd.f32 0.0, %v416
  %v418 = vpop.f32.mrb[0].mxu0
  %419 = vmatprep.mubr.bf16.mxu0 %v185
  %420 = vmatmul.mubr.bf16.gmra.mrb[0].mxu0 %v184
  %v421 = vpop.f32.mrb[0].mxu0
  %v422 = vadd.f32 0.0, %v421
  %v423 = vpop.f32.mrb[0].mxu0
  %v424 = vpop.f32.mrb[0].mxu0
  %v425 = vadd.f32 0.0, %v424
  %v426 = vpop.f32.mrb[0].mxu0
  %427 = vmatprep.mubr.bf16.mxu0 %v188
  %428 = vmatmul.mubr.bf16.gmra.mrb[0].mxu0 %v187
  %v429 = vpop.f32.mrb[0].mxu0
  %v430 = vadd.f32 0.0, %v429
  %v431 = vpop.f32.mrb[0].mxu0
  %v432 = vpop.f32.mrb[0].mxu0
  %v433 = vadd.f32 0.0, %v432
  %v434 = vpop.f32.mrb[0].mxu0
  %435 = vdwg.mxu0
  %436 = vmatprep.subr.bf16.mxu0 0
  %437 = vmatpush1.bf16.msra.mxu0 %v294
  %438 = vmatprep.subr.bf16.mxu0 0
  %439 = vmatpush1.bf16.msra.mxu0 %v295
  %440 = vmatprep.subr.bf16.mxu0 0
  %441 = vmatpush1.bf16.msra.mxu0 0
  %442 = vmatprep.subr.bf16.mxu0 0
  %443 = vmatpush1.bf16.msra.mxu0 0
  %444 = vmatprep.subr.bf16.mxu0 0
  %445 = vmatpush1.bf16.msra.mxu0 0
  %446 = vmatprep.subr.bf16.mxu0 0
  %447 = vmatpush1.bf16.msra.mxu0 0
  %448 = vmatprep.subr.bf16.mxu0 0
  %449 = vmatpush1.bf16.msra.mxu0 0
  %450 = vmatprep.subr.bf16.mxu0 0
  %451 = vmatpush1.bf16.msra.mxu0 0
  %452 = vmatprep.subr.bf16.mxu0 0
  %453 = vmatpush1.bf16.msra.mxu0 0
  %454 = vmatprep.subr.bf16.mxu0 0
  %455 = vmatpush1.bf16.msra.mxu0 0
  %456 = vmatprep.subr.bf16.mxu0 0
  %457 = vmatpush1.bf16.msra.mxu0 0
  %458 = vmatprep.subr.bf16.mxu0 0
  %459 = vmatpush1.bf16.msra.mxu0 0
  %460 = vmatprep.subr.bf16.mxu0 0
  %461 = vmatpush1.bf16.msra.mxu0 0
  %462 = vmatprep.subr.bf16.mxu0 0
  %463 = vmatpush1.bf16.msra.mxu0 0
  %464 = vmatprep.subr.bf16.mxu0 0
  %465 = vmatpush1.bf16.msra.mxu0 0
  %466 = vmatprep.subr.bf16.mxu0 0
  %467 = vmatpush1.bf16.msra.mxu0 0
  %468 = vmatprep.mubr.bf16.mxu0 0
  %469 = vmatmul.mubr.bf16.gmra.mrb[0].mxu0 %v316
  %v470 = vpop.f32.mrb[0].mxu0
  %v471 = vadd.f32 %v374, %v470
  %v472 = vpop.f32.mrb[0].mxu0
  %v473 = vpop.f32.mrb[0].mxu0
  %v474 = vadd.f32 %v377, %v473
  %v475 = vpop.f32.mrb[0].mxu0
  %476 = vmatprep.mubr.bf16.mxu0 0
  %477 = vmatmul.mubr.bf16.gmra.mrb[0].mxu0 %v319
  %v478 = vpop.f32.mrb[0].mxu0
  %v479 = vadd.f32 %v382, %v478
  %v480 = vpop.f32.mrb[0].mxu0
  %v481 = vpop.f32.mrb[0].mxu0
  %v482 = vadd.f32 %v385, %v481
  %v483 = vpop.f32.mrb[0].mxu0
  %484 = vmatprep.mubr.bf16.mxu0 0
  %485 = vmatmul.mubr.bf16.gmra.mrb[0].mxu0 %v322
  %v486 = vpop.f32.mrb[0].mxu0
  %v487 = vadd.f32 %v390, %v486
  %v488 = vpop.f32.mrb[0].mxu0
  %v489 = vpop.f32.mrb[0].mxu0
  %v490 = vadd.f32 %v393, %v489
  %v491 = vpop.f32.mrb[0].mxu0
  %492 = vmatprep.mubr.bf16.mxu0 0
  %493 = vmatmul.mubr.bf16.gmra.mrb[0].mxu0 %v325
  %v494 = vpop.f32.mrb[0].mxu0
  %v495 = vadd.f32 %v398, %v494
  %v496 = vpop.f32.mrb[0].mxu0
  %v497 = vpop.f32.mrb[0].mxu0
  %v498 = vadd.f32 %v401, %v497
  %v499 = vpop.f32.mrb[0].mxu0
  %500 = vmatprep.mubr.bf16.mxu0 0
  %501 = vmatmul.mubr.bf16.gmra.mrb[0].mxu0 %v328
  %v502 = vpop.f32.mrb[0].mxu0
  %v503 = vadd.f32 %v406, %v502
  %v504 = vpop.f32.mrb[0].mxu0
  %v505 = vpop.f32.mrb[0].mxu0
  %v506 = vadd.f32 %v409, %v505
  %v507 = vpop.f32.mrb[0].mxu0
  %508 = vmatprep.mubr.bf16.mxu0 0
  %509 = vmatmul.mubr.bf16.gmra.mrb[0].mxu0 %v331
  %v510 = vpop.f32.mrb[0].mxu0
  %v511 = vadd.f32 %v414, %v510
  %v512 = vpop.f32.mrb[0].mxu0
  %v513 = vpop.f32.mrb[0].mxu0
  %v514 = vadd.f32 %v417, %v513
  %v515 = vpop.f32.mrb[0].mxu0
  %516 = vmatprep.mubr.bf16.mxu0 0
  %517 = vmatmul.mubr.bf16.gmra.mrb[0].mxu0 %v334
  %v518 = vpop.f32.mrb[0].mxu0
  %v519 = vadd.f32 %v422, %v518
  %v520 = vpop.f32.mrb[0].mxu0
  %v521 = vpop.f32.mrb[0].mxu0
  %v522 = vadd.f32 %v425, %v521
  %v523 = vpop.f32.mrb[0].mxu0
  %524 = vmatprep.mubr.bf16.mxu0 0
  %525 = vmatmul.mubr.bf16.gmra.mrb[0].mxu0 %v337
  %v526 = vpop.f32.mrb[0].mxu0
  %v527 = vadd.f32 %v430, %v526
  %v528 = vpop.f32.mrb[0].mxu0
  %v529 = vpop.f32.mrb[0].mxu0
  %v530 = vadd.f32 %v433, %v529
  %v531 = vpop.f32.mrb[0].mxu0
  %532 = vdwg.mxu0
  %v533 = vld [vmem:[%s2] sm:$0x1]
  %v535 = vlaneseq
  %v536 = vshrl.u32 %v535, 7
  %v537 = vsub.s32 0, %v536
  %v538 = vrot.slane %v533, %v537
  %v540 = vmul.f32 %v471, %v538
  %v541 = vmul.f32 %v474, %v538
  %v542 = vmul.f32 %v479, %v538
  %v543 = vmul.f32 %v482, %v538
  %v544 = vmul.f32 %v487, %v538
  %v545 = vmul.f32 %v490, %v538
  %v546 = vmul.f32 %v495, %v538
  %v547 = vmul.f32 %v498, %v538
  %v548 = vmul.f32 %v503, %v538
  %v549 = vmul.f32 %v506, %v538
  %v550 = vmul.f32 %v511, %v538
  %v551 = vmul.f32 %v514, %v538
  %v552 = vmul.f32 %v519, %v538
  %v553 = vmul.f32 %v522, %v538
  %v554 = vmul.f32 %v527, %v538
  %v555 = vmul.f32 %v530, %v538
  %v556 = vld [vmem:[%s3] sm:$0x1]
  %v558 = vlaneseq
  %v559 = vshrl.u32 %v558, 7
  %v560 = vsub.s32 0, %v559
  %v561 = vrot.slane %v556, %v560
  %v563 = vadd.f32 %v540, %v561
  %v564 = vadd.f32 %v541, %v561
  %v565 = vadd.f32 %v542, %v561
  %v566 = vadd.f32 %v543, %v561
  %v567 = vadd.f32 %v544, %v561
  %v568 = vadd.f32 %v545, %v561
  %v569 = vadd.f32 %v546, %v561
  %v570 = vadd.f32 %v547, %v561
  %v571 = vadd.f32 %v548, %v561
  %v572 = vadd.f32 %v549, %v561
  %v573 = vadd.f32 %v550, %v561
  %v574 = vadd.f32 %v551, %v561
  %v575 = vadd.f32 %v552, %v561
  %v576 = vadd.f32 %v553, %v561
  %v577 = vadd.f32 %v554, %v561
  %v578 = vadd.f32 %v555, %v561
  %vm579 = vcmp.ge.f32.partialorder %v563, 0.0
  %vm580 = vcmp.ge.f32.partialorder %v564, 0.0
  %vm581 = vcmp.ge.f32.partialorder %v565, 0.0
  %vm582 = vcmp.ge.f32.partialorder %v566, 0.0
  %vm583 = vcmp.ge.f32.partialorder %v567, 0.0
  %vm584 = vcmp.ge.f32.partialorder %v568, 0.0
  %vm585 = vcmp.ge.f32.partialorder %v569, 0.0
  %vm586 = vcmp.ge.f32.partialorder %v570, 0.0
  %vm587 = vcmp.ge.f32.partialorder %v571, 0.0
  %vm588 = vcmp.ge.f32.partialorder %v572, 0.0
  %vm589 = vcmp.ge.f32.partialorder %v573, 0.0
  %vm590 = vcmp.ge.f32.partialorder %v574, 0.0
  %vm591 = vcmp.ge.f32.partialorder %v575, 0.0
  %vm592 = vcmp.ge.f32.partialorder %v576, 0.0
  %vm593 = vcmp.ge.f32.partialorder %v577, 0.0
  %vm594 = vcmp.ge.f32.partialorder %v578, 0.0
  %v595 = vmul.f32 %v563, 0.01
  %v596 = vmul.f32 %v564, 0.01
  %v597 = vmul.f32 %v565, 0.01
  %v598 = vmul.f32 %v566, 0.01
  %v599 = vmul.f32 %v567, 0.01
  %v600 = vmul.f32 %v568, 0.01
  %v601 = vmul.f32 %v569, 0.01
  %v602 = vmul.f32 %v570, 0.01
  %v603 = vmul.f32 %v571, 0.01
  %v604 = vmul.f32 %v572, 0.01
  %v605 = vmul.f32 %v573, 0.01
  %v606 = vmul.f32 %v574, 0.01
  %v607 = vmul.f32 %v575, 0.01
  %v608 = vmul.f32 %v576, 0.01
  %v609 = vmul.f32 %v577, 0.01
  %v610 = vmul.f32 %v578, 0.01
  %v611 = vsel %vm579, %v563, %v595
  %v612 = vsel %vm580, %v564, %v596
  %v613 = vsel %vm581, %v565, %v597
  %v614 = vsel %vm582, %v566, %v598
  %v615 = vsel %vm583, %v567, %v599
  %v616 = vsel %vm584, %v568, %v600
  %v617 = vsel %vm585, %v569, %v601
  %v618 = vsel %vm586, %v570, %v602
  %v619 = vsel %vm587, %v571, %v603
  %v620 = vsel %vm588, %v572, %v604
  %v621 = vsel %vm589, %v573, %v605
  %v622 = vsel %vm590, %v574, %v606
  %v623 = vsel %vm591, %v575, %v607
  %v624 = vsel %vm592, %v576, %v608
  %v625 = vsel %vm593, %v577, %v609
  %v626 = vsel %vm594, %v578, %v610
  %627 = vst [vmem:[%s4] sm:$0xff] %v611
  %628 = vst [vmem:[%s4 + $0x8] sm:$0xff] %v612
  %629 = vst [vmem:[%s4 + $0x10] sm:$0xff] %v613
  %630 = vst [vmem:[%s4 + $0x18] sm:$0xff] %v614
  %631 = vst [vmem:[%s4 + $0x20] sm:$0xff] %v615
  %632 = vst [vmem:[%s4 + $0x28] sm:$0xff] %v616
  %633 = vst [vmem:[%s4 + $0x30] sm:$0xff] %v617
  %634 = vst [vmem:[%s4 + $0x38] sm:$0xff] %v618
  %635 = vst [vmem:[%s4 + $0x40] sm:$0xff] %v619
  %636 = vst [vmem:[%s4 + $0x48] sm:$0xff] %v620
  %637 = vst [vmem:[%s4 + $0x50] sm:$0xff] %v621
  %638 = vst [vmem:[%s4 + $0x58] sm:$0xff] %v622
  %639 = vst [vmem:[%s4 + $0x60] sm:$0xff] %v623
  %640 = vst [vmem:[%s4 + $0x68] sm:$0xff] %v624
  %641 = vst [vmem:[%s4 + $0x70] sm:$0xff] %v625
  %642 = vst [vmem:[%s4 + $0x78] sm:$0xff] %v626
  // Predicated region
  $region18: #{feat_extraction_forward.17} parent=0 // pred_check
    _
  $region19: #{feat_extraction_forward.17} parent=0 // pred_check_branch
    %644 = sbr.rel (0) target = $region21
  $region20: #{feat_extraction_forward.17} parent=0 // pred_region
    _
  $region21: #{feat_extraction_forward.17} parent=0 // pred_fallthru
    _
  // Predicated region
  $region22: #{feat_extraction_forward.17} parent=0 // pred_check
    _
  $region23: #{feat_extraction_forward.17} parent=0 // pred_check_branch
    %646 = sbr.rel (0) target = $region25
  $region24: #{feat_extraction_forward.17} parent=0 // pred_region
    _
  $region25: #{feat_extraction_forward.17} parent=0 // pred_fallthru
    _

// kernel: feat_extraction_forward.16
$region0: #{feat_extraction_forward.16}
  #allocation0 [shape = 'u32[]', space=smem, size = 0x4, offset = 0x4, fixed_abs, tag = 'smem constant byte address 0x4 - core index']
  #allocation1 [shape = 'u32[144,128]{1,0:T(1,128)}', space=vmem, size = 0x12000, scoped, tag = 'internal scratch']
  %s0 = inlined_call_operand.vmem [shape: bf16[512,27], index: 0, kind: input, shape index: {}]
  %s1 = inlined_call_operand.vmem [shape: bf16[27,128], index: 1, kind: input, shape index: {}]
  %s2 = inlined_call_operand.vmem [shape: f32[1,128], index: 2, kind: input, shape index: {}]
  %s3 = inlined_call_operand.vmem [shape: f32[1,128], index: 3, kind: input, shape index: {}]
  %s4 = inlined_call_operand.vmem [shape: f32[512,128], index: 4, kind: output, shape index: {}]
  %s5 = sld [smem:[#allocation0]]
  $region26: #{feat_extraction_forward.16} parent=0
    _
  %s7 = ssub.s32 1, %s5
  %s8 = scalar_select 0, %s7, %s5
  // Predicated region
  $region2: #{feat_extraction_forward.16} parent=0 // pred_check
    _
  $region3: #{feat_extraction_forward.16} parent=0 // pred_check_branch
    %10 = sbr.rel (0) target = $region5
  $region4: #{feat_extraction_forward.16} parent=0 // pred_region
    _
  $region5: #{feat_extraction_forward.16} parent=0 // pred_fallthru
    _
  // Predicated region
  $region6: #{feat_extraction_forward.16} parent=0 // pred_check
    _
  $region7: #{feat_extraction_forward.16} parent=0 // pred_check_branch
    %12 = sbr.rel (0) target = $region9
  $region8: #{feat_extraction_forward.16} parent=0 // pred_region
    _
  $region9: #{feat_extraction_forward.16} parent=0 // pred_fallthru
    _
  // Predicated region
  $region10: #{feat_extraction_forward.16} parent=0 // pred_check
    _
  $region11: #{feat_extraction_forward.16} parent=0 // pred_check_branch
    %14 = sbr.rel (0) target = $region13
  $region12: #{feat_extraction_forward.16} parent=0 // pred_region
    _
  $region13: #{feat_extraction_forward.16} parent=0 // pred_fallthru
    _
  // Predicated region
  $region14: #{feat_extraction_forward.16} parent=0 // pred_check
    _
  $region15: #{feat_extraction_forward.16} parent=0 // pred_check_branch
    %16 = sbr.rel (0) target = $region17
  $region16: #{feat_extraction_forward.16} parent=0 // pred_region
    _
  $region17: #{feat_extraction_forward.16} parent=0 // pred_fallthru
    _
  %v18 = vld [vmem:[%s0] sm:$0xf]
  %v19 = vld [vmem:[%s0 + $0x4] sm:$0xf]
  %v20 = vld [vmem:[%s0 + $0x8] sm:$0xf]
  %v21 = vld [vmem:[%s0 + $0xc] sm:$0xf]
  %v22 = vld [vmem:[%s0 + $0x10] sm:$0xf]
  %v23 = vld [vmem:[%s0 + $0x14] sm:$0xf]
  %v24 = vld [vmem:[%s0 + $0x18] sm:$0xf]
  %v25 = vld [vmem:[%s0 + $0x1c] sm:$0xf]
  %v26 = vld [vmem:[%s0 + $0x20] sm:$0xf]
  %v27 = vld [vmem:[%s0 + $0x24] sm:$0xf]
  %v28 = vld [vmem:[%s0 + $0x28] sm:$0xf]
  %v29 = vld [vmem:[%s0 + $0x2c] sm:$0xf]
  %v30 = vld [vmem:[%s0 + $0x30] sm:$0xf]
  %v31 = vld [vmem:[%s0 + $0x34] sm:$0xf]
  %v32 = vld [vmem:[%s0 + $0x38] sm:$0xf]
  %v33 = vld [vmem:[%s0 + $0x3c] sm:$0xf]
  %v34 = vld [vmem:[%s0 + $0x40] sm:$0xf]
  %v35 = vld [vmem:[%s0 + $0x44] sm:$0xf]
  %v36 = vld [vmem:[%s0 + $0x48] sm:$0xf]
  %v37 = vld [vmem:[%s0 + $0x4c] sm:$0xf]
  %v38 = vld [vmem:[%s0 + $0x50] sm:$0xf]
  %v39 = vld [vmem:[%s0 + $0x54] sm:$0xf]
  %v40 = vld [vmem:[%s0 + $0x58] sm:$0xf]
  %v41 = vld [vmem:[%s0 + $0x5c] sm:$0xf]
  %v42 = vld [vmem:[%s0 + $0x60] sm:$0xf]
  %v43 = vld [vmem:[%s0 + $0x64] sm:$0xf]
  %v44 = vld [vmem:[%s0 + $0x68] sm:$0xf]
  %v45 = vld [vmem:[%s0 + $0x6c] sm:$0xf]
  %v46 = vld [vmem:[%s0 + $0x70] sm:$0xf]
  %v47 = vld [vmem:[%s0 + $0x74] sm:$0xf]
  %v48 = vld [vmem:[%s0 + $0x78] sm:$0xf]
  %v49 = vld [vmem:[%s0 + $0x7c] sm:$0xf]
  %v50 = vld [vmem:[%s0 + $0x80] sm:$0xf]
  %v51 = vld [vmem:[%s0 + $0x84] sm:$0xf]
  %v52 = vld [vmem:[%s0 + $0x88] sm:$0xf]
  %v53 = vld [vmem:[%s0 + $0x8c] sm:$0xf]
  %v54 = vld [vmem:[%s0 + $0x90] sm:$0xf]
  %v55 = vld [vmem:[%s0 + $0x94] sm:$0xf]
  %v56 = vld [vmem:[%s0 + $0x98] sm:$0xf]
  %v57 = vld [vmem:[%s0 + $0x9c] sm:$0xf]
  %v58 = vld [vmem:[%s0 + $0xa0] sm:$0xf]
  %v59 = vld [vmem:[%s0 + $0xa4] sm:$0xf]
  %v60 = vld [vmem:[%s0 + $0xa8] sm:$0xf]
  %v61 = vld [vmem:[%s0 + $0xac] sm:$0xf]
  %v62 = vld [vmem:[%s0 + $0xb0] sm:$0xf]
  %v63 = vld [vmem:[%s0 + $0xb4] sm:$0xf]
  %v64 = vld [vmem:[%s0 + $0xb8] sm:$0xf]
  %v65 = vld [vmem:[%s0 + $0xbc] sm:$0xf]
  %v66 = vld [vmem:[%s0 + $0xc0] sm:$0xf]
  %v67 = vld [vmem:[%s0 + $0xc4] sm:$0xf]
  %v68 = vld [vmem:[%s0 + $0xc8] sm:$0xf]
  %v69 = vld [vmem:[%s0 + $0xcc] sm:$0xf]
  %v70 = vld [vmem:[%s0 + $0xd0] sm:$0xf]
  %v71 = vld [vmem:[%s0 + $0xd4] sm:$0xf]
  %v72 = vld [vmem:[%s0 + $0xd8] sm:$0xf]
  %v73 = vld [vmem:[%s0 + $0xdc] sm:$0xf]
  %v74 = vld [vmem:[%s0 + $0xe0] sm:$0xf]
  %v75 = vld [vmem:[%s0 + $0xe4] sm:$0xf]
  %v76 = vld [vmem:[%s0 + $0xe8] sm:$0xf]
  %v77 = vld [vmem:[%s0 + $0xec] sm:$0xf]
  %v78 = vld [vmem:[%s0 + $0xf0] sm:$0xf]
  %v79 = vld [vmem:[%s0 + $0xf4] sm:$0xf]
  %v80 = vld [vmem:[%s0 + $0xf8] sm:$0xf]
  %v81 = vld [vmem:[%s0 + $0xfc] sm:$0xf]
  %v82 = vld [vmem:[%s1] sm:$0xf]
  %v83 = vld [vmem:[%s1 + $0x4] sm:$0xf]
  %v84 = vld [vmem:[%s1 + $0x8] sm:$0xf]
  %v85 = vld [vmem:[%s1 + $0xc] sm:$0x3]
  %v150 = vunpack.c.l.b16 %v18
  %v151 = vunpack.c.l.b16 %v19
  %v152 = vunpack.c.l.b16 %v20
  %v153 = vunpack.c.l.b16 %v21
  %v154 = vunpack.c.l.b16 %v22
  %v155 = vunpack.c.l.b16 %v23
  %v156 = vunpack.c.l.b16 %v24
  %v157 = vunpack.c.l.b16 %v25
  %v158 = vunpack.c.l.b16 %v26
  %v159 = vunpack.c.l.b16 %v27
  %v160 = vunpack.c.l.b16 %v28
  %v161 = vunpack.c.l.b16 %v29
  %v162 = vunpack.c.l.b16 %v30
  %v163 = vunpack.c.l.b16 %v31
  %v164 = vunpack.c.l.b16 %v32
  %v165 = vunpack.c.l.b16 %v33
  %v166 = vunpack.c.l.b16 %v34
  %v167 = vunpack.c.l.b16 %v35
  %v168 = vunpack.c.l.b16 %v36
  %v169 = vunpack.c.l.b16 %v37
  %v170 = vunpack.c.l.b16 %v38
  %v171 = vunpack.c.l.b16 %v39
  %v172 = vunpack.c.l.b16 %v40
  %v173 = vunpack.c.l.b16 %v41
  %v174 = vunpack.c.l.b16 %v42
  %v175 = vunpack.c.l.b16 %v43
  %v176 = vunpack.c.l.b16 %v44
  %v177 = vunpack.c.l.b16 %v45
  %v178 = vunpack.c.l.b16 %v46
  %v179 = vunpack.c.l.b16 %v47
  %v180 = vunpack.c.l.b16 %v48
  %v181 = vunpack.c.l.b16 %v49
  %v182 = vunpack.c.l.b16 %v50
  %v183 = vunpack.c.l.b16 %v51
  %v184 = vunpack.c.l.b16 %v52
  %v185 = vunpack.c.l.b16 %v53
  %v186 = vunpack.c.l.b16 %v54
  %v187 = vunpack.c.l.b16 %v55
  %v188 = vunpack.c.l.b16 %v56
  %v189 = vunpack.c.l.b16 %v57
  %v190 = vunpack.c.l.b16 %v58
  %v191 = vunpack.c.l.b16 %v59
  %v192 = vunpack.c.l.b16 %v60
  %v193 = vunpack.c.l.b16 %v61
  %v194 = vunpack.c.l.b16 %v62
  %v195 = vunpack.c.l.b16 %v63
  %v196 = vunpack.c.l.b16 %v64
  %v197 = vunpack.c.l.b16 %v65
  %v198 = vunpack.c.l.b16 %v66
  %v199 = vunpack.c.l.b16 %v67
  %v200 = vunpack.c.l.b16 %v68
  %v201 = vunpack.c.l.b16 %v69
  %v202 = vunpack.c.l.b16 %v70
  %v203 = vunpack.c.l.b16 %v71
  %v204 = vunpack.c.l.b16 %v72
  %v205 = vunpack.c.l.b16 %v73
  %v206 = vunpack.c.l.b16 %v74
  %v207 = vunpack.c.l.b16 %v75
  %v208 = vunpack.c.l.b16 %v76
  %v209 = vunpack.c.l.b16 %v77
  %v210 = vunpack.c.l.b16 %v78
  %v211 = vunpack.c.l.b16 %v79
  %v212 = vunpack.c.l.b16 %v80
  %v213 = vunpack.c.l.b16 %v81
  %v214 = vpack.c.b16 %v151, %v150
  %v215 = vpack.c.b16 %v153, %v152
  %v216 = vpack.c.b16 %v155, %v154
  %v217 = vpack.c.b16 %v157, %v156
  %v218 = vpack.c.b16 %v159, %v158
  %v219 = vpack.c.b16 %v161, %v160
  %v220 = vpack.c.b16 %v163, %v162
  %v221 = vpack.c.b16 %v165, %v164
  %v222 = vpack.c.b16 %v167, %v166
  %v223 = vpack.c.b16 %v169, %v168
  %v224 = vpack.c.b16 %v171, %v170
  %v225 = vpack.c.b16 %v173, %v172
  %v226 = vpack.c.b16 %v175, %v174
  %v227 = vpack.c.b16 %v177, %v176
  %v228 = vpack.c.b16 %v179, %v178
  %v229 = vpack.c.b16 %v181, %v180
  %v230 = vpack.c.b16 %v183, %v182
  %v231 = vpack.c.b16 %v185, %v184
  %v232 = vpack.c.b16 %v187, %v186
  %v233 = vpack.c.b16 %v189, %v188
  %v234 = vpack.c.b16 %v191, %v190
  %v235 = vpack.c.b16 %v193, %v192
  %v236 = vpack.c.b16 %v195, %v194
  %v237 = vpack.c.b16 %v197, %v196
  %v238 = vpack.c.b16 %v199, %v198
  %v239 = vpack.c.b16 %v201, %v200
  %v240 = vpack.c.b16 %v203, %v202
  %v241 = vpack.c.b16 %v205, %v204
  %v242 = vpack.c.b16 %v207, %v206
  %v243 = vpack.c.b16 %v209, %v208
  %v244 = vpack.c.b16 %v211, %v210
  %v245 = vpack.c.b16 %v213, %v212
  %v250 = vunpack.c.l.b16 %v82
  %v251 = vunpack.c.l.b16 %v83
  %v252 = vunpack.c.l.b16 %v84
  %v253 = vunpack.c.l.b16 %v85
  %v254 = vpack.c.b16 %v251, %v250
  %v255 = vpack.c.b16 %v253, %v252
  %vm257 = vcmask 220160
  %v259 = vsel %vm257, %v214, 0
  %v262 = vsel %vm257, %v215, 0
  %v265 = vsel %vm257, %v216, 0
  %v268 = vsel %vm257, %v217, 0
  %v271 = vsel %vm257, %v218, 0
  %v274 = vsel %vm257, %v219, 0
  %v277 = vsel %vm257, %v220, 0
  %v280 = vsel %vm257, %v221, 0
  %v283 = vsel %vm257, %v222, 0
  %v286 = vsel %vm257, %v223, 0
  %v289 = vsel %vm257, %v224, 0
  %v292 = vsel %vm257, %v225, 0
  %v295 = vsel %vm257, %v226, 0
  %v298 = vsel %vm257, %v227, 0
  %v301 = vsel %vm257, %v228, 0
  %v304 = vsel %vm257, %v229, 0
  %v307 = vsel %vm257, %v230, 0
  %v310 = vsel %vm257, %v231, 0
  %v313 = vsel %vm257, %v232, 0
  %v316 = vsel %vm257, %v233, 0
  %v319 = vsel %vm257, %v234, 0
  %v322 = vsel %vm257, %v235, 0
  %v325 = vsel %vm257, %v236, 0
  %v328 = vsel %vm257, %v237, 0
  %v331 = vsel %vm257, %v238, 0
  %v334 = vsel %vm257, %v239, 0
  %v337 = vsel %vm257, %v240, 0
  %v340 = vsel %vm257, %v241, 0
  %v343 = vsel %vm257, %v242, 0
  %v346 = vsel %vm257, %v243, 0
  %v349 = vsel %vm257, %v244, 0
  %v352 = vsel %vm257, %v245, 0
  %vm354 = vcmask 1044480
  %vm355 = vcmask 1045504
  %v356 = vsel %vm354, 4294967295, 65535
  %v357 = vsel %vm355, %v356, 0
  %v359 = vand.u32 %v255, %v357
  %361 = vmatprep.subr.bf16.mxu0 0
  %362 = vmatpush1.bf16.msra.mxu0 %v254
  %363 = vmatprep.subr.bf16.mxu0 0
  %364 = vmatpush1.bf16.msra.mxu0 %v359
  %365 = vmatprep.subr.bf16.mxu0 0
  %366 = vmatpush1.bf16.msra.mxu0 0
  %367 = vmatprep.subr.bf16.mxu0 0
  %368 = vmatpush1.bf16.msra.mxu0 0
  %369 = vmatprep.subr.bf16.mxu0 0
  %370 = vmatpush1.bf16.msra.mxu0 0
  %371 = vmatprep.subr.bf16.mxu0 0
  %372 = vmatpush1.bf16.msra.mxu0 0
  %373 = vmatprep.subr.bf16.mxu0 0
  %374 = vmatpush1.bf16.msra.mxu0 0
  %375 = vmatprep.subr.bf16.mxu0 0
  %376 = vmatpush1.bf16.msra.mxu0 0
  %377 = vmatprep.subr.bf16.mxu0 0
  %378 = vmatpush1.bf16.msra.mxu0 0
  %379 = vmatprep.subr.bf16.mxu0 0
  %380 = vmatpush1.bf16.msra.mxu0 0
  %381 = vmatprep.subr.bf16.mxu0 0
  %382 = vmatpush1.bf16.msra.mxu0 0
  %383 = vmatprep.subr.bf16.mxu0 0
  %384 = vmatpush1.bf16.msra.mxu0 0
  %385 = vmatprep.subr.bf16.mxu0 0
  %386 = vmatpush1.bf16.msra.mxu0 0
  %387 = vmatprep.subr.bf16.mxu0 0
  %388 = vmatpush1.bf16.msra.mxu0 0
  %389 = vmatprep.subr.bf16.mxu0 0
  %390 = vmatpush1.bf16.msra.mxu0 0
  %391 = vmatprep.subr.bf16.mxu0 0
  %392 = vmatpush1.bf16.msra.mxu0 0
  %393 = vmatprep.mubr.bf16.mxu0 0
  %394 = vmatmul.mubr.bf16.gmra.mrb[0].mxu0 %v259
  %v395 = vpop.f32.mrb[0].mxu0
  %v396 = vadd.f32 0.0, %v395
  %v397 = vpop.f32.mrb[0].mxu0
  %v398 = vpop.f32.mrb[0].mxu0
  %v399 = vadd.f32 0.0, %v398
  %v400 = vpop.f32.mrb[0].mxu0
  %401 = vmatprep.mubr.bf16.mxu0 0
  %402 = vmatmul.mubr.bf16.gmra.mrb[0].mxu0 %v262
  %v403 = vpop.f32.mrb[0].mxu0
  %v404 = vadd.f32 0.0, %v403
  %v405 = vpop.f32.mrb[0].mxu0
  %v406 = vpop.f32.mrb[0].mxu0
  %v407 = vadd.f32 0.0, %v406
  %v408 = vpop.f32.mrb[0].mxu0
  %409 = vmatprep.mubr.bf16.mxu0 0
  %410 = vmatmul.mubr.bf16.gmra.mrb[0].mxu0 %v265
  %v411 = vpop.f32.mrb[0].mxu0
  %v412 = vadd.f32 0.0, %v411
  %v413 = vpop.f32.mrb[0].mxu0
  %v414 = vpop.f32.mrb[0].mxu0
  %v415 = vadd.f32 0.0, %v414
  %v416 = vpop.f32.mrb[0].mxu0
  %417 = vmatprep.mubr.bf16.mxu0 0
  %418 = vmatmul.mubr.bf16.gmra.mrb[0].mxu0 %v268
  %v419 = vpop.f32.mrb[0].mxu0
  %v420 = vadd.f32 0.0, %v419
  %v421 = vpop.f32.mrb[0].mxu0
  %v422 = vpop.f32.mrb[0].mxu0
  %v423 = vadd.f32 0.0, %v422
  %v424 = vpop.f32.mrb[0].mxu0
  %425 = vmatprep.mubr.bf16.mxu0 0
  %426 = vmatmul.mubr.bf16.gmra.mrb[0].mxu0 %v271
  %v427 = vpop.f32.mrb[0].mxu0
  %v428 = vadd.f32 0.0, %v427
  %v429 = vpop.f32.mrb[0].mxu0
  %v430 = vpop.f32.mrb[0].mxu0
  %v431 = vadd.f32 0.0, %v430
  %v432 = vpop.f32.mrb[0].mxu0
  %433 = vmatprep.mubr.bf16.mxu0 0
  %434 = vmatmul.mubr.bf16.gmra.mrb[0].mxu0 %v274
  %v435 = vpop.f32.mrb[0].mxu0
  %v436 = vadd.f32 0.0, %v435
  %v437 = vpop.f32.mrb[0].mxu0
  %v438 = vpop.f32.mrb[0].mxu0
  %v439 = vadd.f32 0.0, %v438
  %v440 = vpop.f32.mrb[0].mxu0
  %441 = vmatprep.mubr.bf16.mxu0 0
  %442 = vmatmul.mubr.bf16.gmra.mrb[0].mxu0 %v277
  %v443 = vpop.f32.mrb[0].mxu0
  %v444 = vadd.f32 0.0, %v443
  %v445 = vpop.f32.mrb[0].mxu0
  %v446 = vpop.f32.mrb[0].mxu0
  %v447 = vadd.f32 0.0, %v446
  %v448 = vpop.f32.mrb[0].mxu0
  %449 = vmatprep.mubr.bf16.mxu0 0
  %450 = vmatmul.mubr.bf16.gmra.mrb[0].mxu0 %v280
  %v451 = vpop.f32.mrb[0].mxu0
  %v452 = vadd.f32 0.0, %v451
  %v453 = vpop.f32.mrb[0].mxu0
  %v454 = vpop.f32.mrb[0].mxu0
  %v455 = vadd.f32 0.0, %v454
  %v456 = vpop.f32.mrb[0].mxu0
  %457 = vmatprep.mubr.bf16.mxu0 0
  %458 = vmatmul.mubr.bf16.gmra.mrb[0].mxu0 %v283
  %v459 = vpop.f32.mrb[0].mxu0
  %v460 = vadd.f32 0.0, %v459
  %v461 = vpop.f32.mrb[0].mxu0
  %v462 = vpop.f32.mrb[0].mxu0
  %v463 = vadd.f32 0.0, %v462
  %v464 = vpop.f32.mrb[0].mxu0
  %465 = vmatprep.mubr.bf16.mxu0 0
  %466 = vmatmul.mubr.bf16.gmra.mrb[0].mxu0 %v286
  %v467 = vpop.f32.mrb[0].mxu0
  %v468 = vadd.f32 0.0, %v467
  %v469 = vpop.f32.mrb[0].mxu0
  %v470 = vpop.f32.mrb[0].mxu0
  %v471 = vadd.f32 0.0, %v470
  %v472 = vpop.f32.mrb[0].mxu0
  %473 = vmatprep.mubr.bf16.mxu0 0
  %474 = vmatmul.mubr.bf16.gmra.mrb[0].mxu0 %v289
  %v475 = vpop.f32.mrb[0].mxu0
  %v476 = vadd.f32 0.0, %v475
  %v477 = vpop.f32.mrb[0].mxu0
  %v478 = vpop.f32.mrb[0].mxu0
  %v479 = vadd.f32 0.0, %v478
  %v480 = vpop.f32.mrb[0].mxu0
  %481 = vmatprep.mubr.bf16.mxu0 0
  %482 = vmatmul.mubr.bf16.gmra.mrb[0].mxu0 %v292
  %v483 = vpop.f32.mrb[0].mxu0
  %v484 = vadd.f32 0.0, %v483
  %v485 = vpop.f32.mrb[0].mxu0
  %v486 = vpop.f32.mrb[0].mxu0
  %v487 = vadd.f32 0.0, %v486
  %v488 = vpop.f32.mrb[0].mxu0
  %489 = vmatprep.mubr.bf16.mxu0 0
  %490 = vmatmul.mubr.bf16.gmra.mrb[0].mxu0 %v295
  %v491 = vpop.f32.mrb[0].mxu0
  %v492 = vadd.f32 0.0, %v491
  %v493 = vpop.f32.mrb[0].mxu0
  %v494 = vpop.f32.mrb[0].mxu0
  %v495 = vadd.f32 0.0, %v494
  %v496 = vpop.f32.mrb[0].mxu0
  %497 = vmatprep.mubr.bf16.mxu0 0
  %498 = vmatmul.mubr.bf16.gmra.mrb[0].mxu0 %v298
  %v499 = vpop.f32.mrb[0].mxu0
  %v500 = vadd.f32 0.0, %v499
  %v501 = vpop.f32.mrb[0].mxu0
  %v502 = vpop.f32.mrb[0].mxu0
  %v503 = vadd.f32 0.0, %v502
  %v504 = vpop.f32.mrb[0].mxu0
  %505 = vmatprep.mubr.bf16.mxu0 0
  %506 = vmatmul.mubr.bf16.gmra.mrb[0].mxu0 %v301
  %v507 = vpop.f32.mrb[0].mxu0
  %v508 = vadd.f32 0.0, %v507
  %v509 = vpop.f32.mrb[0].mxu0
  %v510 = vpop.f32.mrb[0].mxu0
  %v511 = vadd.f32 0.0, %v510
  %v512 = vpop.f32.mrb[0].mxu0
  %513 = vmatprep.mubr.bf16.mxu0 0
  %514 = vmatmul.mubr.bf16.gmra.mrb[0].mxu0 %v304
  %v515 = vpop.f32.mrb[0].mxu0
  %v516 = vadd.f32 0.0, %v515
  %v517 = vpop.f32.mrb[0].mxu0
  %v518 = vpop.f32.mrb[0].mxu0
  %v519 = vadd.f32 0.0, %v518
  %v520 = vpop.f32.mrb[0].mxu0
  %521 = vmatprep.mubr.bf16.mxu0 0
  %522 = vmatmul.mubr.bf16.gmra.mrb[0].mxu0 %v307
  %v523 = vpop.f32.mrb[0].mxu0
  %v524 = vadd.f32 0.0, %v523
  %v525 = vpop.f32.mrb[0].mxu0
  %v526 = vpop.f32.mrb[0].mxu0
  %v527 = vadd.f32 0.0, %v526
  %v528 = vpop.f32.mrb[0].mxu0
  %529 = vmatprep.mubr.bf16.mxu0 0
  %530 = vmatmul.mubr.bf16.gmra.mrb[0].mxu0 %v310
  %v531 = vpop.f32.mrb[0].mxu0
  %v532 = vadd.f32 0.0, %v531
  %v533 = vpop.f32.mrb[0].mxu0
  %v534 = vpop.f32.mrb[0].mxu0
  %v535 = vadd.f32 0.0, %v534
  %v536 = vpop.f32.mrb[0].mxu0
  %537 = vmatprep.mubr.bf16.mxu0 0
  %538 = vmatmul.mubr.bf16.gmra.mrb[0].mxu0 %v313
  %v539 = vpop.f32.mrb[0].mxu0
  %v540 = vadd.f32 0.0, %v539
  %v541 = vpop.f32.mrb[0].mxu0
  %v542 = vpop.f32.mrb[0].mxu0
  %v543 = vadd.f32 0.0, %v542
  %v544 = vpop.f32.mrb[0].mxu0
  %545 = vmatprep.mubr.bf16.mxu0 0
  %546 = vmatmul.mubr.bf16.gmra.mrb[0].mxu0 %v316
  %v547 = vpop.f32.mrb[0].mxu0
  %v548 = vadd.f32 0.0, %v547
  %v549 = vpop.f32.mrb[0].mxu0
  %v550 = vpop.f32.mrb[0].mxu0
  %v551 = vadd.f32 0.0, %v550
  %v552 = vpop.f32.mrb[0].mxu0
  %553 = vmatprep.mubr.bf16.mxu0 0
  %554 = vmatmul.mubr.bf16.gmra.mrb[0].mxu0 %v319
  %v555 = vpop.f32.mrb[0].mxu0
  %v556 = vadd.f32 0.0, %v555
  %v557 = vpop.f32.mrb[0].mxu0
  %v558 = vpop.f32.mrb[0].mxu0
  %v559 = vadd.f32 0.0, %v558
  %v560 = vpop.f32.mrb[0].mxu0
  %561 = vmatprep.mubr.bf16.mxu0 0
  %562 = vmatmul.mubr.bf16.gmra.mrb[0].mxu0 %v322
  %v563 = vpop.f32.mrb[0].mxu0
  %v564 = vadd.f32 0.0, %v563
  %v565 = vpop.f32.mrb[0].mxu0
  %v566 = vpop.f32.mrb[0].mxu0
  %v567 = vadd.f32 0.0, %v566
  %v568 = vpop.f32.mrb[0].mxu0
  %569 = vmatprep.mubr.bf16.mxu0 0
  %570 = vmatmul.mubr.bf16.gmra.mrb[0].mxu0 %v325
  %v571 = vpop.f32.mrb[0].mxu0
  %v572 = vadd.f32 0.0, %v571
  %v573 = vpop.f32.mrb[0].mxu0
  %v574 = vpop.f32.mrb[0].mxu0
  %v575 = vadd.f32 0.0, %v574
  %v576 = vpop.f32.mrb[0].mxu0
  %577 = vmatprep.mubr.bf16.mxu0 0
  %578 = vmatmul.mubr.bf16.gmra.mrb[0].mxu0 %v328
  %v579 = vpop.f32.mrb[0].mxu0
  %v580 = vadd.f32 0.0, %v579
  %v581 = vpop.f32.mrb[0].mxu0
  %v582 = vpop.f32.mrb[0].mxu0
  %v583 = vadd.f32 0.0, %v582
  %v584 = vpop.f32.mrb[0].mxu0
  %585 = vmatprep.mubr.bf16.mxu0 0
  %586 = vmatmul.mubr.bf16.gmra.mrb[0].mxu0 %v331
  %v587 = vpop.f32.mrb[0].mxu0
  %v588 = vadd.f32 0.0, %v587
  %v589 = vpop.f32.mrb[0].mxu0
  %v590 = vpop.f32.mrb[0].mxu0
  %v591 = vadd.f32 0.0, %v590
  %v592 = vpop.f32.mrb[0].mxu0
  %593 = vmatprep.mubr.bf16.mxu0 0
  %594 = vmatmul.mubr.bf16.gmra.mrb[0].mxu0 %v334
  %v595 = vpop.f32.mrb[0].mxu0
  %v596 = vadd.f32 0.0, %v595
  %v597 = vpop.f32.mrb[0].mxu0
  %v598 = vpop.f32.mrb[0].mxu0
  %v599 = vadd.f32 0.0, %v598
  %v600 = vpop.f32.mrb[0].mxu0
  %601 = vmatprep.mubr.bf16.mxu0 0
  %602 = vmatmul.mubr.bf16.gmra.mrb[0].mxu0 %v337
  %v603 = vpop.f32.mrb[0].mxu0
  %v604 = vadd.f32 0.0, %v603
  %v605 = vpop.f32.mrb[0].mxu0
  %v606 = vpop.f32.mrb[0].mxu0
  %v607 = vadd.f32 0.0, %v606
  %v608 = vpop.f32.mrb[0].mxu0
  %609 = vmatprep.mubr.bf16.mxu0 0
  %610 = vmatmul.mubr.bf16.gmra.mrb[0].mxu0 %v340
  %v611 = vpop.f32.mrb[0].mxu0
  %v612 = vadd.f32 0.0, %v611
  %v613 = vpop.f32.mrb[0].mxu0
  %v614 = vpop.f32.mrb[0].mxu0
  %v615 = vadd.f32 0.0, %v614
  %v616 = vpop.f32.mrb[0].mxu0
  %617 = vmatprep.mubr.bf16.mxu0 0
  %618 = vmatmul.mubr.bf16.gmra.mrb[0].mxu0 %v343
  %v619 = vpop.f32.mrb[0].mxu0
  %v620 = vadd.f32 0.0, %v619
  %v621 = vpop.f32.mrb[0].mxu0
  %v622 = vpop.f32.mrb[0].mxu0
  %v623 = vadd.f32 0.0, %v622
  %v624 = vpop.f32.mrb[0].mxu0
  %625 = vmatprep.mubr.bf16.mxu0 0
  %626 = vmatmul.mubr.bf16.gmra.mrb[0].mxu0 %v346
  %v627 = vpop.f32.mrb[0].mxu0
  %v628 = vadd.f32 0.0, %v627
  %v629 = vpop.f32.mrb[0].mxu0
  %v630 = vpop.f32.mrb[0].mxu0
  %v631 = vadd.f32 0.0, %v630
  %v632 = vpop.f32.mrb[0].mxu0
  %633 = vmatprep.mubr.bf16.mxu0 0
  %634 = vmatmul.mubr.bf16.gmra.mrb[0].mxu0 %v349
  %v635 = vpop.f32.mrb[0].mxu0
  %v636 = vadd.f32 0.0, %v635
  %v637 = vpop.f32.mrb[0].mxu0
  %v638 = vpop.f32.mrb[0].mxu0
  %v639 = vadd.f32 0.0, %v638
  %v640 = vpop.f32.mrb[0].mxu0
  %641 = vmatprep.mubr.bf16.mxu0 0
  %642 = vmatmul.mubr.bf16.gmra.mrb[0].mxu0 %v352
  %v643 = vpop.f32.mrb[0].mxu0
  %v644 = vadd.f32 0.0, %v643
  %v645 = vpop.f32.mrb[0].mxu0
  %v646 = vpop.f32.mrb[0].mxu0
  %v647 = vadd.f32 0.0, %v646
  %v648 = vpop.f32.mrb[0].mxu0
  %649 = vdwg.mxu0
  %v650 = vld [vmem:[%s2] sm:$0x1]
  %v652 = vlaneseq
  %v653 = vshrl.u32 %v652, 7
  %v654 = vsub.s32 0, %v653
  %v655 = vrot.slane %v650, %v654
  %v657 = vmul.f32 %v396, %v655
  %v658 = vmul.f32 %v399, %v655
  %v659 = vmul.f32 %v404, %v655
  %v660 = vmul.f32 %v407, %v655
  %v661 = vmul.f32 %v412, %v655
  %v662 = vmul.f32 %v415, %v655
  %v663 = vmul.f32 %v420, %v655
  %v664 = vmul.f32 %v423, %v655
  %v665 = vmul.f32 %v428, %v655
  %v666 = vmul.f32 %v431, %v655
  %v667 = vmul.f32 %v436, %v655
  %v668 = vmul.f32 %v439, %v655
  %v669 = vmul.f32 %v444, %v655
  %v670 = vmul.f32 %v447, %v655
  %v671 = vmul.f32 %v452, %v655
  %v672 = vmul.f32 %v455, %v655
  %v673 = vmul.f32 %v460, %v655
  %v674 = vmul.f32 %v463, %v655
  %v675 = vmul.f32 %v468, %v655
  %v676 = vmul.f32 %v471, %v655
  %v677 = vmul.f32 %v476, %v655
  %v678 = vmul.f32 %v479, %v655
  %v679 = vmul.f32 %v484, %v655
  %v680 = vmul.f32 %v487, %v655
  %v681 = vmul.f32 %v492, %v655
  %v682 = vmul.f32 %v495, %v655
  %v683 = vmul.f32 %v500, %v655
  %v684 = vmul.f32 %v503, %v655
  %v685 = vmul.f32 %v508, %v655
  %v686 = vmul.f32 %v511, %v655
  %v687 = vmul.f32 %v516, %v655
  %v688 = vmul.f32 %v519, %v655
  %v689 = vmul.f32 %v524, %v655
  %v690 = vmul.f32 %v527, %v655
  %v691 = vmul.f32 %v532, %v655
  %v692 = vmul.f32 %v535, %v655
  %v693 = vmul.f32 %v540, %v655
  %v694 = vmul.f32 %v543, %v655
  %v695 = vmul.f32 %v548, %v655
  %v696 = vmul.f32 %v551, %v655
  %v697 = vmul.f32 %v556, %v655
  %v698 = vmul.f32 %v559, %v655
  %v699 = vmul.f32 %v564, %v655
  %v700 = vmul.f32 %v567, %v655
  %v701 = vmul.f32 %v572, %v655
  %v702 = vmul.f32 %v575, %v655
  %v703 = vmul.f32 %v580, %v655
  %v704 = vmul.f32 %v583, %v655
  %v705 = vmul.f32 %v588, %v655
  %v706 = vmul.f32 %v591, %v655
  %v707 = vmul.f32 %v596, %v655
  %v708 = vmul.f32 %v599, %v655
  %v709 = vmul.f32 %v604, %v655
  %v710 = vmul.f32 %v607, %v655
  %v711 = vmul.f32 %v612, %v655
  %v712 = vmul.f32 %v615, %v655
  %v713 = vmul.f32 %v620, %v655
  %v714 = vmul.f32 %v623, %v655
  %v715 = vmul.f32 %v628, %v655
  %v716 = vmul.f32 %v631, %v655
  %v717 = vmul.f32 %v636, %v655
  %v718 = vmul.f32 %v639, %v655
  %v719 = vmul.f32 %v644, %v655
  %v720 = vmul.f32 %v647, %v655
  %v721 = vld [vmem:[%s3] sm:$0x1]
  %v723 = vlaneseq
  %v724 = vshrl.u32 %v723, 7
  %v725 = vsub.s32 0, %v724
  %v726 = vrot.slane %v721, %v725
  %v728 = vadd.f32 %v657, %v726
  %v729 = vadd.f32 %v658, %v726
  %v730 = vadd.f32 %v659, %v726
  %v731 = vadd.f32 %v660, %v726
  %v732 = vadd.f32 %v661, %v726
  %v733 = vadd.f32 %v662, %v726
  %v734 = vadd.f32 %v663, %v726
  %v735 = vadd.f32 %v664, %v726
  %v736 = vadd.f32 %v665, %v726
  %v737 = vadd.f32 %v666, %v726
  %v738 = vadd.f32 %v667, %v726
  %v739 = vadd.f32 %v668, %v726
  %v740 = vadd.f32 %v669, %v726
  %v741 = vadd.f32 %v670, %v726
  %v742 = vadd.f32 %v671, %v726
  %v743 = vadd.f32 %v672, %v726
  %v744 = vadd.f32 %v673, %v726
  %v745 = vadd.f32 %v674, %v726
  %v746 = vadd.f32 %v675, %v726
  %v747 = vadd.f32 %v676, %v726
  %v748 = vadd.f32 %v677, %v726
  %v749 = vadd.f32 %v678, %v726
  %v750 = vadd.f32 %v679, %v726
  %v751 = vadd.f32 %v680, %v726
  %v752 = vadd.f32 %v681, %v726
  %v753 = vadd.f32 %v682, %v726
  %v754 = vadd.f32 %v683, %v726
  %v755 = vadd.f32 %v684, %v726
  %v756 = vadd.f32 %v685, %v726
  %v757 = vadd.f32 %v686, %v726
  %v758 = vadd.f32 %v687, %v726
  %v759 = vadd.f32 %v688, %v726
  %v760 = vadd.f32 %v689, %v726
  %v761 = vadd.f32 %v690, %v726
  %v762 = vadd.f32 %v691, %v726
  %v763 = vadd.f32 %v692, %v726
  %v764 = vadd.f32 %v693, %v726
  %v765 = vadd.f32 %v694, %v726
  %v766 = vadd.f32 %v695, %v726
  %v767 = vadd.f32 %v696, %v726
  %v768 = vadd.f32 %v697, %v726
  %v769 = vadd.f32 %v698, %v726
  %v770 = vadd.f32 %v699, %v726
  %v771 = vadd.f32 %v700, %v726
  %v772 = vadd.f32 %v701, %v726
  %v773 = vadd.f32 %v702, %v726
  %v774 = vadd.f32 %v703, %v726
  %v775 = vadd.f32 %v704, %v726
  %v776 = vadd.f32 %v705, %v726
  %v777 = vadd.f32 %v706, %v726
  %v778 = vadd.f32 %v707, %v726
  %v779 = vadd.f32 %v708, %v726
  %v780 = vadd.f32 %v709, %v726
  %v781 = vadd.f32 %v710, %v726
  %v782 = vadd.f32 %v711, %v726
  %v783 = vadd.f32 %v712, %v726
  %v784 = vadd.f32 %v713, %v726
  %v785 = vadd.f32 %v714, %v726
  %v786 = vadd.f32 %v715, %v726
  %v787 = vadd.f32 %v716, %v726
  %v788 = vadd.f32 %v717, %v726
  %v789 = vadd.f32 %v718, %v726
  %v790 = vadd.f32 %v719, %v726
  %v791 = vadd.f32 %v720, %v726
  %vm792 = vcmp.ge.f32.partialorder %v728, 0.0
  %vm793 = vcmp.ge.f32.partialorder %v729, 0.0
  %vm794 = vcmp.ge.f32.partialorder %v730, 0.0
  %vm795 = vcmp.ge.f32.partialorder %v731, 0.0
  %vm796 = vcmp.ge.f32.partialorder %v732, 0.0
  %vm797 = vcmp.ge.f32.partialorder %v733, 0.0
  %vm798 = vcmp.ge.f32.partialorder %v734, 0.0
  %vm799 = vcmp.ge.f32.partialorder %v735, 0.0
  %vm800 = vcmp.ge.f32.partialorder %v736, 0.0
  %vm801 = vcmp.ge.f32.partialorder %v737, 0.0
  %vm802 = vcmp.ge.f32.partialorder %v738, 0.0
  %vm803 = vcmp.ge.f32.partialorder %v739, 0.0
  %vm804 = vcmp.ge.f32.partialorder %v740, 0.0
  %vm805 = vcmp.ge.f32.partialorder %v741, 0.0
  %vm806 = vcmp.ge.f32.partialorder %v742, 0.0
  %vm807 = vcmp.ge.f32.partialorder %v743, 0.0
  %vm808 = vcmp.ge.f32.partialorder %v744, 0.0
  %vm809 = vcmp.ge.f32.partialorder %v745, 0.0
  %vm810 = vcmp.ge.f32.partialorder %v746, 0.0
  %vm811 = vcmp.ge.f32.partialorder %v747, 0.0
  %vm812 = vcmp.ge.f32.partialorder %v748, 0.0
  %vm813 = vcmp.ge.f32.partialorder %v749, 0.0
  %vm814 = vcmp.ge.f32.partialorder %v750, 0.0
  %vm815 = vcmp.ge.f32.partialorder %v751, 0.0
  %vm816 = vcmp.ge.f32.partialorder %v752, 0.0
  %vm817 = vcmp.ge.f32.partialorder %v753, 0.0
  %vm818 = vcmp.ge.f32.partialorder %v754, 0.0
  %vm819 = vcmp.ge.f32.partialorder %v755, 0.0
  %vm820 = vcmp.ge.f32.partialorder %v756, 0.0
  %vm821 = vcmp.ge.f32.partialorder %v757, 0.0
  %vm822 = vcmp.ge.f32.partialorder %v758, 0.0
  %vm823 = vcmp.ge.f32.partialorder %v759, 0.0
  %vm824 = vcmp.ge.f32.partialorder %v760, 0.0
  %vm825 = vcmp.ge.f32.partialorder %v761, 0.0
  %vm826 = vcmp.ge.f32.partialorder %v762, 0.0
  %vm827 = vcmp.ge.f32.partialorder %v763, 0.0
  %vm828 = vcmp.ge.f32.partialorder %v764, 0.0
  %vm829 = vcmp.ge.f32.partialorder %v765, 0.0
  %vm830 = vcmp.ge.f32.partialorder %v766, 0.0
  %vm831 = vcmp.ge.f32.partialorder %v767, 0.0
  %vm832 = vcmp.ge.f32.partialorder %v768, 0.0
  %vm833 = vcmp.ge.f32.partialorder %v769, 0.0
  %vm834 = vcmp.ge.f32.partialorder %v770, 0.0
  %vm835 = vcmp.ge.f32.partialorder %v771, 0.0
  %vm836 = vcmp.ge.f32.partialorder %v772, 0.0
  %vm837 = vcmp.ge.f32.partialorder %v773, 0.0
  %vm838 = vcmp.ge.f32.partialorder %v774, 0.0
  %vm839 = vcmp.ge.f32.partialorder %v775, 0.0
  %vm840 = vcmp.ge.f32.partialorder %v776, 0.0
  %vm841 = vcmp.ge.f32.partialorder %v777, 0.0
  %vm842 = vcmp.ge.f32.partialorder %v778, 0.0
  %vm843 = vcmp.ge.f32.partialorder %v779, 0.0
  %vm844 = vcmp.ge.f32.partialorder %v780, 0.0
  %vm845 = vcmp.ge.f32.partialorder %v781, 0.0
  %vm846 = vcmp.ge.f32.partialorder %v782, 0.0
  %vm847 = vcmp.ge.f32.partialorder %v783, 0.0
  %vm848 = vcmp.ge.f32.partialorder %v784, 0.0
  %vm849 = vcmp.ge.f32.partialorder %v785, 0.0
  %vm850 = vcmp.ge.f32.partialorder %v786, 0.0
  %vm851 = vcmp.ge.f32.partialorder %v787, 0.0
  %vm852 = vcmp.ge.f32.partialorder %v788, 0.0
  %vm853 = vcmp.ge.f32.partialorder %v789, 0.0
  %vm854 = vcmp.ge.f32.partialorder %v790, 0.0
  %vm855 = vcmp.ge.f32.partialorder %v791, 0.0
  %v856 = vmul.f32 %v728, 0.01
  %v857 = vmul.f32 %v729, 0.01
  %v858 = vmul.f32 %v730, 0.01
  %v859 = vmul.f32 %v731, 0.01
  %v860 = vmul.f32 %v732, 0.01
  %v861 = vmul.f32 %v733, 0.01
  %v862 = vmul.f32 %v734, 0.01
  %v863 = vmul.f32 %v735, 0.01
  %v864 = vmul.f32 %v736, 0.01
  %v865 = vmul.f32 %v737, 0.01
  %v866 = vmul.f32 %v738, 0.01
  %v867 = vmul.f32 %v739, 0.01
  %v868 = vmul.f32 %v740, 0.01
  %v869 = vmul.f32 %v741, 0.01
  %v870 = vmul.f32 %v742, 0.01
  %v871 = vmul.f32 %v743, 0.01
  %v872 = vmul.f32 %v744, 0.01
  %v873 = vmul.f32 %v745, 0.01
  %v874 = vmul.f32 %v746, 0.01
  %v875 = vmul.f32 %v747, 0.01
  %v876 = vmul.f32 %v748, 0.01
  %v877 = vmul.f32 %v749, 0.01
  %v878 = vmul.f32 %v750, 0.01
  %v879 = vmul.f32 %v751, 0.01
  %v880 = vmul.f32 %v752, 0.01
  %v881 = vmul.f32 %v753, 0.01
  %v882 = vmul.f32 %v754, 0.01
  %v883 = vmul.f32 %v755, 0.01
  %v884 = vmul.f32 %v756, 0.01
  %v885 = vmul.f32 %v757, 0.01
  %v886 = vmul.f32 %v758, 0.01
  %v887 = vmul.f32 %v759, 0.01
  %v888 = vmul.f32 %v760, 0.01
  %v889 = vmul.f32 %v761, 0.01
  %v890 = vmul.f32 %v762, 0.01
  %v891 = vmul.f32 %v763, 0.01
  %v892 = vmul.f32 %v764, 0.01
  %v893 = vmul.f32 %v765, 0.01
  %v894 = vmul.f32 %v766, 0.01
  %v895 = vmul.f32 %v767, 0.01
  %v896 = vmul.f32 %v768, 0.01
  %v897 = vmul.f32 %v769, 0.01
  %v898 = vmul.f32 %v770, 0.01
  %v899 = vmul.f32 %v771, 0.01
  %v900 = vmul.f32 %v772, 0.01
  %v901 = vmul.f32 %v773, 0.01
  %v902 = vmul.f32 %v774, 0.01
  %v903 = vmul.f32 %v775, 0.01
  %v904 = vmul.f32 %v776, 0.01
  %v905 = vmul.f32 %v777, 0.01
  %v906 = vmul.f32 %v778, 0.01
  %v907 = vmul.f32 %v779, 0.01
  %v908 = vmul.f32 %v780, 0.01
  %v909 = vmul.f32 %v781, 0.01
  %v910 = vmul.f32 %v782, 0.01
  %v911 = vmul.f32 %v783, 0.01
  %v912 = vmul.f32 %v784, 0.01
  %v913 = vmul.f32 %v785, 0.01
  %v914 = vmul.f32 %v786, 0.01
  %v915 = vmul.f32 %v787, 0.01
  %v916 = vmul.f32 %v788, 0.01
  %v917 = vmul.f32 %v789, 0.01
  %v918 = vmul.f32 %v790, 0.01
  %v919 = vmul.f32 %v791, 0.01
  %v920 = vsel %vm792, %v728, %v856
  %v921 = vsel %vm793, %v729, %v857
  %v922 = vsel %vm794, %v730, %v858
  %v923 = vsel %vm795, %v731, %v859
  %v924 = vsel %vm796, %v732, %v860
  %v925 = vsel %vm797, %v733, %v861
  %v926 = vsel %vm798, %v734, %v862
  %v927 = vsel %vm799, %v735, %v863
  %v928 = vsel %vm800, %v736, %v864
  %v929 = vsel %vm801, %v737, %v865
  %v930 = vsel %vm802, %v738, %v866
  %v931 = vsel %vm803, %v739, %v867
  %v932 = vsel %vm804, %v740, %v868
  %v933 = vsel %vm805, %v741, %v869
  %v934 = vsel %vm806, %v742, %v870
  %v935 = vsel %vm807, %v743, %v871
  %v936 = vsel %vm808, %v744, %v872
  %v937 = vsel %vm809, %v745, %v873
  %v938 = vsel %vm810, %v746, %v874
  %v939 = vsel %vm811, %v747, %v875
  %v940 = vsel %vm812, %v748, %v876
  %v941 = vsel %vm813, %v749, %v877
  %v942 = vsel %vm814, %v750, %v878
  %v943 = vsel %vm815, %v751, %v879
  %v944 = vsel %vm816, %v752, %v880
  %v945 = vsel %vm817, %v753, %v881
  %v946 = vsel %vm818, %v754, %v882
  %v947 = vsel %vm819, %v755, %v883
  %v948 = vsel %vm820, %v756, %v884
  %v949 = vsel %vm821, %v757, %v885
  %v950 = vsel %vm822, %v758, %v886
  %v951 = vsel %vm823, %v759, %v887
  %v952 = vsel %vm824, %v760, %v888
  %v953 = vsel %vm825, %v761, %v889
  %v954 = vsel %vm826, %v762, %v890
  %v955 = vsel %vm827, %v763, %v891
  %v956 = vsel %vm828, %v764, %v892
  %v957 = vsel %vm829, %v765, %v893
  %v958 = vsel %vm830, %v766, %v894
  %v959 = vsel %vm831, %v767, %v895
  %v960 = vsel %vm832, %v768, %v896
  %v961 = vsel %vm833, %v769, %v897
  %v962 = vsel %vm834, %v770, %v898
  %v963 = vsel %vm835, %v771, %v899
  %v964 = vsel %vm836, %v772, %v900
  %v965 = vsel %vm837, %v773, %v901
  %v966 = vsel %vm838, %v774, %v902
  %v967 = vsel %vm839, %v775, %v903
  %v968 = vsel %vm840, %v776, %v904
  %v969 = vsel %vm841, %v777, %v905
  %v970 = vsel %vm842, %v778, %v906
  %v971 = vsel %vm843, %v779, %v907
  %v972 = vsel %vm844, %v780, %v908
  %v973 = vsel %vm845, %v781, %v909
  %v974 = vsel %vm846, %v782, %v910
  %v975 = vsel %vm847, %v783, %v911
  %v976 = vsel %vm848, %v784, %v912
  %v977 = vsel %vm849, %v785, %v913
  %v978 = vsel %vm850, %v786, %v914
  %v979 = vsel %vm851, %v787, %v915
  %v980 = vsel %vm852, %v788, %v916
  %v981 = vsel %vm853, %v789, %v917
  %v982 = vsel %vm854, %v790, %v918
  %v983 = vsel %vm855, %v791, %v919
  %984 = vst [vmem:[%s4] sm:$0xff] %v920
  %985 = vst [vmem:[%s4 + $0x8] sm:$0xff] %v921
  %986 = vst [vmem:[%s4 + $0x10] sm:$0xff] %v922
  %987 = vst [vmem:[%s4 + $0x18] sm:$0xff] %v923
  %988 = vst [vmem:[%s4 + $0x20] sm:$0xff] %v924
  %989 = vst [vmem:[%s4 + $0x28] sm:$0xff] %v925
  %990 = vst [vmem:[%s4 + $0x30] sm:$0xff] %v926
  %991 = vst [vmem:[%s4 + $0x38] sm:$0xff] %v927
  %992 = vst [vmem:[%s4 + $0x40] sm:$0xff] %v928
  %993 = vst [vmem:[%s4 + $0x48] sm:$0xff] %v929
  %994 = vst [vmem:[%s4 + $0x50] sm:$0xff] %v930
  %995 = vst [vmem:[%s4 + $0x58] sm:$0xff] %v931
  %996 = vst [vmem:[%s4 + $0x60] sm:$0xff] %v932
  %997 = vst [vmem:[%s4 + $0x68] sm:$0xff] %v933
  %998 = vst [vmem:[%s4 + $0x70] sm:$0xff] %v934
  %999 = vst [vmem:[%s4 + $0x78] sm:$0xff] %v935
  %1000 = vst [vmem:[%s4 + $0x80] sm:$0xff] %v936
  %1001 = vst [vmem:[%s4 + $0x88] sm:$0xff] %v937
  %1002 = vst [vmem:[%s4 + $0x90] sm:$0xff] %v938
  %1003 = vst [vmem:[%s4 + $0x98] sm:$0xff] %v939
  %1004 = vst [vmem:[%s4 + $0xa0] sm:$0xff] %v940
  %1005 = vst [vmem:[%s4 + $0xa8] sm:$0xff] %v941
  %1006 = vst [vmem:[%s4 + $0xb0] sm:$0xff] %v942
  %1007 = vst [vmem:[%s4 + $0xb8] sm:$0xff] %v943
  %1008 = vst [vmem:[%s4 + $0xc0] sm:$0xff] %v944
  %1009 = vst [vmem:[%s4 + $0xc8] sm:$0xff] %v945
  %1010 = vst [vmem:[%s4 + $0xd0] sm:$0xff] %v946
  %1011 = vst [vmem:[%s4 + $0xd8] sm:$0xff] %v947
  %1012 = vst [vmem:[%s4 + $0xe0] sm:$0xff] %v948
  %1013 = vst [vmem:[%s4 + $0xe8] sm:$0xff] %v949
  %1014 = vst [vmem:[%s4 + $0xf0] sm:$0xff] %v950
  %1015 = vst [vmem:[%s4 + $0xf8] sm:$0xff] %v951
  %1016 = vst [vmem:[%s4 + $0x100] sm:$0xff] %v952
  %1017 = vst [vmem:[%s4 + $0x108] sm:$0xff] %v953
  %1018 = vst [vmem:[%s4 + $0x110] sm:$0xff] %v954
  %1019 = vst [vmem:[%s4 + $0x118] sm:$0xff] %v955
  %1020 = vst [vmem:[%s4 + $0x120] sm:$0xff] %v956
  %1021 = vst [vmem:[%s4 + $0x128] sm:$0xff] %v957
  %1022 = vst [vmem:[%s4 + $0x130] sm:$0xff] %v958
  %1023 = vst [vmem:[%s4 + $0x138] sm:$0xff] %v959
  %1024 = vst [vmem:[%s4 + $0x140] sm:$0xff] %v960
  %1025 = vst [vmem:[%s4 + $0x148] sm:$0xff] %v961
  %1026 = vst [vmem:[%s4 + $0x150] sm:$0xff] %v962
  %1027 = vst [vmem:[%s4 + $0x158] sm:$0xff] %v963
  %1028 = vst [vmem:[%s4 + $0x160] sm:$0xff] %v964
  %1029 = vst [vmem:[%s4 + $0x168] sm:$0xff] %v965
  %1030 = vst [vmem:[%s4 + $0x170] sm:$0xff] %v966
  %1031 = vst [vmem:[%s4 + $0x178] sm:$0xff] %v967
  %1032 = vst [vmem:[%s4 + $0x180] sm:$0xff] %v968
  %1033 = vst [vmem:[%s4 + $0x188] sm:$0xff] %v969
  %1034 = vst [vmem:[%s4 + $0x190] sm:$0xff] %v970
  %1035 = vst [vmem:[%s4 + $0x198] sm:$0xff] %v971
  %1036 = vst [vmem:[%s4 + $0x1a0] sm:$0xff] %v972
  %1037 = vst [vmem:[%s4 + $0x1a8] sm:$0xff] %v973
  %1038 = vst [vmem:[%s4 + $0x1b0] sm:$0xff] %v974
  %1039 = vst [vmem:[%s4 + $0x1b8] sm:$0xff] %v975
  %1040 = vst [vmem:[%s4 + $0x1c0] sm:$0xff] %v976
  %1041 = vst [vmem:[%s4 + $0x1c8] sm:$0xff] %v977
  %1042 = vst [vmem:[%s4 + $0x1d0] sm:$0xff] %v978
  %1043 = vst [vmem:[%s4 + $0x1d8] sm:$0xff] %v979
  %1044 = vst [vmem:[%s4 + $0x1e0] sm:$0xff] %v980
  %1045 = vst [vmem:[%s4 + $0x1e8] sm:$0xff] %v981
  %1046 = vst [vmem:[%s4 + $0x1f0] sm:$0xff] %v982
  %1047 = vst [vmem:[%s4 + $0x1f8] sm:$0xff] %v983
  // Predicated region
  $region18: #{feat_extraction_forward.16} parent=0 // pred_check
    _
  $region19: #{feat_extraction_forward.16} parent=0 // pred_check_branch
    %1049 = sbr.rel (0) target = $region21
  $region20: #{feat_extraction_forward.16} parent=0 // pred_region
    _
  $region21: #{feat_extraction_forward.16} parent=0 // pred_fallthru
    _
  // Predicated region
  $region22: #{feat_extraction_forward.16} parent=0 // pred_check
    _
  $region23: #{feat_extraction_forward.16} parent=0 // pred_check_branch
    %1051 = sbr.rel (0) target = $region25
  $region24: #{feat_extraction_forward.16} parent=0 // pred_region
    _
  $region25: #{feat_extraction_forward.16} parent=0 // pred_fallthru
    _

// kernel: feat_extraction_forward.19
$region0: #{feat_extraction_forward.19}
  #allocation0 [shape = 'u32[]', space=smem, size = 0x4, offset = 0x4, fixed_abs, tag = 'smem constant byte address 0x4 - core index']
  #allocation1 [shape = 'u32[144,128]{1,0:T(1,128)}', space=vmem, size = 0x12000, scoped, tag = 'internal scratch']
  %s0 = inlined_call_operand.vmem [shape: bf16[32,576], index: 0, kind: input, shape index: {}]
  %s1 = inlined_call_operand.vmem [shape: bf16[576,128], index: 1, kind: input, shape index: {}]
  %s2 = inlined_call_operand.vmem [shape: f32[1,128], index: 2, kind: input, shape index: {}]
  %s3 = inlined_call_operand.vmem [shape: f32[1,128], index: 3, kind: input, shape index: {}]
  %s4 = inlined_call_operand.vmem [shape: f32[32,128], index: 4, kind: output, shape index: {}]
  %s5 = sld [smem:[#allocation0]]
  $region26: #{feat_extraction_forward.19} parent=0
    _
  %s7 = ssub.s32 1, %s5
  %s8 = scalar_select 0, %s7, %s5
  // Predicated region
  $region2: #{feat_extraction_forward.19} parent=0 // pred_check
    _
  $region3: #{feat_extraction_forward.19} parent=0 // pred_check_branch
    %10 = sbr.rel (0) target = $region5
  $region4: #{feat_extraction_forward.19} parent=0 // pred_region
    _
  $region5: #{feat_extraction_forward.19} parent=0 // pred_fallthru
    _
  // Predicated region
  $region6: #{feat_extraction_forward.19} parent=0 // pred_check
    _
  $region7: #{feat_extraction_forward.19} parent=0 // pred_check_branch
    %12 = sbr.rel (0) target = $region9
  $region8: #{feat_extraction_forward.19} parent=0 // pred_region
    _
  $region9: #{feat_extraction_forward.19} parent=0 // pred_fallthru
    _
  // Predicated region
  $region10: #{feat_extraction_forward.19} parent=0 // pred_check
    _
  $region11: #{feat_extraction_forward.19} parent=0 // pred_check_branch
    %14 = sbr.rel (0) target = $region13
  $region12: #{feat_extraction_forward.19} parent=0 // pred_region
    _
  $region13: #{feat_extraction_forward.19} parent=0 // pred_fallthru
    _
  // Predicated region
  $region14: #{feat_extraction_forward.19} parent=0 // pred_check
    _
  $region15: #{feat_extraction_forward.19} parent=0 // pred_check_branch
    %16 = sbr.rel (0) target = $region17
  $region16: #{feat_extraction_forward.19} parent=0 // pred_region
    _
  $region17: #{feat_extraction_forward.19} parent=0 // pred_fallthru
    _
  %v18 = vld [vmem:[%s0] sm:$0xff]
  %v19 = vld [vmem:[%s0 + $0x8] sm:$0xff]
  %v20 = vld [vmem:[%s0 + $0x10] sm:$0xf]
  %v21 = vld [vmem:[%s0 + $0x14] sm:$0xff]
  %v22 = vld [vmem:[%s0 + $0x1c] sm:$0xff]
  %v23 = vld [vmem:[%s0 + $0x24] sm:$0xf]
  %v24 = vld [vmem:[%s0 + $0x28] sm:$0xff]
  %v25 = vld [vmem:[%s0 + $0x30] sm:$0xff]
  %v26 = vld [vmem:[%s0 + $0x38] sm:$0xf]
  %v27 = vld [vmem:[%s0 + $0x3c] sm:$0xff]
  %v28 = vld [vmem:[%s0 + $0x44] sm:$0xff]
  %v29 = vld [vmem:[%s0 + $0x4c] sm:$0xf]
  %v30 = vld [vmem:[%s1] sm:$0xf]
  %v31 = vld [vmem:[%s1 + $0x4] sm:$0xf]
  %v32 = vld [vmem:[%s1 + $0x8] sm:$0xf]
  %v33 = vld [vmem:[%s1 + $0xc] sm:$0xf]
  %v34 = vld [vmem:[%s1 + $0x10] sm:$0xf]
  %v35 = vld [vmem:[%s1 + $0x14] sm:$0xf]
  %v36 = vld [vmem:[%s1 + $0x18] sm:$0xf]
  %v37 = vld [vmem:[%s1 + $0x1c] sm:$0xf]
  %v38 = vld [vmem:[%s1 + $0x20] sm:$0xf]
  %v39 = vld [vmem:[%s1 + $0x24] sm:$0xf]
  %v40 = vld [vmem:[%s1 + $0x28] sm:$0xf]
  %v41 = vld [vmem:[%s1 + $0x2c] sm:$0xf]
  %v42 = vld [vmem:[%s1 + $0x30] sm:$0xf]
  %v43 = vld [vmem:[%s1 + $0x34] sm:$0xf]
  %v44 = vld [vmem:[%s1 + $0x38] sm:$0xf]
  %v45 = vld [vmem:[%s1 + $0x3c] sm:$0xf]
  %v46 = vld [vmem:[%s1 + $0x40] sm:$0xf]
  %v47 = vld [vmem:[%s1 + $0x44] sm:$0xf]
  %v48 = vld [vmem:[%s1 + $0x48] sm:$0xf]
  %v49 = vld [vmem:[%s1 + $0x4c] sm:$0xf]
  %v50 = vld [vmem:[%s1 + $0x50] sm:$0xf]
  %v51 = vld [vmem:[%s1 + $0x54] sm:$0xf]
  %v52 = vld [vmem:[%s1 + $0x58] sm:$0xf]
  %v53 = vld [vmem:[%s1 + $0x5c] sm:$0xf]
  %v54 = vld [vmem:[%s1 + $0x60] sm:$0xf]
  %v55 = vld [vmem:[%s1 + $0x64] sm:$0xf]
  %v56 = vld [vmem:[%s1 + $0x68] sm:$0xf]
  %v57 = vld [vmem:[%s1 + $0x6c] sm:$0xf]
  %v58 = vld [vmem:[%s1 + $0x70] sm:$0xf]
  %v59 = vld [vmem:[%s1 + $0x74] sm:$0xf]
  %v60 = vld [vmem:[%s1 + $0x78] sm:$0xf]
  %v61 = vld [vmem:[%s1 + $0x7c] sm:$0xf]
  %v62 = vld [vmem:[%s1 + $0x80] sm:$0xf]
  %v63 = vld [vmem:[%s1 + $0x84] sm:$0xf]
  %v64 = vld [vmem:[%s1 + $0x88] sm:$0xf]
  %v65 = vld [vmem:[%s1 + $0x8c] sm:$0xf]
  %v66 = vld [vmem:[%s1 + $0x90] sm:$0xf]
  %v67 = vld [vmem:[%s1 + $0x94] sm:$0xf]
  %v68 = vld [vmem:[%s1 + $0x98] sm:$0xf]
  %v69 = vld [vmem:[%s1 + $0x9c] sm:$0xf]
  %v70 = vld [vmem:[%s1 + $0xa0] sm:$0xf]
  %v71 = vld [vmem:[%s1 + $0xa4] sm:$0xf]
  %v72 = vld [vmem:[%s1 + $0xa8] sm:$0xf]
  %v73 = vld [vmem:[%s1 + $0xac] sm:$0xf]
  %v74 = vld [vmem:[%s1 + $0xb0] sm:$0xf]
  %v75 = vld [vmem:[%s1 + $0xb4] sm:$0xf]
  %v76 = vld [vmem:[%s1 + $0xb8] sm:$0xf]
  %v77 = vld [vmem:[%s1 + $0xbc] sm:$0xf]
  %v78 = vld [vmem:[%s1 + $0xc0] sm:$0xf]
  %v79 = vld [vmem:[%s1 + $0xc4] sm:$0xf]
  %v80 = vld [vmem:[%s1 + $0xc8] sm:$0xf]
  %v81 = vld [vmem:[%s1 + $0xcc] sm:$0xf]
  %v82 = vld [vmem:[%s1 + $0xd0] sm:$0xf]
  %v83 = vld [vmem:[%s1 + $0xd4] sm:$0xf]
  %v84 = vld [vmem:[%s1 + $0xd8] sm:$0xf]
  %v85 = vld [vmem:[%s1 + $0xdc] sm:$0xf]
  %v86 = vld [vmem:[%s1 + $0xe0] sm:$0xf]
  %v87 = vld [vmem:[%s1 + $0xe4] sm:$0xf]
  %v88 = vld [vmem:[%s1 + $0xe8] sm:$0xf]
  %v89 = vld [vmem:[%s1 + $0xec] sm:$0xf]
  %v90 = vld [vmem:[%s1 + $0xf0] sm:$0xf]
  %v91 = vld [vmem:[%s1 + $0xf4] sm:$0xf]
  %v92 = vld [vmem:[%s1 + $0xf8] sm:$0xf]
  %v93 = vld [vmem:[%s1 + $0xfc] sm:$0xf]
  %v94 = vld [vmem:[%s1 + $0x100] sm:$0xf]
  %v95 = vld [vmem:[%s1 + $0x104] sm:$0xf]
  %v96 = vld [vmem:[%s1 + $0x108] sm:$0xf]
  %v97 = vld [vmem:[%s1 + $0x10c] sm:$0xf]
  %v98 = vld [vmem:[%s1 + $0x110] sm:$0xf]
  %v99 = vld [vmem:[%s1 + $0x114] sm:$0xf]
  %v100 = vld [vmem:[%s1 + $0x118] sm:$0xf]
  %v101 = vld [vmem:[%s1 + $0x11c] sm:$0xf]
  %v114 = vunpack.c.l.b16 %v18
  %v115 = vunpack.c.h.b16 %v18
  %v116 = vunpack.c.l.b16 %v19
  %v117 = vunpack.c.h.b16 %v19
  %v118 = vunpack.c.l.b16 %v20
  %v119 = vunpack.c.l.b16 %v21
  %v120 = vunpack.c.h.b16 %v21
  %v121 = vunpack.c.l.b16 %v22
  %v122 = vunpack.c.h.b16 %v22
  %v123 = vunpack.c.l.b16 %v23
  %v124 = vunpack.c.l.b16 %v24
  %v125 = vunpack.c.h.b16 %v24
  %v126 = vunpack.c.l.b16 %v25
  %v127 = vunpack.c.h.b16 %v25
  %v128 = vunpack.c.l.b16 %v26
  %v129 = vunpack.c.l.b16 %v27
  %v130 = vunpack.c.h.b16 %v27
  %v131 = vunpack.c.l.b16 %v28
  %v132 = vunpack.c.h.b16 %v28
  %v133 = vunpack.c.l.b16 %v29
  %v134 = vpack.c.b16 %v119, %v114
  %v135 = vpack.c.b16 %v120, %v115
  %v136 = vpack.c.b16 %v121, %v116
  %v137 = vpack.c.b16 %v122, %v117
  %v138 = vpack.c.b16 %v123, %v118
  %v139 = vpack.c.b16 %v129, %v124
  %v140 = vpack.c.b16 %v130, %v125
  %v141 = vpack.c.b16 %v131, %v126
  %v142 = vpack.c.b16 %v132, %v127
  %v143 = vpack.c.b16 %v133, %v128
  %v224 = vunpack.c.l.b16 %v30
  %v225 = vunpack.c.l.b16 %v31
  %v226 = vunpack.c.l.b16 %v32
  %v227 = vunpack.c.l.b16 %v33
  %v228 = vunpack.c.l.b16 %v34
  %v229 = vunpack.c.l.b16 %v35
  %v230 = vunpack.c.l.b16 %v36
  %v231 = vunpack.c.l.b16 %v37
  %v232 = vunpack.c.l.b16 %v38
  %v233 = vunpack.c.l.b16 %v39
  %v234 = vunpack.c.l.b16 %v40
  %v235 = vunpack.c.l.b16 %v41
  %v236 = vunpack.c.l.b16 %v42
  %v237 = vunpack.c.l.b16 %v43
  %v238 = vunpack.c.l.b16 %v44
  %v239 = vunpack.c.l.b16 %v45
  %v240 = vunpack.c.l.b16 %v46
  %v241 = vunpack.c.l.b16 %v47
  %v242 = vunpack.c.l.b16 %v48
  %v243 = vunpack.c.l.b16 %v49
  %v244 = vunpack.c.l.b16 %v50
  %v245 = vunpack.c.l.b16 %v51
  %v246 = vunpack.c.l.b16 %v52
  %v247 = vunpack.c.l.b16 %v53
  %v248 = vunpack.c.l.b16 %v54
  %v249 = vunpack.c.l.b16 %v55
  %v250 = vunpack.c.l.b16 %v56
  %v251 = vunpack.c.l.b16 %v57
  %v252 = vunpack.c.l.b16 %v58
  %v253 = vunpack.c.l.b16 %v59
  %v254 = vunpack.c.l.b16 %v60
  %v255 = vunpack.c.l.b16 %v61
  %v256 = vunpack.c.l.b16 %v62
  %v257 = vunpack.c.l.b16 %v63
  %v258 = vunpack.c.l.b16 %v64
  %v259 = vunpack.c.l.b16 %v65
  %v260 = vunpack.c.l.b16 %v66
  %v261 = vunpack.c.l.b16 %v67
  %v262 = vunpack.c.l.b16 %v68
  %v263 = vunpack.c.l.b16 %v69
  %v264 = vunpack.c.l.b16 %v70
  %v265 = vunpack.c.l.b16 %v71
  %v266 = vunpack.c.l.b16 %v72
  %v267 = vunpack.c.l.b16 %v73
  %v268 = vunpack.c.l.b16 %v74
  %v269 = vunpack.c.l.b16 %v75
  %v270 = vunpack.c.l.b16 %v76
  %v271 = vunpack.c.l.b16 %v77
  %v272 = vunpack.c.l.b16 %v78
  %v273 = vunpack.c.l.b16 %v79
  %v274 = vunpack.c.l.b16 %v80
  %v275 = vunpack.c.l.b16 %v81
  %v276 = vunpack.c.l.b16 %v82
  %v277 = vunpack.c.l.b16 %v83
  %v278 = vunpack.c.l.b16 %v84
  %v279 = vunpack.c.l.b16 %v85
  %v280 = vunpack.c.l.b16 %v86
  %v281 = vunpack.c.l.b16 %v87
  %v282 = vunpack.c.l.b16 %v88
  %v283 = vunpack.c.l.b16 %v89
  %v284 = vunpack.c.l.b16 %v90
  %v285 = vunpack.c.l.b16 %v91
  %v286 = vunpack.c.l.b16 %v92
  %v287 = vunpack.c.l.b16 %v93
  %v288 = vunpack.c.l.b16 %v94
  %v289 = vunpack.c.l.b16 %v95
  %v290 = vunpack.c.l.b16 %v96
  %v291 = vunpack.c.l.b16 %v97
  %v292 = vunpack.c.l.b16 %v98
  %v293 = vunpack.c.l.b16 %v99
  %v294 = vunpack.c.l.b16 %v100
  %v295 = vunpack.c.l.b16 %v101
  %v296 = vpack.c.b16 %v225, %v224
  %v297 = vpack.c.b16 %v227, %v226
  %v298 = vpack.c.b16 %v229, %v228
  %v299 = vpack.c.b16 %v231, %v230
  %v300 = vpack.c.b16 %v233, %v232
  %v301 = vpack.c.b16 %v235, %v234
  %v302 = vpack.c.b16 %v237, %v236
  %v303 = vpack.c.b16 %v239, %v238
  %v304 = vpack.c.b16 %v241, %v240
  %v305 = vpack.c.b16 %v243, %v242
  %v306 = vpack.c.b16 %v245, %v244
  %v307 = vpack.c.b16 %v247, %v246
  %v308 = vpack.c.b16 %v249, %v248
  %v309 = vpack.c.b16 %v251, %v250
  %v310 = vpack.c.b16 %v253, %v252
  %v311 = vpack.c.b16 %v255, %v254
  %v312 = vpack.c.b16 %v257, %v256
  %v313 = vpack.c.b16 %v259, %v258
  %v314 = vpack.c.b16 %v261, %v260
  %v315 = vpack.c.b16 %v263, %v262
  %v316 = vpack.c.b16 %v265, %v264
  %v317 = vpack.c.b16 %v267, %v266
  %v318 = vpack.c.b16 %v269, %v268
  %v319 = vpack.c.b16 %v271, %v270
  %v320 = vpack.c.b16 %v273, %v272
  %v321 = vpack.c.b16 %v275, %v274
  %v322 = vpack.c.b16 %v277, %v276
  %v323 = vpack.c.b16 %v279, %v278
  %v324 = vpack.c.b16 %v281, %v280
  %v325 = vpack.c.b16 %v283, %v282
  %v326 = vpack.c.b16 %v285, %v284
  %v327 = vpack.c.b16 %v287, %v286
  %v328 = vpack.c.b16 %v289, %v288
  %v329 = vpack.c.b16 %v291, %v290
  %v330 = vpack.c.b16 %v293, %v292
  %v331 = vpack.c.b16 %v295, %v294
  %vm368 = vcmask 523264
  %v370 = vsel %vm368, %v138, 0
  %v373 = vsel %vm368, %v143, 0
  %375 = vmatprep.subr.bf16.mxu0 0
  %376 = vmatpush1.bf16.msra.mxu0 %v296
  %377 = vmatprep.subr.bf16.mxu0 0
  %378 = vmatpush1.bf16.msra.mxu0 %v297
  %379 = vmatprep.subr.bf16.mxu0 0
  %380 = vmatpush1.bf16.msra.mxu0 %v298
  %381 = vmatprep.subr.bf16.mxu0 0
  %382 = vmatpush1.bf16.msra.mxu0 %v299
  %383 = vmatprep.subr.bf16.mxu0 0
  %384 = vmatpush1.bf16.msra.mxu0 %v300
  %385 = vmatprep.subr.bf16.mxu0 0
  %386 = vmatpush1.bf16.msra.mxu0 %v301
  %387 = vmatprep.subr.bf16.mxu0 0
  %388 = vmatpush1.bf16.msra.mxu0 %v302
  %389 = vmatprep.subr.bf16.mxu0 0
  %390 = vmatpush1.bf16.msra.mxu0 %v303
  %391 = vmatprep.subr.bf16.mxu0 0
  %392 = vmatpush1.bf16.msra.mxu0 %v304
  %393 = vmatprep.subr.bf16.mxu0 0
  %394 = vmatpush1.bf16.msra.mxu0 %v305
  %395 = vmatprep.subr.bf16.mxu0 0
  %396 = vmatpush1.bf16.msra.mxu0 %v306
  %397 = vmatprep.subr.bf16.mxu0 0
  %398 = vmatpush1.bf16.msra.mxu0 %v307
  %399 = vmatprep.subr.bf16.mxu0 0
  %400 = vmatpush1.bf16.msra.mxu0 %v308
  %401 = vmatprep.subr.bf16.mxu0 0
  %402 = vmatpush1.bf16.msra.mxu0 %v309
  %403 = vmatprep.subr.bf16.mxu0 0
  %404 = vmatpush1.bf16.msra.mxu0 %v310
  %405 = vmatprep.subr.bf16.mxu0 0
  %406 = vmatpush1.bf16.msra.mxu0 %v311
  %407 = vmatprep.mubr.bf16.mxu0 %v135
  %408 = vmatmul.mubr.bf16.gmra.mrb[0].mxu0 %v134
  %v409 = vpop.f32.mrb[0].mxu0
  %v410 = vadd.f32 0.0, %v409
  %v411 = vpop.f32.mrb[0].mxu0
  %v412 = vpop.f32.mrb[0].mxu0
  %v413 = vadd.f32 0.0, %v412
  %v414 = vpop.f32.mrb[0].mxu0
  %415 = vmatprep.mubr.bf16.mxu0 %v140
  %416 = vmatmul.mubr.bf16.gmra.mrb[0].mxu0 %v139
  %v417 = vpop.f32.mrb[0].mxu0
  %v418 = vadd.f32 0.0, %v417
  %v419 = vpop.f32.mrb[0].mxu0
  %v420 = vpop.f32.mrb[0].mxu0
  %v421 = vadd.f32 0.0, %v420
  %v422 = vpop.f32.mrb[0].mxu0
  %423 = vdwg.mxu0
  %424 = vmatprep.subr.bf16.mxu0 0
  %425 = vmatpush1.bf16.msra.mxu0 %v312
  %426 = vmatprep.subr.bf16.mxu0 0
  %427 = vmatpush1.bf16.msra.mxu0 %v313
  %428 = vmatprep.subr.bf16.mxu0 0
  %429 = vmatpush1.bf16.msra.mxu0 %v314
  %430 = vmatprep.subr.bf16.mxu0 0
  %431 = vmatpush1.bf16.msra.mxu0 %v315
  %432 = vmatprep.subr.bf16.mxu0 0
  %433 = vmatpush1.bf16.msra.mxu0 %v316
  %434 = vmatprep.subr.bf16.mxu0 0
  %435 = vmatpush1.bf16.msra.mxu0 %v317
  %436 = vmatprep.subr.bf16.mxu0 0
  %437 = vmatpush1.bf16.msra.mxu0 %v318
  %438 = vmatprep.subr.bf16.mxu0 0
  %439 = vmatpush1.bf16.msra.mxu0 %v319
  %440 = vmatprep.subr.bf16.mxu0 0
  %441 = vmatpush1.bf16.msra.mxu0 %v320
  %442 = vmatprep.subr.bf16.mxu0 0
  %443 = vmatpush1.bf16.msra.mxu0 %v321
  %444 = vmatprep.subr.bf16.mxu0 0
  %445 = vmatpush1.bf16.msra.mxu0 %v322
  %446 = vmatprep.subr.bf16.mxu0 0
  %447 = vmatpush1.bf16.msra.mxu0 %v323
  %448 = vmatprep.subr.bf16.mxu0 0
  %449 = vmatpush1.bf16.msra.mxu0 %v324
  %450 = vmatprep.subr.bf16.mxu0 0
  %451 = vmatpush1.bf16.msra.mxu0 %v325
  %452 = vmatprep.subr.bf16.mxu0 0
  %453 = vmatpush1.bf16.msra.mxu0 %v326
  %454 = vmatprep.subr.bf16.mxu0 0
  %455 = vmatpush1.bf16.msra.mxu0 %v327
  %456 = vmatprep.mubr.bf16.mxu0 %v137
  %457 = vmatmul.mubr.bf16.gmra.mrb[0].mxu0 %v136
  %v458 = vpop.f32.mrb[0].mxu0
  %v459 = vadd.f32 %v410, %v458
  %v460 = vpop.f32.mrb[0].mxu0
  %v461 = vpop.f32.mrb[0].mxu0
  %v462 = vadd.f32 %v413, %v461
  %v463 = vpop.f32.mrb[0].mxu0
  %464 = vmatprep.mubr.bf16.mxu0 %v142
  %465 = vmatmul.mubr.bf16.gmra.mrb[0].mxu0 %v141
  %v466 = vpop.f32.mrb[0].mxu0
  %v467 = vadd.f32 %v418, %v466
  %v468 = vpop.f32.mrb[0].mxu0
  %v469 = vpop.f32.mrb[0].mxu0
  %v470 = vadd.f32 %v421, %v469
  %v471 = vpop.f32.mrb[0].mxu0
  %472 = vdwg.mxu0
  %473 = vmatprep.subr.bf16.mxu0 0
  %474 = vmatpush1.bf16.msra.mxu0 %v328
  %475 = vmatprep.subr.bf16.mxu0 0
  %476 = vmatpush1.bf16.msra.mxu0 %v329
  %477 = vmatprep.subr.bf16.mxu0 0
  %478 = vmatpush1.bf16.msra.mxu0 %v330
  %479 = vmatprep.subr.bf16.mxu0 0
  %480 = vmatpush1.bf16.msra.mxu0 %v331
  %481 = vmatprep.subr.bf16.mxu0 0
  %482 = vmatpush1.bf16.msra.mxu0 0
  %483 = vmatprep.subr.bf16.mxu0 0
  %484 = vmatpush1.bf16.msra.mxu0 0
  %485 = vmatprep.subr.bf16.mxu0 0
  %486 = vmatpush1.bf16.msra.mxu0 0
  %487 = vmatprep.subr.bf16.mxu0 0
  %488 = vmatpush1.bf16.msra.mxu0 0
  %489 = vmatprep.subr.bf16.mxu0 0
  %490 = vmatpush1.bf16.msra.mxu0 0
  %491 = vmatprep.subr.bf16.mxu0 0
  %492 = vmatpush1.bf16.msra.mxu0 0
  %493 = vmatprep.subr.bf16.mxu0 0
  %494 = vmatpush1.bf16.msra.mxu0 0
  %495 = vmatprep.subr.bf16.mxu0 0
  %496 = vmatpush1.bf16.msra.mxu0 0
  %497 = vmatprep.subr.bf16.mxu0 0
  %498 = vmatpush1.bf16.msra.mxu0 0
  %499 = vmatprep.subr.bf16.mxu0 0
  %500 = vmatpush1.bf16.msra.mxu0 0
  %501 = vmatprep.subr.bf16.mxu0 0
  %502 = vmatpush1.bf16.msra.mxu0 0
  %503 = vmatprep.subr.bf16.mxu0 0
  %504 = vmatpush1.bf16.msra.mxu0 0
  %505 = vmatprep.mubr.bf16.mxu0 0
  %506 = vmatmul.mubr.bf16.gmra.mrb[0].mxu0 %v370
  %v507 = vpop.f32.mrb[0].mxu0
  %v508 = vadd.f32 %v459, %v507
  %v509 = vpop.f32.mrb[0].mxu0
  %v510 = vpop.f32.mrb[0].mxu0
  %v511 = vadd.f32 %v462, %v510
  %v512 = vpop.f32.mrb[0].mxu0
  %513 = vmatprep.mubr.bf16.mxu0 0
  %514 = vmatmul.mubr.bf16.gmra.mrb[0].mxu0 %v373
  %v515 = vpop.f32.mrb[0].mxu0
  %v516 = vadd.f32 %v467, %v515
  %v517 = vpop.f32.mrb[0].mxu0
  %v518 = vpop.f32.mrb[0].mxu0
  %v519 = vadd.f32 %v470, %v518
  %v520 = vpop.f32.mrb[0].mxu0
  %521 = vdwg.mxu0
  %v522 = vld [vmem:[%s2] sm:$0x1]
  %v524 = vlaneseq
  %v525 = vshrl.u32 %v524, 7
  %v526 = vsub.s32 0, %v525
  %v527 = vrot.slane %v522, %v526
  %v529 = vmul.f32 %v508, %v527
  %v530 = vmul.f32 %v511, %v527
  %v531 = vmul.f32 %v516, %v527
  %v532 = vmul.f32 %v519, %v527
  %v533 = vld [vmem:[%s3] sm:$0x1]
  %v535 = vlaneseq
  %v536 = vshrl.u32 %v535, 7
  %v537 = vsub.s32 0, %v536
  %v538 = vrot.slane %v533, %v537
  %v540 = vadd.f32 %v529, %v538
  %v541 = vadd.f32 %v530, %v538
  %v542 = vadd.f32 %v531, %v538
  %v543 = vadd.f32 %v532, %v538
  %vm544 = vcmp.ge.f32.partialorder %v540, 0.0
  %vm545 = vcmp.ge.f32.partialorder %v541, 0.0
  %vm546 = vcmp.ge.f32.partialorder %v542, 0.0
  %vm547 = vcmp.ge.f32.partialorder %v543, 0.0
  %v548 = vmul.f32 %v540, 0.01
  %v549 = vmul.f32 %v541, 0.01
  %v550 = vmul.f32 %v542, 0.01
  %v551 = vmul.f32 %v543, 0.01
  %v552 = vsel %vm544, %v540, %v548
  %v553 = vsel %vm545, %v541, %v549
  %v554 = vsel %vm546, %v542, %v550
  %v555 = vsel %vm547, %v543, %v551
  %556 = vst [vmem:[%s4] sm:$0xff] %v552
  %557 = vst [vmem:[%s4 + $0x8] sm:$0xff] %v553
  %558 = vst [vmem:[%s4 + $0x10] sm:$0xff] %v554
  %559 = vst [vmem:[%s4 + $0x18] sm:$0xff] %v555
  // Predicated region
  $region18: #{feat_extraction_forward.19} parent=0 // pred_check
    _
  $region19: #{feat_extraction_forward.19} parent=0 // pred_check_branch
    %561 = sbr.rel (0) target = $region21
  $region20: #{feat_extraction_forward.19} parent=0 // pred_region
    _
  $region21: #{feat_extraction_forward.19} parent=0 // pred_fallthru
    _
  // Predicated region
  $region22: #{feat_extraction_forward.19} parent=0 // pred_check
    _
  $region23: #{feat_extraction_forward.19} parent=0 // pred_check_branch
    %563 = sbr.rel (0) target = $region25
  $region24: #{feat_extraction_forward.19} parent=0 // pred_region
    _
  $region25: #{feat_extraction_forward.19} parent=0 // pred_fallthru
    _

// kernel: feat_extraction_forward.21
$region0: #{feat_extraction_forward.21}
  #allocation0 [shape = 'u32[]', space=smem, size = 0x4, offset = 0x4, fixed_abs, tag = 'smem constant byte address 0x4 - core index']
  #allocation1 [shape = 'u32[144,128]{1,0:T(1,128)}', space=vmem, size = 0x12000, scoped, tag = 'internal scratch']
  %s0 = inlined_call_operand.vmem [shape: bf16[8,1152], index: 0, kind: input, shape index: {}]
  %s1 = inlined_call_operand.vmem [shape: bf16[1152,128], index: 1, kind: input, shape index: {}]
  %s2 = inlined_call_operand.vmem [shape: f32[1,128], index: 2, kind: input, shape index: {}]
  %s3 = inlined_call_operand.vmem [shape: f32[1,128], index: 3, kind: input, shape index: {}]
  %s4 = inlined_call_operand.vmem [shape: f32[8,128], index: 4, kind: output, shape index: {}]
  %s5 = sld [smem:[#allocation0]]
  $region26: #{feat_extraction_forward.21} parent=0
    _
  %s7 = ssub.s32 1, %s5
  %s8 = scalar_select 0, %s7, %s5
  // Predicated region
  $region2: #{feat_extraction_forward.21} parent=0 // pred_check
    _
  $region3: #{feat_extraction_forward.21} parent=0 // pred_check_branch
    %10 = sbr.rel (0) target = $region5
  $region4: #{feat_extraction_forward.21} parent=0 // pred_region
    _
  $region5: #{feat_extraction_forward.21} parent=0 // pred_fallthru
    _
  // Predicated region
  $region6: #{feat_extraction_forward.21} parent=0 // pred_check
    _
  $region7: #{feat_extraction_forward.21} parent=0 // pred_check_branch
    %12 = sbr.rel (0) target = $region9
  $region8: #{feat_extraction_forward.21} parent=0 // pred_region
    _
  $region9: #{feat_extraction_forward.21} parent=0 // pred_fallthru
    _
  // Predicated region
  $region10: #{feat_extraction_forward.21} parent=0 // pred_check
    _
  $region11: #{feat_extraction_forward.21} parent=0 // pred_check_branch
    %14 = sbr.rel (0) target = $region13
  $region12: #{feat_extraction_forward.21} parent=0 // pred_region
    _
  $region13: #{feat_extraction_forward.21} parent=0 // pred_fallthru
    _
  // Predicated region
  $region14: #{feat_extraction_forward.21} parent=0 // pred_check
    _
  $region15: #{feat_extraction_forward.21} parent=0 // pred_check_branch
    %16 = sbr.rel (0) target = $region17
  $region16: #{feat_extraction_forward.21} parent=0 // pred_region
    _
  $region17: #{feat_extraction_forward.21} parent=0 // pred_fallthru
    _
  %v18 = vld [vmem:[%s0] sm:$0xff]
  %v19 = vld [vmem:[%s0 + $0x8] sm:$0xff]
  %v20 = vld [vmem:[%s0 + $0x10] sm:$0xff]
  %v21 = vld [vmem:[%s0 + $0x18] sm:$0xff]
  %v22 = vld [vmem:[%s0 + $0x20] sm:$0xf]
  %v23 = vld [vmem:[%s1] sm:$0xf]
  %v24 = vld [vmem:[%s1 + $0x4] sm:$0xf]
  %v25 = vld [vmem:[%s1 + $0x8] sm:$0xf]
  %v26 = vld [vmem:[%s1 + $0xc] sm:$0xf]
  %v27 = vld [vmem:[%s1 + $0x10] sm:$0xf]
  %v28 = vld [vmem:[%s1 + $0x14] sm:$0xf]
  %v29 = vld [vmem:[%s1 + $0x18] sm:$0xf]
  %v30 = vld [vmem:[%s1 + $0x1c] sm:$0xf]
  %v31 = vld [vmem:[%s1 + $0x20] sm:$0xf]
  %v32 = vld [vmem:[%s1 + $0x24] sm:$0xf]
  %v33 = vld [vmem:[%s1 + $0x28] sm:$0xf]
  %v34 = vld [vmem:[%s1 + $0x2c] sm:$0xf]
  %v35 = vld [vmem:[%s1 + $0x30] sm:$0xf]
  %v36 = vld [vmem:[%s1 + $0x34] sm:$0xf]
  %v37 = vld [vmem:[%s1 + $0x38] sm:$0xf]
  %v38 = vld [vmem:[%s1 + $0x3c] sm:$0xf]
  %v39 = vld [vmem:[%s1 + $0x40] sm:$0xf]
  %v40 = vld [vmem:[%s1 + $0x44] sm:$0xf]
  %v41 = vld [vmem:[%s1 + $0x48] sm:$0xf]
  %v42 = vld [vmem:[%s1 + $0x4c] sm:$0xf]
  %v43 = vld [vmem:[%s1 + $0x50] sm:$0xf]
  %v44 = vld [vmem:[%s1 + $0x54] sm:$0xf]
  %v45 = vld [vmem:[%s1 + $0x58] sm:$0xf]
  %v46 = vld [vmem:[%s1 + $0x5c] sm:$0xf]
  %v47 = vld [vmem:[%s1 + $0x60] sm:$0xf]
  %v48 = vld [vmem:[%s1 + $0x64] sm:$0xf]
  %v49 = vld [vmem:[%s1 + $0x68] sm:$0xf]
  %v50 = vld [vmem:[%s1 + $0x6c] sm:$0xf]
  %v51 = vld [vmem:[%s1 + $0x70] sm:$0xf]
  %v52 = vld [vmem:[%s1 + $0x74] sm:$0xf]
  %v53 = vld [vmem:[%s1 + $0x78] sm:$0xf]
  %v54 = vld [vmem:[%s1 + $0x7c] sm:$0xf]
  %v55 = vld [vmem:[%s1 + $0x80] sm:$0xf]
  %v56 = vld [vmem:[%s1 + $0x84] sm:$0xf]
  %v57 = vld [vmem:[%s1 + $0x88] sm:$0xf]
  %v58 = vld [vmem:[%s1 + $0x8c] sm:$0xf]
  %v59 = vld [vmem:[%s1 + $0x90] sm:$0xf]
  %v60 = vld [vmem:[%s1 + $0x94] sm:$0xf]
  %v61 = vld [vmem:[%s1 + $0x98] sm:$0xf]
  %v62 = vld [vmem:[%s1 + $0x9c] sm:$0xf]
  %v63 = vld [vmem:[%s1 + $0xa0] sm:$0xf]
  %v64 = vld [vmem:[%s1 + $0xa4] sm:$0xf]
  %v65 = vld [vmem:[%s1 + $0xa8] sm:$0xf]
  %v66 = vld [vmem:[%s1 + $0xac] sm:$0xf]
  %v67 = vld [vmem:[%s1 + $0xb0] sm:$0xf]
  %v68 = vld [vmem:[%s1 + $0xb4] sm:$0xf]
  %v69 = vld [vmem:[%s1 + $0xb8] sm:$0xf]
  %v70 = vld [vmem:[%s1 + $0xbc] sm:$0xf]
  %v71 = vld [vmem:[%s1 + $0xc0] sm:$0xf]
  %v72 = vld [vmem:[%s1 + $0xc4] sm:$0xf]
  %v73 = vld [vmem:[%s1 + $0xc8] sm:$0xf]
  %v74 = vld [vmem:[%s1 + $0xcc] sm:$0xf]
  %v75 = vld [vmem:[%s1 + $0xd0] sm:$0xf]
  %v76 = vld [vmem:[%s1 + $0xd4] sm:$0xf]
  %v77 = vld [vmem:[%s1 + $0xd8] sm:$0xf]
  %v78 = vld [vmem:[%s1 + $0xdc] sm:$0xf]
  %v79 = vld [vmem:[%s1 + $0xe0] sm:$0xf]
  %v80 = vld [vmem:[%s1 + $0xe4] sm:$0xf]
  %v81 = vld [vmem:[%s1 + $0xe8] sm:$0xf]
  %v82 = vld [vmem:[%s1 + $0xec] sm:$0xf]
  %v83 = vld [vmem:[%s1 + $0xf0] sm:$0xf]
  %v84 = vld [vmem:[%s1 + $0xf4] sm:$0xf]
  %v85 = vld [vmem:[%s1 + $0xf8] sm:$0xf]
  %v86 = vld [vmem:[%s1 + $0xfc] sm:$0xf]
  %v87 = vld [vmem:[%s1 + $0x100] sm:$0xf]
  %v88 = vld [vmem:[%s1 + $0x104] sm:$0xf]
  %v89 = vld [vmem:[%s1 + $0x108] sm:$0xf]
  %v90 = vld [vmem:[%s1 + $0x10c] sm:$0xf]
  %v91 = vld [vmem:[%s1 + $0x110] sm:$0xf]
  %v92 = vld [vmem:[%s1 + $0x114] sm:$0xf]
  %v93 = vld [vmem:[%s1 + $0x118] sm:$0xf]
  %v94 = vld [vmem:[%s1 + $0x11c] sm:$0xf]
  %v95 = vld [vmem:[%s1 + $0x120] sm:$0xf]
  %v96 = vld [vmem:[%s1 + $0x124] sm:$0xf]
  %v97 = vld [vmem:[%s1 + $0x128] sm:$0xf]
  %v98 = vld [vmem:[%s1 + $0x12c] sm:$0xf]
  %v99 = vld [vmem:[%s1 + $0x130] sm:$0xf]
  %v100 = vld [vmem:[%s1 + $0x134] sm:$0xf]
  %v101 = vld [vmem:[%s1 + $0x138] sm:$0xf]
  %v102 = vld [vmem:[%s1 + $0x13c] sm:$0xf]
  %v103 = vld [vmem:[%s1 + $0x140] sm:$0xf]
  %v104 = vld [vmem:[%s1 + $0x144] sm:$0xf]
  %v105 = vld [vmem:[%s1 + $0x148] sm:$0xf]
  %v106 = vld [vmem:[%s1 + $0x14c] sm:$0xf]
  %v107 = vld [vmem:[%s1 + $0x150] sm:$0xf]
  %v108 = vld [vmem:[%s1 + $0x154] sm:$0xf]
  %v109 = vld [vmem:[%s1 + $0x158] sm:$0xf]
  %v110 = vld [vmem:[%s1 + $0x15c] sm:$0xf]
  %v111 = vld [vmem:[%s1 + $0x160] sm:$0xf]
  %v112 = vld [vmem:[%s1 + $0x164] sm:$0xf]
  %v113 = vld [vmem:[%s1 + $0x168] sm:$0xf]
  %v114 = vld [vmem:[%s1 + $0x16c] sm:$0xf]
  %v115 = vld [vmem:[%s1 + $0x170] sm:$0xf]
  %v116 = vld [vmem:[%s1 + $0x174] sm:$0xf]
  %v117 = vld [vmem:[%s1 + $0x178] sm:$0xf]
  %v118 = vld [vmem:[%s1 + $0x17c] sm:$0xf]
  %v119 = vld [vmem:[%s1 + $0x180] sm:$0xf]
  %v120 = vld [vmem:[%s1 + $0x184] sm:$0xf]
  %v121 = vld [vmem:[%s1 + $0x188] sm:$0xf]
  %v122 = vld [vmem:[%s1 + $0x18c] sm:$0xf]
  %v123 = vld [vmem:[%s1 + $0x190] sm:$0xf]
  %v124 = vld [vmem:[%s1 + $0x194] sm:$0xf]
  %v125 = vld [vmem:[%s1 + $0x198] sm:$0xf]
  %v126 = vld [vmem:[%s1 + $0x19c] sm:$0xf]
  %v127 = vld [vmem:[%s1 + $0x1a0] sm:$0xf]
  %v128 = vld [vmem:[%s1 + $0x1a4] sm:$0xf]
  %v129 = vld [vmem:[%s1 + $0x1a8] sm:$0xf]
  %v130 = vld [vmem:[%s1 + $0x1ac] sm:$0xf]
  %v131 = vld [vmem:[%s1 + $0x1b0] sm:$0xf]
  %v132 = vld [vmem:[%s1 + $0x1b4] sm:$0xf]
  %v133 = vld [vmem:[%s1 + $0x1b8] sm:$0xf]
  %v134 = vld [vmem:[%s1 + $0x1bc] sm:$0xf]
  %v135 = vld [vmem:[%s1 + $0x1c0] sm:$0xf]
  %v136 = vld [vmem:[%s1 + $0x1c4] sm:$0xf]
  %v137 = vld [vmem:[%s1 + $0x1c8] sm:$0xf]
  %v138 = vld [vmem:[%s1 + $0x1cc] sm:$0xf]
  %v139 = vld [vmem:[%s1 + $0x1d0] sm:$0xf]
  %v140 = vld [vmem:[%s1 + $0x1d4] sm:$0xf]
  %v141 = vld [vmem:[%s1 + $0x1d8] sm:$0xf]
  %v142 = vld [vmem:[%s1 + $0x1dc] sm:$0xf]
  %v143 = vld [vmem:[%s1 + $0x1e0] sm:$0xf]
  %v144 = vld [vmem:[%s1 + $0x1e4] sm:$0xf]
  %v145 = vld [vmem:[%s1 + $0x1e8] sm:$0xf]
  %v146 = vld [vmem:[%s1 + $0x1ec] sm:$0xf]
  %v147 = vld [vmem:[%s1 + $0x1f0] sm:$0xf]
  %v148 = vld [vmem:[%s1 + $0x1f4] sm:$0xf]
  %v149 = vld [vmem:[%s1 + $0x1f8] sm:$0xf]
  %v150 = vld [vmem:[%s1 + $0x1fc] sm:$0xf]
  %v151 = vld [vmem:[%s1 + $0x200] sm:$0xf]
  %v152 = vld [vmem:[%s1 + $0x204] sm:$0xf]
  %v153 = vld [vmem:[%s1 + $0x208] sm:$0xf]
  %v154 = vld [vmem:[%s1 + $0x20c] sm:$0xf]
  %v155 = vld [vmem:[%s1 + $0x210] sm:$0xf]
  %v156 = vld [vmem:[%s1 + $0x214] sm:$0xf]
  %v157 = vld [vmem:[%s1 + $0x218] sm:$0xf]
  %v158 = vld [vmem:[%s1 + $0x21c] sm:$0xf]
  %v159 = vld [vmem:[%s1 + $0x220] sm:$0xf]
  %v160 = vld [vmem:[%s1 + $0x224] sm:$0xf]
  %v161 = vld [vmem:[%s1 + $0x228] sm:$0xf]
  %v162 = vld [vmem:[%s1 + $0x22c] sm:$0xf]
  %v163 = vld [vmem:[%s1 + $0x230] sm:$0xf]
  %v164 = vld [vmem:[%s1 + $0x234] sm:$0xf]
  %v165 = vld [vmem:[%s1 + $0x238] sm:$0xf]
  %v166 = vld [vmem:[%s1 + $0x23c] sm:$0xf]
  %v172 = vunpack.c.l.b16 %v18
  %v173 = vunpack.c.h.b16 %v18
  %v174 = vunpack.c.l.b16 %v19
  %v175 = vunpack.c.h.b16 %v19
  %v176 = vunpack.c.l.b16 %v20
  %v177 = vunpack.c.h.b16 %v20
  %v178 = vunpack.c.l.b16 %v21
  %v179 = vunpack.c.h.b16 %v21
  %v180 = vunpack.c.l.b16 %v22
  %v181 = vpack.c.b16 %v172, %v172
  %v182 = vpack.c.b16 %v173, %v173
  %v183 = vpack.c.b16 %v174, %v174
  %v184 = vpack.c.b16 %v175, %v175
  %v185 = vpack.c.b16 %v176, %v176
  %v186 = vpack.c.b16 %v177, %v177
  %v187 = vpack.c.b16 %v178, %v178
  %v188 = vpack.c.b16 %v179, %v179
  %v189 = vpack.c.b16 %v180, %v180
  %v343 = vunpack.c.l.b16 %v23
  %v344 = vunpack.c.l.b16 %v24
  %v345 = vunpack.c.l.b16 %v25
  %v346 = vunpack.c.l.b16 %v26
  %v347 = vunpack.c.l.b16 %v27
  %v348 = vunpack.c.l.b16 %v28
  %v349 = vunpack.c.l.b16 %v29
  %v350 = vunpack.c.l.b16 %v30
  %v351 = vunpack.c.l.b16 %v31
  %v352 = vunpack.c.l.b16 %v32
  %v353 = vunpack.c.l.b16 %v33
  %v354 = vunpack.c.l.b16 %v34
  %v355 = vunpack.c.l.b16 %v35
  %v356 = vunpack.c.l.b16 %v36
  %v357 = vunpack.c.l.b16 %v37
  %v358 = vunpack.c.l.b16 %v38
  %v359 = vunpack.c.l.b16 %v39
  %v360 = vunpack.c.l.b16 %v40
  %v361 = vunpack.c.l.b16 %v41
  %v362 = vunpack.c.l.b16 %v42
  %v363 = vunpack.c.l.b16 %v43
  %v364 = vunpack.c.l.b16 %v44
  %v365 = vunpack.c.l.b16 %v45
  %v366 = vunpack.c.l.b16 %v46
  %v367 = vunpack.c.l.b16 %v47
  %v368 = vunpack.c.l.b16 %v48
  %v369 = vunpack.c.l.b16 %v49
  %v370 = vunpack.c.l.b16 %v50
  %v371 = vunpack.c.l.b16 %v51
  %v372 = vunpack.c.l.b16 %v52
  %v373 = vunpack.c.l.b16 %v53
  %v374 = vunpack.c.l.b16 %v54
  %v375 = vunpack.c.l.b16 %v55
  %v376 = vunpack.c.l.b16 %v56
  %v377 = vunpack.c.l.b16 %v57
  %v378 = vunpack.c.l.b16 %v58
  %v379 = vunpack.c.l.b16 %v59
  %v380 = vunpack.c.l.b16 %v60
  %v381 = vunpack.c.l.b16 %v61
  %v382 = vunpack.c.l.b16 %v62
  %v383 = vunpack.c.l.b16 %v63
  %v384 = vunpack.c.l.b16 %v64
  %v385 = vunpack.c.l.b16 %v65
  %v386 = vunpack.c.l.b16 %v66
  %v387 = vunpack.c.l.b16 %v67
  %v388 = vunpack.c.l.b16 %v68
  %v389 = vunpack.c.l.b16 %v69
  %v390 = vunpack.c.l.b16 %v70
  %v391 = vunpack.c.l.b16 %v71
  %v392 = vunpack.c.l.b16 %v72
  %v393 = vunpack.c.l.b16 %v73
  %v394 = vunpack.c.l.b16 %v74
  %v395 = vunpack.c.l.b16 %v75
  %v396 = vunpack.c.l.b16 %v76
  %v397 = vunpack.c.l.b16 %v77
  %v398 = vunpack.c.l.b16 %v78
  %v399 = vunpack.c.l.b16 %v79
  %v400 = vunpack.c.l.b16 %v80
  %v401 = vunpack.c.l.b16 %v81
  %v402 = vunpack.c.l.b16 %v82
  %v403 = vunpack.c.l.b16 %v83
  %v404 = vunpack.c.l.b16 %v84
  %v405 = vunpack.c.l.b16 %v85
  %v406 = vunpack.c.l.b16 %v86
  %v407 = vunpack.c.l.b16 %v87
  %v408 = vunpack.c.l.b16 %v88
  %v409 = vunpack.c.l.b16 %v89
  %v410 = vunpack.c.l.b16 %v90
  %v411 = vunpack.c.l.b16 %v91
  %v412 = vunpack.c.l.b16 %v92
  %v413 = vunpack.c.l.b16 %v93
  %v414 = vunpack.c.l.b16 %v94
  %v415 = vunpack.c.l.b16 %v95
  %v416 = vunpack.c.l.b16 %v96
  %v417 = vunpack.c.l.b16 %v97
  %v418 = vunpack.c.l.b16 %v98
  %v419 = vunpack.c.l.b16 %v99
  %v420 = vunpack.c.l.b16 %v100
  %v421 = vunpack.c.l.b16 %v101
  %v422 = vunpack.c.l.b16 %v102
  %v423 = vunpack.c.l.b16 %v103
  %v424 = vunpack.c.l.b16 %v104
  %v425 = vunpack.c.l.b16 %v105
  %v426 = vunpack.c.l.b16 %v106
  %v427 = vunpack.c.l.b16 %v107
  %v428 = vunpack.c.l.b16 %v108
  %v429 = vunpack.c.l.b16 %v109
  %v430 = vunpack.c.l.b16 %v110
  %v431 = vunpack.c.l.b16 %v111
  %v432 = vunpack.c.l.b16 %v112
  %v433 = vunpack.c.l.b16 %v113
  %v434 = vunpack.c.l.b16 %v114
  %v435 = vunpack.c.l.b16 %v115
  %v436 = vunpack.c.l.b16 %v116
  %v437 = vunpack.c.l.b16 %v117
  %v438 = vunpack.c.l.b16 %v118
  %v439 = vunpack.c.l.b16 %v119
  %v440 = vunpack.c.l.b16 %v120
  %v441 = vunpack.c.l.b16 %v121
  %v442 = vunpack.c.l.b16 %v122
  %v443 = vunpack.c.l.b16 %v123
  %v444 = vunpack.c.l.b16 %v124
  %v445 = vunpack.c.l.b16 %v125
  %v446 = vunpack.c.l.b16 %v126
  %v447 = vunpack.c.l.b16 %v127
  %v448 = vunpack.c.l.b16 %v128
  %v449 = vunpack.c.l.b16 %v129
  %v450 = vunpack.c.l.b16 %v130
  %v451 = vunpack.c.l.b16 %v131
  %v452 = vunpack.c.l.b16 %v132
  %v453 = vunpack.c.l.b16 %v133
  %v454 = vunpack.c.l.b16 %v134
  %v455 = vunpack.c.l.b16 %v135
  %v456 = vunpack.c.l.b16 %v136
  %v457 = vunpack.c.l.b16 %v137
  %v458 = vunpack.c.l.b16 %v138
  %v459 = vunpack.c.l.b16 %v139
  %v460 = vunpack.c.l.b16 %v140
  %v461 = vunpack.c.l.b16 %v141
  %v462 = vunpack.c.l.b16 %v142
  %v463 = vunpack.c.l.b16 %v143
  %v464 = vunpack.c.l.b16 %v144
  %v465 = vunpack.c.l.b16 %v145
  %v466 = vunpack.c.l.b16 %v146
  %v467 = vunpack.c.l.b16 %v147
  %v468 = vunpack.c.l.b16 %v148
  %v469 = vunpack.c.l.b16 %v149
  %v470 = vunpack.c.l.b16 %v150
  %v471 = vunpack.c.l.b16 %v151
  %v472 = vunpack.c.l.b16 %v152
  %v473 = vunpack.c.l.b16 %v153
  %v474 = vunpack.c.l.b16 %v154
  %v475 = vunpack.c.l.b16 %v155
  %v476 = vunpack.c.l.b16 %v156
  %v477 = vunpack.c.l.b16 %v157
  %v478 = vunpack.c.l.b16 %v158
  %v479 = vunpack.c.l.b16 %v159
  %v480 = vunpack.c.l.b16 %v160
  %v481 = vunpack.c.l.b16 %v161
  %v482 = vunpack.c.l.b16 %v162
  %v483 = vunpack.c.l.b16 %v163
  %v484 = vunpack.c.l.b16 %v164
  %v485 = vunpack.c.l.b16 %v165
  %v486 = vunpack.c.l.b16 %v166
  %v487 = vpack.c.b16 %v344, %v343
  %v488 = vpack.c.b16 %v346, %v345
  %v489 = vpack.c.b16 %v348, %v347
  %v490 = vpack.c.b16 %v350, %v349
  %v491 = vpack.c.b16 %v352, %v351
  %v492 = vpack.c.b16 %v354, %v353
  %v493 = vpack.c.b16 %v356, %v355
  %v494 = vpack.c.b16 %v358, %v357
  %v495 = vpack.c.b16 %v360, %v359
  %v496 = vpack.c.b16 %v362, %v361
  %v497 = vpack.c.b16 %v364, %v363
  %v498 = vpack.c.b16 %v366, %v365
  %v499 = vpack.c.b16 %v368, %v367
  %v500 = vpack.c.b16 %v370, %v369
  %v501 = vpack.c.b16 %v372, %v371
  %v502 = vpack.c.b16 %v374, %v373
  %v503 = vpack.c.b16 %v376, %v375
  %v504 = vpack.c.b16 %v378, %v377
  %v505 = vpack.c.b16 %v380, %v379
  %v506 = vpack.c.b16 %v382, %v381
  %v507 = vpack.c.b16 %v384, %v383
  %v508 = vpack.c.b16 %v386, %v385
  %v509 = vpack.c.b16 %v388, %v387
  %v510 = vpack.c.b16 %v390, %v389
  %v511 = vpack.c.b16 %v392, %v391
  %v512 = vpack.c.b16 %v394, %v393
  %v513 = vpack.c.b16 %v396, %v395
  %v514 = vpack.c.b16 %v398, %v397
  %v515 = vpack.c.b16 %v400, %v399
  %v516 = vpack.c.b16 %v402, %v401
  %v517 = vpack.c.b16 %v404, %v403
  %v518 = vpack.c.b16 %v406, %v405
  %v519 = vpack.c.b16 %v408, %v407
  %v520 = vpack.c.b16 %v410, %v409
  %v521 = vpack.c.b16 %v412, %v411
  %v522 = vpack.c.b16 %v414, %v413
  %v523 = vpack.c.b16 %v416, %v415
  %v524 = vpack.c.b16 %v418, %v417
  %v525 = vpack.c.b16 %v420, %v419
  %v526 = vpack.c.b16 %v422, %v421
  %v527 = vpack.c.b16 %v424, %v423
  %v528 = vpack.c.b16 %v426, %v425
  %v529 = vpack.c.b16 %v428, %v427
  %v530 = vpack.c.b16 %v430, %v429
  %v531 = vpack.c.b16 %v432, %v431
  %v532 = vpack.c.b16 %v434, %v433
  %v533 = vpack.c.b16 %v436, %v435
  %v534 = vpack.c.b16 %v438, %v437
  %v535 = vpack.c.b16 %v440, %v439
  %v536 = vpack.c.b16 %v442, %v441
  %v537 = vpack.c.b16 %v444, %v443
  %v538 = vpack.c.b16 %v446, %v445
  %v539 = vpack.c.b16 %v448, %v447
  %v540 = vpack.c.b16 %v450, %v449
  %v541 = vpack.c.b16 %v452, %v451
  %v542 = vpack.c.b16 %v454, %v453
  %v543 = vpack.c.b16 %v456, %v455
  %v544 = vpack.c.b16 %v458, %v457
  %v545 = vpack.c.b16 %v460, %v459
  %v546 = vpack.c.b16 %v462, %v461
  %v547 = vpack.c.b16 %v464, %v463
  %v548 = vpack.c.b16 %v466, %v465
  %v549 = vpack.c.b16 %v468, %v467
  %v550 = vpack.c.b16 %v470, %v469
  %v551 = vpack.c.b16 %v472, %v471
  %v552 = vpack.c.b16 %v474, %v473
  %v553 = vpack.c.b16 %v476, %v475
  %v554 = vpack.c.b16 %v478, %v477
  %v555 = vpack.c.b16 %v480, %v479
  %v556 = vpack.c.b16 %v482, %v481
  %v557 = vpack.c.b16 %v484, %v483
  %v558 = vpack.c.b16 %v486, %v485
  %631 = vmatprep.subr.bf16.mxu0 0
  %632 = vmatpush1.bf16.msra.mxu0 %v487
  %633 = vmatprep.subr.bf16.mxu0 0
  %634 = vmatpush1.bf16.msra.mxu0 %v488
  %635 = vmatprep.subr.bf16.mxu0 0
  %636 = vmatpush1.bf16.msra.mxu0 %v489
  %637 = vmatprep.subr.bf16.mxu0 0
  %638 = vmatpush1.bf16.msra.mxu0 %v490
  %639 = vmatprep.subr.bf16.mxu0 0
  %640 = vmatpush1.bf16.msra.mxu0 %v491
  %641 = vmatprep.subr.bf16.mxu0 0
  %642 = vmatpush1.bf16.msra.mxu0 %v492
  %643 = vmatprep.subr.bf16.mxu0 0
  %644 = vmatpush1.bf16.msra.mxu0 %v493
  %645 = vmatprep.subr.bf16.mxu0 0
  %646 = vmatpush1.bf16.msra.mxu0 %v494
  %647 = vmatprep.subr.bf16.mxu0 0
  %648 = vmatpush1.bf16.msra.mxu0 %v495
  %649 = vmatprep.subr.bf16.mxu0 0
  %650 = vmatpush1.bf16.msra.mxu0 %v496
  %651 = vmatprep.subr.bf16.mxu0 0
  %652 = vmatpush1.bf16.msra.mxu0 %v497
  %653 = vmatprep.subr.bf16.mxu0 0
  %654 = vmatpush1.bf16.msra.mxu0 %v498
  %655 = vmatprep.subr.bf16.mxu0 0
  %656 = vmatpush1.bf16.msra.mxu0 %v499
  %657 = vmatprep.subr.bf16.mxu0 0
  %658 = vmatpush1.bf16.msra.mxu0 %v500
  %659 = vmatprep.subr.bf16.mxu0 0
  %660 = vmatpush1.bf16.msra.mxu0 %v501
  %661 = vmatprep.subr.bf16.mxu0 0
  %662 = vmatpush1.bf16.msra.mxu0 %v502
  %663 = vmatprep.mubr.bf16.mxu0 %v182
  %664 = vmatmul.mubr.bf16.gmra.mrb[0].mxu0 %v181
  %v665 = vpop.f32.mrb[0].mxu0
  %v666 = vadd.f32 0.0, %v665
  %v667 = vpop.f32.mrb[0].mxu0
  %v668 = vpop.f32.mrb[0].mxu0
  %v669 = vpop.f32.mrb[0].mxu0
  %670 = vdwg.mxu0
  %671 = vmatprep.subr.bf16.mxu0 0
  %672 = vmatpush1.bf16.msra.mxu0 %v503
  %673 = vmatprep.subr.bf16.mxu0 0
  %674 = vmatpush1.bf16.msra.mxu0 %v504
  %675 = vmatprep.subr.bf16.mxu0 0
  %676 = vmatpush1.bf16.msra.mxu0 %v505
  %677 = vmatprep.subr.bf16.mxu0 0
  %678 = vmatpush1.bf16.msra.mxu0 %v506
  %679 = vmatprep.subr.bf16.mxu0 0
  %680 = vmatpush1.bf16.msra.mxu0 %v507
  %681 = vmatprep.subr.bf16.mxu0 0
  %682 = vmatpush1.bf16.msra.mxu0 %v508
  %683 = vmatprep.subr.bf16.mxu0 0
  %684 = vmatpush1.bf16.msra.mxu0 %v509
  %685 = vmatprep.subr.bf16.mxu0 0
  %686 = vmatpush1.bf16.msra.mxu0 %v510
  %687 = vmatprep.subr.bf16.mxu0 0
  %688 = vmatpush1.bf16.msra.mxu0 %v511
  %689 = vmatprep.subr.bf16.mxu0 0
  %690 = vmatpush1.bf16.msra.mxu0 %v512
  %691 = vmatprep.subr.bf16.mxu0 0
  %692 = vmatpush1.bf16.msra.mxu0 %v513
  %693 = vmatprep.subr.bf16.mxu0 0
  %694 = vmatpush1.bf16.msra.mxu0 %v514
  %695 = vmatprep.subr.bf16.mxu0 0
  %696 = vmatpush1.bf16.msra.mxu0 %v515
  %697 = vmatprep.subr.bf16.mxu0 0
  %698 = vmatpush1.bf16.msra.mxu0 %v516
  %699 = vmatprep.subr.bf16.mxu0 0
  %700 = vmatpush1.bf16.msra.mxu0 %v517
  %701 = vmatprep.subr.bf16.mxu0 0
  %702 = vmatpush1.bf16.msra.mxu0 %v518
  %703 = vmatprep.mubr.bf16.mxu0 %v184
  %704 = vmatmul.mubr.bf16.gmra.mrb[0].mxu0 %v183
  %v705 = vpop.f32.mrb[0].mxu0
  %v706 = vadd.f32 %v666, %v705
  %v707 = vpop.f32.mrb[0].mxu0
  %v708 = vpop.f32.mrb[0].mxu0
  %v709 = vpop.f32.mrb[0].mxu0
  %710 = vdwg.mxu0
  %711 = vmatprep.subr.bf16.mxu0 0
  %712 = vmatpush1.bf16.msra.mxu0 %v519
  %713 = vmatprep.subr.bf16.mxu0 0
  %714 = vmatpush1.bf16.msra.mxu0 %v520
  %715 = vmatprep.subr.bf16.mxu0 0
  %716 = vmatpush1.bf16.msra.mxu0 %v521
  %717 = vmatprep.subr.bf16.mxu0 0
  %718 = vmatpush1.bf16.msra.mxu0 %v522
  %719 = vmatprep.subr.bf16.mxu0 0
  %720 = vmatpush1.bf16.msra.mxu0 %v523
  %721 = vmatprep.subr.bf16.mxu0 0
  %722 = vmatpush1.bf16.msra.mxu0 %v524
  %723 = vmatprep.subr.bf16.mxu0 0
  %724 = vmatpush1.bf16.msra.mxu0 %v525
  %725 = vmatprep.subr.bf16.mxu0 0
  %726 = vmatpush1.bf16.msra.mxu0 %v526
  %727 = vmatprep.subr.bf16.mxu0 0
  %728 = vmatpush1.bf16.msra.mxu0 %v527
  %729 = vmatprep.subr.bf16.mxu0 0
  %730 = vmatpush1.bf16.msra.mxu0 %v528
  %731 = vmatprep.subr.bf16.mxu0 0
  %732 = vmatpush1.bf16.msra.mxu0 %v529
  %733 = vmatprep.subr.bf16.mxu0 0
  %734 = vmatpush1.bf16.msra.mxu0 %v530
  %735 = vmatprep.subr.bf16.mxu0 0
  %736 = vmatpush1.bf16.msra.mxu0 %v531
  %737 = vmatprep.subr.bf16.mxu0 0
  %738 = vmatpush1.bf16.msra.mxu0 %v532
  %739 = vmatprep.subr.bf16.mxu0 0
  %740 = vmatpush1.bf16.msra.mxu0 %v533
  %741 = vmatprep.subr.bf16.mxu0 0
  %742 = vmatpush1.bf16.msra.mxu0 %v534
  %743 = vmatprep.mubr.bf16.mxu0 %v186
  %744 = vmatmul.mubr.bf16.gmra.mrb[0].mxu0 %v185
  %v745 = vpop.f32.mrb[0].mxu0
  %v746 = vadd.f32 %v706, %v745
  %v747 = vpop.f32.mrb[0].mxu0
  %v748 = vpop.f32.mrb[0].mxu0
  %v749 = vpop.f32.mrb[0].mxu0
  %750 = vdwg.mxu0
  %751 = vmatprep.subr.bf16.mxu0 0
  %752 = vmatpush1.bf16.msra.mxu0 %v535
  %753 = vmatprep.subr.bf16.mxu0 0
  %754 = vmatpush1.bf16.msra.mxu0 %v536
  %755 = vmatprep.subr.bf16.mxu0 0
  %756 = vmatpush1.bf16.msra.mxu0 %v537
  %757 = vmatprep.subr.bf16.mxu0 0
  %758 = vmatpush1.bf16.msra.mxu0 %v538
  %759 = vmatprep.subr.bf16.mxu0 0
  %760 = vmatpush1.bf16.msra.mxu0 %v539
  %761 = vmatprep.subr.bf16.mxu0 0
  %762 = vmatpush1.bf16.msra.mxu0 %v540
  %763 = vmatprep.subr.bf16.mxu0 0
  %764 = vmatpush1.bf16.msra.mxu0 %v541
  %765 = vmatprep.subr.bf16.mxu0 0
  %766 = vmatpush1.bf16.msra.mxu0 %v542
  %767 = vmatprep.subr.bf16.mxu0 0
  %768 = vmatpush1.bf16.msra.mxu0 %v543
  %769 = vmatprep.subr.bf16.mxu0 0
  %770 = vmatpush1.bf16.msra.mxu0 %v544
  %771 = vmatprep.subr.bf16.mxu0 0
  %772 = vmatpush1.bf16.msra.mxu0 %v545
  %773 = vmatprep.subr.bf16.mxu0 0
  %774 = vmatpush1.bf16.msra.mxu0 %v546
  %775 = vmatprep.subr.bf16.mxu0 0
  %776 = vmatpush1.bf16.msra.mxu0 %v547
  %777 = vmatprep.subr.bf16.mxu0 0
  %778 = vmatpush1.bf16.msra.mxu0 %v548
  %779 = vmatprep.subr.bf16.mxu0 0
  %780 = vmatpush1.bf16.msra.mxu0 %v549
  %781 = vmatprep.subr.bf16.mxu0 0
  %782 = vmatpush1.bf16.msra.mxu0 %v550
  %783 = vmatprep.mubr.bf16.mxu0 %v188
  %784 = vmatmul.mubr.bf16.gmra.mrb[0].mxu0 %v187
  %v785 = vpop.f32.mrb[0].mxu0
  %v786 = vadd.f32 %v746, %v785
  %v787 = vpop.f32.mrb[0].mxu0
  %v788 = vpop.f32.mrb[0].mxu0
  %v789 = vpop.f32.mrb[0].mxu0
  %790 = vdwg.mxu0
  %791 = vmatprep.subr.bf16.mxu0 0
  %792 = vmatpush1.bf16.msra.mxu0 %v551
  %793 = vmatprep.subr.bf16.mxu0 0
  %794 = vmatpush1.bf16.msra.mxu0 %v552
  %795 = vmatprep.subr.bf16.mxu0 0
  %796 = vmatpush1.bf16.msra.mxu0 %v553
  %797 = vmatprep.subr.bf16.mxu0 0
  %798 = vmatpush1.bf16.msra.mxu0 %v554
  %799 = vmatprep.subr.bf16.mxu0 0
  %800 = vmatpush1.bf16.msra.mxu0 %v555
  %801 = vmatprep.subr.bf16.mxu0 0
  %802 = vmatpush1.bf16.msra.mxu0 %v556
  %803 = vmatprep.subr.bf16.mxu0 0
  %804 = vmatpush1.bf16.msra.mxu0 %v557
  %805 = vmatprep.subr.bf16.mxu0 0
  %806 = vmatpush1.bf16.msra.mxu0 %v558
  %807 = vmatprep.subr.bf16.mxu0 0
  %808 = vmatpush1.bf16.msra.mxu0 0
  %809 = vmatprep.subr.bf16.mxu0 0
  %810 = vmatpush1.bf16.msra.mxu0 0
  %811 = vmatprep.subr.bf16.mxu0 0
  %812 = vmatpush1.bf16.msra.mxu0 0
  %813 = vmatprep.subr.bf16.mxu0 0
  %814 = vmatpush1.bf16.msra.mxu0 0
  %815 = vmatprep.subr.bf16.mxu0 0
  %816 = vmatpush1.bf16.msra.mxu0 0
  %817 = vmatprep.subr.bf16.mxu0 0
  %818 = vmatpush1.bf16.msra.mxu0 0
  %819 = vmatprep.subr.bf16.mxu0 0
  %820 = vmatpush1.bf16.msra.mxu0 0
  %821 = vmatprep.subr.bf16.mxu0 0
  %822 = vmatpush1.bf16.msra.mxu0 0
  %823 = vmatprep.mubr.bf16.mxu0 0
  %824 = vmatmul.mubr.bf16.gmra.mrb[0].mxu0 %v189
  %v825 = vpop.f32.mrb[0].mxu0
  %v826 = vadd.f32 %v786, %v825
  %v827 = vpop.f32.mrb[0].mxu0
  %v828 = vpop.f32.mrb[0].mxu0
  %v829 = vpop.f32.mrb[0].mxu0
  %830 = vdwg.mxu0
  %v831 = vld [vmem:[%s2] sm:$0x1]
  %v833 = vlaneseq
  %v834 = vshrl.u32 %v833, 7
  %v835 = vsub.s32 0, %v834
  %v836 = vrot.slane %v831, %v835
  %v838 = vmul.f32 %v826, %v836
  %v839 = vld [vmem:[%s3] sm:$0x1]
  %v841 = vlaneseq
  %v842 = vshrl.u32 %v841, 7
  %v843 = vsub.s32 0, %v842
  %v844 = vrot.slane %v839, %v843
  %v846 = vadd.f32 %v838, %v844
  %vm847 = vcmp.ge.f32.partialorder %v846, 0.0
  %v848 = vmul.f32 %v846, 0.01
  %v849 = vsel %vm847, %v846, %v848
  %850 = vst [vmem:[%s4] sm:$0xff] %v849
  // Predicated region
  $region18: #{feat_extraction_forward.21} parent=0 // pred_check
    _
  $region19: #{feat_extraction_forward.21} parent=0 // pred_check_branch
    %852 = sbr.rel (0) target = $region21
  $region20: #{feat_extraction_forward.21} parent=0 // pred_region
    _
  $region21: #{feat_extraction_forward.21} parent=0 // pred_fallthru
    _
  // Predicated region
  $region22: #{feat_extraction_forward.21} parent=0 // pred_check
    _
  $region23: #{feat_extraction_forward.21} parent=0 // pred_check_branch
    %854 = sbr.rel (0) target = $region25
  $region24: #{feat_extraction_forward.21} parent=0 // pred_region
    _
  $region25: #{feat_extraction_forward.21} parent=0 // pred_fallthru
    _

// kernel: feat_extraction_forward.22
$region0: #{feat_extraction_forward.22}
  #allocation0 [shape = 'u32[]', space=smem, size = 0x4, offset = 0x4, fixed_abs, tag = 'smem constant byte address 0x4 - core index']
  #allocation1 [shape = 'u32[144,128]{1,0:T(1,128)}', space=vmem, size = 0x12000, scoped, tag = 'internal scratch']
  %s0 = inlined_call_operand.vmem [shape: bf16[8,1152], index: 0, kind: input, shape index: {}]
  %s1 = inlined_call_operand.vmem [shape: bf16[1152,256], index: 1, kind: input, shape index: {}]
  %s2 = inlined_call_operand.vmem [shape: f32[1,256], index: 2, kind: input, shape index: {}]
  %s3 = inlined_call_operand.vmem [shape: f32[1,256], index: 3, kind: input, shape index: {}]
  %s4 = inlined_call_operand.vmem [shape: f32[8,256], index: 4, kind: output, shape index: {}]
  %s5 = sld [smem:[#allocation0]]
  $region26: #{feat_extraction_forward.22} parent=0
    _
  %s7 = ssub.s32 1, %s5
  %s8 = scalar_select 0, %s7, %s5
  // Predicated region
  $region2: #{feat_extraction_forward.22} parent=0 // pred_check
    _
  $region3: #{feat_extraction_forward.22} parent=0 // pred_check_branch
    %10 = sbr.rel (0) target = $region5
  $region4: #{feat_extraction_forward.22} parent=0 // pred_region
    _
  $region5: #{feat_extraction_forward.22} parent=0 // pred_fallthru
    _
  // Predicated region
  $region6: #{feat_extraction_forward.22} parent=0 // pred_check
    _
  $region7: #{feat_extraction_forward.22} parent=0 // pred_check_branch
    %12 = sbr.rel (0) target = $region9
  $region8: #{feat_extraction_forward.22} parent=0 // pred_region
    _
  $region9: #{feat_extraction_forward.22} parent=0 // pred_fallthru
    _
  // Predicated region
  $region10: #{feat_extraction_forward.22} parent=0 // pred_check
    _
  $region11: #{feat_extraction_forward.22} parent=0 // pred_check_branch
    %14 = sbr.rel (0) target = $region13
  $region12: #{feat_extraction_forward.22} parent=0 // pred_region
    _
  $region13: #{feat_extraction_forward.22} parent=0 // pred_fallthru
    _
  // Predicated region
  $region14: #{feat_extraction_forward.22} parent=0 // pred_check
    _
  $region15: #{feat_extraction_forward.22} parent=0 // pred_check_branch
    %16 = sbr.rel (0) target = $region17
  $region16: #{feat_extraction_forward.22} parent=0 // pred_region
    _
  $region17: #{feat_extraction_forward.22} parent=0 // pred_fallthru
    _
  %v18 = vld [vmem:[%s0] sm:$0xff]
  %v19 = vld [vmem:[%s0 + $0x8] sm:$0xff]
  %v20 = vld [vmem:[%s0 + $0x10] sm:$0xff]
  %v21 = vld [vmem:[%s0 + $0x18] sm:$0xff]
  %v22 = vld [vmem:[%s0 + $0x20] sm:$0xf]
  %v23 = vld [vmem:[%s1] sm:$0xff]
  %v24 = vld [vmem:[%s1 + $0x8] sm:$0xff]
  %v25 = vld [vmem:[%s1 + $0x10] sm:$0xff]
  %v26 = vld [vmem:[%s1 + $0x18] sm:$0xff]
  %v27 = vld [vmem:[%s1 + $0x20] sm:$0xff]
  %v28 = vld [vmem:[%s1 + $0x28] sm:$0xff]
  %v29 = vld [vmem:[%s1 + $0x30] sm:$0xff]
  %v30 = vld [vmem:[%s1 + $0x38] sm:$0xff]
  %v31 = vld [vmem:[%s1 + $0x40] sm:$0xff]
  %v32 = vld [vmem:[%s1 + $0x48] sm:$0xff]
  %v33 = vld [vmem:[%s1 + $0x50] sm:$0xff]
  %v34 = vld [vmem:[%s1 + $0x58] sm:$0xff]
  %v35 = vld [vmem:[%s1 + $0x60] sm:$0xff]
  %v36 = vld [vmem:[%s1 + $0x68] sm:$0xff]
  %v37 = vld [vmem:[%s1 + $0x70] sm:$0xff]
  %v38 = vld [vmem:[%s1 + $0x78] sm:$0xff]
  %v39 = vld [vmem:[%s1 + $0x80] sm:$0xff]
  %v40 = vld [vmem:[%s1 + $0x88] sm:$0xff]
  %v41 = vld [vmem:[%s1 + $0x90] sm:$0xff]
  %v42 = vld [vmem:[%s1 + $0x98] sm:$0xff]
  %v43 = vld [vmem:[%s1 + $0xa0] sm:$0xff]
  %v44 = vld [vmem:[%s1 + $0xa8] sm:$0xff]
  %v45 = vld [vmem:[%s1 + $0xb0] sm:$0xff]
  %v46 = vld [vmem:[%s1 + $0xb8] sm:$0xff]
  %v47 = vld [vmem:[%s1 + $0xc0] sm:$0xff]
  %v48 = vld [vmem:[%s1 + $0xc8] sm:$0xff]
  %v49 = vld [vmem:[%s1 + $0xd0] sm:$0xff]
  %v50 = vld [vmem:[%s1 + $0xd8] sm:$0xff]
  %v51 = vld [vmem:[%s1 + $0xe0] sm:$0xff]
  %v52 = vld [vmem:[%s1 + $0xe8] sm:$0xff]
  %v53 = vld [vmem:[%s1 + $0xf0] sm:$0xff]
  %v54 = vld [vmem:[%s1 + $0xf8] sm:$0xff]
  %v55 = vld [vmem:[%s1 + $0x100] sm:$0xff]
  %v56 = vld [vmem:[%s1 + $0x108] sm:$0xff]
  %v57 = vld [vmem:[%s1 + $0x110] sm:$0xff]
  %v58 = vld [vmem:[%s1 + $0x118] sm:$0xff]
  %v59 = vld [vmem:[%s1 + $0x120] sm:$0xff]
  %v60 = vld [vmem:[%s1 + $0x128] sm:$0xff]
  %v61 = vld [vmem:[%s1 + $0x130] sm:$0xff]
  %v62 = vld [vmem:[%s1 + $0x138] sm:$0xff]
  %v63 = vld [vmem:[%s1 + $0x140] sm:$0xff]
  %v64 = vld [vmem:[%s1 + $0x148] sm:$0xff]
  %v65 = vld [vmem:[%s1 + $0x150] sm:$0xff]
  %v66 = vld [vmem:[%s1 + $0x158] sm:$0xff]
  %v67 = vld [vmem:[%s1 + $0x160] sm:$0xff]
  %v68 = vld [vmem:[%s1 + $0x168] sm:$0xff]
  %v69 = vld [vmem:[%s1 + $0x170] sm:$0xff]
  %v70 = vld [vmem:[%s1 + $0x178] sm:$0xff]
  %v71 = vld [vmem:[%s1 + $0x180] sm:$0xff]
  %v72 = vld [vmem:[%s1 + $0x188] sm:$0xff]
  %v73 = vld [vmem:[%s1 + $0x190] sm:$0xff]
  %v74 = vld [vmem:[%s1 + $0x198] sm:$0xff]
  %v75 = vld [vmem:[%s1 + $0x1a0] sm:$0xff]
  %v76 = vld [vmem:[%s1 + $0x1a8] sm:$0xff]
  %v77 = vld [vmem:[%s1 + $0x1b0] sm:$0xff]
  %v78 = vld [vmem:[%s1 + $0x1b8] sm:$0xff]
  %v79 = vld [vmem:[%s1 + $0x1c0] sm:$0xff]
  %v80 = vld [vmem:[%s1 + $0x1c8] sm:$0xff]
  %v81 = vld [vmem:[%s1 + $0x1d0] sm:$0xff]
  %v82 = vld [vmem:[%s1 + $0x1d8] sm:$0xff]
  %v83 = vld [vmem:[%s1 + $0x1e0] sm:$0xff]
  %v84 = vld [vmem:[%s1 + $0x1e8] sm:$0xff]
  %v85 = vld [vmem:[%s1 + $0x1f0] sm:$0xff]
  %v86 = vld [vmem:[%s1 + $0x1f8] sm:$0xff]
  %v87 = vld [vmem:[%s1 + $0x200] sm:$0xff]
  %v88 = vld [vmem:[%s1 + $0x208] sm:$0xff]
  %v89 = vld [vmem:[%s1 + $0x210] sm:$0xff]
  %v90 = vld [vmem:[%s1 + $0x218] sm:$0xff]
  %v91 = vld [vmem:[%s1 + $0x220] sm:$0xff]
  %v92 = vld [vmem:[%s1 + $0x228] sm:$0xff]
  %v93 = vld [vmem:[%s1 + $0x230] sm:$0xff]
  %v94 = vld [vmem:[%s1 + $0x238] sm:$0xff]
  %v95 = vld [vmem:[%s1 + $0x240] sm:$0xff]
  %v96 = vld [vmem:[%s1 + $0x248] sm:$0xff]
  %v97 = vld [vmem:[%s1 + $0x250] sm:$0xff]
  %v98 = vld [vmem:[%s1 + $0x258] sm:$0xff]
  %v99 = vld [vmem:[%s1 + $0x260] sm:$0xff]
  %v100 = vld [vmem:[%s1 + $0x268] sm:$0xff]
  %v101 = vld [vmem:[%s1 + $0x270] sm:$0xff]
  %v102 = vld [vmem:[%s1 + $0x278] sm:$0xff]
  %v103 = vld [vmem:[%s1 + $0x280] sm:$0xff]
  %v104 = vld [vmem:[%s1 + $0x288] sm:$0xff]
  %v105 = vld [vmem:[%s1 + $0x290] sm:$0xff]
  %v106 = vld [vmem:[%s1 + $0x298] sm:$0xff]
  %v107 = vld [vmem:[%s1 + $0x2a0] sm:$0xff]
  %v108 = vld [vmem:[%s1 + $0x2a8] sm:$0xff]
  %v109 = vld [vmem:[%s1 + $0x2b0] sm:$0xff]
  %v110 = vld [vmem:[%s1 + $0x2b8] sm:$0xff]
  %v111 = vld [vmem:[%s1 + $0x2c0] sm:$0xff]
  %v112 = vld [vmem:[%s1 + $0x2c8] sm:$0xff]
  %v113 = vld [vmem:[%s1 + $0x2d0] sm:$0xff]
  %v114 = vld [vmem:[%s1 + $0x2d8] sm:$0xff]
  %v115 = vld [vmem:[%s1 + $0x2e0] sm:$0xff]
  %v116 = vld [vmem:[%s1 + $0x2e8] sm:$0xff]
  %v117 = vld [vmem:[%s1 + $0x2f0] sm:$0xff]
  %v118 = vld [vmem:[%s1 + $0x2f8] sm:$0xff]
  %v119 = vld [vmem:[%s1 + $0x300] sm:$0xff]
  %v120 = vld [vmem:[%s1 + $0x308] sm:$0xff]
  %v121 = vld [vmem:[%s1 + $0x310] sm:$0xff]
  %v122 = vld [vmem:[%s1 + $0x318] sm:$0xff]
  %v123 = vld [vmem:[%s1 + $0x320] sm:$0xff]
  %v124 = vld [vmem:[%s1 + $0x328] sm:$0xff]
  %v125 = vld [vmem:[%s1 + $0x330] sm:$0xff]
  %v126 = vld [vmem:[%s1 + $0x338] sm:$0xff]
  %v127 = vld [vmem:[%s1 + $0x340] sm:$0xff]
  %v128 = vld [vmem:[%s1 + $0x348] sm:$0xff]
  %v129 = vld [vmem:[%s1 + $0x350] sm:$0xff]
  %v130 = vld [vmem:[%s1 + $0x358] sm:$0xff]
  %v131 = vld [vmem:[%s1 + $0x360] sm:$0xff]
  %v132 = vld [vmem:[%s1 + $0x368] sm:$0xff]
  %v133 = vld [vmem:[%s1 + $0x370] sm:$0xff]
  %v134 = vld [vmem:[%s1 + $0x378] sm:$0xff]
  %v135 = vld [vmem:[%s1 + $0x380] sm:$0xff]
  %v136 = vld [vmem:[%s1 + $0x388] sm:$0xff]
  %v137 = vld [vmem:[%s1 + $0x390] sm:$0xff]
  %v138 = vld [vmem:[%s1 + $0x398] sm:$0xff]
  %v139 = vld [vmem:[%s1 + $0x3a0] sm:$0xff]
  %v140 = vld [vmem:[%s1 + $0x3a8] sm:$0xff]
  %v141 = vld [vmem:[%s1 + $0x3b0] sm:$0xff]
  %v142 = vld [vmem:[%s1 + $0x3b8] sm:$0xff]
  %v143 = vld [vmem:[%s1 + $0x3c0] sm:$0xff]
  %v144 = vld [vmem:[%s1 + $0x3c8] sm:$0xff]
  %v145 = vld [vmem:[%s1 + $0x3d0] sm:$0xff]
  %v146 = vld [vmem:[%s1 + $0x3d8] sm:$0xff]
  %v147 = vld [vmem:[%s1 + $0x3e0] sm:$0xff]
  %v148 = vld [vmem:[%s1 + $0x3e8] sm:$0xff]
  %v149 = vld [vmem:[%s1 + $0x3f0] sm:$0xff]
  %v150 = vld [vmem:[%s1 + $0x3f8] sm:$0xff]
  %v151 = vld [vmem:[%s1 + $0x400] sm:$0xff]
  %v152 = vld [vmem:[%s1 + $0x408] sm:$0xff]
  %v153 = vld [vmem:[%s1 + $0x410] sm:$0xff]
  %v154 = vld [vmem:[%s1 + $0x418] sm:$0xff]
  %v155 = vld [vmem:[%s1 + $0x420] sm:$0xff]
  %v156 = vld [vmem:[%s1 + $0x428] sm:$0xff]
  %v157 = vld [vmem:[%s1 + $0x430] sm:$0xff]
  %v158 = vld [vmem:[%s1 + $0x438] sm:$0xff]
  %v159 = vld [vmem:[%s1 + $0x440] sm:$0xff]
  %v160 = vld [vmem:[%s1 + $0x448] sm:$0xff]
  %v161 = vld [vmem:[%s1 + $0x450] sm:$0xff]
  %v162 = vld [vmem:[%s1 + $0x458] sm:$0xff]
  %v163 = vld [vmem:[%s1 + $0x460] sm:$0xff]
  %v164 = vld [vmem:[%s1 + $0x468] sm:$0xff]
  %v165 = vld [vmem:[%s1 + $0x470] sm:$0xff]
  %v166 = vld [vmem:[%s1 + $0x478] sm:$0xff]
  %v172 = vunpack.c.l.b16 %v18
  %v173 = vunpack.c.h.b16 %v18
  %v174 = vunpack.c.l.b16 %v19
  %v175 = vunpack.c.h.b16 %v19
  %v176 = vunpack.c.l.b16 %v20
  %v177 = vunpack.c.h.b16 %v20
  %v178 = vunpack.c.l.b16 %v21
  %v179 = vunpack.c.h.b16 %v21
  %v180 = vunpack.c.l.b16 %v22
  %v181 = vpack.c.b16 %v172, %v172
  %v182 = vpack.c.b16 %v173, %v173
  %v183 = vpack.c.b16 %v174, %v174
  %v184 = vpack.c.b16 %v175, %v175
  %v185 = vpack.c.b16 %v176, %v176
  %v186 = vpack.c.b16 %v177, %v177
  %v187 = vpack.c.b16 %v178, %v178
  %v188 = vpack.c.b16 %v179, %v179
  %v189 = vpack.c.b16 %v180, %v180
  %v343 = vunpack.c.l.b16 %v23
  %v344 = vunpack.c.h.b16 %v23
  %v345 = vunpack.c.l.b16 %v24
  %v346 = vunpack.c.h.b16 %v24
  %v347 = vunpack.c.l.b16 %v25
  %v348 = vunpack.c.h.b16 %v25
  %v349 = vunpack.c.l.b16 %v26
  %v350 = vunpack.c.h.b16 %v26
  %v351 = vunpack.c.l.b16 %v27
  %v352 = vunpack.c.h.b16 %v27
  %v353 = vunpack.c.l.b16 %v28
  %v354 = vunpack.c.h.b16 %v28
  %v355 = vunpack.c.l.b16 %v29
  %v356 = vunpack.c.h.b16 %v29
  %v357 = vunpack.c.l.b16 %v30
  %v358 = vunpack.c.h.b16 %v30
  %v359 = vunpack.c.l.b16 %v31
  %v360 = vunpack.c.h.b16 %v31
  %v361 = vunpack.c.l.b16 %v32
  %v362 = vunpack.c.h.b16 %v32
  %v363 = vunpack.c.l.b16 %v33
  %v364 = vunpack.c.h.b16 %v33
  %v365 = vunpack.c.l.b16 %v34
  %v366 = vunpack.c.h.b16 %v34
  %v367 = vunpack.c.l.b16 %v35
  %v368 = vunpack.c.h.b16 %v35
  %v369 = vunpack.c.l.b16 %v36
  %v370 = vunpack.c.h.b16 %v36
  %v371 = vunpack.c.l.b16 %v37
  %v372 = vunpack.c.h.b16 %v37
  %v373 = vunpack.c.l.b16 %v38
  %v374 = vunpack.c.h.b16 %v38
  %v375 = vunpack.c.l.b16 %v39
  %v376 = vunpack.c.h.b16 %v39
  %v377 = vunpack.c.l.b16 %v40
  %v378 = vunpack.c.h.b16 %v40
  %v379 = vunpack.c.l.b16 %v41
  %v380 = vunpack.c.h.b16 %v41
  %v381 = vunpack.c.l.b16 %v42
  %v382 = vunpack.c.h.b16 %v42
  %v383 = vunpack.c.l.b16 %v43
  %v384 = vunpack.c.h.b16 %v43
  %v385 = vunpack.c.l.b16 %v44
  %v386 = vunpack.c.h.b16 %v44
  %v387 = vunpack.c.l.b16 %v45
  %v388 = vunpack.c.h.b16 %v45
  %v389 = vunpack.c.l.b16 %v46
  %v390 = vunpack.c.h.b16 %v46
  %v391 = vunpack.c.l.b16 %v47
  %v392 = vunpack.c.h.b16 %v47
  %v393 = vunpack.c.l.b16 %v48
  %v394 = vunpack.c.h.b16 %v48
  %v395 = vunpack.c.l.b16 %v49
  %v396 = vunpack.c.h.b16 %v49
  %v397 = vunpack.c.l.b16 %v50
  %v398 = vunpack.c.h.b16 %v50
  %v399 = vunpack.c.l.b16 %v51
  %v400 = vunpack.c.h.b16 %v51
  %v401 = vunpack.c.l.b16 %v52
  %v402 = vunpack.c.h.b16 %v52
  %v403 = vunpack.c.l.b16 %v53
  %v404 = vunpack.c.h.b16 %v53
  %v405 = vunpack.c.l.b16 %v54
  %v406 = vunpack.c.h.b16 %v54
  %v407 = vunpack.c.l.b16 %v55
  %v408 = vunpack.c.h.b16 %v55
  %v409 = vunpack.c.l.b16 %v56
  %v410 = vunpack.c.h.b16 %v56
  %v411 = vunpack.c.l.b16 %v57
  %v412 = vunpack.c.h.b16 %v57
  %v413 = vunpack.c.l.b16 %v58
  %v414 = vunpack.c.h.b16 %v58
  %v415 = vunpack.c.l.b16 %v59
  %v416 = vunpack.c.h.b16 %v59
  %v417 = vunpack.c.l.b16 %v60
  %v418 = vunpack.c.h.b16 %v60
  %v419 = vunpack.c.l.b16 %v61
  %v420 = vunpack.c.h.b16 %v61
  %v421 = vunpack.c.l.b16 %v62
  %v422 = vunpack.c.h.b16 %v62
  %v423 = vunpack.c.l.b16 %v63
  %v424 = vunpack.c.h.b16 %v63
  %v425 = vunpack.c.l.b16 %v64
  %v426 = vunpack.c.h.b16 %v64
  %v427 = vunpack.c.l.b16 %v65
  %v428 = vunpack.c.h.b16 %v65
  %v429 = vunpack.c.l.b16 %v66
  %v430 = vunpack.c.h.b16 %v66
  %v431 = vunpack.c.l.b16 %v67
  %v432 = vunpack.c.h.b16 %v67
  %v433 = vunpack.c.l.b16 %v68
  %v434 = vunpack.c.h.b16 %v68
  %v435 = vunpack.c.l.b16 %v69
  %v436 = vunpack.c.h.b16 %v69
  %v437 = vunpack.c.l.b16 %v70
  %v438 = vunpack.c.h.b16 %v70
  %v439 = vunpack.c.l.b16 %v71
  %v440 = vunpack.c.h.b16 %v71
  %v441 = vunpack.c.l.b16 %v72
  %v442 = vunpack.c.h.b16 %v72
  %v443 = vunpack.c.l.b16 %v73
  %v444 = vunpack.c.h.b16 %v73
  %v445 = vunpack.c.l.b16 %v74
  %v446 = vunpack.c.h.b16 %v74
  %v447 = vunpack.c.l.b16 %v75
  %v448 = vunpack.c.h.b16 %v75
  %v449 = vunpack.c.l.b16 %v76
  %v450 = vunpack.c.h.b16 %v76
  %v451 = vunpack.c.l.b16 %v77
  %v452 = vunpack.c.h.b16 %v77
  %v453 = vunpack.c.l.b16 %v78
  %v454 = vunpack.c.h.b16 %v78
  %v455 = vunpack.c.l.b16 %v79
  %v456 = vunpack.c.h.b16 %v79
  %v457 = vunpack.c.l.b16 %v80
  %v458 = vunpack.c.h.b16 %v80
  %v459 = vunpack.c.l.b16 %v81
  %v460 = vunpack.c.h.b16 %v81
  %v461 = vunpack.c.l.b16 %v82
  %v462 = vunpack.c.h.b16 %v82
  %v463 = vunpack.c.l.b16 %v83
  %v464 = vunpack.c.h.b16 %v83
  %v465 = vunpack.c.l.b16 %v84
  %v466 = vunpack.c.h.b16 %v84
  %v467 = vunpack.c.l.b16 %v85
  %v468 = vunpack.c.h.b16 %v85
  %v469 = vunpack.c.l.b16 %v86
  %v470 = vunpack.c.h.b16 %v86
  %v471 = vunpack.c.l.b16 %v87
  %v472 = vunpack.c.h.b16 %v87
  %v473 = vunpack.c.l.b16 %v88
  %v474 = vunpack.c.h.b16 %v88
  %v475 = vunpack.c.l.b16 %v89
  %v476 = vunpack.c.h.b16 %v89
  %v477 = vunpack.c.l.b16 %v90
  %v478 = vunpack.c.h.b16 %v90
  %v479 = vunpack.c.l.b16 %v91
  %v480 = vunpack.c.h.b16 %v91
  %v481 = vunpack.c.l.b16 %v92
  %v482 = vunpack.c.h.b16 %v92
  %v483 = vunpack.c.l.b16 %v93
  %v484 = vunpack.c.h.b16 %v93
  %v485 = vunpack.c.l.b16 %v94
  %v486 = vunpack.c.h.b16 %v94
  %v487 = vunpack.c.l.b16 %v95
  %v488 = vunpack.c.h.b16 %v95
  %v489 = vunpack.c.l.b16 %v96
  %v490 = vunpack.c.h.b16 %v96
  %v491 = vunpack.c.l.b16 %v97
  %v492 = vunpack.c.h.b16 %v97
  %v493 = vunpack.c.l.b16 %v98
  %v494 = vunpack.c.h.b16 %v98
  %v495 = vunpack.c.l.b16 %v99
  %v496 = vunpack.c.h.b16 %v99
  %v497 = vunpack.c.l.b16 %v100
  %v498 = vunpack.c.h.b16 %v100
  %v499 = vunpack.c.l.b16 %v101
  %v500 = vunpack.c.h.b16 %v101
  %v501 = vunpack.c.l.b16 %v102
  %v502 = vunpack.c.h.b16 %v102
  %v503 = vunpack.c.l.b16 %v103
  %v504 = vunpack.c.h.b16 %v103
  %v505 = vunpack.c.l.b16 %v104
  %v506 = vunpack.c.h.b16 %v104
  %v507 = vunpack.c.l.b16 %v105
  %v508 = vunpack.c.h.b16 %v105
  %v509 = vunpack.c.l.b16 %v106
  %v510 = vunpack.c.h.b16 %v106
  %v511 = vunpack.c.l.b16 %v107
  %v512 = vunpack.c.h.b16 %v107
  %v513 = vunpack.c.l.b16 %v108
  %v514 = vunpack.c.h.b16 %v108
  %v515 = vunpack.c.l.b16 %v109
  %v516 = vunpack.c.h.b16 %v109
  %v517 = vunpack.c.l.b16 %v110
  %v518 = vunpack.c.h.b16 %v110
  %v519 = vunpack.c.l.b16 %v111
  %v520 = vunpack.c.h.b16 %v111
  %v521 = vunpack.c.l.b16 %v112
  %v522 = vunpack.c.h.b16 %v112
  %v523 = vunpack.c.l.b16 %v113
  %v524 = vunpack.c.h.b16 %v113
  %v525 = vunpack.c.l.b16 %v114
  %v526 = vunpack.c.h.b16 %v114
  %v527 = vunpack.c.l.b16 %v115
  %v528 = vunpack.c.h.b16 %v115
  %v529 = vunpack.c.l.b16 %v116
  %v530 = vunpack.c.h.b16 %v116
  %v531 = vunpack.c.l.b16 %v117
  %v532 = vunpack.c.h.b16 %v117
  %v533 = vunpack.c.l.b16 %v118
  %v534 = vunpack.c.h.b16 %v118
  %v535 = vunpack.c.l.b16 %v119
  %v536 = vunpack.c.h.b16 %v119
  %v537 = vunpack.c.l.b16 %v120
  %v538 = vunpack.c.h.b16 %v120
  %v539 = vunpack.c.l.b16 %v121
  %v540 = vunpack.c.h.b16 %v121
  %v541 = vunpack.c.l.b16 %v122
  %v542 = vunpack.c.h.b16 %v122
  %v543 = vunpack.c.l.b16 %v123
  %v544 = vunpack.c.h.b16 %v123
  %v545 = vunpack.c.l.b16 %v124
  %v546 = vunpack.c.h.b16 %v124
  %v547 = vunpack.c.l.b16 %v125
  %v548 = vunpack.c.h.b16 %v125
  %v549 = vunpack.c.l.b16 %v126
  %v550 = vunpack.c.h.b16 %v126
  %v551 = vunpack.c.l.b16 %v127
  %v552 = vunpack.c.h.b16 %v127
  %v553 = vunpack.c.l.b16 %v128
  %v554 = vunpack.c.h.b16 %v128
  %v555 = vunpack.c.l.b16 %v129
  %v556 = vunpack.c.h.b16 %v129
  %v557 = vunpack.c.l.b16 %v130
  %v558 = vunpack.c.h.b16 %v130
  %v559 = vunpack.c.l.b16 %v131
  %v560 = vunpack.c.h.b16 %v131
  %v561 = vunpack.c.l.b16 %v132
  %v562 = vunpack.c.h.b16 %v132
  %v563 = vunpack.c.l.b16 %v133
  %v564 = vunpack.c.h.b16 %v133
  %v565 = vunpack.c.l.b16 %v134
  %v566 = vunpack.c.h.b16 %v134
  %v567 = vunpack.c.l.b16 %v135
  %v568 = vunpack.c.h.b16 %v135
  %v569 = vunpack.c.l.b16 %v136
  %v570 = vunpack.c.h.b16 %v136
  %v571 = vunpack.c.l.b16 %v137
  %v572 = vunpack.c.h.b16 %v137
  %v573 = vunpack.c.l.b16 %v138
  %v574 = vunpack.c.h.b16 %v138
  %v575 = vunpack.c.l.b16 %v139
  %v576 = vunpack.c.h.b16 %v139
  %v577 = vunpack.c.l.b16 %v140
  %v578 = vunpack.c.h.b16 %v140
  %v579 = vunpack.c.l.b16 %v141
  %v580 = vunpack.c.h.b16 %v141
  %v581 = vunpack.c.l.b16 %v142
  %v582 = vunpack.c.h.b16 %v142
  %v583 = vunpack.c.l.b16 %v143
  %v584 = vunpack.c.h.b16 %v143
  %v585 = vunpack.c.l.b16 %v144
  %v586 = vunpack.c.h.b16 %v144
  %v587 = vunpack.c.l.b16 %v145
  %v588 = vunpack.c.h.b16 %v145
  %v589 = vunpack.c.l.b16 %v146
  %v590 = vunpack.c.h.b16 %v146
  %v591 = vunpack.c.l.b16 %v147
  %v592 = vunpack.c.h.b16 %v147
  %v593 = vunpack.c.l.b16 %v148
  %v594 = vunpack.c.h.b16 %v148
  %v595 = vunpack.c.l.b16 %v149
  %v596 = vunpack.c.h.b16 %v149
  %v597 = vunpack.c.l.b16 %v150
  %v598 = vunpack.c.h.b16 %v150
  %v599 = vunpack.c.l.b16 %v151
  %v600 = vunpack.c.h.b16 %v151
  %v601 = vunpack.c.l.b16 %v152
  %v602 = vunpack.c.h.b16 %v152
  %v603 = vunpack.c.l.b16 %v153
  %v604 = vunpack.c.h.b16 %v153
  %v605 = vunpack.c.l.b16 %v154
  %v606 = vunpack.c.h.b16 %v154
  %v607 = vunpack.c.l.b16 %v155
  %v608 = vunpack.c.h.b16 %v155
  %v609 = vunpack.c.l.b16 %v156
  %v610 = vunpack.c.h.b16 %v156
  %v611 = vunpack.c.l.b16 %v157
  %v612 = vunpack.c.h.b16 %v157
  %v613 = vunpack.c.l.b16 %v158
  %v614 = vunpack.c.h.b16 %v158
  %v615 = vunpack.c.l.b16 %v159
  %v616 = vunpack.c.h.b16 %v159
  %v617 = vunpack.c.l.b16 %v160
  %v618 = vunpack.c.h.b16 %v160
  %v619 = vunpack.c.l.b16 %v161
  %v620 = vunpack.c.h.b16 %v161
  %v621 = vunpack.c.l.b16 %v162
  %v622 = vunpack.c.h.b16 %v162
  %v623 = vunpack.c.l.b16 %v163
  %v624 = vunpack.c.h.b16 %v163
  %v625 = vunpack.c.l.b16 %v164
  %v626 = vunpack.c.h.b16 %v164
  %v627 = vunpack.c.l.b16 %v165
  %v628 = vunpack.c.h.b16 %v165
  %v629 = vunpack.c.l.b16 %v166
  %v630 = vunpack.c.h.b16 %v166
  %v631 = vpack.c.b16 %v345, %v343
  %v632 = vpack.c.b16 %v346, %v344
  %v633 = vpack.c.b16 %v349, %v347
  %v634 = vpack.c.b16 %v350, %v348
  %v635 = vpack.c.b16 %v353, %v351
  %v636 = vpack.c.b16 %v354, %v352
  %v637 = vpack.c.b16 %v357, %v355
  %v638 = vpack.c.b16 %v358, %v356
  %v639 = vpack.c.b16 %v361, %v359
  %v640 = vpack.c.b16 %v362, %v360
  %v641 = vpack.c.b16 %v365, %v363
  %v642 = vpack.c.b16 %v366, %v364
  %v643 = vpack.c.b16 %v369, %v367
  %v644 = vpack.c.b16 %v370, %v368
  %v645 = vpack.c.b16 %v373, %v371
  %v646 = vpack.c.b16 %v374, %v372
  %v647 = vpack.c.b16 %v377, %v375
  %v648 = vpack.c.b16 %v378, %v376
  %v649 = vpack.c.b16 %v381, %v379
  %v650 = vpack.c.b16 %v382, %v380
  %v651 = vpack.c.b16 %v385, %v383
  %v652 = vpack.c.b16 %v386, %v384
  %v653 = vpack.c.b16 %v389, %v387
  %v654 = vpack.c.b16 %v390, %v388
  %v655 = vpack.c.b16 %v393, %v391
  %v656 = vpack.c.b16 %v394, %v392
  %v657 = vpack.c.b16 %v397, %v395
  %v658 = vpack.c.b16 %v398, %v396
  %v659 = vpack.c.b16 %v401, %v399
  %v660 = vpack.c.b16 %v402, %v400
  %v661 = vpack.c.b16 %v405, %v403
  %v662 = vpack.c.b16 %v406, %v404
  %v663 = vpack.c.b16 %v409, %v407
  %v664 = vpack.c.b16 %v410, %v408
  %v665 = vpack.c.b16 %v413, %v411
  %v666 = vpack.c.b16 %v414, %v412
  %v667 = vpack.c.b16 %v417, %v415
  %v668 = vpack.c.b16 %v418, %v416
  %v669 = vpack.c.b16 %v421, %v419
  %v670 = vpack.c.b16 %v422, %v420
  %v671 = vpack.c.b16 %v425, %v423
  %v672 = vpack.c.b16 %v426, %v424
  %v673 = vpack.c.b16 %v429, %v427
  %v674 = vpack.c.b16 %v430, %v428
  %v675 = vpack.c.b16 %v433, %v431
  %v676 = vpack.c.b16 %v434, %v432
  %v677 = vpack.c.b16 %v437, %v435
  %v678 = vpack.c.b16 %v438, %v436
  %v679 = vpack.c.b16 %v441, %v439
  %v680 = vpack.c.b16 %v442, %v440
  %v681 = vpack.c.b16 %v445, %v443
  %v682 = vpack.c.b16 %v446, %v444
  %v683 = vpack.c.b16 %v449, %v447
  %v684 = vpack.c.b16 %v450, %v448
  %v685 = vpack.c.b16 %v453, %v451
  %v686 = vpack.c.b16 %v454, %v452
  %v687 = vpack.c.b16 %v457, %v455
  %v688 = vpack.c.b16 %v458, %v456
  %v689 = vpack.c.b16 %v461, %v459
  %v690 = vpack.c.b16 %v462, %v460
  %v691 = vpack.c.b16 %v465, %v463
  %v692 = vpack.c.b16 %v466, %v464
  %v693 = vpack.c.b16 %v469, %v467
  %v694 = vpack.c.b16 %v470, %v468
  %v695 = vpack.c.b16 %v473, %v471
  %v696 = vpack.c.b16 %v474, %v472
  %v697 = vpack.c.b16 %v477, %v475
  %v698 = vpack.c.b16 %v478, %v476
  %v699 = vpack.c.b16 %v481, %v479
  %v700 = vpack.c.b16 %v482, %v480
  %v701 = vpack.c.b16 %v485, %v483
  %v702 = vpack.c.b16 %v486, %v484
  %v703 = vpack.c.b16 %v489, %v487
  %v704 = vpack.c.b16 %v490, %v488
  %v705 = vpack.c.b16 %v493, %v491
  %v706 = vpack.c.b16 %v494, %v492
  %v707 = vpack.c.b16 %v497, %v495
  %v708 = vpack.c.b16 %v498, %v496
  %v709 = vpack.c.b16 %v501, %v499
  %v710 = vpack.c.b16 %v502, %v500
  %v711 = vpack.c.b16 %v505, %v503
  %v712 = vpack.c.b16 %v506, %v504
  %v713 = vpack.c.b16 %v509, %v507
  %v714 = vpack.c.b16 %v510, %v508
  %v715 = vpack.c.b16 %v513, %v511
  %v716 = vpack.c.b16 %v514, %v512
  %v717 = vpack.c.b16 %v517, %v515
  %v718 = vpack.c.b16 %v518, %v516
  %v719 = vpack.c.b16 %v521, %v519
  %v720 = vpack.c.b16 %v522, %v520
  %v721 = vpack.c.b16 %v525, %v523
  %v722 = vpack.c.b16 %v526, %v524
  %v723 = vpack.c.b16 %v529, %v527
  %v724 = vpack.c.b16 %v530, %v528
  %v725 = vpack.c.b16 %v533, %v531
  %v726 = vpack.c.b16 %v534, %v532
  %v727 = vpack.c.b16 %v537, %v535
  %v728 = vpack.c.b16 %v538, %v536
  %v729 = vpack.c.b16 %v541, %v539
  %v730 = vpack.c.b16 %v542, %v540
  %v731 = vpack.c.b16 %v545, %v543
  %v732 = vpack.c.b16 %v546, %v544
  %v733 = vpack.c.b16 %v549, %v547
  %v734 = vpack.c.b16 %v550, %v548
  %v735 = vpack.c.b16 %v553, %v551
  %v736 = vpack.c.b16 %v554, %v552
  %v737 = vpack.c.b16 %v557, %v555
  %v738 = vpack.c.b16 %v558, %v556
  %v739 = vpack.c.b16 %v561, %v559
  %v740 = vpack.c.b16 %v562, %v560
  %v741 = vpack.c.b16 %v565, %v563
  %v742 = vpack.c.b16 %v566, %v564
  %v743 = vpack.c.b16 %v569, %v567
  %v744 = vpack.c.b16 %v570, %v568
  %v745 = vpack.c.b16 %v573, %v571
  %v746 = vpack.c.b16 %v574, %v572
  %v747 = vpack.c.b16 %v577, %v575
  %v748 = vpack.c.b16 %v578, %v576
  %v749 = vpack.c.b16 %v581, %v579
  %v750 = vpack.c.b16 %v582, %v580
  %v751 = vpack.c.b16 %v585, %v583
  %v752 = vpack.c.b16 %v586, %v584
  %v753 = vpack.c.b16 %v589, %v587
  %v754 = vpack.c.b16 %v590, %v588
  %v755 = vpack.c.b16 %v593, %v591
  %v756 = vpack.c.b16 %v594, %v592
  %v757 = vpack.c.b16 %v597, %v595
  %v758 = vpack.c.b16 %v598, %v596
  %v759 = vpack.c.b16 %v601, %v599
  %v760 = vpack.c.b16 %v602, %v600
  %v761 = vpack.c.b16 %v605, %v603
  %v762 = vpack.c.b16 %v606, %v604
  %v763 = vpack.c.b16 %v609, %v607
  %v764 = vpack.c.b16 %v610, %v608
  %v765 = vpack.c.b16 %v613, %v611
  %v766 = vpack.c.b16 %v614, %v612
  %v767 = vpack.c.b16 %v617, %v615
  %v768 = vpack.c.b16 %v618, %v616
  %v769 = vpack.c.b16 %v621, %v619
  %v770 = vpack.c.b16 %v622, %v620
  %v771 = vpack.c.b16 %v625, %v623
  %v772 = vpack.c.b16 %v626, %v624
  %v773 = vpack.c.b16 %v629, %v627
  %v774 = vpack.c.b16 %v630, %v628
  %919 = vmatprep.subr.bf16.mxu0 %v632
  %920 = vmatpush1.bf16.msra.mxu0 %v631
  %921 = vmatprep.subr.bf16.mxu0 %v634
  %922 = vmatpush1.bf16.msra.mxu0 %v633
  %923 = vmatprep.subr.bf16.mxu0 %v636
  %924 = vmatpush1.bf16.msra.mxu0 %v635
  %925 = vmatprep.subr.bf16.mxu0 %v638
  %926 = vmatpush1.bf16.msra.mxu0 %v637
  %927 = vmatprep.subr.bf16.mxu0 %v640
  %928 = vmatpush1.bf16.msra.mxu0 %v639
  %929 = vmatprep.subr.bf16.mxu0 %v642
  %930 = vmatpush1.bf16.msra.mxu0 %v641
  %931 = vmatprep.subr.bf16.mxu0 %v644
  %932 = vmatpush1.bf16.msra.mxu0 %v643
  %933 = vmatprep.subr.bf16.mxu0 %v646
  %934 = vmatpush1.bf16.msra.mxu0 %v645
  %935 = vmatprep.subr.bf16.mxu0 %v648
  %936 = vmatpush1.bf16.msra.mxu0 %v647
  %937 = vmatprep.subr.bf16.mxu0 %v650
  %938 = vmatpush1.bf16.msra.mxu0 %v649
  %939 = vmatprep.subr.bf16.mxu0 %v652
  %940 = vmatpush1.bf16.msra.mxu0 %v651
  %941 = vmatprep.subr.bf16.mxu0 %v654
  %942 = vmatpush1.bf16.msra.mxu0 %v653
  %943 = vmatprep.subr.bf16.mxu0 %v656
  %944 = vmatpush1.bf16.msra.mxu0 %v655
  %945 = vmatprep.subr.bf16.mxu0 %v658
  %946 = vmatpush1.bf16.msra.mxu0 %v657
  %947 = vmatprep.subr.bf16.mxu0 %v660
  %948 = vmatpush1.bf16.msra.mxu0 %v659
  %949 = vmatprep.subr.bf16.mxu0 %v662
  %950 = vmatpush1.bf16.msra.mxu0 %v661
  %951 = vmatprep.mubr.bf16.mxu0 %v182
  %952 = vmatmul.mubr.bf16.gmra.mrb[0].mxu0 %v181
  %v953 = vpop.f32.mrb[0].mxu0
  %v954 = vadd.f32 0.0, %v953
  %v955 = vpop.f32.mrb[0].mxu0
  %v956 = vadd.f32 0.0, %v955
  %v957 = vpop.f32.mrb[0].mxu0
  %v958 = vpop.f32.mrb[0].mxu0
  %959 = vdwg.mxu0
  %960 = vmatprep.subr.bf16.mxu0 %v664
  %961 = vmatpush1.bf16.msra.mxu0 %v663
  %962 = vmatprep.subr.bf16.mxu0 %v666
  %963 = vmatpush1.bf16.msra.mxu0 %v665
  %964 = vmatprep.subr.bf16.mxu0 %v668
  %965 = vmatpush1.bf16.msra.mxu0 %v667
  %966 = vmatprep.subr.bf16.mxu0 %v670
  %967 = vmatpush1.bf16.msra.mxu0 %v669
  %968 = vmatprep.subr.bf16.mxu0 %v672
  %969 = vmatpush1.bf16.msra.mxu0 %v671
  %970 = vmatprep.subr.bf16.mxu0 %v674
  %971 = vmatpush1.bf16.msra.mxu0 %v673
  %972 = vmatprep.subr.bf16.mxu0 %v676
  %973 = vmatpush1.bf16.msra.mxu0 %v675
  %974 = vmatprep.subr.bf16.mxu0 %v678
  %975 = vmatpush1.bf16.msra.mxu0 %v677
  %976 = vmatprep.subr.bf16.mxu0 %v680
  %977 = vmatpush1.bf16.msra.mxu0 %v679
  %978 = vmatprep.subr.bf16.mxu0 %v682
  %979 = vmatpush1.bf16.msra.mxu0 %v681
  %980 = vmatprep.subr.bf16.mxu0 %v684
  %981 = vmatpush1.bf16.msra.mxu0 %v683
  %982 = vmatprep.subr.bf16.mxu0 %v686
  %983 = vmatpush1.bf16.msra.mxu0 %v685
  %984 = vmatprep.subr.bf16.mxu0 %v688
  %985 = vmatpush1.bf16.msra.mxu0 %v687
  %986 = vmatprep.subr.bf16.mxu0 %v690
  %987 = vmatpush1.bf16.msra.mxu0 %v689
  %988 = vmatprep.subr.bf16.mxu0 %v692
  %989 = vmatpush1.bf16.msra.mxu0 %v691
  %990 = vmatprep.subr.bf16.mxu0 %v694
  %991 = vmatpush1.bf16.msra.mxu0 %v693
  %992 = vmatprep.mubr.bf16.mxu0 %v184
  %993 = vmatmul.mubr.bf16.gmra.mrb[0].mxu0 %v183
  %v994 = vpop.f32.mrb[0].mxu0
  %v995 = vadd.f32 %v954, %v994
  %v996 = vpop.f32.mrb[0].mxu0
  %v997 = vadd.f32 %v956, %v996
  %v998 = vpop.f32.mrb[0].mxu0
  %v999 = vpop.f32.mrb[0].mxu0
  %1000 = vdwg.mxu0
  %1001 = vmatprep.subr.bf16.mxu0 %v696
  %1002 = vmatpush1.bf16.msra.mxu0 %v695
  %1003 = vmatprep.subr.bf16.mxu0 %v698
  %1004 = vmatpush1.bf16.msra.mxu0 %v697
  %1005 = vmatprep.subr.bf16.mxu0 %v700
  %1006 = vmatpush1.bf16.msra.mxu0 %v699
  %1007 = vmatprep.subr.bf16.mxu0 %v702
  %1008 = vmatpush1.bf16.msra.mxu0 %v701
  %1009 = vmatprep.subr.bf16.mxu0 %v704
  %1010 = vmatpush1.bf16.msra.mxu0 %v703
  %1011 = vmatprep.subr.bf16.mxu0 %v706
  %1012 = vmatpush1.bf16.msra.mxu0 %v705
  %1013 = vmatprep.subr.bf16.mxu0 %v708
  %1014 = vmatpush1.bf16.msra.mxu0 %v707
  %1015 = vmatprep.subr.bf16.mxu0 %v710
  %1016 = vmatpush1.bf16.msra.mxu0 %v709
  %1017 = vmatprep.subr.bf16.mxu0 %v712
  %1018 = vmatpush1.bf16.msra.mxu0 %v711
  %1019 = vmatprep.subr.bf16.mxu0 %v714
  %1020 = vmatpush1.bf16.msra.mxu0 %v713
  %1021 = vmatprep.subr.bf16.mxu0 %v716
  %1022 = vmatpush1.bf16.msra.mxu0 %v715
  %1023 = vmatprep.subr.bf16.mxu0 %v718
  %1024 = vmatpush1.bf16.msra.mxu0 %v717
  %1025 = vmatprep.subr.bf16.mxu0 %v720
  %1026 = vmatpush1.bf16.msra.mxu0 %v719
  %1027 = vmatprep.subr.bf16.mxu0 %v722
  %1028 = vmatpush1.bf16.msra.mxu0 %v721
  %1029 = vmatprep.subr.bf16.mxu0 %v724
  %1030 = vmatpush1.bf16.msra.mxu0 %v723
  %1031 = vmatprep.subr.bf16.mxu0 %v726
  %1032 = vmatpush1.bf16.msra.mxu0 %v725
  %1033 = vmatprep.mubr.bf16.mxu0 %v186
  %1034 = vmatmul.mubr.bf16.gmra.mrb[0].mxu0 %v185
  %v1035 = vpop.f32.mrb[0].mxu0
  %v1036 = vadd.f32 %v995, %v1035
  %v1037 = vpop.f32.mrb[0].mxu0
  %v1038 = vadd.f32 %v997, %v1037
  %v1039 = vpop.f32.mrb[0].mxu0
  %v1040 = vpop.f32.mrb[0].mxu0
  %1041 = vdwg.mxu0
  %1042 = vmatprep.subr.bf16.mxu0 %v728
  %1043 = vmatpush1.bf16.msra.mxu0 %v727
  %1044 = vmatprep.subr.bf16.mxu0 %v730
  %1045 = vmatpush1.bf16.msra.mxu0 %v729
  %1046 = vmatprep.subr.bf16.mxu0 %v732
  %1047 = vmatpush1.bf16.msra.mxu0 %v731
  %1048 = vmatprep.subr.bf16.mxu0 %v734
  %1049 = vmatpush1.bf16.msra.mxu0 %v733
  %1050 = vmatprep.subr.bf16.mxu0 %v736
  %1051 = vmatpush1.bf16.msra.mxu0 %v735
  %1052 = vmatprep.subr.bf16.mxu0 %v738
  %1053 = vmatpush1.bf16.msra.mxu0 %v737
  %1054 = vmatprep.subr.bf16.mxu0 %v740
  %1055 = vmatpush1.bf16.msra.mxu0 %v739
  %1056 = vmatprep.subr.bf16.mxu0 %v742
  %1057 = vmatpush1.bf16.msra.mxu0 %v741
  %1058 = vmatprep.subr.bf16.mxu0 %v744
  %1059 = vmatpush1.bf16.msra.mxu0 %v743
  %1060 = vmatprep.subr.bf16.mxu0 %v746
  %1061 = vmatpush1.bf16.msra.mxu0 %v745
  %1062 = vmatprep.subr.bf16.mxu0 %v748
  %1063 = vmatpush1.bf16.msra.mxu0 %v747
  %1064 = vmatprep.subr.bf16.mxu0 %v750
  %1065 = vmatpush1.bf16.msra.mxu0 %v749
  %1066 = vmatprep.subr.bf16.mxu0 %v752
  %1067 = vmatpush1.bf16.msra.mxu0 %v751
  %1068 = vmatprep.subr.bf16.mxu0 %v754
  %1069 = vmatpush1.bf16.msra.mxu0 %v753
  %1070 = vmatprep.subr.bf16.mxu0 %v756
  %1071 = vmatpush1.bf16.msra.mxu0 %v755
  %1072 = vmatprep.subr.bf16.mxu0 %v758
  %1073 = vmatpush1.bf16.msra.mxu0 %v757
  %1074 = vmatprep.mubr.bf16.mxu0 %v188
  %1075 = vmatmul.mubr.bf16.gmra.mrb[0].mxu0 %v187
  %v1076 = vpop.f32.mrb[0].mxu0
  %v1077 = vadd.f32 %v1036, %v1076
  %v1078 = vpop.f32.mrb[0].mxu0
  %v1079 = vadd.f32 %v1038, %v1078
  %v1080 = vpop.f32.mrb[0].mxu0
  %v1081 = vpop.f32.mrb[0].mxu0
  %1082 = vdwg.mxu0
  %1083 = vmatprep.subr.bf16.mxu0 %v760
  %1084 = vmatpush1.bf16.msra.mxu0 %v759
  %1085 = vmatprep.subr.bf16.mxu0 %v762
  %1086 = vmatpush1.bf16.msra.mxu0 %v761
  %1087 = vmatprep.subr.bf16.mxu0 %v764
  %1088 = vmatpush1.bf16.msra.mxu0 %v763
  %1089 = vmatprep.subr.bf16.mxu0 %v766
  %1090 = vmatpush1.bf16.msra.mxu0 %v765
  %1091 = vmatprep.subr.bf16.mxu0 %v768
  %1092 = vmatpush1.bf16.msra.mxu0 %v767
  %1093 = vmatprep.subr.bf16.mxu0 %v770
  %1094 = vmatpush1.bf16.msra.mxu0 %v769
  %1095 = vmatprep.subr.bf16.mxu0 %v772
  %1096 = vmatpush1.bf16.msra.mxu0 %v771
  %1097 = vmatprep.subr.bf16.mxu0 %v774
  %1098 = vmatpush1.bf16.msra.mxu0 %v773
  %1099 = vmatprep.subr.bf16.mxu0 0
  %1100 = vmatpush1.bf16.msra.mxu0 0
  %1101 = vmatprep.subr.bf16.mxu0 0
  %1102 = vmatpush1.bf16.msra.mxu0 0
  %1103 = vmatprep.subr.bf16.mxu0 0
  %1104 = vmatpush1.bf16.msra.mxu0 0
  %1105 = vmatprep.subr.bf16.mxu0 0
  %1106 = vmatpush1.bf16.msra.mxu0 0
  %1107 = vmatprep.subr.bf16.mxu0 0
  %1108 = vmatpush1.bf16.msra.mxu0 0
  %1109 = vmatprep.subr.bf16.mxu0 0
  %1110 = vmatpush1.bf16.msra.mxu0 0
  %1111 = vmatprep.subr.bf16.mxu0 0
  %1112 = vmatpush1.bf16.msra.mxu0 0
  %1113 = vmatprep.subr.bf16.mxu0 0
  %1114 = vmatpush1.bf16.msra.mxu0 0
  %1115 = vmatprep.mubr.bf16.mxu0 0
  %1116 = vmatmul.mubr.bf16.gmra.mrb[0].mxu0 %v189
  %v1117 = vpop.f32.mrb[0].mxu0
  %v1118 = vadd.f32 %v1077, %v1117
  %v1119 = vpop.f32.mrb[0].mxu0
  %v1120 = vadd.f32 %v1079, %v1119
  %v1121 = vpop.f32.mrb[0].mxu0
  %v1122 = vpop.f32.mrb[0].mxu0
  %1123 = vdwg.mxu0
  %v1124 = vld [vmem:[%s2] sm:$0x3]
  %v1126 = vlaneseq
  %v1127 = vshrl.u32 %v1126, 7
  %v1128 = vsub.s32 0, %v1127
  %v1129 = vrot.slane %v1124, %v1128
  %v1130 = vlaneseq
  %v1131 = vshrl.u32 %v1130, 7
  %v1132 = vsub.s32 1, %v1131
  %v1133 = vrot.slane %v1124, %v1132
  %v1136 = vmul.f32 %v1118, %v1129
  %v1137 = vmul.f32 %v1120, %v1133
  %v1138 = vld [vmem:[%s3] sm:$0x3]
  %v1140 = vlaneseq
  %v1141 = vshrl.u32 %v1140, 7
  %v1142 = vsub.s32 0, %v1141
  %v1143 = vrot.slane %v1138, %v1142
  %v1144 = vlaneseq
  %v1145 = vshrl.u32 %v1144, 7
  %v1146 = vsub.s32 1, %v1145
  %v1147 = vrot.slane %v1138, %v1146
  %v1150 = vadd.f32 %v1136, %v1143
  %v1151 = vadd.f32 %v1137, %v1147
  %vm1152 = vcmp.ge.f32.partialorder %v1150, 0.0
  %vm1153 = vcmp.ge.f32.partialorder %v1151, 0.0
  %v1154 = vmul.f32 %v1150, 0.01
  %v1155 = vmul.f32 %v1151, 0.01
  %v1156 = vsel %vm1152, %v1150, %v1154
  %v1157 = vsel %vm1153, %v1151, %v1155
  %1158 = vst [vmem:[%s4] sm:$0xff] %v1156
  %1159 = vst [vmem:[%s4 + $0x8] sm:$0xff] %v1157
  // Predicated region
  $region18: #{feat_extraction_forward.22} parent=0 // pred_check
    _
  $region19: #{feat_extraction_forward.22} parent=0 // pred_check_branch
    %1161 = sbr.rel (0) target = $region21
  $region20: #{feat_extraction_forward.22} parent=0 // pred_region
    _
  $region21: #{feat_extraction_forward.22} parent=0 // pred_fallthru
    _
  // Predicated region
  $region22: #{feat_extraction_forward.22} parent=0 // pred_check
    _
  $region23: #{feat_extraction_forward.22} parent=0 // pred_check_branch
    %1163 = sbr.rel (0) target = $region25
  $region24: #{feat_extraction_forward.22} parent=0 // pred_region
    _
  $region25: #{feat_extraction_forward.22} parent=0 // pred_fallthru
    _

// kernel: feat_extraction_forward.23
$region0: #{feat_extraction_forward.23}
  #allocation0 [shape = 'u32[]', space=smem, size = 0x4, offset = 0x4, fixed_abs, tag = 'smem constant byte address 0x4 - core index']
  #allocation1 [shape = 'u32[144,128]{1,0:T(1,128)}', space=vmem, size = 0x12000, scoped, tag = 'internal scratch']
  %s0 = inlined_call_operand.vmem [shape: bf16[8,2304], index: 0, kind: input, shape index: {}]
  %s1 = inlined_call_operand.vmem [shape: bf16[2304,256], index: 1, kind: input, shape index: {}]
  %s2 = inlined_call_operand.vmem [shape: f32[1,256], index: 2, kind: input, shape index: {}]
  %s3 = inlined_call_operand.vmem [shape: f32[1,256], index: 3, kind: input, shape index: {}]
  %s4 = inlined_call_operand.vmem [shape: f32[8,256], index: 4, kind: output, shape index: {}]
  %s5 = sld [smem:[#allocation0]]
  $region26: #{feat_extraction_forward.23} parent=0
    _
  %s7 = ssub.s32 1, %s5
  %s8 = scalar_select 0, %s7, %s5
  // Predicated region
  $region2: #{feat_extraction_forward.23} parent=0 // pred_check
    _
  $region3: #{feat_extraction_forward.23} parent=0 // pred_check_branch
    %10 = sbr.rel (0) target = $region5
  $region4: #{feat_extraction_forward.23} parent=0 // pred_region
    _
  $region5: #{feat_extraction_forward.23} parent=0 // pred_fallthru
    _
  // Predicated region
  $region6: #{feat_extraction_forward.23} parent=0 // pred_check
    _
  $region7: #{feat_extraction_forward.23} parent=0 // pred_check_branch
    %12 = sbr.rel (0) target = $region9
  $region8: #{feat_extraction_forward.23} parent=0 // pred_region
    _
  $region9: #{feat_extraction_forward.23} parent=0 // pred_fallthru
    _
  // Predicated region
  $region10: #{feat_extraction_forward.23} parent=0 // pred_check
    _
  $region11: #{feat_extraction_forward.23} parent=0 // pred_check_branch
    %14 = sbr.rel (0) target = $region13
  $region12: #{feat_extraction_forward.23} parent=0 // pred_region
    _
  $region13: #{feat_extraction_forward.23} parent=0 // pred_fallthru
    _
  // Predicated region
  $region14: #{feat_extraction_forward.23} parent=0 // pred_check
    _
  $region15: #{feat_extraction_forward.23} parent=0 // pred_check_branch
    %16 = sbr.rel (0) target = $region17
  $region16: #{feat_extraction_forward.23} parent=0 // pred_region
    _
  $region17: #{feat_extraction_forward.23} parent=0 // pred_fallthru
    _
  %v17 = vld [vmem:[%s0] sm:$0xff]
  %v18 = vld [vmem:[%s0 + $0x8] sm:$0xff]
  %v19 = vld [vmem:[%s0 + $0x10] sm:$0xff]
  %v20 = vld [vmem:[%s0 + $0x18] sm:$0xff]
  %v21 = vld [vmem:[%s0 + $0x20] sm:$0xff]
  %v22 = vld [vmem:[%s0 + $0x28] sm:$0xff]
  %v23 = vld [vmem:[%s0 + $0x30] sm:$0xff]
  %v24 = vld [vmem:[%s0 + $0x38] sm:$0xff]
  %v25 = vld [vmem:[%s0 + $0x40] sm:$0xff]
  %v26 = vld [vmem:[%s1] sm:$0xff]
  %v27 = vld [vmem:[%s1 + $0x8] sm:$0xff]
  %v28 = vld [vmem:[%s1 + $0x10] sm:$0xff]
  %v29 = vld [vmem:[%s1 + $0x18] sm:$0xff]
  %v30 = vld [vmem:[%s1 + $0x20] sm:$0xff]
  %v31 = vld [vmem:[%s1 + $0x28] sm:$0xff]
  %v32 = vld [vmem:[%s1 + $0x30] sm:$0xff]
  %v33 = vld [vmem:[%s1 + $0x38] sm:$0xff]
  %v34 = vld [vmem:[%s1 + $0x40] sm:$0xff]
  %v35 = vld [vmem:[%s1 + $0x48] sm:$0xff]
  %v36 = vld [vmem:[%s1 + $0x50] sm:$0xff]
  %v37 = vld [vmem:[%s1 + $0x58] sm:$0xff]
  %v38 = vld [vmem:[%s1 + $0x60] sm:$0xff]
  %v39 = vld [vmem:[%s1 + $0x68] sm:$0xff]
  %v40 = vld [vmem:[%s1 + $0x70] sm:$0xff]
  %v41 = vld [vmem:[%s1 + $0x78] sm:$0xff]
  %v42 = vld [vmem:[%s1 + $0x80] sm:$0xff]
  %v43 = vld [vmem:[%s1 + $0x88] sm:$0xff]
  %v44 = vld [vmem:[%s1 + $0x90] sm:$0xff]
  %v45 = vld [vmem:[%s1 + $0x98] sm:$0xff]
  %v46 = vld [vmem:[%s1 + $0xa0] sm:$0xff]
  %v47 = vld [vmem:[%s1 + $0xa8] sm:$0xff]
  %v48 = vld [vmem:[%s1 + $0xb0] sm:$0xff]
  %v49 = vld [vmem:[%s1 + $0xb8] sm:$0xff]
  %v50 = vld [vmem:[%s1 + $0xc0] sm:$0xff]
  %v51 = vld [vmem:[%s1 + $0xc8] sm:$0xff]
  %v52 = vld [vmem:[%s1 + $0xd0] sm:$0xff]
  %v53 = vld [vmem:[%s1 + $0xd8] sm:$0xff]
  %v54 = vld [vmem:[%s1 + $0xe0] sm:$0xff]
  %v55 = vld [vmem:[%s1 + $0xe8] sm:$0xff]
  %v56 = vld [vmem:[%s1 + $0xf0] sm:$0xff]
  %v57 = vld [vmem:[%s1 + $0xf8] sm:$0xff]
  %v58 = vld [vmem:[%s1 + $0x100] sm:$0xff]
  %v59 = vld [vmem:[%s1 + $0x108] sm:$0xff]
  %v60 = vld [vmem:[%s1 + $0x110] sm:$0xff]
  %v61 = vld [vmem:[%s1 + $0x118] sm:$0xff]
  %v62 = vld [vmem:[%s1 + $0x120] sm:$0xff]
  %v63 = vld [vmem:[%s1 + $0x128] sm:$0xff]
  %v64 = vld [vmem:[%s1 + $0x130] sm:$0xff]
  %v65 = vld [vmem:[%s1 + $0x138] sm:$0xff]
  %v66 = vld [vmem:[%s1 + $0x140] sm:$0xff]
  %v67 = vld [vmem:[%s1 + $0x148] sm:$0xff]
  %v68 = vld [vmem:[%s1 + $0x150] sm:$0xff]
  %v69 = vld [vmem:[%s1 + $0x158] sm:$0xff]
  %v70 = vld [vmem:[%s1 + $0x160] sm:$0xff]
  %v71 = vld [vmem:[%s1 + $0x168] sm:$0xff]
  %v72 = vld [vmem:[%s1 + $0x170] sm:$0xff]
  %v73 = vld [vmem:[%s1 + $0x178] sm:$0xff]
  %v74 = vld [vmem:[%s1 + $0x180] sm:$0xff]
  %v75 = vld [vmem:[%s1 + $0x188] sm:$0xff]
  %v76 = vld [vmem:[%s1 + $0x190] sm:$0xff]
  %v77 = vld [vmem:[%s1 + $0x198] sm:$0xff]
  %v78 = vld [vmem:[%s1 + $0x1a0] sm:$0xff]
  %v79 = vld [vmem:[%s1 + $0x1a8] sm:$0xff]
  %v80 = vld [vmem:[%s1 + $0x1b0] sm:$0xff]
  %v81 = vld [vmem:[%s1 + $0x1b8] sm:$0xff]
  %v82 = vld [vmem:[%s1 + $0x1c0] sm:$0xff]
  %v83 = vld [vmem:[%s1 + $0x1c8] sm:$0xff]
  %v84 = vld [vmem:[%s1 + $0x1d0] sm:$0xff]
  %v85 = vld [vmem:[%s1 + $0x1d8] sm:$0xff]
  %v86 = vld [vmem:[%s1 + $0x1e0] sm:$0xff]
  %v87 = vld [vmem:[%s1 + $0x1e8] sm:$0xff]
  %v88 = vld [vmem:[%s1 + $0x1f0] sm:$0xff]
  %v89 = vld [vmem:[%s1 + $0x1f8] sm:$0xff]
  %v90 = vld [vmem:[%s1 + $0x200] sm:$0xff]
  %v91 = vld [vmem:[%s1 + $0x208] sm:$0xff]
  %v92 = vld [vmem:[%s1 + $0x210] sm:$0xff]
  %v93 = vld [vmem:[%s1 + $0x218] sm:$0xff]
  %v94 = vld [vmem:[%s1 + $0x220] sm:$0xff]
  %v95 = vld [vmem:[%s1 + $0x228] sm:$0xff]
  %v96 = vld [vmem:[%s1 + $0x230] sm:$0xff]
  %v97 = vld [vmem:[%s1 + $0x238] sm:$0xff]
  %v98 = vld [vmem:[%s1 + $0x240] sm:$0xff]
  %v99 = vld [vmem:[%s1 + $0x248] sm:$0xff]
  %v100 = vld [vmem:[%s1 + $0x250] sm:$0xff]
  %v101 = vld [vmem:[%s1 + $0x258] sm:$0xff]
  %v102 = vld [vmem:[%s1 + $0x260] sm:$0xff]
  %v103 = vld [vmem:[%s1 + $0x268] sm:$0xff]
  %v104 = vld [vmem:[%s1 + $0x270] sm:$0xff]
  %v105 = vld [vmem:[%s1 + $0x278] sm:$0xff]
  %v106 = vld [vmem:[%s1 + $0x280] sm:$0xff]
  %v107 = vld [vmem:[%s1 + $0x288] sm:$0xff]
  %v108 = vld [vmem:[%s1 + $0x290] sm:$0xff]
  %v109 = vld [vmem:[%s1 + $0x298] sm:$0xff]
  %v110 = vld [vmem:[%s1 + $0x2a0] sm:$0xff]
  %v111 = vld [vmem:[%s1 + $0x2a8] sm:$0xff]
  %v112 = vld [vmem:[%s1 + $0x2b0] sm:$0xff]
  %v113 = vld [vmem:[%s1 + $0x2b8] sm:$0xff]
  %v114 = vld [vmem:[%s1 + $0x2c0] sm:$0xff]
  %v115 = vld [vmem:[%s1 + $0x2c8] sm:$0xff]
  %v116 = vld [vmem:[%s1 + $0x2d0] sm:$0xff]
  %v117 = vld [vmem:[%s1 + $0x2d8] sm:$0xff]
  %v118 = vld [vmem:[%s1 + $0x2e0] sm:$0xff]
  %v119 = vld [vmem:[%s1 + $0x2e8] sm:$0xff]
  %v120 = vld [vmem:[%s1 + $0x2f0] sm:$0xff]
  %v121 = vld [vmem:[%s1 + $0x2f8] sm:$0xff]
  %v122 = vld [vmem:[%s1 + $0x300] sm:$0xff]
  %v123 = vld [vmem:[%s1 + $0x308] sm:$0xff]
  %v124 = vld [vmem:[%s1 + $0x310] sm:$0xff]
  %v125 = vld [vmem:[%s1 + $0x318] sm:$0xff]
  %v126 = vld [vmem:[%s1 + $0x320] sm:$0xff]
  %v127 = vld [vmem:[%s1 + $0x328] sm:$0xff]
  %v128 = vld [vmem:[%s1 + $0x330] sm:$0xff]
  %v129 = vld [vmem:[%s1 + $0x338] sm:$0xff]
  %v130 = vld [vmem:[%s1 + $0x340] sm:$0xff]
  %v131 = vld [vmem:[%s1 + $0x348] sm:$0xff]
  %v132 = vld [vmem:[%s1 + $0x350] sm:$0xff]
  %v133 = vld [vmem:[%s1 + $0x358] sm:$0xff]
  %v134 = vld [vmem:[%s1 + $0x360] sm:$0xff]
  %v135 = vld [vmem:[%s1 + $0x368] sm:$0xff]
  %v136 = vld [vmem:[%s1 + $0x370] sm:$0xff]
  %v137 = vld [vmem:[%s1 + $0x378] sm:$0xff]
  %v138 = vld [vmem:[%s1 + $0x380] sm:$0xff]
  %v139 = vld [vmem:[%s1 + $0x388] sm:$0xff]
  %v140 = vld [vmem:[%s1 + $0x390] sm:$0xff]
  %v141 = vld [vmem:[%s1 + $0x398] sm:$0xff]
  %v142 = vld [vmem:[%s1 + $0x3a0] sm:$0xff]
  %v143 = vld [vmem:[%s1 + $0x3a8] sm:$0xff]
  %v144 = vld [vmem:[%s1 + $0x3b0] sm:$0xff]
  %v145 = vld [vmem:[%s1 + $0x3b8] sm:$0xff]
  %v146 = vld [vmem:[%s1 + $0x3c0] sm:$0xff]
  %v147 = vld [vmem:[%s1 + $0x3c8] sm:$0xff]
  %v148 = vld [vmem:[%s1 + $0x3d0] sm:$0xff]
  %v149 = vld [vmem:[%s1 + $0x3d8] sm:$0xff]
  %v150 = vld [vmem:[%s1 + $0x3e0] sm:$0xff]
  %v151 = vld [vmem:[%s1 + $0x3e8] sm:$0xff]
  %v152 = vld [vmem:[%s1 + $0x3f0] sm:$0xff]
  %v153 = vld [vmem:[%s1 + $0x3f8] sm:$0xff]
  %v154 = vld [vmem:[%s1 + $0x400] sm:$0xff]
  %v155 = vld [vmem:[%s1 + $0x408] sm:$0xff]
  %v156 = vld [vmem:[%s1 + $0x410] sm:$0xff]
  %v157 = vld [vmem:[%s1 + $0x418] sm:$0xff]
  %v158 = vld [vmem:[%s1 + $0x420] sm:$0xff]
  %v159 = vld [vmem:[%s1 + $0x428] sm:$0xff]
  %v160 = vld [vmem:[%s1 + $0x430] sm:$0xff]
  %v161 = vld [vmem:[%s1 + $0x438] sm:$0xff]
  %v162 = vld [vmem:[%s1 + $0x440] sm:$0xff]
  %v163 = vld [vmem:[%s1 + $0x448] sm:$0xff]
  %v164 = vld [vmem:[%s1 + $0x450] sm:$0xff]
  %v165 = vld [vmem:[%s1 + $0x458] sm:$0xff]
  %v166 = vld [vmem:[%s1 + $0x460] sm:$0xff]
  %v167 = vld [vmem:[%s1 + $0x468] sm:$0xff]
  %v168 = vld [vmem:[%s1 + $0x470] sm:$0xff]
  %v169 = vld [vmem:[%s1 + $0x478] sm:$0xff]
  %v170 = vld [vmem:[%s1 + $0x480] sm:$0xff]
  %v171 = vld [vmem:[%s1 + $0x488] sm:$0xff]
  %v172 = vld [vmem:[%s1 + $0x490] sm:$0xff]
  %v173 = vld [vmem:[%s1 + $0x498] sm:$0xff]
  %v174 = vld [vmem:[%s1 + $0x4a0] sm:$0xff]
  %v175 = vld [vmem:[%s1 + $0x4a8] sm:$0xff]
  %v176 = vld [vmem:[%s1 + $0x4b0] sm:$0xff]
  %v177 = vld [vmem:[%s1 + $0x4b8] sm:$0xff]
  %v178 = vld [vmem:[%s1 + $0x4c0] sm:$0xff]
  %v179 = vld [vmem:[%s1 + $0x4c8] sm:$0xff]
  %v180 = vld [vmem:[%s1 + $0x4d0] sm:$0xff]
  %v181 = vld [vmem:[%s1 + $0x4d8] sm:$0xff]
  %v182 = vld [vmem:[%s1 + $0x4e0] sm:$0xff]
  %v183 = vld [vmem:[%s1 + $0x4e8] sm:$0xff]
  %v184 = vld [vmem:[%s1 + $0x4f0] sm:$0xff]
  %v185 = vld [vmem:[%s1 + $0x4f8] sm:$0xff]
  %v186 = vld [vmem:[%s1 + $0x500] sm:$0xff]
  %v187 = vld [vmem:[%s1 + $0x508] sm:$0xff]
  %v188 = vld [vmem:[%s1 + $0x510] sm:$0xff]
  %v189 = vld [vmem:[%s1 + $0x518] sm:$0xff]
  %v190 = vld [vmem:[%s1 + $0x520] sm:$0xff]
  %v191 = vld [vmem:[%s1 + $0x528] sm:$0xff]
  %v192 = vld [vmem:[%s1 + $0x530] sm:$0xff]
  %v193 = vld [vmem:[%s1 + $0x538] sm:$0xff]
  %v194 = vld [vmem:[%s1 + $0x540] sm:$0xff]
  %v195 = vld [vmem:[%s1 + $0x548] sm:$0xff]
  %v196 = vld [vmem:[%s1 + $0x550] sm:$0xff]
  %v197 = vld [vmem:[%s1 + $0x558] sm:$0xff]
  %v198 = vld [vmem:[%s1 + $0x560] sm:$0xff]
  %v199 = vld [vmem:[%s1 + $0x568] sm:$0xff]
  %v200 = vld [vmem:[%s1 + $0x570] sm:$0xff]
  %v201 = vld [vmem:[%s1 + $0x578] sm:$0xff]
  %v202 = vld [vmem:[%s1 + $0x580] sm:$0xff]
  %v203 = vld [vmem:[%s1 + $0x588] sm:$0xff]
  %v204 = vld [vmem:[%s1 + $0x590] sm:$0xff]
  %v205 = vld [vmem:[%s1 + $0x598] sm:$0xff]
  %v206 = vld [vmem:[%s1 + $0x5a0] sm:$0xff]
  %v207 = vld [vmem:[%s1 + $0x5a8] sm:$0xff]
  %v208 = vld [vmem:[%s1 + $0x5b0] sm:$0xff]
  %v209 = vld [vmem:[%s1 + $0x5b8] sm:$0xff]
  %v210 = vld [vmem:[%s1 + $0x5c0] sm:$0xff]
  %v211 = vld [vmem:[%s1 + $0x5c8] sm:$0xff]
  %v212 = vld [vmem:[%s1 + $0x5d0] sm:$0xff]
  %v213 = vld [vmem:[%s1 + $0x5d8] sm:$0xff]
  %v214 = vld [vmem:[%s1 + $0x5e0] sm:$0xff]
  %v215 = vld [vmem:[%s1 + $0x5e8] sm:$0xff]
  %v216 = vld [vmem:[%s1 + $0x5f0] sm:$0xff]
  %v217 = vld [vmem:[%s1 + $0x5f8] sm:$0xff]
  %v218 = vld [vmem:[%s1 + $0x600] sm:$0xff]
  %v219 = vld [vmem:[%s1 + $0x608] sm:$0xff]
  %v220 = vld [vmem:[%s1 + $0x610] sm:$0xff]
  %v221 = vld [vmem:[%s1 + $0x618] sm:$0xff]
  %v222 = vld [vmem:[%s1 + $0x620] sm:$0xff]
  %v223 = vld [vmem:[%s1 + $0x628] sm:$0xff]
  %v224 = vld [vmem:[%s1 + $0x630] sm:$0xff]
  %v225 = vld [vmem:[%s1 + $0x638] sm:$0xff]
  %v226 = vld [vmem:[%s1 + $0x640] sm:$0xff]
  %v227 = vld [vmem:[%s1 + $0x648] sm:$0xff]
  %v228 = vld [vmem:[%s1 + $0x650] sm:$0xff]
  %v229 = vld [vmem:[%s1 + $0x658] sm:$0xff]
  %v230 = vld [vmem:[%s1 + $0x660] sm:$0xff]
  %v231 = vld [vmem:[%s1 + $0x668] sm:$0xff]
  %v232 = vld [vmem:[%s1 + $0x670] sm:$0xff]
  %v233 = vld [vmem:[%s1 + $0x678] sm:$0xff]
  %v234 = vld [vmem:[%s1 + $0x680] sm:$0xff]
  %v235 = vld [vmem:[%s1 + $0x688] sm:$0xff]
  %v236 = vld [vmem:[%s1 + $0x690] sm:$0xff]
  %v237 = vld [vmem:[%s1 + $0x698] sm:$0xff]
  %v238 = vld [vmem:[%s1 + $0x6a0] sm:$0xff]
  %v239 = vld [vmem:[%s1 + $0x6a8] sm:$0xff]
  %v240 = vld [vmem:[%s1 + $0x6b0] sm:$0xff]
  %v241 = vld [vmem:[%s1 + $0x6b8] sm:$0xff]
  %v242 = vld [vmem:[%s1 + $0x6c0] sm:$0xff]
  %v243 = vld [vmem:[%s1 + $0x6c8] sm:$0xff]
  %v244 = vld [vmem:[%s1 + $0x6d0] sm:$0xff]
  %v245 = vld [vmem:[%s1 + $0x6d8] sm:$0xff]
  %v246 = vld [vmem:[%s1 + $0x6e0] sm:$0xff]
  %v247 = vld [vmem:[%s1 + $0x6e8] sm:$0xff]
  %v248 = vld [vmem:[%s1 + $0x6f0] sm:$0xff]
  %v249 = vld [vmem:[%s1 + $0x6f8] sm:$0xff]
  %v250 = vld [vmem:[%s1 + $0x700] sm:$0xff]
  %v251 = vld [vmem:[%s1 + $0x708] sm:$0xff]
  %v252 = vld [vmem:[%s1 + $0x710] sm:$0xff]
  %v253 = vld [vmem:[%s1 + $0x718] sm:$0xff]
  %v254 = vld [vmem:[%s1 + $0x720] sm:$0xff]
  %v255 = vld [vmem:[%s1 + $0x728] sm:$0xff]
  %v256 = vld [vmem:[%s1 + $0x730] sm:$0xff]
  %v257 = vld [vmem:[%s1 + $0x738] sm:$0xff]
  %v258 = vld [vmem:[%s1 + $0x740] sm:$0xff]
  %v259 = vld [vmem:[%s1 + $0x748] sm:$0xff]
  %v260 = vld [vmem:[%s1 + $0x750] sm:$0xff]
  %v261 = vld [vmem:[%s1 + $0x758] sm:$0xff]
  %v262 = vld [vmem:[%s1 + $0x760] sm:$0xff]
  %v263 = vld [vmem:[%s1 + $0x768] sm:$0xff]
  %v264 = vld [vmem:[%s1 + $0x770] sm:$0xff]
  %v265 = vld [vmem:[%s1 + $0x778] sm:$0xff]
  %v266 = vld [vmem:[%s1 + $0x780] sm:$0xff]
  %v267 = vld [vmem:[%s1 + $0x788] sm:$0xff]
  %v268 = vld [vmem:[%s1 + $0x790] sm:$0xff]
  %v269 = vld [vmem:[%s1 + $0x798] sm:$0xff]
  %v270 = vld [vmem:[%s1 + $0x7a0] sm:$0xff]
  %v271 = vld [vmem:[%s1 + $0x7a8] sm:$0xff]
  %v272 = vld [vmem:[%s1 + $0x7b0] sm:$0xff]
  %v273 = vld [vmem:[%s1 + $0x7b8] sm:$0xff]
  %v274 = vld [vmem:[%s1 + $0x7c0] sm:$0xff]
  %v275 = vld [vmem:[%s1 + $0x7c8] sm:$0xff]
  %v276 = vld [vmem:[%s1 + $0x7d0] sm:$0xff]
  %v277 = vld [vmem:[%s1 + $0x7d8] sm:$0xff]
  %v278 = vld [vmem:[%s1 + $0x7e0] sm:$0xff]
  %v279 = vld [vmem:[%s1 + $0x7e8] sm:$0xff]
  %v280 = vld [vmem:[%s1 + $0x7f0] sm:$0xff]
  %v281 = vld [vmem:[%s1 + $0x7f8] sm:$0xff]
  %v282 = vld [vmem:[%s1 + $0x800] sm:$0xff]
  %v283 = vld [vmem:[%s1 + $0x808] sm:$0xff]
  %v284 = vld [vmem:[%s1 + $0x810] sm:$0xff]
  %v285 = vld [vmem:[%s1 + $0x818] sm:$0xff]
  %v286 = vld [vmem:[%s1 + $0x820] sm:$0xff]
  %v287 = vld [vmem:[%s1 + $0x828] sm:$0xff]
  %v288 = vld [vmem:[%s1 + $0x830] sm:$0xff]
  %v289 = vld [vmem:[%s1 + $0x838] sm:$0xff]
  %v290 = vld [vmem:[%s1 + $0x840] sm:$0xff]
  %v291 = vld [vmem:[%s1 + $0x848] sm:$0xff]
  %v292 = vld [vmem:[%s1 + $0x850] sm:$0xff]
  %v293 = vld [vmem:[%s1 + $0x858] sm:$0xff]
  %v294 = vld [vmem:[%s1 + $0x860] sm:$0xff]
  %v295 = vld [vmem:[%s1 + $0x868] sm:$0xff]
  %v296 = vld [vmem:[%s1 + $0x870] sm:$0xff]
  %v297 = vld [vmem:[%s1 + $0x878] sm:$0xff]
  %v298 = vld [vmem:[%s1 + $0x880] sm:$0xff]
  %v299 = vld [vmem:[%s1 + $0x888] sm:$0xff]
  %v300 = vld [vmem:[%s1 + $0x890] sm:$0xff]
  %v301 = vld [vmem:[%s1 + $0x898] sm:$0xff]
  %v302 = vld [vmem:[%s1 + $0x8a0] sm:$0xff]
  %v303 = vld [vmem:[%s1 + $0x8a8] sm:$0xff]
  %v304 = vld [vmem:[%s1 + $0x8b0] sm:$0xff]
  %v305 = vld [vmem:[%s1 + $0x8b8] sm:$0xff]
  %v306 = vld [vmem:[%s1 + $0x8c0] sm:$0xff]
  %v307 = vld [vmem:[%s1 + $0x8c8] sm:$0xff]
  %v308 = vld [vmem:[%s1 + $0x8d0] sm:$0xff]
  %v309 = vld [vmem:[%s1 + $0x8d8] sm:$0xff]
  %v310 = vld [vmem:[%s1 + $0x8e0] sm:$0xff]
  %v311 = vld [vmem:[%s1 + $0x8e8] sm:$0xff]
  %v312 = vld [vmem:[%s1 + $0x8f0] sm:$0xff]
  %v313 = vld [vmem:[%s1 + $0x8f8] sm:$0xff]
  %v323 = vunpack.c.l.b16 %v17
  %v324 = vunpack.c.h.b16 %v17
  %v325 = vunpack.c.l.b16 %v18
  %v326 = vunpack.c.h.b16 %v18
  %v327 = vunpack.c.l.b16 %v19
  %v328 = vunpack.c.h.b16 %v19
  %v329 = vunpack.c.l.b16 %v20
  %v330 = vunpack.c.h.b16 %v20
  %v331 = vunpack.c.l.b16 %v21
  %v332 = vunpack.c.h.b16 %v21
  %v333 = vunpack.c.l.b16 %v22
  %v334 = vunpack.c.h.b16 %v22
  %v335 = vunpack.c.l.b16 %v23
  %v336 = vunpack.c.h.b16 %v23
  %v337 = vunpack.c.l.b16 %v24
  %v338 = vunpack.c.h.b16 %v24
  %v339 = vunpack.c.l.b16 %v25
  %v340 = vunpack.c.h.b16 %v25
  %v341 = vpack.c.b16 %v323, %v323
  %v342 = vpack.c.b16 %v324, %v324
  %v343 = vpack.c.b16 %v325, %v325
  %v344 = vpack.c.b16 %v326, %v326
  %v345 = vpack.c.b16 %v327, %v327
  %v346 = vpack.c.b16 %v328, %v328
  %v347 = vpack.c.b16 %v329, %v329
  %v348 = vpack.c.b16 %v330, %v330
  %v349 = vpack.c.b16 %v331, %v331
  %v350 = vpack.c.b16 %v332, %v332
  %v351 = vpack.c.b16 %v333, %v333
  %v352 = vpack.c.b16 %v334, %v334
  %v353 = vpack.c.b16 %v335, %v335
  %v354 = vpack.c.b16 %v336, %v336
  %v355 = vpack.c.b16 %v337, %v337
  %v356 = vpack.c.b16 %v338, %v338
  %v357 = vpack.c.b16 %v339, %v339
  %v358 = vpack.c.b16 %v340, %v340
  %v665 = vunpack.c.l.b16 %v26
  %v666 = vunpack.c.h.b16 %v26
  %v667 = vunpack.c.l.b16 %v27
  %v668 = vunpack.c.h.b16 %v27
  %v669 = vunpack.c.l.b16 %v28
  %v670 = vunpack.c.h.b16 %v28
  %v671 = vunpack.c.l.b16 %v29
  %v672 = vunpack.c.h.b16 %v29
  %v673 = vunpack.c.l.b16 %v30
  %v674 = vunpack.c.h.b16 %v30
  %v675 = vunpack.c.l.b16 %v31
  %v676 = vunpack.c.h.b16 %v31
  %v677 = vunpack.c.l.b16 %v32
  %v678 = vunpack.c.h.b16 %v32
  %v679 = vunpack.c.l.b16 %v33
  %v680 = vunpack.c.h.b16 %v33
  %v681 = vunpack.c.l.b16 %v34
  %v682 = vunpack.c.h.b16 %v34
  %v683 = vunpack.c.l.b16 %v35
  %v684 = vunpack.c.h.b16 %v35
  %v685 = vunpack.c.l.b16 %v36
  %v686 = vunpack.c.h.b16 %v36
  %v687 = vunpack.c.l.b16 %v37
  %v688 = vunpack.c.h.b16 %v37
  %v689 = vunpack.c.l.b16 %v38
  %v690 = vunpack.c.h.b16 %v38
  %v691 = vunpack.c.l.b16 %v39
  %v692 = vunpack.c.h.b16 %v39
  %v693 = vunpack.c.l.b16 %v40
  %v694 = vunpack.c.h.b16 %v40
  %v695 = vunpack.c.l.b16 %v41
  %v696 = vunpack.c.h.b16 %v41
  %v697 = vunpack.c.l.b16 %v42
  %v698 = vunpack.c.h.b16 %v42
  %v699 = vunpack.c.l.b16 %v43
  %v700 = vunpack.c.h.b16 %v43
  %v701 = vunpack.c.l.b16 %v44
  %v702 = vunpack.c.h.b16 %v44
  %v703 = vunpack.c.l.b16 %v45
  %v704 = vunpack.c.h.b16 %v45
  %v705 = vunpack.c.l.b16 %v46
  %v706 = vunpack.c.h.b16 %v46
  %v707 = vunpack.c.l.b16 %v47
  %v708 = vunpack.c.h.b16 %v47
  %v709 = vunpack.c.l.b16 %v48
  %v710 = vunpack.c.h.b16 %v48
  %v711 = vunpack.c.l.b16 %v49
  %v712 = vunpack.c.h.b16 %v49
  %v713 = vunpack.c.l.b16 %v50
  %v714 = vunpack.c.h.b16 %v50
  %v715 = vunpack.c.l.b16 %v51
  %v716 = vunpack.c.h.b16 %v51
  %v717 = vunpack.c.l.b16 %v52
  %v718 = vunpack.c.h.b16 %v52
  %v719 = vunpack.c.l.b16 %v53
  %v720 = vunpack.c.h.b16 %v53
  %v721 = vunpack.c.l.b16 %v54
  %v722 = vunpack.c.h.b16 %v54
  %v723 = vunpack.c.l.b16 %v55
  %v724 = vunpack.c.h.b16 %v55
  %v725 = vunpack.c.l.b16 %v56
  %v726 = vunpack.c.h.b16 %v56
  %v727 = vunpack.c.l.b16 %v57
  %v728 = vunpack.c.h.b16 %v57
  %v729 = vunpack.c.l.b16 %v58
  %v730 = vunpack.c.h.b16 %v58
  %v731 = vunpack.c.l.b16 %v59
  %v732 = vunpack.c.h.b16 %v59
  %v733 = vunpack.c.l.b16 %v60
  %v734 = vunpack.c.h.b16 %v60
  %v735 = vunpack.c.l.b16 %v61
  %v736 = vunpack.c.h.b16 %v61
  %v737 = vunpack.c.l.b16 %v62
  %v738 = vunpack.c.h.b16 %v62
  %v739 = vunpack.c.l.b16 %v63
  %v740 = vunpack.c.h.b16 %v63
  %v741 = vunpack.c.l.b16 %v64
  %v742 = vunpack.c.h.b16 %v64
  %v743 = vunpack.c.l.b16 %v65
  %v744 = vunpack.c.h.b16 %v65
  %v745 = vunpack.c.l.b16 %v66
  %v746 = vunpack.c.h.b16 %v66
  %v747 = vunpack.c.l.b16 %v67
  %v748 = vunpack.c.h.b16 %v67
  %v749 = vunpack.c.l.b16 %v68
  %v750 = vunpack.c.h.b16 %v68
  %v751 = vunpack.c.l.b16 %v69
  %v752 = vunpack.c.h.b16 %v69
  %v753 = vunpack.c.l.b16 %v70
  %v754 = vunpack.c.h.b16 %v70
  %v755 = vunpack.c.l.b16 %v71
  %v756 = vunpack.c.h.b16 %v71
  %v757 = vunpack.c.l.b16 %v72
  %v758 = vunpack.c.h.b16 %v72
  %v759 = vunpack.c.l.b16 %v73
  %v760 = vunpack.c.h.b16 %v73
  %v761 = vunpack.c.l.b16 %v74
  %v762 = vunpack.c.h.b16 %v74
  %v763 = vunpack.c.l.b16 %v75
  %v764 = vunpack.c.h.b16 %v75
  %v765 = vunpack.c.l.b16 %v76
  %v766 = vunpack.c.h.b16 %v76
  %v767 = vunpack.c.l.b16 %v77
  %v768 = vunpack.c.h.b16 %v77
  %v769 = vunpack.c.l.b16 %v78
  %v770 = vunpack.c.h.b16 %v78
  %v771 = vunpack.c.l.b16 %v79
  %v772 = vunpack.c.h.b16 %v79
  %v773 = vunpack.c.l.b16 %v80
  %v774 = vunpack.c.h.b16 %v80
  %v775 = vunpack.c.l.b16 %v81
  %v776 = vunpack.c.h.b16 %v81
  %v777 = vunpack.c.l.b16 %v82
  %v778 = vunpack.c.h.b16 %v82
  %v779 = vunpack.c.l.b16 %v83
  %v780 = vunpack.c.h.b16 %v83
  %v781 = vunpack.c.l.b16 %v84
  %v782 = vunpack.c.h.b16 %v84
  %v783 = vunpack.c.l.b16 %v85
  %v784 = vunpack.c.h.b16 %v85
  %v785 = vunpack.c.l.b16 %v86
  %v786 = vunpack.c.h.b16 %v86
  %v787 = vunpack.c.l.b16 %v87
  %v788 = vunpack.c.h.b16 %v87
  %v789 = vunpack.c.l.b16 %v88
  %v790 = vunpack.c.h.b16 %v88
  %v791 = vunpack.c.l.b16 %v89
  %v792 = vunpack.c.h.b16 %v89
  %v793 = vunpack.c.l.b16 %v90
  %v794 = vunpack.c.h.b16 %v90
  %v795 = vunpack.c.l.b16 %v91
  %v796 = vunpack.c.h.b16 %v91
  %v797 = vunpack.c.l.b16 %v92
  %v798 = vunpack.c.h.b16 %v92
  %v799 = vunpack.c.l.b16 %v93
  %v800 = vunpack.c.h.b16 %v93
  %v801 = vunpack.c.l.b16 %v94
  %v802 = vunpack.c.h.b16 %v94
  %v803 = vunpack.c.l.b16 %v95
  %v804 = vunpack.c.h.b16 %v95
  %v805 = vunpack.c.l.b16 %v96
  %v806 = vunpack.c.h.b16 %v96
  %v807 = vunpack.c.l.b16 %v97
  %v808 = vunpack.c.h.b16 %v97
  %v809 = vunpack.c.l.b16 %v98
  %v810 = vunpack.c.h.b16 %v98
  %v811 = vunpack.c.l.b16 %v99
  %v812 = vunpack.c.h.b16 %v99
  %v813 = vunpack.c.l.b16 %v100
  %v814 = vunpack.c.h.b16 %v100
  %v815 = vunpack.c.l.b16 %v101
  %v816 = vunpack.c.h.b16 %v101
  %v817 = vunpack.c.l.b16 %v102
  %v818 = vunpack.c.h.b16 %v102
  %v819 = vunpack.c.l.b16 %v103
  %v820 = vunpack.c.h.b16 %v103
  %v821 = vunpack.c.l.b16 %v104
  %v822 = vunpack.c.h.b16 %v104
  %v823 = vunpack.c.l.b16 %v105
  %v824 = vunpack.c.h.b16 %v105
  %v825 = vunpack.c.l.b16 %v106
  %v826 = vunpack.c.h.b16 %v106
  %v827 = vunpack.c.l.b16 %v107
  %v828 = vunpack.c.h.b16 %v107
  %v829 = vunpack.c.l.b16 %v108
  %v830 = vunpack.c.h.b16 %v108
  %v831 = vunpack.c.l.b16 %v109
  %v832 = vunpack.c.h.b16 %v109
  %v833 = vunpack.c.l.b16 %v110
  %v834 = vunpack.c.h.b16 %v110
  %v835 = vunpack.c.l.b16 %v111
  %v836 = vunpack.c.h.b16 %v111
  %v837 = vunpack.c.l.b16 %v112
  %v838 = vunpack.c.h.b16 %v112
  %v839 = vunpack.c.l.b16 %v113
  %v840 = vunpack.c.h.b16 %v113
  %v841 = vunpack.c.l.b16 %v114
  %v842 = vunpack.c.h.b16 %v114
  %v843 = vunpack.c.l.b16 %v115
  %v844 = vunpack.c.h.b16 %v115
  %v845 = vunpack.c.l.b16 %v116
  %v846 = vunpack.c.h.b16 %v116
  %v847 = vunpack.c.l.b16 %v117
  %v848 = vunpack.c.h.b16 %v117
  %v849 = vunpack.c.l.b16 %v118
  %v850 = vunpack.c.h.b16 %v118
  %v851 = vunpack.c.l.b16 %v119
  %v852 = vunpack.c.h.b16 %v119
  %v853 = vunpack.c.l.b16 %v120
  %v854 = vunpack.c.h.b16 %v120
  %v855 = vunpack.c.l.b16 %v121
  %v856 = vunpack.c.h.b16 %v121
  %v857 = vunpack.c.l.b16 %v122
  %v858 = vunpack.c.h.b16 %v122
  %v859 = vunpack.c.l.b16 %v123
  %v860 = vunpack.c.h.b16 %v123
  %v861 = vunpack.c.l.b16 %v124
  %v862 = vunpack.c.h.b16 %v124
  %v863 = vunpack.c.l.b16 %v125
  %v864 = vunpack.c.h.b16 %v125
  %v865 = vunpack.c.l.b16 %v126
  %v866 = vunpack.c.h.b16 %v126
  %v867 = vunpack.c.l.b16 %v127
  %v868 = vunpack.c.h.b16 %v127
  %v869 = vunpack.c.l.b16 %v128
  %v870 = vunpack.c.h.b16 %v128
  %v871 = vunpack.c.l.b16 %v129
  %v872 = vunpack.c.h.b16 %v129
  %v873 = vunpack.c.l.b16 %v130
  %v874 = vunpack.c.h.b16 %v130
  %v875 = vunpack.c.l.b16 %v131
  %v876 = vunpack.c.h.b16 %v131
  %v877 = vunpack.c.l.b16 %v132
  %v878 = vunpack.c.h.b16 %v132
  %v879 = vunpack.c.l.b16 %v133
  %v880 = vunpack.c.h.b16 %v133
  %v881 = vunpack.c.l.b16 %v134
  %v882 = vunpack.c.h.b16 %v134
  %v883 = vunpack.c.l.b16 %v135
  %v884 = vunpack.c.h.b16 %v135
  %v885 = vunpack.c.l.b16 %v136
  %v886 = vunpack.c.h.b16 %v136
  %v887 = vunpack.c.l.b16 %v137
  %v888 = vunpack.c.h.b16 %v137
  %v889 = vunpack.c.l.b16 %v138
  %v890 = vunpack.c.h.b16 %v138
  %v891 = vunpack.c.l.b16 %v139
  %v892 = vunpack.c.h.b16 %v139
  %v893 = vunpack.c.l.b16 %v140
  %v894 = vunpack.c.h.b16 %v140
  %v895 = vunpack.c.l.b16 %v141
  %v896 = vunpack.c.h.b16 %v141
  %v897 = vunpack.c.l.b16 %v142
  %v898 = vunpack.c.h.b16 %v142
  %v899 = vunpack.c.l.b16 %v143
  %v900 = vunpack.c.h.b16 %v143
  %v901 = vunpack.c.l.b16 %v144
  %v902 = vunpack.c.h.b16 %v144
  %v903 = vunpack.c.l.b16 %v145
  %v904 = vunpack.c.h.b16 %v145
  %v905 = vunpack.c.l.b16 %v146
  %v906 = vunpack.c.h.b16 %v146
  %v907 = vunpack.c.l.b16 %v147
  %v908 = vunpack.c.h.b16 %v147
  %v909 = vunpack.c.l.b16 %v148
  %v910 = vunpack.c.h.b16 %v148
  %v911 = vunpack.c.l.b16 %v149
  %v912 = vunpack.c.h.b16 %v149
  %v913 = vunpack.c.l.b16 %v150
  %v914 = vunpack.c.h.b16 %v150
  %v915 = vunpack.c.l.b16 %v151
  %v916 = vunpack.c.h.b16 %v151
  %v917 = vunpack.c.l.b16 %v152
  %v918 = vunpack.c.h.b16 %v152
  %v919 = vunpack.c.l.b16 %v153
  %v920 = vunpack.c.h.b16 %v153
  %v921 = vunpack.c.l.b16 %v154
  %v922 = vunpack.c.h.b16 %v154
  %v923 = vunpack.c.l.b16 %v155
  %v924 = vunpack.c.h.b16 %v155
  %v925 = vunpack.c.l.b16 %v156
  %v926 = vunpack.c.h.b16 %v156
  %v927 = vunpack.c.l.b16 %v157
  %v928 = vunpack.c.h.b16 %v157
  %v929 = vunpack.c.l.b16 %v158
  %v930 = vunpack.c.h.b16 %v158
  %v931 = vunpack.c.l.b16 %v159
  %v932 = vunpack.c.h.b16 %v159
  %v933 = vunpack.c.l.b16 %v160
  %v934 = vunpack.c.h.b16 %v160
  %v935 = vunpack.c.l.b16 %v161
  %v936 = vunpack.c.h.b16 %v161
  %v937 = vunpack.c.l.b16 %v162
  %v938 = vunpack.c.h.b16 %v162
  %v939 = vunpack.c.l.b16 %v163
  %v940 = vunpack.c.h.b16 %v163
  %v941 = vunpack.c.l.b16 %v164
  %v942 = vunpack.c.h.b16 %v164
  %v943 = vunpack.c.l.b16 %v165
  %v944 = vunpack.c.h.b16 %v165
  %v945 = vunpack.c.l.b16 %v166
  %v946 = vunpack.c.h.b16 %v166
  %v947 = vunpack.c.l.b16 %v167
  %v948 = vunpack.c.h.b16 %v167
  %v949 = vunpack.c.l.b16 %v168
  %v950 = vunpack.c.h.b16 %v168
  %v951 = vunpack.c.l.b16 %v169
  %v952 = vunpack.c.h.b16 %v169
  %v953 = vunpack.c.l.b16 %v170
  %v954 = vunpack.c.h.b16 %v170
  %v955 = vunpack.c.l.b16 %v171
  %v956 = vunpack.c.h.b16 %v171
  %v957 = vunpack.c.l.b16 %v172
  %v958 = vunpack.c.h.b16 %v172
  %v959 = vunpack.c.l.b16 %v173
  %v960 = vunpack.c.h.b16 %v173
  %v961 = vunpack.c.l.b16 %v174
  %v962 = vunpack.c.h.b16 %v174
  %v963 = vunpack.c.l.b16 %v175
  %v964 = vunpack.c.h.b16 %v175
  %v965 = vunpack.c.l.b16 %v176
  %v966 = vunpack.c.h.b16 %v176
  %v967 = vunpack.c.l.b16 %v177
  %v968 = vunpack.c.h.b16 %v177
  %v969 = vunpack.c.l.b16 %v178
  %v970 = vunpack.c.h.b16 %v178
  %v971 = vunpack.c.l.b16 %v179
  %v972 = vunpack.c.h.b16 %v179
  %v973 = vunpack.c.l.b16 %v180
  %v974 = vunpack.c.h.b16 %v180
  %v975 = vunpack.c.l.b16 %v181
  %v976 = vunpack.c.h.b16 %v181
  %v977 = vunpack.c.l.b16 %v182
  %v978 = vunpack.c.h.b16 %v182
  %v979 = vunpack.c.l.b16 %v183
  %v980 = vunpack.c.h.b16 %v183
  %v981 = vunpack.c.l.b16 %v184
  %v982 = vunpack.c.h.b16 %v184
  %v983 = vunpack.c.l.b16 %v185
  %v984 = vunpack.c.h.b16 %v185
  %v985 = vunpack.c.l.b16 %v186
  %v986 = vunpack.c.h.b16 %v186
  %v987 = vunpack.c.l.b16 %v187
  %v988 = vunpack.c.h.b16 %v187
  %v989 = vunpack.c.l.b16 %v188
  %v990 = vunpack.c.h.b16 %v188
  %v991 = vunpack.c.l.b16 %v189
  %v992 = vunpack.c.h.b16 %v189
  %v993 = vunpack.c.l.b16 %v190
  %v994 = vunpack.c.h.b16 %v190
  %v995 = vunpack.c.l.b16 %v191
  %v996 = vunpack.c.h.b16 %v191
  %v997 = vunpack.c.l.b16 %v192
  %v998 = vunpack.c.h.b16 %v192
  %v999 = vunpack.c.l.b16 %v193
  %v1000 = vunpack.c.h.b16 %v193
  %v1001 = vunpack.c.l.b16 %v194
  %v1002 = vunpack.c.h.b16 %v194
  %v1003 = vunpack.c.l.b16 %v195
  %v1004 = vunpack.c.h.b16 %v195
  %v1005 = vunpack.c.l.b16 %v196
  %v1006 = vunpack.c.h.b16 %v196
  %v1007 = vunpack.c.l.b16 %v197
  %v1008 = vunpack.c.h.b16 %v197
  %v1009 = vunpack.c.l.b16 %v198
  %v1010 = vunpack.c.h.b16 %v198
  %v1011 = vunpack.c.l.b16 %v199
  %v1012 = vunpack.c.h.b16 %v199
  %v1013 = vunpack.c.l.b16 %v200
  %v1014 = vunpack.c.h.b16 %v200
  %v1015 = vunpack.c.l.b16 %v201
  %v1016 = vunpack.c.h.b16 %v201
  %v1017 = vunpack.c.l.b16 %v202
  %v1018 = vunpack.c.h.b16 %v202
  %v1019 = vunpack.c.l.b16 %v203
  %v1020 = vunpack.c.h.b16 %v203
  %v1021 = vunpack.c.l.b16 %v204
  %v1022 = vunpack.c.h.b16 %v204
  %v1023 = vunpack.c.l.b16 %v205
  %v1024 = vunpack.c.h.b16 %v205
  %v1025 = vunpack.c.l.b16 %v206
  %v1026 = vunpack.c.h.b16 %v206
  %v1027 = vunpack.c.l.b16 %v207
  %v1028 = vunpack.c.h.b16 %v207
  %v1029 = vunpack.c.l.b16 %v208
  %v1030 = vunpack.c.h.b16 %v208
  %v1031 = vunpack.c.l.b16 %v209
  %v1032 = vunpack.c.h.b16 %v209
  %v1033 = vunpack.c.l.b16 %v210
  %v1034 = vunpack.c.h.b16 %v210
  %v1035 = vunpack.c.l.b16 %v211
  %v1036 = vunpack.c.h.b16 %v211
  %v1037 = vunpack.c.l.b16 %v212
  %v1038 = vunpack.c.h.b16 %v212
  %v1039 = vunpack.c.l.b16 %v213
  %v1040 = vunpack.c.h.b16 %v213
  %v1041 = vunpack.c.l.b16 %v214
  %v1042 = vunpack.c.h.b16 %v214
  %v1043 = vunpack.c.l.b16 %v215
  %v1044 = vunpack.c.h.b16 %v215
  %v1045 = vunpack.c.l.b16 %v216
  %v1046 = vunpack.c.h.b16 %v216
  %v1047 = vunpack.c.l.b16 %v217
  %v1048 = vunpack.c.h.b16 %v217
  %v1049 = vunpack.c.l.b16 %v218
  %v1050 = vunpack.c.h.b16 %v218
  %v1051 = vunpack.c.l.b16 %v219
  %v1052 = vunpack.c.h.b16 %v219
  %v1053 = vunpack.c.l.b16 %v220
  %v1054 = vunpack.c.h.b16 %v220
  %v1055 = vunpack.c.l.b16 %v221
  %v1056 = vunpack.c.h.b16 %v221
  %v1057 = vunpack.c.l.b16 %v222
  %v1058 = vunpack.c.h.b16 %v222
  %v1059 = vunpack.c.l.b16 %v223
  %v1060 = vunpack.c.h.b16 %v223
  %v1061 = vunpack.c.l.b16 %v224
  %v1062 = vunpack.c.h.b16 %v224
  %v1063 = vunpack.c.l.b16 %v225
  %v1064 = vunpack.c.h.b16 %v225
  %v1065 = vunpack.c.l.b16 %v226
  %v1066 = vunpack.c.h.b16 %v226
  %v1067 = vunpack.c.l.b16 %v227
  %v1068 = vunpack.c.h.b16 %v227
  %v1069 = vunpack.c.l.b16 %v228
  %v1070 = vunpack.c.h.b16 %v228
  %v1071 = vunpack.c.l.b16 %v229
  %v1072 = vunpack.c.h.b16 %v229
  %v1073 = vunpack.c.l.b16 %v230
  %v1074 = vunpack.c.h.b16 %v230
  %v1075 = vunpack.c.l.b16 %v231
  %v1076 = vunpack.c.h.b16 %v231
  %v1077 = vunpack.c.l.b16 %v232
  %v1078 = vunpack.c.h.b16 %v232
  %v1079 = vunpack.c.l.b16 %v233
  %v1080 = vunpack.c.h.b16 %v233
  %v1081 = vunpack.c.l.b16 %v234
  %v1082 = vunpack.c.h.b16 %v234
  %v1083 = vunpack.c.l.b16 %v235
  %v1084 = vunpack.c.h.b16 %v235
  %v1085 = vunpack.c.l.b16 %v236
  %v1086 = vunpack.c.h.b16 %v236
  %v1087 = vunpack.c.l.b16 %v237
  %v1088 = vunpack.c.h.b16 %v237
  %v1089 = vunpack.c.l.b16 %v238
  %v1090 = vunpack.c.h.b16 %v238
  %v1091 = vunpack.c.l.b16 %v239
  %v1092 = vunpack.c.h.b16 %v239
  %v1093 = vunpack.c.l.b16 %v240
  %v1094 = vunpack.c.h.b16 %v240
  %v1095 = vunpack.c.l.b16 %v241
  %v1096 = vunpack.c.h.b16 %v241
  %v1097 = vunpack.c.l.b16 %v242
  %v1098 = vunpack.c.h.b16 %v242
  %v1099 = vunpack.c.l.b16 %v243
  %v1100 = vunpack.c.h.b16 %v243
  %v1101 = vunpack.c.l.b16 %v244
  %v1102 = vunpack.c.h.b16 %v244
  %v1103 = vunpack.c.l.b16 %v245
  %v1104 = vunpack.c.h.b16 %v245
  %v1105 = vunpack.c.l.b16 %v246
  %v1106 = vunpack.c.h.b16 %v246
  %v1107 = vunpack.c.l.b16 %v247
  %v1108 = vunpack.c.h.b16 %v247
  %v1109 = vunpack.c.l.b16 %v248
  %v1110 = vunpack.c.h.b16 %v248
  %v1111 = vunpack.c.l.b16 %v249
  %v1112 = vunpack.c.h.b16 %v249
  %v1113 = vunpack.c.l.b16 %v250
  %v1114 = vunpack.c.h.b16 %v250
  %v1115 = vunpack.c.l.b16 %v251
  %v1116 = vunpack.c.h.b16 %v251
  %v1117 = vunpack.c.l.b16 %v252
  %v1118 = vunpack.c.h.b16 %v252
  %v1119 = vunpack.c.l.b16 %v253
  %v1120 = vunpack.c.h.b16 %v253
  %v1121 = vunpack.c.l.b16 %v254
  %v1122 = vunpack.c.h.b16 %v254
  %v1123 = vunpack.c.l.b16 %v255
  %v1124 = vunpack.c.h.b16 %v255
  %v1125 = vunpack.c.l.b16 %v256
  %v1126 = vunpack.c.h.b16 %v256
  %v1127 = vunpack.c.l.b16 %v257
  %v1128 = vunpack.c.h.b16 %v257
  %v1129 = vunpack.c.l.b16 %v258
  %v1130 = vunpack.c.h.b16 %v258
  %v1131 = vunpack.c.l.b16 %v259
  %v1132 = vunpack.c.h.b16 %v259
  %v1133 = vunpack.c.l.b16 %v260
  %v1134 = vunpack.c.h.b16 %v260
  %v1135 = vunpack.c.l.b16 %v261
  %v1136 = vunpack.c.h.b16 %v261
  %v1137 = vunpack.c.l.b16 %v262
  %v1138 = vunpack.c.h.b16 %v262
  %v1139 = vunpack.c.l.b16 %v263
  %v1140 = vunpack.c.h.b16 %v263
  %v1141 = vunpack.c.l.b16 %v264
  %v1142 = vunpack.c.h.b16 %v264
  %v1143 = vunpack.c.l.b16 %v265
  %v1144 = vunpack.c.h.b16 %v265
  %v1145 = vunpack.c.l.b16 %v266
  %v1146 = vunpack.c.h.b16 %v266
  %v1147 = vunpack.c.l.b16 %v267
  %v1148 = vunpack.c.h.b16 %v267
  %v1149 = vunpack.c.l.b16 %v268
  %v1150 = vunpack.c.h.b16 %v268
  %v1151 = vunpack.c.l.b16 %v269
  %v1152 = vunpack.c.h.b16 %v269
  %v1153 = vunpack.c.l.b16 %v270
  %v1154 = vunpack.c.h.b16 %v270
  %v1155 = vunpack.c.l.b16 %v271
  %v1156 = vunpack.c.h.b16 %v271
  %v1157 = vunpack.c.l.b16 %v272
  %v1158 = vunpack.c.h.b16 %v272
  %v1159 = vunpack.c.l.b16 %v273
  %v1160 = vunpack.c.h.b16 %v273
  %v1161 = vunpack.c.l.b16 %v274
  %v1162 = vunpack.c.h.b16 %v274
  %v1163 = vunpack.c.l.b16 %v275
  %v1164 = vunpack.c.h.b16 %v275
  %v1165 = vunpack.c.l.b16 %v276
  %v1166 = vunpack.c.h.b16 %v276
  %v1167 = vunpack.c.l.b16 %v277
  %v1168 = vunpack.c.h.b16 %v277
  %v1169 = vunpack.c.l.b16 %v278
  %v1170 = vunpack.c.h.b16 %v278
  %v1171 = vunpack.c.l.b16 %v279
  %v1172 = vunpack.c.h.b16 %v279
  %v1173 = vunpack.c.l.b16 %v280
  %v1174 = vunpack.c.h.b16 %v280
  %v1175 = vunpack.c.l.b16 %v281
  %v1176 = vunpack.c.h.b16 %v281
  %v1177 = vunpack.c.l.b16 %v282
  %v1178 = vunpack.c.h.b16 %v282
  %v1179 = vunpack.c.l.b16 %v283
  %v1180 = vunpack.c.h.b16 %v283
  %v1181 = vunpack.c.l.b16 %v284
  %v1182 = vunpack.c.h.b16 %v284
  %v1183 = vunpack.c.l.b16 %v285
  %v1184 = vunpack.c.h.b16 %v285
  %v1185 = vunpack.c.l.b16 %v286
  %v1186 = vunpack.c.h.b16 %v286
  %v1187 = vunpack.c.l.b16 %v287
  %v1188 = vunpack.c.h.b16 %v287
  %v1189 = vunpack.c.l.b16 %v288
  %v1190 = vunpack.c.h.b16 %v288
  %v1191 = vunpack.c.l.b16 %v289
  %v1192 = vunpack.c.h.b16 %v289
  %v1193 = vunpack.c.l.b16 %v290
  %v1194 = vunpack.c.h.b16 %v290
  %v1195 = vunpack.c.l.b16 %v291
  %v1196 = vunpack.c.h.b16 %v291
  %v1197 = vunpack.c.l.b16 %v292
  %v1198 = vunpack.c.h.b16 %v292
  %v1199 = vunpack.c.l.b16 %v293
  %v1200 = vunpack.c.h.b16 %v293
  %v1201 = vunpack.c.l.b16 %v294
  %v1202 = vunpack.c.h.b16 %v294
  %v1203 = vunpack.c.l.b16 %v295
  %v1204 = vunpack.c.h.b16 %v295
  %v1205 = vunpack.c.l.b16 %v296
  %v1206 = vunpack.c.h.b16 %v296
  %v1207 = vunpack.c.l.b16 %v297
  %v1208 = vunpack.c.h.b16 %v297
  %v1209 = vunpack.c.l.b16 %v298
  %v1210 = vunpack.c.h.b16 %v298
  %v1211 = vunpack.c.l.b16 %v299
  %v1212 = vunpack.c.h.b16 %v299
  %v1213 = vunpack.c.l.b16 %v300
  %v1214 = vunpack.c.h.b16 %v300
  %v1215 = vunpack.c.l.b16 %v301
  %v1216 = vunpack.c.h.b16 %v301
  %v1217 = vunpack.c.l.b16 %v302
  %v1218 = vunpack.c.h.b16 %v302
  %v1219 = vunpack.c.l.b16 %v303
  %v1220 = vunpack.c.h.b16 %v303
  %v1221 = vunpack.c.l.b16 %v304
  %v1222 = vunpack.c.h.b16 %v304
  %v1223 = vunpack.c.l.b16 %v305
  %v1224 = vunpack.c.h.b16 %v305
  %v1225 = vunpack.c.l.b16 %v306
  %v1226 = vunpack.c.h.b16 %v306
  %v1227 = vunpack.c.l.b16 %v307
  %v1228 = vunpack.c.h.b16 %v307
  %v1229 = vunpack.c.l.b16 %v308
  %v1230 = vunpack.c.h.b16 %v308
  %v1231 = vunpack.c.l.b16 %v309
  %v1232 = vunpack.c.h.b16 %v309
  %v1233 = vunpack.c.l.b16 %v310
  %v1234 = vunpack.c.h.b16 %v310
  %v1235 = vunpack.c.l.b16 %v311
  %v1236 = vunpack.c.h.b16 %v311
  %v1237 = vunpack.c.l.b16 %v312
  %v1238 = vunpack.c.h.b16 %v312
  %v1239 = vunpack.c.l.b16 %v313
  %v1240 = vunpack.c.h.b16 %v313
  %v1241 = vpack.c.b16 %v667, %v665
  %v1242 = vpack.c.b16 %v668, %v666
  %v1243 = vpack.c.b16 %v671, %v669
  %v1244 = vpack.c.b16 %v672, %v670
  %v1245 = vpack.c.b16 %v675, %v673
  %v1246 = vpack.c.b16 %v676, %v674
  %v1247 = vpack.c.b16 %v679, %v677
  %v1248 = vpack.c.b16 %v680, %v678
  %v1249 = vpack.c.b16 %v683, %v681
  %v1250 = vpack.c.b16 %v684, %v682
  %v1251 = vpack.c.b16 %v687, %v685
  %v1252 = vpack.c.b16 %v688, %v686
  %v1253 = vpack.c.b16 %v691, %v689
  %v1254 = vpack.c.b16 %v692, %v690
  %v1255 = vpack.c.b16 %v695, %v693
  %v1256 = vpack.c.b16 %v696, %v694
  %v1257 = vpack.c.b16 %v699, %v697
  %v1258 = vpack.c.b16 %v700, %v698
  %v1259 = vpack.c.b16 %v703, %v701
  %v1260 = vpack.c.b16 %v704, %v702
  %v1261 = vpack.c.b16 %v707, %v705
  %v1262 = vpack.c.b16 %v708, %v706
  %v1263 = vpack.c.b16 %v711, %v709
  %v1264 = vpack.c.b16 %v712, %v710
  %v1265 = vpack.c.b16 %v715, %v713
  %v1266 = vpack.c.b16 %v716, %v714
  %v1267 = vpack.c.b16 %v719, %v717
  %v1268 = vpack.c.b16 %v720, %v718
  %v1269 = vpack.c.b16 %v723, %v721
  %v1270 = vpack.c.b16 %v724, %v722
  %v1271 = vpack.c.b16 %v727, %v725
  %v1272 = vpack.c.b16 %v728, %v726
  %v1273 = vpack.c.b16 %v731, %v729
  %v1274 = vpack.c.b16 %v732, %v730
  %v1275 = vpack.c.b16 %v735, %v733
  %v1276 = vpack.c.b16 %v736, %v734
  %v1277 = vpack.c.b16 %v739, %v737
  %v1278 = vpack.c.b16 %v740, %v738
  %v1279 = vpack.c.b16 %v743, %v741
  %v1280 = vpack.c.b16 %v744, %v742
  %v1281 = vpack.c.b16 %v747, %v745
  %v1282 = vpack.c.b16 %v748, %v746
  %v1283 = vpack.c.b16 %v751, %v749
  %v1284 = vpack.c.b16 %v752, %v750
  %v1285 = vpack.c.b16 %v755, %v753
  %v1286 = vpack.c.b16 %v756, %v754
  %v1287 = vpack.c.b16 %v759, %v757
  %v1288 = vpack.c.b16 %v760, %v758
  %v1289 = vpack.c.b16 %v763, %v761
  %v1290 = vpack.c.b16 %v764, %v762
  %v1291 = vpack.c.b16 %v767, %v765
  %v1292 = vpack.c.b16 %v768, %v766
  %v1293 = vpack.c.b16 %v771, %v769
  %v1294 = vpack.c.b16 %v772, %v770
  %v1295 = vpack.c.b16 %v775, %v773
  %v1296 = vpack.c.b16 %v776, %v774
  %v1297 = vpack.c.b16 %v779, %v777
  %v1298 = vpack.c.b16 %v780, %v778
  %v1299 = vpack.c.b16 %v783, %v781
  %v1300 = vpack.c.b16 %v784, %v782
  %v1301 = vpack.c.b16 %v787, %v785
  %v1302 = vpack.c.b16 %v788, %v786
  %v1303 = vpack.c.b16 %v791, %v789
  %v1304 = vpack.c.b16 %v792, %v790
  %v1305 = vpack.c.b16 %v795, %v793
  %v1306 = vpack.c.b16 %v796, %v794
  %v1307 = vpack.c.b16 %v799, %v797
  %v1308 = vpack.c.b16 %v800, %v798
  %v1309 = vpack.c.b16 %v803, %v801
  %v1310 = vpack.c.b16 %v804, %v802
  %v1311 = vpack.c.b16 %v807, %v805
  %v1312 = vpack.c.b16 %v808, %v806
  %v1313 = vpack.c.b16 %v811, %v809
  %v1314 = vpack.c.b16 %v812, %v810
  %v1315 = vpack.c.b16 %v815, %v813
  %v1316 = vpack.c.b16 %v816, %v814
  %v1317 = vpack.c.b16 %v819, %v817
  %v1318 = vpack.c.b16 %v820, %v818
  %v1319 = vpack.c.b16 %v823, %v821
  %v1320 = vpack.c.b16 %v824, %v822
  %v1321 = vpack.c.b16 %v827, %v825
  %v1322 = vpack.c.b16 %v828, %v826
  %v1323 = vpack.c.b16 %v831, %v829
  %v1324 = vpack.c.b16 %v832, %v830
  %v1325 = vpack.c.b16 %v835, %v833
  %v1326 = vpack.c.b16 %v836, %v834
  %v1327 = vpack.c.b16 %v839, %v837
  %v1328 = vpack.c.b16 %v840, %v838
  %v1329 = vpack.c.b16 %v843, %v841
  %v1330 = vpack.c.b16 %v844, %v842
  %v1331 = vpack.c.b16 %v847, %v845
  %v1332 = vpack.c.b16 %v848, %v846
  %v1333 = vpack.c.b16 %v851, %v849
  %v1334 = vpack.c.b16 %v852, %v850
  %v1335 = vpack.c.b16 %v855, %v853
  %v1336 = vpack.c.b16 %v856, %v854
  %v1337 = vpack.c.b16 %v859, %v857
  %v1338 = vpack.c.b16 %v860, %v858
  %v1339 = vpack.c.b16 %v863, %v861
  %v1340 = vpack.c.b16 %v864, %v862
  %v1341 = vpack.c.b16 %v867, %v865
  %v1342 = vpack.c.b16 %v868, %v866
  %v1343 = vpack.c.b16 %v871, %v869
  %v1344 = vpack.c.b16 %v872, %v870
  %v1345 = vpack.c.b16 %v875, %v873
  %v1346 = vpack.c.b16 %v876, %v874
  %v1347 = vpack.c.b16 %v879, %v877
  %v1348 = vpack.c.b16 %v880, %v878
  %v1349 = vpack.c.b16 %v883, %v881
  %v1350 = vpack.c.b16 %v884, %v882
  %v1351 = vpack.c.b16 %v887, %v885
  %v1352 = vpack.c.b16 %v888, %v886
  %v1353 = vpack.c.b16 %v891, %v889
  %v1354 = vpack.c.b16 %v892, %v890
  %v1355 = vpack.c.b16 %v895, %v893
  %v1356 = vpack.c.b16 %v896, %v894
  %v1357 = vpack.c.b16 %v899, %v897
  %v1358 = vpack.c.b16 %v900, %v898
  %v1359 = vpack.c.b16 %v903, %v901
  %v1360 = vpack.c.b16 %v904, %v902
  %v1361 = vpack.c.b16 %v907, %v905
  %v1362 = vpack.c.b16 %v908, %v906
  %v1363 = vpack.c.b16 %v911, %v909
  %v1364 = vpack.c.b16 %v912, %v910
  %v1365 = vpack.c.b16 %v915, %v913
  %v1366 = vpack.c.b16 %v916, %v914
  %v1367 = vpack.c.b16 %v919, %v917
  %v1368 = vpack.c.b16 %v920, %v918
  %v1369 = vpack.c.b16 %v923, %v921
  %v1370 = vpack.c.b16 %v924, %v922
  %v1371 = vpack.c.b16 %v927, %v925
  %v1372 = vpack.c.b16 %v928, %v926
  %v1373 = vpack.c.b16 %v931, %v929
  %v1374 = vpack.c.b16 %v932, %v930
  %v1375 = vpack.c.b16 %v935, %v933
  %v1376 = vpack.c.b16 %v936, %v934
  %v1377 = vpack.c.b16 %v939, %v937
  %v1378 = vpack.c.b16 %v940, %v938
  %v1379 = vpack.c.b16 %v943, %v941
  %v1380 = vpack.c.b16 %v944, %v942
  %v1381 = vpack.c.b16 %v947, %v945
  %v1382 = vpack.c.b16 %v948, %v946
  %v1383 = vpack.c.b16 %v951, %v949
  %v1384 = vpack.c.b16 %v952, %v950
  %v1385 = vpack.c.b16 %v955, %v953
  %v1386 = vpack.c.b16 %v956, %v954
  %v1387 = vpack.c.b16 %v959, %v957
  %v1388 = vpack.c.b16 %v960, %v958
  %v1389 = vpack.c.b16 %v963, %v961
  %v1390 = vpack.c.b16 %v964, %v962
  %v1391 = vpack.c.b16 %v967, %v965
  %v1392 = vpack.c.b16 %v968, %v966
  %v1393 = vpack.c.b16 %v971, %v969
  %v1394 = vpack.c.b16 %v972, %v970
  %v1395 = vpack.c.b16 %v975, %v973
  %v1396 = vpack.c.b16 %v976, %v974
  %v1397 = vpack.c.b16 %v979, %v977
  %v1398 = vpack.c.b16 %v980, %v978
  %v1399 = vpack.c.b16 %v983, %v981
  %v1400 = vpack.c.b16 %v984, %v982
  %v1401 = vpack.c.b16 %v987, %v985
  %v1402 = vpack.c.b16 %v988, %v986
  %v1403 = vpack.c.b16 %v991, %v989
  %v1404 = vpack.c.b16 %v992, %v990
  %v1405 = vpack.c.b16 %v995, %v993
  %v1406 = vpack.c.b16 %v996, %v994
  %v1407 = vpack.c.b16 %v999, %v997
  %v1408 = vpack.c.b16 %v1000, %v998
  %v1409 = vpack.c.b16 %v1003, %v1001
  %v1410 = vpack.c.b16 %v1004, %v1002
  %v1411 = vpack.c.b16 %v1007, %v1005
  %v1412 = vpack.c.b16 %v1008, %v1006
  %v1413 = vpack.c.b16 %v1011, %v1009
  %v1414 = vpack.c.b16 %v1012, %v1010
  %v1415 = vpack.c.b16 %v1015, %v1013
  %v1416 = vpack.c.b16 %v1016, %v1014
  %v1417 = vpack.c.b16 %v1019, %v1017
  %v1418 = vpack.c.b16 %v1020, %v1018
  %v1419 = vpack.c.b16 %v1023, %v1021
  %v1420 = vpack.c.b16 %v1024, %v1022
  %v1421 = vpack.c.b16 %v1027, %v1025
  %v1422 = vpack.c.b16 %v1028, %v1026
  %v1423 = vpack.c.b16 %v1031, %v1029
  %v1424 = vpack.c.b16 %v1032, %v1030
  %v1425 = vpack.c.b16 %v1035, %v1033
  %v1426 = vpack.c.b16 %v1036, %v1034
  %v1427 = vpack.c.b16 %v1039, %v1037
  %v1428 = vpack.c.b16 %v1040, %v1038
  %v1429 = vpack.c.b16 %v1043, %v1041
  %v1430 = vpack.c.b16 %v1044, %v1042
  %v1431 = vpack.c.b16 %v1047, %v1045
  %v1432 = vpack.c.b16 %v1048, %v1046
  %v1433 = vpack.c.b16 %v1051, %v1049
  %v1434 = vpack.c.b16 %v1052, %v1050
  %v1435 = vpack.c.b16 %v1055, %v1053
  %v1436 = vpack.c.b16 %v1056, %v1054
  %v1437 = vpack.c.b16 %v1059, %v1057
  %v1438 = vpack.c.b16 %v1060, %v1058
  %v1439 = vpack.c.b16 %v1063, %v1061
  %v1440 = vpack.c.b16 %v1064, %v1062
  %v1441 = vpack.c.b16 %v1067, %v1065
  %v1442 = vpack.c.b16 %v1068, %v1066
  %v1443 = vpack.c.b16 %v1071, %v1069
  %v1444 = vpack.c.b16 %v1072, %v1070
  %v1445 = vpack.c.b16 %v1075, %v1073
  %v1446 = vpack.c.b16 %v1076, %v1074
  %v1447 = vpack.c.b16 %v1079, %v1077
  %v1448 = vpack.c.b16 %v1080, %v1078
  %v1449 = vpack.c.b16 %v1083, %v1081
  %v1450 = vpack.c.b16 %v1084, %v1082
  %v1451 = vpack.c.b16 %v1087, %v1085
  %v1452 = vpack.c.b16 %v1088, %v1086
  %v1453 = vpack.c.b16 %v1091, %v1089
  %v1454 = vpack.c.b16 %v1092, %v1090
  %v1455 = vpack.c.b16 %v1095, %v1093
  %v1456 = vpack.c.b16 %v1096, %v1094
  %v1457 = vpack.c.b16 %v1099, %v1097
  %v1458 = vpack.c.b16 %v1100, %v1098
  %v1459 = vpack.c.b16 %v1103, %v1101
  %v1460 = vpack.c.b16 %v1104, %v1102
  %v1461 = vpack.c.b16 %v1107, %v1105
  %v1462 = vpack.c.b16 %v1108, %v1106
  %v1463 = vpack.c.b16 %v1111, %v1109
  %v1464 = vpack.c.b16 %v1112, %v1110
  %v1465 = vpack.c.b16 %v1115, %v1113
  %v1466 = vpack.c.b16 %v1116, %v1114
  %v1467 = vpack.c.b16 %v1119, %v1117
  %v1468 = vpack.c.b16 %v1120, %v1118
  %v1469 = vpack.c.b16 %v1123, %v1121
  %v1470 = vpack.c.b16 %v1124, %v1122
  %v1471 = vpack.c.b16 %v1127, %v1125
  %v1472 = vpack.c.b16 %v1128, %v1126
  %v1473 = vpack.c.b16 %v1131, %v1129
  %v1474 = vpack.c.b16 %v1132, %v1130
  %v1475 = vpack.c.b16 %v1135, %v1133
  %v1476 = vpack.c.b16 %v1136, %v1134
  %v1477 = vpack.c.b16 %v1139, %v1137
  %v1478 = vpack.c.b16 %v1140, %v1138
  %v1479 = vpack.c.b16 %v1143, %v1141
  %v1480 = vpack.c.b16 %v1144, %v1142
  %v1481 = vpack.c.b16 %v1147, %v1145
  %v1482 = vpack.c.b16 %v1148, %v1146
  %v1483 = vpack.c.b16 %v1151, %v1149
  %v1484 = vpack.c.b16 %v1152, %v1150
  %v1485 = vpack.c.b16 %v1155, %v1153
  %v1486 = vpack.c.b16 %v1156, %v1154
  %v1487 = vpack.c.b16 %v1159, %v1157
  %v1488 = vpack.c.b16 %v1160, %v1158
  %v1489 = vpack.c.b16 %v1163, %v1161
  %v1490 = vpack.c.b16 %v1164, %v1162
  %v1491 = vpack.c.b16 %v1167, %v1165
  %v1492 = vpack.c.b16 %v1168, %v1166
  %v1493 = vpack.c.b16 %v1171, %v1169
  %v1494 = vpack.c.b16 %v1172, %v1170
  %v1495 = vpack.c.b16 %v1175, %v1173
  %v1496 = vpack.c.b16 %v1176, %v1174
  %v1497 = vpack.c.b16 %v1179, %v1177
  %v1498 = vpack.c.b16 %v1180, %v1178
  %v1499 = vpack.c.b16 %v1183, %v1181
  %v1500 = vpack.c.b16 %v1184, %v1182
  %v1501 = vpack.c.b16 %v1187, %v1185
  %v1502 = vpack.c.b16 %v1188, %v1186
  %v1503 = vpack.c.b16 %v1191, %v1189
  %v1504 = vpack.c.b16 %v1192, %v1190
  %v1505 = vpack.c.b16 %v1195, %v1193
  %v1506 = vpack.c.b16 %v1196, %v1194
  %v1507 = vpack.c.b16 %v1199, %v1197
  %v1508 = vpack.c.b16 %v1200, %v1198
  %v1509 = vpack.c.b16 %v1203, %v1201
  %v1510 = vpack.c.b16 %v1204, %v1202
  %v1511 = vpack.c.b16 %v1207, %v1205
  %v1512 = vpack.c.b16 %v1208, %v1206
  %v1513 = vpack.c.b16 %v1211, %v1209
  %v1514 = vpack.c.b16 %v1212, %v1210
  %v1515 = vpack.c.b16 %v1215, %v1213
  %v1516 = vpack.c.b16 %v1216, %v1214
  %v1517 = vpack.c.b16 %v1219, %v1217
  %v1518 = vpack.c.b16 %v1220, %v1218
  %v1519 = vpack.c.b16 %v1223, %v1221
  %v1520 = vpack.c.b16 %v1224, %v1222
  %v1521 = vpack.c.b16 %v1227, %v1225
  %v1522 = vpack.c.b16 %v1228, %v1226
  %v1523 = vpack.c.b16 %v1231, %v1229
  %v1524 = vpack.c.b16 %v1232, %v1230
  %v1525 = vpack.c.b16 %v1235, %v1233
  %v1526 = vpack.c.b16 %v1236, %v1234
  %v1527 = vpack.c.b16 %v1239, %v1237
  %v1528 = vpack.c.b16 %v1240, %v1238
  %1817 = vmatprep.subr.bf16.mxu0 %v1242
  %1818 = vmatpush1.bf16.msra.mxu0 %v1241
  %1819 = vmatprep.subr.bf16.mxu0 %v1244
  %1820 = vmatpush1.bf16.msra.mxu0 %v1243
  %1821 = vmatprep.subr.bf16.mxu0 %v1246
  %1822 = vmatpush1.bf16.msra.mxu0 %v1245
  %1823 = vmatprep.subr.bf16.mxu0 %v1248
  %1824 = vmatpush1.bf16.msra.mxu0 %v1247
  %1825 = vmatprep.subr.bf16.mxu0 %v1250
  %1826 = vmatpush1.bf16.msra.mxu0 %v1249
  %1827 = vmatprep.subr.bf16.mxu0 %v1252
  %1828 = vmatpush1.bf16.msra.mxu0 %v1251
  %1829 = vmatprep.subr.bf16.mxu0 %v1254
  %1830 = vmatpush1.bf16.msra.mxu0 %v1253
  %1831 = vmatprep.subr.bf16.mxu0 %v1256
  %1832 = vmatpush1.bf16.msra.mxu0 %v1255
  %1833 = vmatprep.subr.bf16.mxu0 %v1258
  %1834 = vmatpush1.bf16.msra.mxu0 %v1257
  %1835 = vmatprep.subr.bf16.mxu0 %v1260
  %1836 = vmatpush1.bf16.msra.mxu0 %v1259
  %1837 = vmatprep.subr.bf16.mxu0 %v1262
  %1838 = vmatpush1.bf16.msra.mxu0 %v1261
  %1839 = vmatprep.subr.bf16.mxu0 %v1264
  %1840 = vmatpush1.bf16.msra.mxu0 %v1263
  %1841 = vmatprep.subr.bf16.mxu0 %v1266
  %1842 = vmatpush1.bf16.msra.mxu0 %v1265
  %1843 = vmatprep.subr.bf16.mxu0 %v1268
  %1844 = vmatpush1.bf16.msra.mxu0 %v1267
  %1845 = vmatprep.subr.bf16.mxu0 %v1270
  %1846 = vmatpush1.bf16.msra.mxu0 %v1269
  %1847 = vmatprep.subr.bf16.mxu0 %v1272
  %1848 = vmatpush1.bf16.msra.mxu0 %v1271
  %1849 = vmatprep.mubr.bf16.mxu0 %v342
  %1850 = vmatmul.mubr.bf16.gmra.mrb[0].mxu0 %v341
  %v1851 = vpop.f32.mrb[0].mxu0
  %v1852 = vadd.f32 0.0, %v1851
  %v1853 = vpop.f32.mrb[0].mxu0
  %v1854 = vadd.f32 0.0, %v1853
  %v1855 = vpop.f32.mrb[0].mxu0
  %v1856 = vpop.f32.mrb[0].mxu0
  %1857 = vdwg.mxu0
  %1858 = vmatprep.subr.bf16.mxu0 %v1274
  %1859 = vmatpush1.bf16.msra.mxu0 %v1273
  %1860 = vmatprep.subr.bf16.mxu0 %v1276
  %1861 = vmatpush1.bf16.msra.mxu0 %v1275
  %1862 = vmatprep.subr.bf16.mxu0 %v1278
  %1863 = vmatpush1.bf16.msra.mxu0 %v1277
  %1864 = vmatprep.subr.bf16.mxu0 %v1280
  %1865 = vmatpush1.bf16.msra.mxu0 %v1279
  %1866 = vmatprep.subr.bf16.mxu0 %v1282
  %1867 = vmatpush1.bf16.msra.mxu0 %v1281
  %1868 = vmatprep.subr.bf16.mxu0 %v1284
  %1869 = vmatpush1.bf16.msra.mxu0 %v1283
  %1870 = vmatprep.subr.bf16.mxu0 %v1286
  %1871 = vmatpush1.bf16.msra.mxu0 %v1285
  %1872 = vmatprep.subr.bf16.mxu0 %v1288
  %1873 = vmatpush1.bf16.msra.mxu0 %v1287
  %1874 = vmatprep.subr.bf16.mxu0 %v1290
  %1875 = vmatpush1.bf16.msra.mxu0 %v1289
  %1876 = vmatprep.subr.bf16.mxu0 %v1292
  %1877 = vmatpush1.bf16.msra.mxu0 %v1291
  %1878 = vmatprep.subr.bf16.mxu0 %v1294
  %1879 = vmatpush1.bf16.msra.mxu0 %v1293
  %1880 = vmatprep.subr.bf16.mxu0 %v1296
  %1881 = vmatpush1.bf16.msra.mxu0 %v1295
  %1882 = vmatprep.subr.bf16.mxu0 %v1298
  %1883 = vmatpush1.bf16.msra.mxu0 %v1297
  %1884 = vmatprep.subr.bf16.mxu0 %v1300
  %1885 = vmatpush1.bf16.msra.mxu0 %v1299
  %1886 = vmatprep.subr.bf16.mxu0 %v1302
  %1887 = vmatpush1.bf16.msra.mxu0 %v1301
  %1888 = vmatprep.subr.bf16.mxu0 %v1304
  %1889 = vmatpush1.bf16.msra.mxu0 %v1303
  %1890 = vmatprep.mubr.bf16.mxu0 %v344
  %1891 = vmatmul.mubr.bf16.gmra.mrb[0].mxu0 %v343
  %v1892 = vpop.f32.mrb[0].mxu0
  %v1893 = vadd.f32 %v1852, %v1892
  %v1894 = vpop.f32.mrb[0].mxu0
  %v1895 = vadd.f32 %v1854, %v1894
  %v1896 = vpop.f32.mrb[0].mxu0
  %v1897 = vpop.f32.mrb[0].mxu0
  %1898 = vdwg.mxu0
  %1899 = vmatprep.subr.bf16.mxu0 %v1306
  %1900 = vmatpush1.bf16.msra.mxu0 %v1305
  %1901 = vmatprep.subr.bf16.mxu0 %v1308
  %1902 = vmatpush1.bf16.msra.mxu0 %v1307
  %1903 = vmatprep.subr.bf16.mxu0 %v1310
  %1904 = vmatpush1.bf16.msra.mxu0 %v1309
  %1905 = vmatprep.subr.bf16.mxu0 %v1312
  %1906 = vmatpush1.bf16.msra.mxu0 %v1311
  %1907 = vmatprep.subr.bf16.mxu0 %v1314
  %1908 = vmatpush1.bf16.msra.mxu0 %v1313
  %1909 = vmatprep.subr.bf16.mxu0 %v1316
  %1910 = vmatpush1.bf16.msra.mxu0 %v1315
  %1911 = vmatprep.subr.bf16.mxu0 %v1318
  %1912 = vmatpush1.bf16.msra.mxu0 %v1317
  %1913 = vmatprep.subr.bf16.mxu0 %v1320
  %1914 = vmatpush1.bf16.msra.mxu0 %v1319
  %1915 = vmatprep.subr.bf16.mxu0 %v1322
  %1916 = vmatpush1.bf16.msra.mxu0 %v1321
  %1917 = vmatprep.subr.bf16.mxu0 %v1324
  %1918 = vmatpush1.bf16.msra.mxu0 %v1323
  %1919 = vmatprep.subr.bf16.mxu0 %v1326
  %1920 = vmatpush1.bf16.msra.mxu0 %v1325
  %1921 = vmatprep.subr.bf16.mxu0 %v1328
  %1922 = vmatpush1.bf16.msra.mxu0 %v1327
  %1923 = vmatprep.subr.bf16.mxu0 %v1330
  %1924 = vmatpush1.bf16.msra.mxu0 %v1329
  %1925 = vmatprep.subr.bf16.mxu0 %v1332
  %1926 = vmatpush1.bf16.msra.mxu0 %v1331
  %1927 = vmatprep.subr.bf16.mxu0 %v1334
  %1928 = vmatpush1.bf16.msra.mxu0 %v1333
  %1929 = vmatprep.subr.bf16.mxu0 %v1336
  %1930 = vmatpush1.bf16.msra.mxu0 %v1335
  %1931 = vmatprep.mubr.bf16.mxu0 %v346
  %1932 = vmatmul.mubr.bf16.gmra.mrb[0].mxu0 %v345
  %v1933 = vpop.f32.mrb[0].mxu0
  %v1934 = vadd.f32 %v1893, %v1933
  %v1935 = vpop.f32.mrb[0].mxu0
  %v1936 = vadd.f32 %v1895, %v1935
  %v1937 = vpop.f32.mrb[0].mxu0
  %v1938 = vpop.f32.mrb[0].mxu0
  %1939 = vdwg.mxu0
  %1940 = vmatprep.subr.bf16.mxu0 %v1338
  %1941 = vmatpush1.bf16.msra.mxu0 %v1337
  %1942 = vmatprep.subr.bf16.mxu0 %v1340
  %1943 = vmatpush1.bf16.msra.mxu0 %v1339
  %1944 = vmatprep.subr.bf16.mxu0 %v1342
  %1945 = vmatpush1.bf16.msra.mxu0 %v1341
  %1946 = vmatprep.subr.bf16.mxu0 %v1344
  %1947 = vmatpush1.bf16.msra.mxu0 %v1343
  %1948 = vmatprep.subr.bf16.mxu0 %v1346
  %1949 = vmatpush1.bf16.msra.mxu0 %v1345
  %1950 = vmatprep.subr.bf16.mxu0 %v1348
  %1951 = vmatpush1.bf16.msra.mxu0 %v1347
  %1952 = vmatprep.subr.bf16.mxu0 %v1350
  %1953 = vmatpush1.bf16.msra.mxu0 %v1349
  %1954 = vmatprep.subr.bf16.mxu0 %v1352
  %1955 = vmatpush1.bf16.msra.mxu0 %v1351
  %1956 = vmatprep.subr.bf16.mxu0 %v1354
  %1957 = vmatpush1.bf16.msra.mxu0 %v1353
  %1958 = vmatprep.subr.bf16.mxu0 %v1356
  %1959 = vmatpush1.bf16.msra.mxu0 %v1355
  %1960 = vmatprep.subr.bf16.mxu0 %v1358
  %1961 = vmatpush1.bf16.msra.mxu0 %v1357
  %1962 = vmatprep.subr.bf16.mxu0 %v1360
  %1963 = vmatpush1.bf16.msra.mxu0 %v1359
  %1964 = vmatprep.subr.bf16.mxu0 %v1362
  %1965 = vmatpush1.bf16.msra.mxu0 %v1361
  %1966 = vmatprep.subr.bf16.mxu0 %v1364
  %1967 = vmatpush1.bf16.msra.mxu0 %v1363
  %1968 = vmatprep.subr.bf16.mxu0 %v1366
  %1969 = vmatpush1.bf16.msra.mxu0 %v1365
  %1970 = vmatprep.subr.bf16.mxu0 %v1368
  %1971 = vmatpush1.bf16.msra.mxu0 %v1367
  %1972 = vmatprep.mubr.bf16.mxu0 %v348
  %1973 = vmatmul.mubr.bf16.gmra.mrb[0].mxu0 %v347
  %v1974 = vpop.f32.mrb[0].mxu0
  %v1975 = vadd.f32 %v1934, %v1974
  %v1976 = vpop.f32.mrb[0].mxu0
  %v1977 = vadd.f32 %v1936, %v1976
  %v1978 = vpop.f32.mrb[0].mxu0
  %v1979 = vpop.f32.mrb[0].mxu0
  %1980 = vdwg.mxu0
  %1981 = vmatprep.subr.bf16.mxu0 %v1370
  %1982 = vmatpush1.bf16.msra.mxu0 %v1369
  %1983 = vmatprep.subr.bf16.mxu0 %v1372
  %1984 = vmatpush1.bf16.msra.mxu0 %v1371
  %1985 = vmatprep.subr.bf16.mxu0 %v1374
  %1986 = vmatpush1.bf16.msra.mxu0 %v1373
  %1987 = vmatprep.subr.bf16.mxu0 %v1376
  %1988 = vmatpush1.bf16.msra.mxu0 %v1375
  %1989 = vmatprep.subr.bf16.mxu0 %v1378
  %1990 = vmatpush1.bf16.msra.mxu0 %v1377
  %1991 = vmatprep.subr.bf16.mxu0 %v1380
  %1992 = vmatpush1.bf16.msra.mxu0 %v1379
  %1993 = vmatprep.subr.bf16.mxu0 %v1382
  %1994 = vmatpush1.bf16.msra.mxu0 %v1381
  %1995 = vmatprep.subr.bf16.mxu0 %v1384
  %1996 = vmatpush1.bf16.msra.mxu0 %v1383
  %1997 = vmatprep.subr.bf16.mxu0 %v1386
  %1998 = vmatpush1.bf16.msra.mxu0 %v1385
  %1999 = vmatprep.subr.bf16.mxu0 %v1388
  %2000 = vmatpush1.bf16.msra.mxu0 %v1387
  %2001 = vmatprep.subr.bf16.mxu0 %v1390
  %2002 = vmatpush1.bf16.msra.mxu0 %v1389
  %2003 = vmatprep.subr.bf16.mxu0 %v1392
  %2004 = vmatpush1.bf16.msra.mxu0 %v1391
  %2005 = vmatprep.subr.bf16.mxu0 %v1394
  %2006 = vmatpush1.bf16.msra.mxu0 %v1393
  %2007 = vmatprep.subr.bf16.mxu0 %v1396
  %2008 = vmatpush1.bf16.msra.mxu0 %v1395
  %2009 = vmatprep.subr.bf16.mxu0 %v1398
  %2010 = vmatpush1.bf16.msra.mxu0 %v1397
  %2011 = vmatprep.subr.bf16.mxu0 %v1400
  %2012 = vmatpush1.bf16.msra.mxu0 %v1399
  %2013 = vmatprep.mubr.bf16.mxu0 %v350
  %2014 = vmatmul.mubr.bf16.gmra.mrb[0].mxu0 %v349
  %v2015 = vpop.f32.mrb[0].mxu0
  %v2016 = vadd.f32 %v1975, %v2015
  %v2017 = vpop.f32.mrb[0].mxu0
  %v2018 = vadd.f32 %v1977, %v2017
  %v2019 = vpop.f32.mrb[0].mxu0
  %v2020 = vpop.f32.mrb[0].mxu0
  %2021 = vdwg.mxu0
  %2022 = vmatprep.subr.bf16.mxu0 %v1402
  %2023 = vmatpush1.bf16.msra.mxu0 %v1401
  %2024 = vmatprep.subr.bf16.mxu0 %v1404
  %2025 = vmatpush1.bf16.msra.mxu0 %v1403
  %2026 = vmatprep.subr.bf16.mxu0 %v1406
  %2027 = vmatpush1.bf16.msra.mxu0 %v1405
  %2028 = vmatprep.subr.bf16.mxu0 %v1408
  %2029 = vmatpush1.bf16.msra.mxu0 %v1407
  %2030 = vmatprep.subr.bf16.mxu0 %v1410
  %2031 = vmatpush1.bf16.msra.mxu0 %v1409
  %2032 = vmatprep.subr.bf16.mxu0 %v1412
  %2033 = vmatpush1.bf16.msra.mxu0 %v1411
  %2034 = vmatprep.subr.bf16.mxu0 %v1414
  %2035 = vmatpush1.bf16.msra.mxu0 %v1413
  %2036 = vmatprep.subr.bf16.mxu0 %v1416
  %2037 = vmatpush1.bf16.msra.mxu0 %v1415
  %2038 = vmatprep.subr.bf16.mxu0 %v1418
  %2039 = vmatpush1.bf16.msra.mxu0 %v1417
  %2040 = vmatprep.subr.bf16.mxu0 %v1420
  %2041 = vmatpush1.bf16.msra.mxu0 %v1419
  %2042 = vmatprep.subr.bf16.mxu0 %v1422
  %2043 = vmatpush1.bf16.msra.mxu0 %v1421
  %2044 = vmatprep.subr.bf16.mxu0 %v1424
  %2045 = vmatpush1.bf16.msra.mxu0 %v1423
  %2046 = vmatprep.subr.bf16.mxu0 %v1426
  %2047 = vmatpush1.bf16.msra.mxu0 %v1425
  %2048 = vmatprep.subr.bf16.mxu0 %v1428
  %2049 = vmatpush1.bf16.msra.mxu0 %v1427
  %2050 = vmatprep.subr.bf16.mxu0 %v1430
  %2051 = vmatpush1.bf16.msra.mxu0 %v1429
  %2052 = vmatprep.subr.bf16.mxu0 %v1432
  %2053 = vmatpush1.bf16.msra.mxu0 %v1431
  %2054 = vmatprep.mubr.bf16.mxu0 %v352
  %2055 = vmatmul.mubr.bf16.gmra.mrb[0].mxu0 %v351
  %v2056 = vpop.f32.mrb[0].mxu0
  %v2057 = vadd.f32 %v2016, %v2056
  %v2058 = vpop.f32.mrb[0].mxu0
  %v2059 = vadd.f32 %v2018, %v2058
  %v2060 = vpop.f32.mrb[0].mxu0
  %v2061 = vpop.f32.mrb[0].mxu0
  %2062 = vdwg.mxu0
  %2063 = vmatprep.subr.bf16.mxu0 %v1434
  %2064 = vmatpush1.bf16.msra.mxu0 %v1433
  %2065 = vmatprep.subr.bf16.mxu0 %v1436
  %2066 = vmatpush1.bf16.msra.mxu0 %v1435
  %2067 = vmatprep.subr.bf16.mxu0 %v1438
  %2068 = vmatpush1.bf16.msra.mxu0 %v1437
  %2069 = vmatprep.subr.bf16.mxu0 %v1440
  %2070 = vmatpush1.bf16.msra.mxu0 %v1439
  %2071 = vmatprep.subr.bf16.mxu0 %v1442
  %2072 = vmatpush1.bf16.msra.mxu0 %v1441
  %2073 = vmatprep.subr.bf16.mxu0 %v1444
  %2074 = vmatpush1.bf16.msra.mxu0 %v1443
  %2075 = vmatprep.subr.bf16.mxu0 %v1446
  %2076 = vmatpush1.bf16.msra.mxu0 %v1445
  %2077 = vmatprep.subr.bf16.mxu0 %v1448
  %2078 = vmatpush1.bf16.msra.mxu0 %v1447
  %2079 = vmatprep.subr.bf16.mxu0 %v1450
  %2080 = vmatpush1.bf16.msra.mxu0 %v1449
  %2081 = vmatprep.subr.bf16.mxu0 %v1452
  %2082 = vmatpush1.bf16.msra.mxu0 %v1451
  %2083 = vmatprep.subr.bf16.mxu0 %v1454
  %2084 = vmatpush1.bf16.msra.mxu0 %v1453
  %2085 = vmatprep.subr.bf16.mxu0 %v1456
  %2086 = vmatpush1.bf16.msra.mxu0 %v1455
  %2087 = vmatprep.subr.bf16.mxu0 %v1458
  %2088 = vmatpush1.bf16.msra.mxu0 %v1457
  %2089 = vmatprep.subr.bf16.mxu0 %v1460
  %2090 = vmatpush1.bf16.msra.mxu0 %v1459
  %2091 = vmatprep.subr.bf16.mxu0 %v1462
  %2092 = vmatpush1.bf16.msra.mxu0 %v1461
  %2093 = vmatprep.subr.bf16.mxu0 %v1464
  %2094 = vmatpush1.bf16.msra.mxu0 %v1463
  %2095 = vmatprep.mubr.bf16.mxu0 %v354
  %2096 = vmatmul.mubr.bf16.gmra.mrb[0].mxu0 %v353
  %v2097 = vpop.f32.mrb[0].mxu0
  %v2098 = vadd.f32 %v2057, %v2097
  %v2099 = vpop.f32.mrb[0].mxu0
  %v2100 = vadd.f32 %v2059, %v2099
  %v2101 = vpop.f32.mrb[0].mxu0
  %v2102 = vpop.f32.mrb[0].mxu0
  %2103 = vdwg.mxu0
  %2104 = vmatprep.subr.bf16.mxu0 %v1466
  %2105 = vmatpush1.bf16.msra.mxu0 %v1465
  %2106 = vmatprep.subr.bf16.mxu0 %v1468
  %2107 = vmatpush1.bf16.msra.mxu0 %v1467
  %2108 = vmatprep.subr.bf16.mxu0 %v1470
  %2109 = vmatpush1.bf16.msra.mxu0 %v1469
  %2110 = vmatprep.subr.bf16.mxu0 %v1472
  %2111 = vmatpush1.bf16.msra.mxu0 %v1471
  %2112 = vmatprep.subr.bf16.mxu0 %v1474
  %2113 = vmatpush1.bf16.msra.mxu0 %v1473
  %2114 = vmatprep.subr.bf16.mxu0 %v1476
  %2115 = vmatpush1.bf16.msra.mxu0 %v1475
  %2116 = vmatprep.subr.bf16.mxu0 %v1478
  %2117 = vmatpush1.bf16.msra.mxu0 %v1477
  %2118 = vmatprep.subr.bf16.mxu0 %v1480
  %2119 = vmatpush1.bf16.msra.mxu0 %v1479
  %2120 = vmatprep.subr.bf16.mxu0 %v1482
  %2121 = vmatpush1.bf16.msra.mxu0 %v1481
  %2122 = vmatprep.subr.bf16.mxu0 %v1484
  %2123 = vmatpush1.bf16.msra.mxu0 %v1483
  %2124 = vmatprep.subr.bf16.mxu0 %v1486
  %2125 = vmatpush1.bf16.msra.mxu0 %v1485
  %2126 = vmatprep.subr.bf16.mxu0 %v1488
  %2127 = vmatpush1.bf16.msra.mxu0 %v1487
  %2128 = vmatprep.subr.bf16.mxu0 %v1490
  %2129 = vmatpush1.bf16.msra.mxu0 %v1489
  %2130 = vmatprep.subr.bf16.mxu0 %v1492
  %2131 = vmatpush1.bf16.msra.mxu0 %v1491
  %2132 = vmatprep.subr.bf16.mxu0 %v1494
  %2133 = vmatpush1.bf16.msra.mxu0 %v1493
  %2134 = vmatprep.subr.bf16.mxu0 %v1496
  %2135 = vmatpush1.bf16.msra.mxu0 %v1495
  %2136 = vmatprep.mubr.bf16.mxu0 %v356
  %2137 = vmatmul.mubr.bf16.gmra.mrb[0].mxu0 %v355
  %v2138 = vpop.f32.mrb[0].mxu0
  %v2139 = vadd.f32 %v2098, %v2138
  %v2140 = vpop.f32.mrb[0].mxu0
  %v2141 = vadd.f32 %v2100, %v2140
  %v2142 = vpop.f32.mrb[0].mxu0
  %v2143 = vpop.f32.mrb[0].mxu0
  %2144 = vdwg.mxu0
  %2145 = vmatprep.subr.bf16.mxu0 %v1498
  %2146 = vmatpush1.bf16.msra.mxu0 %v1497
  %2147 = vmatprep.subr.bf16.mxu0 %v1500
  %2148 = vmatpush1.bf16.msra.mxu0 %v1499
  %2149 = vmatprep.subr.bf16.mxu0 %v1502
  %2150 = vmatpush1.bf16.msra.mxu0 %v1501
  %2151 = vmatprep.subr.bf16.mxu0 %v1504
  %2152 = vmatpush1.bf16.msra.mxu0 %v1503
  %2153 = vmatprep.subr.bf16.mxu0 %v1506
  %2154 = vmatpush1.bf16.msra.mxu0 %v1505
  %2155 = vmatprep.subr.bf16.mxu0 %v1508
  %2156 = vmatpush1.bf16.msra.mxu0 %v1507
  %2157 = vmatprep.subr.bf16.mxu0 %v1510
  %2158 = vmatpush1.bf16.msra.mxu0 %v1509
  %2159 = vmatprep.subr.bf16.mxu0 %v1512
  %2160 = vmatpush1.bf16.msra.mxu0 %v1511
  %2161 = vmatprep.subr.bf16.mxu0 %v1514
  %2162 = vmatpush1.bf16.msra.mxu0 %v1513
  %2163 = vmatprep.subr.bf16.mxu0 %v1516
  %2164 = vmatpush1.bf16.msra.mxu0 %v1515
  %2165 = vmatprep.subr.bf16.mxu0 %v1518
  %2166 = vmatpush1.bf16.msra.mxu0 %v1517
  %2167 = vmatprep.subr.bf16.mxu0 %v1520
  %2168 = vmatpush1.bf16.msra.mxu0 %v1519
  %2169 = vmatprep.subr.bf16.mxu0 %v1522
  %2170 = vmatpush1.bf16.msra.mxu0 %v1521
  %2171 = vmatprep.subr.bf16.mxu0 %v1524
  %2172 = vmatpush1.bf16.msra.mxu0 %v1523
  %2173 = vmatprep.subr.bf16.mxu0 %v1526
  %2174 = vmatpush1.bf16.msra.mxu0 %v1525
  %2175 = vmatprep.subr.bf16.mxu0 %v1528
  %2176 = vmatpush1.bf16.msra.mxu0 %v1527
  %2177 = vmatprep.mubr.bf16.mxu0 %v358
  %2178 = vmatmul.mubr.bf16.gmra.mrb[0].mxu0 %v357
  %v2179 = vpop.f32.mrb[0].mxu0
  %v2180 = vadd.f32 %v2139, %v2179
  %v2181 = vpop.f32.mrb[0].mxu0
  %v2182 = vadd.f32 %v2141, %v2181
  %v2183 = vpop.f32.mrb[0].mxu0
  %v2184 = vpop.f32.mrb[0].mxu0
  %2185 = vdwg.mxu0
  %v2186 = vld [vmem:[%s2] sm:$0x3]
  %v2188 = vlaneseq
  %v2189 = vshrl.u32 %v2188, 7
  %v2190 = vsub.s32 0, %v2189
  %v2191 = vrot.slane %v2186, %v2190
  %v2192 = vlaneseq
  %v2193 = vshrl.u32 %v2192, 7
  %v2194 = vsub.s32 1, %v2193
  %v2195 = vrot.slane %v2186, %v2194
  %v2198 = vmul.f32 %v2180, %v2191
  %v2199 = vmul.f32 %v2182, %v2195
  %v2200 = vld [vmem:[%s3] sm:$0x3]
  %v2202 = vlaneseq
  %v2203 = vshrl.u32 %v2202, 7
  %v2204 = vsub.s32 0, %v2203
  %v2205 = vrot.slane %v2200, %v2204
  %v2206 = vlaneseq
  %v2207 = vshrl.u32 %v2206, 7
  %v2208 = vsub.s32 1, %v2207
  %v2209 = vrot.slane %v2200, %v2208
  %v2212 = vadd.f32 %v2198, %v2205
  %v2213 = vadd.f32 %v2199, %v2209
  %vm2214 = vcmp.ge.f32.partialorder %v2212, 0.0
  %vm2215 = vcmp.ge.f32.partialorder %v2213, 0.0
  %v2216 = vmul.f32 %v2212, 0.01
  %v2217 = vmul.f32 %v2213, 0.01
  %v2218 = vsel %vm2214, %v2212, %v2216
  %v2219 = vsel %vm2215, %v2213, %v2217
  %2220 = vst [vmem:[%s4] sm:$0xff] %v2218
  %2221 = vst [vmem:[%s4 + $0x8] sm:$0xff] %v2219
  // Predicated region
  $region18: #{feat_extraction_forward.23} parent=0 // pred_check
    _
  $region19: #{feat_extraction_forward.23} parent=0 // pred_check_branch
    %2223 = sbr.rel (0) target = $region21
  $region20: #{feat_extraction_forward.23} parent=0 // pred_region
    _
  $region21: #{feat_extraction_forward.23} parent=0 // pred_fallthru
    _
  // Predicated region
  $region22: #{feat_extraction_forward.23} parent=0 // pred_check
    _
  $region23: #{feat_extraction_forward.23} parent=0 // pred_check_branch
    %2225 = sbr.rel (0) target = $region25
  $region24: #{feat_extraction_forward.23} parent=0 // pred_region
    _
  $region25: #{feat_extraction_forward.23} parent=0 // pred_fallthru
    _

// kernel: feat_extraction_forward.25
$region0: #{feat_extraction_forward.25}
  #allocation0 [shape = 'u32[]', space=smem, size = 0x4, offset = 0x4, fixed_abs, tag = 'smem constant byte address 0x4 - core index']
  #allocation1 [shape = 'u32[144,128]{1,0:T(1,128)}', space=vmem, size = 0x12000, scoped, tag = 'internal scratch']
  %s0 = inlined_call_operand.vmem [shape: bf16[8,2304], index: 0, kind: input, shape index: {}]
  %s1 = inlined_call_operand.vmem [shape: bf16[2304,128], index: 1, kind: input, shape index: {}]
  %s2 = inlined_call_operand.vmem [shape: f32[1,128], index: 2, kind: input, shape index: {}]
  %s3 = inlined_call_operand.vmem [shape: f32[1,128], index: 3, kind: input, shape index: {}]
  %s4 = inlined_call_operand.vmem [shape: f32[8,128], index: 4, kind: output, shape index: {}]
  %s5 = sld [smem:[#allocation0]]
  $region26: #{feat_extraction_forward.25} parent=0
    _
  %s7 = ssub.s32 1, %s5
  %s8 = scalar_select 0, %s7, %s5
  // Predicated region
  $region2: #{feat_extraction_forward.25} parent=0 // pred_check
    _
  $region3: #{feat_extraction_forward.25} parent=0 // pred_check_branch
    %10 = sbr.rel (0) target = $region5
  $region4: #{feat_extraction_forward.25} parent=0 // pred_region
    _
  $region5: #{feat_extraction_forward.25} parent=0 // pred_fallthru
    _
  // Predicated region
  $region6: #{feat_extraction_forward.25} parent=0 // pred_check
    _
  $region7: #{feat_extraction_forward.25} parent=0 // pred_check_branch
    %12 = sbr.rel (0) target = $region9
  $region8: #{feat_extraction_forward.25} parent=0 // pred_region
    _
  $region9: #{feat_extraction_forward.25} parent=0 // pred_fallthru
    _
  // Predicated region
  $region10: #{feat_extraction_forward.25} parent=0 // pred_check
    _
  $region11: #{feat_extraction_forward.25} parent=0 // pred_check_branch
    %14 = sbr.rel (0) target = $region13
  $region12: #{feat_extraction_forward.25} parent=0 // pred_region
    _
  $region13: #{feat_extraction_forward.25} parent=0 // pred_fallthru
    _
  // Predicated region
  $region14: #{feat_extraction_forward.25} parent=0 // pred_check
    _
  $region15: #{feat_extraction_forward.25} parent=0 // pred_check_branch
    %16 = sbr.rel (0) target = $region17
  $region16: #{feat_extraction_forward.25} parent=0 // pred_region
    _
  $region17: #{feat_extraction_forward.25} parent=0 // pred_fallthru
    _
  %v18 = vld [vmem:[%s0] sm:$0xff]
  %v19 = vld [vmem:[%s0 + $0x8] sm:$0xff]
  %v20 = vld [vmem:[%s0 + $0x10] sm:$0xff]
  %v21 = vld [vmem:[%s0 + $0x18] sm:$0xff]
  %v22 = vld [vmem:[%s0 + $0x20] sm:$0xff]
  %v23 = vld [vmem:[%s0 + $0x28] sm:$0xff]
  %v24 = vld [vmem:[%s0 + $0x30] sm:$0xff]
  %v25 = vld [vmem:[%s0 + $0x38] sm:$0xff]
  %v26 = vld [vmem:[%s0 + $0x40] sm:$0xff]
  %v27 = vld [vmem:[%s1] sm:$0xf]
  %v28 = vld [vmem:[%s1 + $0x4] sm:$0xf]
  %v29 = vld [vmem:[%s1 + $0x8] sm:$0xf]
  %v30 = vld [vmem:[%s1 + $0xc] sm:$0xf]
  %v31 = vld [vmem:[%s1 + $0x10] sm:$0xf]
  %v32 = vld [vmem:[%s1 + $0x14] sm:$0xf]
  %v33 = vld [vmem:[%s1 + $0x18] sm:$0xf]
  %v34 = vld [vmem:[%s1 + $0x1c] sm:$0xf]
  %v35 = vld [vmem:[%s1 + $0x20] sm:$0xf]
  %v36 = vld [vmem:[%s1 + $0x24] sm:$0xf]
  %v37 = vld [vmem:[%s1 + $0x28] sm:$0xf]
  %v38 = vld [vmem:[%s1 + $0x2c] sm:$0xf]
  %v39 = vld [vmem:[%s1 + $0x30] sm:$0xf]
  %v40 = vld [vmem:[%s1 + $0x34] sm:$0xf]
  %v41 = vld [vmem:[%s1 + $0x38] sm:$0xf]
  %v42 = vld [vmem:[%s1 + $0x3c] sm:$0xf]
  %v43 = vld [vmem:[%s1 + $0x40] sm:$0xf]
  %v44 = vld [vmem:[%s1 + $0x44] sm:$0xf]
  %v45 = vld [vmem:[%s1 + $0x48] sm:$0xf]
  %v46 = vld [vmem:[%s1 + $0x4c] sm:$0xf]
  %v47 = vld [vmem:[%s1 + $0x50] sm:$0xf]
  %v48 = vld [vmem:[%s1 + $0x54] sm:$0xf]
  %v49 = vld [vmem:[%s1 + $0x58] sm:$0xf]
  %v50 = vld [vmem:[%s1 + $0x5c] sm:$0xf]
  %v51 = vld [vmem:[%s1 + $0x60] sm:$0xf]
  %v52 = vld [vmem:[%s1 + $0x64] sm:$0xf]
  %v53 = vld [vmem:[%s1 + $0x68] sm:$0xf]
  %v54 = vld [vmem:[%s1 + $0x6c] sm:$0xf]
  %v55 = vld [vmem:[%s1 + $0x70] sm:$0xf]
  %v56 = vld [vmem:[%s1 + $0x74] sm:$0xf]
  %v57 = vld [vmem:[%s1 + $0x78] sm:$0xf]
  %v58 = vld [vmem:[%s1 + $0x7c] sm:$0xf]
  %v59 = vld [vmem:[%s1 + $0x80] sm:$0xf]
  %v60 = vld [vmem:[%s1 + $0x84] sm:$0xf]
  %v61 = vld [vmem:[%s1 + $0x88] sm:$0xf]
  %v62 = vld [vmem:[%s1 + $0x8c] sm:$0xf]
  %v63 = vld [vmem:[%s1 + $0x90] sm:$0xf]
  %v64 = vld [vmem:[%s1 + $0x94] sm:$0xf]
  %v65 = vld [vmem:[%s1 + $0x98] sm:$0xf]
  %v66 = vld [vmem:[%s1 + $0x9c] sm:$0xf]
  %v67 = vld [vmem:[%s1 + $0xa0] sm:$0xf]
  %v68 = vld [vmem:[%s1 + $0xa4] sm:$0xf]
  %v69 = vld [vmem:[%s1 + $0xa8] sm:$0xf]
  %v70 = vld [vmem:[%s1 + $0xac] sm:$0xf]
  %v71 = vld [vmem:[%s1 + $0xb0] sm:$0xf]
  %v72 = vld [vmem:[%s1 + $0xb4] sm:$0xf]
  %v73 = vld [vmem:[%s1 + $0xb8] sm:$0xf]
  %v74 = vld [vmem:[%s1 + $0xbc] sm:$0xf]
  %v75 = vld [vmem:[%s1 + $0xc0] sm:$0xf]
  %v76 = vld [vmem:[%s1 + $0xc4] sm:$0xf]
  %v77 = vld [vmem:[%s1 + $0xc8] sm:$0xf]
  %v78 = vld [vmem:[%s1 + $0xcc] sm:$0xf]
  %v79 = vld [vmem:[%s1 + $0xd0] sm:$0xf]
  %v80 = vld [vmem:[%s1 + $0xd4] sm:$0xf]
  %v81 = vld [vmem:[%s1 + $0xd8] sm:$0xf]
  %v82 = vld [vmem:[%s1 + $0xdc] sm:$0xf]
  %v83 = vld [vmem:[%s1 + $0xe0] sm:$0xf]
  %v84 = vld [vmem:[%s1 + $0xe4] sm:$0xf]
  %v85 = vld [vmem:[%s1 + $0xe8] sm:$0xf]
  %v86 = vld [vmem:[%s1 + $0xec] sm:$0xf]
  %v87 = vld [vmem:[%s1 + $0xf0] sm:$0xf]
  %v88 = vld [vmem:[%s1 + $0xf4] sm:$0xf]
  %v89 = vld [vmem:[%s1 + $0xf8] sm:$0xf]
  %v90 = vld [vmem:[%s1 + $0xfc] sm:$0xf]
  %v91 = vld [vmem:[%s1 + $0x100] sm:$0xf]
  %v92 = vld [vmem:[%s1 + $0x104] sm:$0xf]
  %v93 = vld [vmem:[%s1 + $0x108] sm:$0xf]
  %v94 = vld [vmem:[%s1 + $0x10c] sm:$0xf]
  %v95 = vld [vmem:[%s1 + $0x110] sm:$0xf]
  %v96 = vld [vmem:[%s1 + $0x114] sm:$0xf]
  %v97 = vld [vmem:[%s1 + $0x118] sm:$0xf]
  %v98 = vld [vmem:[%s1 + $0x11c] sm:$0xf]
  %v99 = vld [vmem:[%s1 + $0x120] sm:$0xf]
  %v100 = vld [vmem:[%s1 + $0x124] sm:$0xf]
  %v101 = vld [vmem:[%s1 + $0x128] sm:$0xf]
  %v102 = vld [vmem:[%s1 + $0x12c] sm:$0xf]
  %v103 = vld [vmem:[%s1 + $0x130] sm:$0xf]
  %v104 = vld [vmem:[%s1 + $0x134] sm:$0xf]
  %v105 = vld [vmem:[%s1 + $0x138] sm:$0xf]
  %v106 = vld [vmem:[%s1 + $0x13c] sm:$0xf]
  %v107 = vld [vmem:[%s1 + $0x140] sm:$0xf]
  %v108 = vld [vmem:[%s1 + $0x144] sm:$0xf]
  %v109 = vld [vmem:[%s1 + $0x148] sm:$0xf]
  %v110 = vld [vmem:[%s1 + $0x14c] sm:$0xf]
  %v111 = vld [vmem:[%s1 + $0x150] sm:$0xf]
  %v112 = vld [vmem:[%s1 + $0x154] sm:$0xf]
  %v113 = vld [vmem:[%s1 + $0x158] sm:$0xf]
  %v114 = vld [vmem:[%s1 + $0x15c] sm:$0xf]
  %v115 = vld [vmem:[%s1 + $0x160] sm:$0xf]
  %v116 = vld [vmem:[%s1 + $0x164] sm:$0xf]
  %v117 = vld [vmem:[%s1 + $0x168] sm:$0xf]
  %v118 = vld [vmem:[%s1 + $0x16c] sm:$0xf]
  %v119 = vld [vmem:[%s1 + $0x170] sm:$0xf]
  %v120 = vld [vmem:[%s1 + $0x174] sm:$0xf]
  %v121 = vld [vmem:[%s1 + $0x178] sm:$0xf]
  %v122 = vld [vmem:[%s1 + $0x17c] sm:$0xf]
  %v123 = vld [vmem:[%s1 + $0x180] sm:$0xf]
  %v124 = vld [vmem:[%s1 + $0x184] sm:$0xf]
  %v125 = vld [vmem:[%s1 + $0x188] sm:$0xf]
  %v126 = vld [vmem:[%s1 + $0x18c] sm:$0xf]
  %v127 = vld [vmem:[%s1 + $0x190] sm:$0xf]
  %v128 = vld [vmem:[%s1 + $0x194] sm:$0xf]
  %v129 = vld [vmem:[%s1 + $0x198] sm:$0xf]
  %v130 = vld [vmem:[%s1 + $0x19c] sm:$0xf]
  %v131 = vld [vmem:[%s1 + $0x1a0] sm:$0xf]
  %v132 = vld [vmem:[%s1 + $0x1a4] sm:$0xf]
  %v133 = vld [vmem:[%s1 + $0x1a8] sm:$0xf]
  %v134 = vld [vmem:[%s1 + $0x1ac] sm:$0xf]
  %v135 = vld [vmem:[%s1 + $0x1b0] sm:$0xf]
  %v136 = vld [vmem:[%s1 + $0x1b4] sm:$0xf]
  %v137 = vld [vmem:[%s1 + $0x1b8] sm:$0xf]
  %v138 = vld [vmem:[%s1 + $0x1bc] sm:$0xf]
  %v139 = vld [vmem:[%s1 + $0x1c0] sm:$0xf]
  %v140 = vld [vmem:[%s1 + $0x1c4] sm:$0xf]
  %v141 = vld [vmem:[%s1 + $0x1c8] sm:$0xf]
  %v142 = vld [vmem:[%s1 + $0x1cc] sm:$0xf]
  %v143 = vld [vmem:[%s1 + $0x1d0] sm:$0xf]
  %v144 = vld [vmem:[%s1 + $0x1d4] sm:$0xf]
  %v145 = vld [vmem:[%s1 + $0x1d8] sm:$0xf]
  %v146 = vld [vmem:[%s1 + $0x1dc] sm:$0xf]
  %v147 = vld [vmem:[%s1 + $0x1e0] sm:$0xf]
  %v148 = vld [vmem:[%s1 + $0x1e4] sm:$0xf]
  %v149 = vld [vmem:[%s1 + $0x1e8] sm:$0xf]
  %v150 = vld [vmem:[%s1 + $0x1ec] sm:$0xf]
  %v151 = vld [vmem:[%s1 + $0x1f0] sm:$0xf]
  %v152 = vld [vmem:[%s1 + $0x1f4] sm:$0xf]
  %v153 = vld [vmem:[%s1 + $0x1f8] sm:$0xf]
  %v154 = vld [vmem:[%s1 + $0x1fc] sm:$0xf]
  %v155 = vld [vmem:[%s1 + $0x200] sm:$0xf]
  %v156 = vld [vmem:[%s1 + $0x204] sm:$0xf]
  %v157 = vld [vmem:[%s1 + $0x208] sm:$0xf]
  %v158 = vld [vmem:[%s1 + $0x20c] sm:$0xf]
  %v159 = vld [vmem:[%s1 + $0x210] sm:$0xf]
  %v160 = vld [vmem:[%s1 + $0x214] sm:$0xf]
  %v161 = vld [vmem:[%s1 + $0x218] sm:$0xf]
  %v162 = vld [vmem:[%s1 + $0x21c] sm:$0xf]
  %v163 = vld [vmem:[%s1 + $0x220] sm:$0xf]
  %v164 = vld [vmem:[%s1 + $0x224] sm:$0xf]
  %v165 = vld [vmem:[%s1 + $0x228] sm:$0xf]
  %v166 = vld [vmem:[%s1 + $0x22c] sm:$0xf]
  %v167 = vld [vmem:[%s1 + $0x230] sm:$0xf]
  %v168 = vld [vmem:[%s1 + $0x234] sm:$0xf]
  %v169 = vld [vmem:[%s1 + $0x238] sm:$0xf]
  %v170 = vld [vmem:[%s1 + $0x23c] sm:$0xf]
  %v171 = vld [vmem:[%s1 + $0x240] sm:$0xf]
  %v172 = vld [vmem:[%s1 + $0x244] sm:$0xf]
  %v173 = vld [vmem:[%s1 + $0x248] sm:$0xf]
  %v174 = vld [vmem:[%s1 + $0x24c] sm:$0xf]
  %v175 = vld [vmem:[%s1 + $0x250] sm:$0xf]
  %v176 = vld [vmem:[%s1 + $0x254] sm:$0xf]
  %v177 = vld [vmem:[%s1 + $0x258] sm:$0xf]
  %v178 = vld [vmem:[%s1 + $0x25c] sm:$0xf]
  %v179 = vld [vmem:[%s1 + $0x260] sm:$0xf]
  %v180 = vld [vmem:[%s1 + $0x264] sm:$0xf]
  %v181 = vld [vmem:[%s1 + $0x268] sm:$0xf]
  %v182 = vld [vmem:[%s1 + $0x26c] sm:$0xf]
  %v183 = vld [vmem:[%s1 + $0x270] sm:$0xf]
  %v184 = vld [vmem:[%s1 + $0x274] sm:$0xf]
  %v185 = vld [vmem:[%s1 + $0x278] sm:$0xf]
  %v186 = vld [vmem:[%s1 + $0x27c] sm:$0xf]
  %v187 = vld [vmem:[%s1 + $0x280] sm:$0xf]
  %v188 = vld [vmem:[%s1 + $0x284] sm:$0xf]
  %v189 = vld [vmem:[%s1 + $0x288] sm:$0xf]
  %v190 = vld [vmem:[%s1 + $0x28c] sm:$0xf]
  %v191 = vld [vmem:[%s1 + $0x290] sm:$0xf]
  %v192 = vld [vmem:[%s1 + $0x294] sm:$0xf]
  %v193 = vld [vmem:[%s1 + $0x298] sm:$0xf]
  %v194 = vld [vmem:[%s1 + $0x29c] sm:$0xf]
  %v195 = vld [vmem:[%s1 + $0x2a0] sm:$0xf]
  %v196 = vld [vmem:[%s1 + $0x2a4] sm:$0xf]
  %v197 = vld [vmem:[%s1 + $0x2a8] sm:$0xf]
  %v198 = vld [vmem:[%s1 + $0x2ac] sm:$0xf]
  %v199 = vld [vmem:[%s1 + $0x2b0] sm:$0xf]
  %v200 = vld [vmem:[%s1 + $0x2b4] sm:$0xf]
  %v201 = vld [vmem:[%s1 + $0x2b8] sm:$0xf]
  %v202 = vld [vmem:[%s1 + $0x2bc] sm:$0xf]
  %v203 = vld [vmem:[%s1 + $0x2c0] sm:$0xf]
  %v204 = vld [vmem:[%s1 + $0x2c4] sm:$0xf]
  %v205 = vld [vmem:[%s1 + $0x2c8] sm:$0xf]
  %v206 = vld [vmem:[%s1 + $0x2cc] sm:$0xf]
  %v207 = vld [vmem:[%s1 + $0x2d0] sm:$0xf]
  %v208 = vld [vmem:[%s1 + $0x2d4] sm:$0xf]
  %v209 = vld [vmem:[%s1 + $0x2d8] sm:$0xf]
  %v210 = vld [vmem:[%s1 + $0x2dc] sm:$0xf]
  %v211 = vld [vmem:[%s1 + $0x2e0] sm:$0xf]
  %v212 = vld [vmem:[%s1 + $0x2e4] sm:$0xf]
  %v213 = vld [vmem:[%s1 + $0x2e8] sm:$0xf]
  %v214 = vld [vmem:[%s1 + $0x2ec] sm:$0xf]
  %v215 = vld [vmem:[%s1 + $0x2f0] sm:$0xf]
  %v216 = vld [vmem:[%s1 + $0x2f4] sm:$0xf]
  %v217 = vld [vmem:[%s1 + $0x2f8] sm:$0xf]
  %v218 = vld [vmem:[%s1 + $0x2fc] sm:$0xf]
  %v219 = vld [vmem:[%s1 + $0x300] sm:$0xf]
  %v220 = vld [vmem:[%s1 + $0x304] sm:$0xf]
  %v221 = vld [vmem:[%s1 + $0x308] sm:$0xf]
  %v222 = vld [vmem:[%s1 + $0x30c] sm:$0xf]
  %v223 = vld [vmem:[%s1 + $0x310] sm:$0xf]
  %v224 = vld [vmem:[%s1 + $0x314] sm:$0xf]
  %v225 = vld [vmem:[%s1 + $0x318] sm:$0xf]
  %v226 = vld [vmem:[%s1 + $0x31c] sm:$0xf]
  %v227 = vld [vmem:[%s1 + $0x320] sm:$0xf]
  %v228 = vld [vmem:[%s1 + $0x324] sm:$0xf]
  %v229 = vld [vmem:[%s1 + $0x328] sm:$0xf]
  %v230 = vld [vmem:[%s1 + $0x32c] sm:$0xf]
  %v231 = vld [vmem:[%s1 + $0x330] sm:$0xf]
  %v232 = vld [vmem:[%s1 + $0x334] sm:$0xf]
  %v233 = vld [vmem:[%s1 + $0x338] sm:$0xf]
  %v234 = vld [vmem:[%s1 + $0x33c] sm:$0xf]
  %v235 = vld [vmem:[%s1 + $0x340] sm:$0xf]
  %v236 = vld [vmem:[%s1 + $0x344] sm:$0xf]
  %v237 = vld [vmem:[%s1 + $0x348] sm:$0xf]
  %v238 = vld [vmem:[%s1 + $0x34c] sm:$0xf]
  %v239 = vld [vmem:[%s1 + $0x350] sm:$0xf]
  %v240 = vld [vmem:[%s1 + $0x354] sm:$0xf]
  %v241 = vld [vmem:[%s1 + $0x358] sm:$0xf]
  %v242 = vld [vmem:[%s1 + $0x35c] sm:$0xf]
  %v243 = vld [vmem:[%s1 + $0x360] sm:$0xf]
  %v244 = vld [vmem:[%s1 + $0x364] sm:$0xf]
  %v245 = vld [vmem:[%s1 + $0x368] sm:$0xf]
  %v246 = vld [vmem:[%s1 + $0x36c] sm:$0xf]
  %v247 = vld [vmem:[%s1 + $0x370] sm:$0xf]
  %v248 = vld [vmem:[%s1 + $0x374] sm:$0xf]
  %v249 = vld [vmem:[%s1 + $0x378] sm:$0xf]
  %v250 = vld [vmem:[%s1 + $0x37c] sm:$0xf]
  %v251 = vld [vmem:[%s1 + $0x380] sm:$0xf]
  %v252 = vld [vmem:[%s1 + $0x384] sm:$0xf]
  %v253 = vld [vmem:[%s1 + $0x388] sm:$0xf]
  %v254 = vld [vmem:[%s1 + $0x38c] sm:$0xf]
  %v255 = vld [vmem:[%s1 + $0x390] sm:$0xf]
  %v256 = vld [vmem:[%s1 + $0x394] sm:$0xf]
  %v257 = vld [vmem:[%s1 + $0x398] sm:$0xf]
  %v258 = vld [vmem:[%s1 + $0x39c] sm:$0xf]
  %v259 = vld [vmem:[%s1 + $0x3a0] sm:$0xf]
  %v260 = vld [vmem:[%s1 + $0x3a4] sm:$0xf]
  %v261 = vld [vmem:[%s1 + $0x3a8] sm:$0xf]
  %v262 = vld [vmem:[%s1 + $0x3ac] sm:$0xf]
  %v263 = vld [vmem:[%s1 + $0x3b0] sm:$0xf]
  %v264 = vld [vmem:[%s1 + $0x3b4] sm:$0xf]
  %v265 = vld [vmem:[%s1 + $0x3b8] sm:$0xf]
  %v266 = vld [vmem:[%s1 + $0x3bc] sm:$0xf]
  %v267 = vld [vmem:[%s1 + $0x3c0] sm:$0xf]
  %v268 = vld [vmem:[%s1 + $0x3c4] sm:$0xf]
  %v269 = vld [vmem:[%s1 + $0x3c8] sm:$0xf]
  %v270 = vld [vmem:[%s1 + $0x3cc] sm:$0xf]
  %v271 = vld [vmem:[%s1 + $0x3d0] sm:$0xf]
  %v272 = vld [vmem:[%s1 + $0x3d4] sm:$0xf]
  %v273 = vld [vmem:[%s1 + $0x3d8] sm:$0xf]
  %v274 = vld [vmem:[%s1 + $0x3dc] sm:$0xf]
  %v275 = vld [vmem:[%s1 + $0x3e0] sm:$0xf]
  %v276 = vld [vmem:[%s1 + $0x3e4] sm:$0xf]
  %v277 = vld [vmem:[%s1 + $0x3e8] sm:$0xf]
  %v278 = vld [vmem:[%s1 + $0x3ec] sm:$0xf]
  %v279 = vld [vmem:[%s1 + $0x3f0] sm:$0xf]
  %v280 = vld [vmem:[%s1 + $0x3f4] sm:$0xf]
  %v281 = vld [vmem:[%s1 + $0x3f8] sm:$0xf]
  %v282 = vld [vmem:[%s1 + $0x3fc] sm:$0xf]
  %v283 = vld [vmem:[%s1 + $0x400] sm:$0xf]
  %v284 = vld [vmem:[%s1 + $0x404] sm:$0xf]
  %v285 = vld [vmem:[%s1 + $0x408] sm:$0xf]
  %v286 = vld [vmem:[%s1 + $0x40c] sm:$0xf]
  %v287 = vld [vmem:[%s1 + $0x410] sm:$0xf]
  %v288 = vld [vmem:[%s1 + $0x414] sm:$0xf]
  %v289 = vld [vmem:[%s1 + $0x418] sm:$0xf]
  %v290 = vld [vmem:[%s1 + $0x41c] sm:$0xf]
  %v291 = vld [vmem:[%s1 + $0x420] sm:$0xf]
  %v292 = vld [vmem:[%s1 + $0x424] sm:$0xf]
  %v293 = vld [vmem:[%s1 + $0x428] sm:$0xf]
  %v294 = vld [vmem:[%s1 + $0x42c] sm:$0xf]
  %v295 = vld [vmem:[%s1 + $0x430] sm:$0xf]
  %v296 = vld [vmem:[%s1 + $0x434] sm:$0xf]
  %v297 = vld [vmem:[%s1 + $0x438] sm:$0xf]
  %v298 = vld [vmem:[%s1 + $0x43c] sm:$0xf]
  %v299 = vld [vmem:[%s1 + $0x440] sm:$0xf]
  %v300 = vld [vmem:[%s1 + $0x444] sm:$0xf]
  %v301 = vld [vmem:[%s1 + $0x448] sm:$0xf]
  %v302 = vld [vmem:[%s1 + $0x44c] sm:$0xf]
  %v303 = vld [vmem:[%s1 + $0x450] sm:$0xf]
  %v304 = vld [vmem:[%s1 + $0x454] sm:$0xf]
  %v305 = vld [vmem:[%s1 + $0x458] sm:$0xf]
  %v306 = vld [vmem:[%s1 + $0x45c] sm:$0xf]
  %v307 = vld [vmem:[%s1 + $0x460] sm:$0xf]
  %v308 = vld [vmem:[%s1 + $0x464] sm:$0xf]
  %v309 = vld [vmem:[%s1 + $0x468] sm:$0xf]
  %v310 = vld [vmem:[%s1 + $0x46c] sm:$0xf]
  %v311 = vld [vmem:[%s1 + $0x470] sm:$0xf]
  %v312 = vld [vmem:[%s1 + $0x474] sm:$0xf]
  %v313 = vld [vmem:[%s1 + $0x478] sm:$0xf]
  %v314 = vld [vmem:[%s1 + $0x47c] sm:$0xf]
  %v324 = vunpack.c.l.b16 %v18
  %v325 = vunpack.c.h.b16 %v18
  %v326 = vunpack.c.l.b16 %v19
  %v327 = vunpack.c.h.b16 %v19
  %v328 = vunpack.c.l.b16 %v20
  %v329 = vunpack.c.h.b16 %v20
  %v330 = vunpack.c.l.b16 %v21
  %v331 = vunpack.c.h.b16 %v21
  %v332 = vunpack.c.l.b16 %v22
  %v333 = vunpack.c.h.b16 %v22
  %v334 = vunpack.c.l.b16 %v23
  %v335 = vunpack.c.h.b16 %v23
  %v336 = vunpack.c.l.b16 %v24
  %v337 = vunpack.c.h.b16 %v24
  %v338 = vunpack.c.l.b16 %v25
  %v339 = vunpack.c.h.b16 %v25
  %v340 = vunpack.c.l.b16 %v26
  %v341 = vunpack.c.h.b16 %v26
  %v342 = vpack.c.b16 %v324, %v324
  %v343 = vpack.c.b16 %v325, %v325
  %v344 = vpack.c.b16 %v326, %v326
  %v345 = vpack.c.b16 %v327, %v327
  %v346 = vpack.c.b16 %v328, %v328
  %v347 = vpack.c.b16 %v329, %v329
  %v348 = vpack.c.b16 %v330, %v330
  %v349 = vpack.c.b16 %v331, %v331
  %v350 = vpack.c.b16 %v332, %v332
  %v351 = vpack.c.b16 %v333, %v333
  %v352 = vpack.c.b16 %v334, %v334
  %v353 = vpack.c.b16 %v335, %v335
  %v354 = vpack.c.b16 %v336, %v336
  %v355 = vpack.c.b16 %v337, %v337
  %v356 = vpack.c.b16 %v338, %v338
  %v357 = vpack.c.b16 %v339, %v339
  %v358 = vpack.c.b16 %v340, %v340
  %v359 = vpack.c.b16 %v341, %v341
  %v666 = vunpack.c.l.b16 %v27
  %v667 = vunpack.c.l.b16 %v28
  %v668 = vunpack.c.l.b16 %v29
  %v669 = vunpack.c.l.b16 %v30
  %v670 = vunpack.c.l.b16 %v31
  %v671 = vunpack.c.l.b16 %v32
  %v672 = vunpack.c.l.b16 %v33
  %v673 = vunpack.c.l.b16 %v34
  %v674 = vunpack.c.l.b16 %v35
  %v675 = vunpack.c.l.b16 %v36
  %v676 = vunpack.c.l.b16 %v37
  %v677 = vunpack.c.l.b16 %v38
  %v678 = vunpack.c.l.b16 %v39
  %v679 = vunpack.c.l.b16 %v40
  %v680 = vunpack.c.l.b16 %v41
  %v681 = vunpack.c.l.b16 %v42
  %v682 = vunpack.c.l.b16 %v43
  %v683 = vunpack.c.l.b16 %v44
  %v684 = vunpack.c.l.b16 %v45
  %v685 = vunpack.c.l.b16 %v46
  %v686 = vunpack.c.l.b16 %v47
  %v687 = vunpack.c.l.b16 %v48
  %v688 = vunpack.c.l.b16 %v49
  %v689 = vunpack.c.l.b16 %v50
  %v690 = vunpack.c.l.b16 %v51
  %v691 = vunpack.c.l.b16 %v52
  %v692 = vunpack.c.l.b16 %v53
  %v693 = vunpack.c.l.b16 %v54
  %v694 = vunpack.c.l.b16 %v55
  %v695 = vunpack.c.l.b16 %v56
  %v696 = vunpack.c.l.b16 %v57
  %v697 = vunpack.c.l.b16 %v58
  %v698 = vunpack.c.l.b16 %v59
  %v699 = vunpack.c.l.b16 %v60
  %v700 = vunpack.c.l.b16 %v61
  %v701 = vunpack.c.l.b16 %v62
  %v702 = vunpack.c.l.b16 %v63
  %v703 = vunpack.c.l.b16 %v64
  %v704 = vunpack.c.l.b16 %v65
  %v705 = vunpack.c.l.b16 %v66
  %v706 = vunpack.c.l.b16 %v67
  %v707 = vunpack.c.l.b16 %v68
  %v708 = vunpack.c.l.b16 %v69
  %v709 = vunpack.c.l.b16 %v70
  %v710 = vunpack.c.l.b16 %v71
  %v711 = vunpack.c.l.b16 %v72
  %v712 = vunpack.c.l.b16 %v73
  %v713 = vunpack.c.l.b16 %v74
  %v714 = vunpack.c.l.b16 %v75
  %v715 = vunpack.c.l.b16 %v76
  %v716 = vunpack.c.l.b16 %v77
  %v717 = vunpack.c.l.b16 %v78
  %v718 = vunpack.c.l.b16 %v79
  %v719 = vunpack.c.l.b16 %v80
  %v720 = vunpack.c.l.b16 %v81
  %v721 = vunpack.c.l.b16 %v82
  %v722 = vunpack.c.l.b16 %v83
  %v723 = vunpack.c.l.b16 %v84
  %v724 = vunpack.c.l.b16 %v85
  %v725 = vunpack.c.l.b16 %v86
  %v726 = vunpack.c.l.b16 %v87
  %v727 = vunpack.c.l.b16 %v88
  %v728 = vunpack.c.l.b16 %v89
  %v729 = vunpack.c.l.b16 %v90
  %v730 = vunpack.c.l.b16 %v91
  %v731 = vunpack.c.l.b16 %v92
  %v732 = vunpack.c.l.b16 %v93
  %v733 = vunpack.c.l.b16 %v94
  %v734 = vunpack.c.l.b16 %v95
  %v735 = vunpack.c.l.b16 %v96
  %v736 = vunpack.c.l.b16 %v97
  %v737 = vunpack.c.l.b16 %v98
  %v738 = vunpack.c.l.b16 %v99
  %v739 = vunpack.c.l.b16 %v100
  %v740 = vunpack.c.l.b16 %v101
  %v741 = vunpack.c.l.b16 %v102
  %v742 = vunpack.c.l.b16 %v103
  %v743 = vunpack.c.l.b16 %v104
  %v744 = vunpack.c.l.b16 %v105
  %v745 = vunpack.c.l.b16 %v106
  %v746 = vunpack.c.l.b16 %v107
  %v747 = vunpack.c.l.b16 %v108
  %v748 = vunpack.c.l.b16 %v109
  %v749 = vunpack.c.l.b16 %v110
  %v750 = vunpack.c.l.b16 %v111
  %v751 = vunpack.c.l.b16 %v112
  %v752 = vunpack.c.l.b16 %v113
  %v753 = vunpack.c.l.b16 %v114
  %v754 = vunpack.c.l.b16 %v115
  %v755 = vunpack.c.l.b16 %v116
  %v756 = vunpack.c.l.b16 %v117
  %v757 = vunpack.c.l.b16 %v118
  %v758 = vunpack.c.l.b16 %v119
  %v759 = vunpack.c.l.b16 %v120
  %v760 = vunpack.c.l.b16 %v121
  %v761 = vunpack.c.l.b16 %v122
  %v762 = vunpack.c.l.b16 %v123
  %v763 = vunpack.c.l.b16 %v124
  %v764 = vunpack.c.l.b16 %v125
  %v765 = vunpack.c.l.b16 %v126
  %v766 = vunpack.c.l.b16 %v127
  %v767 = vunpack.c.l.b16 %v128
  %v768 = vunpack.c.l.b16 %v129
  %v769 = vunpack.c.l.b16 %v130
  %v770 = vunpack.c.l.b16 %v131
  %v771 = vunpack.c.l.b16 %v132
  %v772 = vunpack.c.l.b16 %v133
  %v773 = vunpack.c.l.b16 %v134
  %v774 = vunpack.c.l.b16 %v135
  %v775 = vunpack.c.l.b16 %v136
  %v776 = vunpack.c.l.b16 %v137
  %v777 = vunpack.c.l.b16 %v138
  %v778 = vunpack.c.l.b16 %v139
  %v779 = vunpack.c.l.b16 %v140
  %v780 = vunpack.c.l.b16 %v141
  %v781 = vunpack.c.l.b16 %v142
  %v782 = vunpack.c.l.b16 %v143
  %v783 = vunpack.c.l.b16 %v144
  %v784 = vunpack.c.l.b16 %v145
  %v785 = vunpack.c.l.b16 %v146
  %v786 = vunpack.c.l.b16 %v147
  %v787 = vunpack.c.l.b16 %v148
  %v788 = vunpack.c.l.b16 %v149
  %v789 = vunpack.c.l.b16 %v150
  %v790 = vunpack.c.l.b16 %v151
  %v791 = vunpack.c.l.b16 %v152
  %v792 = vunpack.c.l.b16 %v153
  %v793 = vunpack.c.l.b16 %v154
  %v794 = vunpack.c.l.b16 %v155
  %v795 = vunpack.c.l.b16 %v156
  %v796 = vunpack.c.l.b16 %v157
  %v797 = vunpack.c.l.b16 %v158
  %v798 = vunpack.c.l.b16 %v159
  %v799 = vunpack.c.l.b16 %v160
  %v800 = vunpack.c.l.b16 %v161
  %v801 = vunpack.c.l.b16 %v162
  %v802 = vunpack.c.l.b16 %v163
  %v803 = vunpack.c.l.b16 %v164
  %v804 = vunpack.c.l.b16 %v165
  %v805 = vunpack.c.l.b16 %v166
  %v806 = vunpack.c.l.b16 %v167
  %v807 = vunpack.c.l.b16 %v168
  %v808 = vunpack.c.l.b16 %v169
  %v809 = vunpack.c.l.b16 %v170
  %v810 = vunpack.c.l.b16 %v171
  %v811 = vunpack.c.l.b16 %v172
  %v812 = vunpack.c.l.b16 %v173
  %v813 = vunpack.c.l.b16 %v174
  %v814 = vunpack.c.l.b16 %v175
  %v815 = vunpack.c.l.b16 %v176
  %v816 = vunpack.c.l.b16 %v177
  %v817 = vunpack.c.l.b16 %v178
  %v818 = vunpack.c.l.b16 %v179
  %v819 = vunpack.c.l.b16 %v180
  %v820 = vunpack.c.l.b16 %v181
  %v821 = vunpack.c.l.b16 %v182
  %v822 = vunpack.c.l.b16 %v183
  %v823 = vunpack.c.l.b16 %v184
  %v824 = vunpack.c.l.b16 %v185
  %v825 = vunpack.c.l.b16 %v186
  %v826 = vunpack.c.l.b16 %v187
  %v827 = vunpack.c.l.b16 %v188
  %v828 = vunpack.c.l.b16 %v189
  %v829 = vunpack.c.l.b16 %v190
  %v830 = vunpack.c.l.b16 %v191
  %v831 = vunpack.c.l.b16 %v192
  %v832 = vunpack.c.l.b16 %v193
  %v833 = vunpack.c.l.b16 %v194
  %v834 = vunpack.c.l.b16 %v195
  %v835 = vunpack.c.l.b16 %v196
  %v836 = vunpack.c.l.b16 %v197
  %v837 = vunpack.c.l.b16 %v198
  %v838 = vunpack.c.l.b16 %v199
  %v839 = vunpack.c.l.b16 %v200
  %v840 = vunpack.c.l.b16 %v201
  %v841 = vunpack.c.l.b16 %v202
  %v842 = vunpack.c.l.b16 %v203
  %v843 = vunpack.c.l.b16 %v204
  %v844 = vunpack.c.l.b16 %v205
  %v845 = vunpack.c.l.b16 %v206
  %v846 = vunpack.c.l.b16 %v207
  %v847 = vunpack.c.l.b16 %v208
  %v848 = vunpack.c.l.b16 %v209
  %v849 = vunpack.c.l.b16 %v210
  %v850 = vunpack.c.l.b16 %v211
  %v851 = vunpack.c.l.b16 %v212
  %v852 = vunpack.c.l.b16 %v213
  %v853 = vunpack.c.l.b16 %v214
  %v854 = vunpack.c.l.b16 %v215
  %v855 = vunpack.c.l.b16 %v216
  %v856 = vunpack.c.l.b16 %v217
  %v857 = vunpack.c.l.b16 %v218
  %v858 = vunpack.c.l.b16 %v219
  %v859 = vunpack.c.l.b16 %v220
  %v860 = vunpack.c.l.b16 %v221
  %v861 = vunpack.c.l.b16 %v222
  %v862 = vunpack.c.l.b16 %v223
  %v863 = vunpack.c.l.b16 %v224
  %v864 = vunpack.c.l.b16 %v225
  %v865 = vunpack.c.l.b16 %v226
  %v866 = vunpack.c.l.b16 %v227
  %v867 = vunpack.c.l.b16 %v228
  %v868 = vunpack.c.l.b16 %v229
  %v869 = vunpack.c.l.b16 %v230
  %v870 = vunpack.c.l.b16 %v231
  %v871 = vunpack.c.l.b16 %v232
  %v872 = vunpack.c.l.b16 %v233
  %v873 = vunpack.c.l.b16 %v234
  %v874 = vunpack.c.l.b16 %v235
  %v875 = vunpack.c.l.b16 %v236
  %v876 = vunpack.c.l.b16 %v237
  %v877 = vunpack.c.l.b16 %v238
  %v878 = vunpack.c.l.b16 %v239
  %v879 = vunpack.c.l.b16 %v240
  %v880 = vunpack.c.l.b16 %v241
  %v881 = vunpack.c.l.b16 %v242
  %v882 = vunpack.c.l.b16 %v243
  %v883 = vunpack.c.l.b16 %v244
  %v884 = vunpack.c.l.b16 %v245
  %v885 = vunpack.c.l.b16 %v246
  %v886 = vunpack.c.l.b16 %v247
  %v887 = vunpack.c.l.b16 %v248
  %v888 = vunpack.c.l.b16 %v249
  %v889 = vunpack.c.l.b16 %v250
  %v890 = vunpack.c.l.b16 %v251
  %v891 = vunpack.c.l.b16 %v252
  %v892 = vunpack.c.l.b16 %v253
  %v893 = vunpack.c.l.b16 %v254
  %v894 = vunpack.c.l.b16 %v255
  %v895 = vunpack.c.l.b16 %v256
  %v896 = vunpack.c.l.b16 %v257
  %v897 = vunpack.c.l.b16 %v258
  %v898 = vunpack.c.l.b16 %v259
  %v899 = vunpack.c.l.b16 %v260
  %v900 = vunpack.c.l.b16 %v261
  %v901 = vunpack.c.l.b16 %v262
  %v902 = vunpack.c.l.b16 %v263
  %v903 = vunpack.c.l.b16 %v264
  %v904 = vunpack.c.l.b16 %v265
  %v905 = vunpack.c.l.b16 %v266
  %v906 = vunpack.c.l.b16 %v267
  %v907 = vunpack.c.l.b16 %v268
  %v908 = vunpack.c.l.b16 %v269
  %v909 = vunpack.c.l.b16 %v270
  %v910 = vunpack.c.l.b16 %v271
  %v911 = vunpack.c.l.b16 %v272
  %v912 = vunpack.c.l.b16 %v273
  %v913 = vunpack.c.l.b16 %v274
  %v914 = vunpack.c.l.b16 %v275
  %v915 = vunpack.c.l.b16 %v276
  %v916 = vunpack.c.l.b16 %v277
  %v917 = vunpack.c.l.b16 %v278
  %v918 = vunpack.c.l.b16 %v279
  %v919 = vunpack.c.l.b16 %v280
  %v920 = vunpack.c.l.b16 %v281
  %v921 = vunpack.c.l.b16 %v282
  %v922 = vunpack.c.l.b16 %v283
  %v923 = vunpack.c.l.b16 %v284
  %v924 = vunpack.c.l.b16 %v285
  %v925 = vunpack.c.l.b16 %v286
  %v926 = vunpack.c.l.b16 %v287
  %v927 = vunpack.c.l.b16 %v288
  %v928 = vunpack.c.l.b16 %v289
  %v929 = vunpack.c.l.b16 %v290
  %v930 = vunpack.c.l.b16 %v291
  %v931 = vunpack.c.l.b16 %v292
  %v932 = vunpack.c.l.b16 %v293
  %v933 = vunpack.c.l.b16 %v294
  %v934 = vunpack.c.l.b16 %v295
  %v935 = vunpack.c.l.b16 %v296
  %v936 = vunpack.c.l.b16 %v297
  %v937 = vunpack.c.l.b16 %v298
  %v938 = vunpack.c.l.b16 %v299
  %v939 = vunpack.c.l.b16 %v300
  %v940 = vunpack.c.l.b16 %v301
  %v941 = vunpack.c.l.b16 %v302
  %v942 = vunpack.c.l.b16 %v303
  %v943 = vunpack.c.l.b16 %v304
  %v944 = vunpack.c.l.b16 %v305
  %v945 = vunpack.c.l.b16 %v306
  %v946 = vunpack.c.l.b16 %v307
  %v947 = vunpack.c.l.b16 %v308
  %v948 = vunpack.c.l.b16 %v309
  %v949 = vunpack.c.l.b16 %v310
  %v950 = vunpack.c.l.b16 %v311
  %v951 = vunpack.c.l.b16 %v312
  %v952 = vunpack.c.l.b16 %v313
  %v953 = vunpack.c.l.b16 %v314
  %v954 = vpack.c.b16 %v667, %v666
  %v955 = vpack.c.b16 %v669, %v668
  %v956 = vpack.c.b16 %v671, %v670
  %v957 = vpack.c.b16 %v673, %v672
  %v958 = vpack.c.b16 %v675, %v674
  %v959 = vpack.c.b16 %v677, %v676
  %v960 = vpack.c.b16 %v679, %v678
  %v961 = vpack.c.b16 %v681, %v680
  %v962 = vpack.c.b16 %v683, %v682
  %v963 = vpack.c.b16 %v685, %v684
  %v964 = vpack.c.b16 %v687, %v686
  %v965 = vpack.c.b16 %v689, %v688
  %v966 = vpack.c.b16 %v691, %v690
  %v967 = vpack.c.b16 %v693, %v692
  %v968 = vpack.c.b16 %v695, %v694
  %v969 = vpack.c.b16 %v697, %v696
  %v970 = vpack.c.b16 %v699, %v698
  %v971 = vpack.c.b16 %v701, %v700
  %v972 = vpack.c.b16 %v703, %v702
  %v973 = vpack.c.b16 %v705, %v704
  %v974 = vpack.c.b16 %v707, %v706
  %v975 = vpack.c.b16 %v709, %v708
  %v976 = vpack.c.b16 %v711, %v710
  %v977 = vpack.c.b16 %v713, %v712
  %v978 = vpack.c.b16 %v715, %v714
  %v979 = vpack.c.b16 %v717, %v716
  %v980 = vpack.c.b16 %v719, %v718
  %v981 = vpack.c.b16 %v721, %v720
  %v982 = vpack.c.b16 %v723, %v722
  %v983 = vpack.c.b16 %v725, %v724
  %v984 = vpack.c.b16 %v727, %v726
  %v985 = vpack.c.b16 %v729, %v728
  %v986 = vpack.c.b16 %v731, %v730
  %v987 = vpack.c.b16 %v733, %v732
  %v988 = vpack.c.b16 %v735, %v734
  %v989 = vpack.c.b16 %v737, %v736
  %v990 = vpack.c.b16 %v739, %v738
  %v991 = vpack.c.b16 %v741, %v740
  %v992 = vpack.c.b16 %v743, %v742
  %v993 = vpack.c.b16 %v745, %v744
  %v994 = vpack.c.b16 %v747, %v746
  %v995 = vpack.c.b16 %v749, %v748
  %v996 = vpack.c.b16 %v751, %v750
  %v997 = vpack.c.b16 %v753, %v752
  %v998 = vpack.c.b16 %v755, %v754
  %v999 = vpack.c.b16 %v757, %v756
  %v1000 = vpack.c.b16 %v759, %v758
  %v1001 = vpack.c.b16 %v761, %v760
  %v1002 = vpack.c.b16 %v763, %v762
  %v1003 = vpack.c.b16 %v765, %v764
  %v1004 = vpack.c.b16 %v767, %v766
  %v1005 = vpack.c.b16 %v769, %v768
  %v1006 = vpack.c.b16 %v771, %v770
  %v1007 = vpack.c.b16 %v773, %v772
  %v1008 = vpack.c.b16 %v775, %v774
  %v1009 = vpack.c.b16 %v777, %v776
  %v1010 = vpack.c.b16 %v779, %v778
  %v1011 = vpack.c.b16 %v781, %v780
  %v1012 = vpack.c.b16 %v783, %v782
  %v1013 = vpack.c.b16 %v785, %v784
  %v1014 = vpack.c.b16 %v787, %v786
  %v1015 = vpack.c.b16 %v789, %v788
  %v1016 = vpack.c.b16 %v791, %v790
  %v1017 = vpack.c.b16 %v793, %v792
  %v1018 = vpack.c.b16 %v795, %v794
  %v1019 = vpack.c.b16 %v797, %v796
  %v1020 = vpack.c.b16 %v799, %v798
  %v1021 = vpack.c.b16 %v801, %v800
  %v1022 = vpack.c.b16 %v803, %v802
  %v1023 = vpack.c.b16 %v805, %v804
  %v1024 = vpack.c.b16 %v807, %v806
  %v1025 = vpack.c.b16 %v809, %v808
  %v1026 = vpack.c.b16 %v811, %v810
  %v1027 = vpack.c.b16 %v813, %v812
  %v1028 = vpack.c.b16 %v815, %v814
  %v1029 = vpack.c.b16 %v817, %v816
  %v1030 = vpack.c.b16 %v819, %v818
  %v1031 = vpack.c.b16 %v821, %v820
  %v1032 = vpack.c.b16 %v823, %v822
  %v1033 = vpack.c.b16 %v825, %v824
  %v1034 = vpack.c.b16 %v827, %v826
  %v1035 = vpack.c.b16 %v829, %v828
  %v1036 = vpack.c.b16 %v831, %v830
  %v1037 = vpack.c.b16 %v833, %v832
  %v1038 = vpack.c.b16 %v835, %v834
  %v1039 = vpack.c.b16 %v837, %v836
  %v1040 = vpack.c.b16 %v839, %v838
  %v1041 = vpack.c.b16 %v841, %v840
  %v1042 = vpack.c.b16 %v843, %v842
  %v1043 = vpack.c.b16 %v845, %v844
  %v1044 = vpack.c.b16 %v847, %v846
  %v1045 = vpack.c.b16 %v849, %v848
  %v1046 = vpack.c.b16 %v851, %v850
  %v1047 = vpack.c.b16 %v853, %v852
  %v1048 = vpack.c.b16 %v855, %v854
  %v1049 = vpack.c.b16 %v857, %v856
  %v1050 = vpack.c.b16 %v859, %v858
  %v1051 = vpack.c.b16 %v861, %v860
  %v1052 = vpack.c.b16 %v863, %v862
  %v1053 = vpack.c.b16 %v865, %v864
  %v1054 = vpack.c.b16 %v867, %v866
  %v1055 = vpack.c.b16 %v869, %v868
  %v1056 = vpack.c.b16 %v871, %v870
  %v1057 = vpack.c.b16 %v873, %v872
  %v1058 = vpack.c.b16 %v875, %v874
  %v1059 = vpack.c.b16 %v877, %v876
  %v1060 = vpack.c.b16 %v879, %v878
  %v1061 = vpack.c.b16 %v881, %v880
  %v1062 = vpack.c.b16 %v883, %v882
  %v1063 = vpack.c.b16 %v885, %v884
  %v1064 = vpack.c.b16 %v887, %v886
  %v1065 = vpack.c.b16 %v889, %v888
  %v1066 = vpack.c.b16 %v891, %v890
  %v1067 = vpack.c.b16 %v893, %v892
  %v1068 = vpack.c.b16 %v895, %v894
  %v1069 = vpack.c.b16 %v897, %v896
  %v1070 = vpack.c.b16 %v899, %v898
  %v1071 = vpack.c.b16 %v901, %v900
  %v1072 = vpack.c.b16 %v903, %v902
  %v1073 = vpack.c.b16 %v905, %v904
  %v1074 = vpack.c.b16 %v907, %v906
  %v1075 = vpack.c.b16 %v909, %v908
  %v1076 = vpack.c.b16 %v911, %v910
  %v1077 = vpack.c.b16 %v913, %v912
  %v1078 = vpack.c.b16 %v915, %v914
  %v1079 = vpack.c.b16 %v917, %v916
  %v1080 = vpack.c.b16 %v919, %v918
  %v1081 = vpack.c.b16 %v921, %v920
  %v1082 = vpack.c.b16 %v923, %v922
  %v1083 = vpack.c.b16 %v925, %v924
  %v1084 = vpack.c.b16 %v927, %v926
  %v1085 = vpack.c.b16 %v929, %v928
  %v1086 = vpack.c.b16 %v931, %v930
  %v1087 = vpack.c.b16 %v933, %v932
  %v1088 = vpack.c.b16 %v935, %v934
  %v1089 = vpack.c.b16 %v937, %v936
  %v1090 = vpack.c.b16 %v939, %v938
  %v1091 = vpack.c.b16 %v941, %v940
  %v1092 = vpack.c.b16 %v943, %v942
  %v1093 = vpack.c.b16 %v945, %v944
  %v1094 = vpack.c.b16 %v947, %v946
  %v1095 = vpack.c.b16 %v949, %v948
  %v1096 = vpack.c.b16 %v951, %v950
  %v1097 = vpack.c.b16 %v953, %v952
  %1242 = vmatprep.subr.bf16.mxu0 0
  %1243 = vmatpush1.bf16.msra.mxu0 %v954
  %1244 = vmatprep.subr.bf16.mxu0 0
  %1245 = vmatpush1.bf16.msra.mxu0 %v955
  %1246 = vmatprep.subr.bf16.mxu0 0
  %1247 = vmatpush1.bf16.msra.mxu0 %v956
  %1248 = vmatprep.subr.bf16.mxu0 0
  %1249 = vmatpush1.bf16.msra.mxu0 %v957
  %1250 = vmatprep.subr.bf16.mxu0 0
  %1251 = vmatpush1.bf16.msra.mxu0 %v958
  %1252 = vmatprep.subr.bf16.mxu0 0
  %1253 = vmatpush1.bf16.msra.mxu0 %v959
  %1254 = vmatprep.subr.bf16.mxu0 0
  %1255 = vmatpush1.bf16.msra.mxu0 %v960
  %1256 = vmatprep.subr.bf16.mxu0 0
  %1257 = vmatpush1.bf16.msra.mxu0 %v961
  %1258 = vmatprep.subr.bf16.mxu0 0
  %1259 = vmatpush1.bf16.msra.mxu0 %v962
  %1260 = vmatprep.subr.bf16.mxu0 0
  %1261 = vmatpush1.bf16.msra.mxu0 %v963
  %1262 = vmatprep.subr.bf16.mxu0 0
  %1263 = vmatpush1.bf16.msra.mxu0 %v964
  %1264 = vmatprep.subr.bf16.mxu0 0
  %1265 = vmatpush1.bf16.msra.mxu0 %v965
  %1266 = vmatprep.subr.bf16.mxu0 0
  %1267 = vmatpush1.bf16.msra.mxu0 %v966
  %1268 = vmatprep.subr.bf16.mxu0 0
  %1269 = vmatpush1.bf16.msra.mxu0 %v967
  %1270 = vmatprep.subr.bf16.mxu0 0
  %1271 = vmatpush1.bf16.msra.mxu0 %v968
  %1272 = vmatprep.subr.bf16.mxu0 0
  %1273 = vmatpush1.bf16.msra.mxu0 %v969
  %1274 = vmatprep.mubr.bf16.mxu0 %v343
  %1275 = vmatmul.mubr.bf16.gmra.mrb[0].mxu0 %v342
  %v1276 = vpop.f32.mrb[0].mxu0
  %v1277 = vadd.f32 0.0, %v1276
  %v1278 = vpop.f32.mrb[0].mxu0
  %v1279 = vpop.f32.mrb[0].mxu0
  %v1280 = vpop.f32.mrb[0].mxu0
  %1281 = vdwg.mxu0
  %1282 = vmatprep.subr.bf16.mxu0 0
  %1283 = vmatpush1.bf16.msra.mxu0 %v970
  %1284 = vmatprep.subr.bf16.mxu0 0
  %1285 = vmatpush1.bf16.msra.mxu0 %v971
  %1286 = vmatprep.subr.bf16.mxu0 0
  %1287 = vmatpush1.bf16.msra.mxu0 %v972
  %1288 = vmatprep.subr.bf16.mxu0 0
  %1289 = vmatpush1.bf16.msra.mxu0 %v973
  %1290 = vmatprep.subr.bf16.mxu0 0
  %1291 = vmatpush1.bf16.msra.mxu0 %v974
  %1292 = vmatprep.subr.bf16.mxu0 0
  %1293 = vmatpush1.bf16.msra.mxu0 %v975
  %1294 = vmatprep.subr.bf16.mxu0 0
  %1295 = vmatpush1.bf16.msra.mxu0 %v976
  %1296 = vmatprep.subr.bf16.mxu0 0
  %1297 = vmatpush1.bf16.msra.mxu0 %v977
  %1298 = vmatprep.subr.bf16.mxu0 0
  %1299 = vmatpush1.bf16.msra.mxu0 %v978
  %1300 = vmatprep.subr.bf16.mxu0 0
  %1301 = vmatpush1.bf16.msra.mxu0 %v979
  %1302 = vmatprep.subr.bf16.mxu0 0
  %1303 = vmatpush1.bf16.msra.mxu0 %v980
  %1304 = vmatprep.subr.bf16.mxu0 0
  %1305 = vmatpush1.bf16.msra.mxu0 %v981
  %1306 = vmatprep.subr.bf16.mxu0 0
  %1307 = vmatpush1.bf16.msra.mxu0 %v982
  %1308 = vmatprep.subr.bf16.mxu0 0
  %1309 = vmatpush1.bf16.msra.mxu0 %v983
  %1310 = vmatprep.subr.bf16.mxu0 0
  %1311 = vmatpush1.bf16.msra.mxu0 %v984
  %1312 = vmatprep.subr.bf16.mxu0 0
  %1313 = vmatpush1.bf16.msra.mxu0 %v985
  %1314 = vmatprep.mubr.bf16.mxu0 %v345
  %1315 = vmatmul.mubr.bf16.gmra.mrb[0].mxu0 %v344
  %v1316 = vpop.f32.mrb[0].mxu0
  %v1317 = vadd.f32 %v1277, %v1316
  %v1318 = vpop.f32.mrb[0].mxu0
  %v1319 = vpop.f32.mrb[0].mxu0
  %v1320 = vpop.f32.mrb[0].mxu0
  %1321 = vdwg.mxu0
  %1322 = vmatprep.subr.bf16.mxu0 0
  %1323 = vmatpush1.bf16.msra.mxu0 %v986
  %1324 = vmatprep.subr.bf16.mxu0 0
  %1325 = vmatpush1.bf16.msra.mxu0 %v987
  %1326 = vmatprep.subr.bf16.mxu0 0
  %1327 = vmatpush1.bf16.msra.mxu0 %v988
  %1328 = vmatprep.subr.bf16.mxu0 0
  %1329 = vmatpush1.bf16.msra.mxu0 %v989
  %1330 = vmatprep.subr.bf16.mxu0 0
  %1331 = vmatpush1.bf16.msra.mxu0 %v990
  %1332 = vmatprep.subr.bf16.mxu0 0
  %1333 = vmatpush1.bf16.msra.mxu0 %v991
  %1334 = vmatprep.subr.bf16.mxu0 0
  %1335 = vmatpush1.bf16.msra.mxu0 %v992
  %1336 = vmatprep.subr.bf16.mxu0 0
  %1337 = vmatpush1.bf16.msra.mxu0 %v993
  %1338 = vmatprep.subr.bf16.mxu0 0
  %1339 = vmatpush1.bf16.msra.mxu0 %v994
  %1340 = vmatprep.subr.bf16.mxu0 0
  %1341 = vmatpush1.bf16.msra.mxu0 %v995
  %1342 = vmatprep.subr.bf16.mxu0 0
  %1343 = vmatpush1.bf16.msra.mxu0 %v996
  %1344 = vmatprep.subr.bf16.mxu0 0
  %1345 = vmatpush1.bf16.msra.mxu0 %v997
  %1346 = vmatprep.subr.bf16.mxu0 0
  %1347 = vmatpush1.bf16.msra.mxu0 %v998
  %1348 = vmatprep.subr.bf16.mxu0 0
  %1349 = vmatpush1.bf16.msra.mxu0 %v999
  %1350 = vmatprep.subr.bf16.mxu0 0
  %1351 = vmatpush1.bf16.msra.mxu0 %v1000
  %1352 = vmatprep.subr.bf16.mxu0 0
  %1353 = vmatpush1.bf16.msra.mxu0 %v1001
  %1354 = vmatprep.mubr.bf16.mxu0 %v347
  %1355 = vmatmul.mubr.bf16.gmra.mrb[0].mxu0 %v346
  %v1356 = vpop.f32.mrb[0].mxu0
  %v1357 = vadd.f32 %v1317, %v1356
  %v1358 = vpop.f32.mrb[0].mxu0
  %v1359 = vpop.f32.mrb[0].mxu0
  %v1360 = vpop.f32.mrb[0].mxu0
  %1361 = vdwg.mxu0
  %1362 = vmatprep.subr.bf16.mxu0 0
  %1363 = vmatpush1.bf16.msra.mxu0 %v1002
  %1364 = vmatprep.subr.bf16.mxu0 0
  %1365 = vmatpush1.bf16.msra.mxu0 %v1003
  %1366 = vmatprep.subr.bf16.mxu0 0
  %1367 = vmatpush1.bf16.msra.mxu0 %v1004
  %1368 = vmatprep.subr.bf16.mxu0 0
  %1369 = vmatpush1.bf16.msra.mxu0 %v1005
  %1370 = vmatprep.subr.bf16.mxu0 0
  %1371 = vmatpush1.bf16.msra.mxu0 %v1006
  %1372 = vmatprep.subr.bf16.mxu0 0
  %1373 = vmatpush1.bf16.msra.mxu0 %v1007
  %1374 = vmatprep.subr.bf16.mxu0 0
  %1375 = vmatpush1.bf16.msra.mxu0 %v1008
  %1376 = vmatprep.subr.bf16.mxu0 0
  %1377 = vmatpush1.bf16.msra.mxu0 %v1009
  %1378 = vmatprep.subr.bf16.mxu0 0
  %1379 = vmatpush1.bf16.msra.mxu0 %v1010
  %1380 = vmatprep.subr.bf16.mxu0 0
  %1381 = vmatpush1.bf16.msra.mxu0 %v1011
  %1382 = vmatprep.subr.bf16.mxu0 0
  %1383 = vmatpush1.bf16.msra.mxu0 %v1012
  %1384 = vmatprep.subr.bf16.mxu0 0
  %1385 = vmatpush1.bf16.msra.mxu0 %v1013
  %1386 = vmatprep.subr.bf16.mxu0 0
  %1387 = vmatpush1.bf16.msra.mxu0 %v1014
  %1388 = vmatprep.subr.bf16.mxu0 0
  %1389 = vmatpush1.bf16.msra.mxu0 %v1015
  %1390 = vmatprep.subr.bf16.mxu0 0
  %1391 = vmatpush1.bf16.msra.mxu0 %v1016
  %1392 = vmatprep.subr.bf16.mxu0 0
  %1393 = vmatpush1.bf16.msra.mxu0 %v1017
  %1394 = vmatprep.mubr.bf16.mxu0 %v349
  %1395 = vmatmul.mubr.bf16.gmra.mrb[0].mxu0 %v348
  %v1396 = vpop.f32.mrb[0].mxu0
  %v1397 = vadd.f32 %v1357, %v1396
  %v1398 = vpop.f32.mrb[0].mxu0
  %v1399 = vpop.f32.mrb[0].mxu0
  %v1400 = vpop.f32.mrb[0].mxu0
  %1401 = vdwg.mxu0
  %1402 = vmatprep.subr.bf16.mxu0 0
  %1403 = vmatpush1.bf16.msra.mxu0 %v1018
  %1404 = vmatprep.subr.bf16.mxu0 0
  %1405 = vmatpush1.bf16.msra.mxu0 %v1019
  %1406 = vmatprep.subr.bf16.mxu0 0
  %1407 = vmatpush1.bf16.msra.mxu0 %v1020
  %1408 = vmatprep.subr.bf16.mxu0 0
  %1409 = vmatpush1.bf16.msra.mxu0 %v1021
  %1410 = vmatprep.subr.bf16.mxu0 0
  %1411 = vmatpush1.bf16.msra.mxu0 %v1022
  %1412 = vmatprep.subr.bf16.mxu0 0
  %1413 = vmatpush1.bf16.msra.mxu0 %v1023
  %1414 = vmatprep.subr.bf16.mxu0 0
  %1415 = vmatpush1.bf16.msra.mxu0 %v1024
  %1416 = vmatprep.subr.bf16.mxu0 0
  %1417 = vmatpush1.bf16.msra.mxu0 %v1025
  %1418 = vmatprep.subr.bf16.mxu0 0
  %1419 = vmatpush1.bf16.msra.mxu0 %v1026
  %1420 = vmatprep.subr.bf16.mxu0 0
  %1421 = vmatpush1.bf16.msra.mxu0 %v1027
  %1422 = vmatprep.subr.bf16.mxu0 0
  %1423 = vmatpush1.bf16.msra.mxu0 %v1028
  %1424 = vmatprep.subr.bf16.mxu0 0
  %1425 = vmatpush1.bf16.msra.mxu0 %v1029
  %1426 = vmatprep.subr.bf16.mxu0 0
  %1427 = vmatpush1.bf16.msra.mxu0 %v1030
  %1428 = vmatprep.subr.bf16.mxu0 0
  %1429 = vmatpush1.bf16.msra.mxu0 %v1031
  %1430 = vmatprep.subr.bf16.mxu0 0
  %1431 = vmatpush1.bf16.msra.mxu0 %v1032
  %1432 = vmatprep.subr.bf16.mxu0 0
  %1433 = vmatpush1.bf16.msra.mxu0 %v1033
  %1434 = vmatprep.mubr.bf16.mxu0 %v351
  %1435 = vmatmul.mubr.bf16.gmra.mrb[0].mxu0 %v350
  %v1436 = vpop.f32.mrb[0].mxu0
  %v1437 = vadd.f32 %v1397, %v1436
  %v1438 = vpop.f32.mrb[0].mxu0
  %v1439 = vpop.f32.mrb[0].mxu0
  %v1440 = vpop.f32.mrb[0].mxu0
  %1441 = vdwg.mxu0
  %1442 = vmatprep.subr.bf16.mxu0 0
  %1443 = vmatpush1.bf16.msra.mxu0 %v1034
  %1444 = vmatprep.subr.bf16.mxu0 0
  %1445 = vmatpush1.bf16.msra.mxu0 %v1035
  %1446 = vmatprep.subr.bf16.mxu0 0
  %1447 = vmatpush1.bf16.msra.mxu0 %v1036
  %1448 = vmatprep.subr.bf16.mxu0 0
  %1449 = vmatpush1.bf16.msra.mxu0 %v1037
  %1450 = vmatprep.subr.bf16.mxu0 0
  %1451 = vmatpush1.bf16.msra.mxu0 %v1038
  %1452 = vmatprep.subr.bf16.mxu0 0
  %1453 = vmatpush1.bf16.msra.mxu0 %v1039
  %1454 = vmatprep.subr.bf16.mxu0 0
  %1455 = vmatpush1.bf16.msra.mxu0 %v1040
  %1456 = vmatprep.subr.bf16.mxu0 0
  %1457 = vmatpush1.bf16.msra.mxu0 %v1041
  %1458 = vmatprep.subr.bf16.mxu0 0
  %1459 = vmatpush1.bf16.msra.mxu0 %v1042
  %1460 = vmatprep.subr.bf16.mxu0 0
  %1461 = vmatpush1.bf16.msra.mxu0 %v1043
  %1462 = vmatprep.subr.bf16.mxu0 0
  %1463 = vmatpush1.bf16.msra.mxu0 %v1044
  %1464 = vmatprep.subr.bf16.mxu0 0
  %1465 = vmatpush1.bf16.msra.mxu0 %v1045
  %1466 = vmatprep.subr.bf16.mxu0 0
  %1467 = vmatpush1.bf16.msra.mxu0 %v1046
  %1468 = vmatprep.subr.bf16.mxu0 0
  %1469 = vmatpush1.bf16.msra.mxu0 %v1047
  %1470 = vmatprep.subr.bf16.mxu0 0
  %1471 = vmatpush1.bf16.msra.mxu0 %v1048
  %1472 = vmatprep.subr.bf16.mxu0 0
  %1473 = vmatpush1.bf16.msra.mxu0 %v1049
  %1474 = vmatprep.mubr.bf16.mxu0 %v353
  %1475 = vmatmul.mubr.bf16.gmra.mrb[0].mxu0 %v352
  %v1476 = vpop.f32.mrb[0].mxu0
  %v1477 = vadd.f32 %v1437, %v1476
  %v1478 = vpop.f32.mrb[0].mxu0
  %v1479 = vpop.f32.mrb[0].mxu0
  %v1480 = vpop.f32.mrb[0].mxu0
  %1481 = vdwg.mxu0
  %1482 = vmatprep.subr.bf16.mxu0 0
  %1483 = vmatpush1.bf16.msra.mxu0 %v1050
  %1484 = vmatprep.subr.bf16.mxu0 0
  %1485 = vmatpush1.bf16.msra.mxu0 %v1051
  %1486 = vmatprep.subr.bf16.mxu0 0
  %1487 = vmatpush1.bf16.msra.mxu0 %v1052
  %1488 = vmatprep.subr.bf16.mxu0 0
  %1489 = vmatpush1.bf16.msra.mxu0 %v1053
  %1490 = vmatprep.subr.bf16.mxu0 0
  %1491 = vmatpush1.bf16.msra.mxu0 %v1054
  %1492 = vmatprep.subr.bf16.mxu0 0
  %1493 = vmatpush1.bf16.msra.mxu0 %v1055
  %1494 = vmatprep.subr.bf16.mxu0 0
  %1495 = vmatpush1.bf16.msra.mxu0 %v1056
  %1496 = vmatprep.subr.bf16.mxu0 0
  %1497 = vmatpush1.bf16.msra.mxu0 %v1057
  %1498 = vmatprep.subr.bf16.mxu0 0
  %1499 = vmatpush1.bf16.msra.mxu0 %v1058
  %1500 = vmatprep.subr.bf16.mxu0 0
  %1501 = vmatpush1.bf16.msra.mxu0 %v1059
  %1502 = vmatprep.subr.bf16.mxu0 0
  %1503 = vmatpush1.bf16.msra.mxu0 %v1060
  %1504 = vmatprep.subr.bf16.mxu0 0
  %1505 = vmatpush1.bf16.msra.mxu0 %v1061
  %1506 = vmatprep.subr.bf16.mxu0 0
  %1507 = vmatpush1.bf16.msra.mxu0 %v1062
  %1508 = vmatprep.subr.bf16.mxu0 0
  %1509 = vmatpush1.bf16.msra.mxu0 %v1063
  %1510 = vmatprep.subr.bf16.mxu0 0
  %1511 = vmatpush1.bf16.msra.mxu0 %v1064
  %1512 = vmatprep.subr.bf16.mxu0 0
  %1513 = vmatpush1.bf16.msra.mxu0 %v1065
  %1514 = vmatprep.mubr.bf16.mxu0 %v355
  %1515 = vmatmul.mubr.bf16.gmra.mrb[0].mxu0 %v354
  %v1516 = vpop.f32.mrb[0].mxu0
  %v1517 = vadd.f32 %v1477, %v1516
  %v1518 = vpop.f32.mrb[0].mxu0
  %v1519 = vpop.f32.mrb[0].mxu0
  %v1520 = vpop.f32.mrb[0].mxu0
  %1521 = vdwg.mxu0
  %1522 = vmatprep.subr.bf16.mxu0 0
  %1523 = vmatpush1.bf16.msra.mxu0 %v1066
  %1524 = vmatprep.subr.bf16.mxu0 0
  %1525 = vmatpush1.bf16.msra.mxu0 %v1067
  %1526 = vmatprep.subr.bf16.mxu0 0
  %1527 = vmatpush1.bf16.msra.mxu0 %v1068
  %1528 = vmatprep.subr.bf16.mxu0 0
  %1529 = vmatpush1.bf16.msra.mxu0 %v1069
  %1530 = vmatprep.subr.bf16.mxu0 0
  %1531 = vmatpush1.bf16.msra.mxu0 %v1070
  %1532 = vmatprep.subr.bf16.mxu0 0
  %1533 = vmatpush1.bf16.msra.mxu0 %v1071
  %1534 = vmatprep.subr.bf16.mxu0 0
  %1535 = vmatpush1.bf16.msra.mxu0 %v1072
  %1536 = vmatprep.subr.bf16.mxu0 0
  %1537 = vmatpush1.bf16.msra.mxu0 %v1073
  %1538 = vmatprep.subr.bf16.mxu0 0
  %1539 = vmatpush1.bf16.msra.mxu0 %v1074
  %1540 = vmatprep.subr.bf16.mxu0 0
  %1541 = vmatpush1.bf16.msra.mxu0 %v1075
  %1542 = vmatprep.subr.bf16.mxu0 0
  %1543 = vmatpush1.bf16.msra.mxu0 %v1076
  %1544 = vmatprep.subr.bf16.mxu0 0
  %1545 = vmatpush1.bf16.msra.mxu0 %v1077
  %1546 = vmatprep.subr.bf16.mxu0 0
  %1547 = vmatpush1.bf16.msra.mxu0 %v1078
  %1548 = vmatprep.subr.bf16.mxu0 0
  %1549 = vmatpush1.bf16.msra.mxu0 %v1079
  %1550 = vmatprep.subr.bf16.mxu0 0
  %1551 = vmatpush1.bf16.msra.mxu0 %v1080
  %1552 = vmatprep.subr.bf16.mxu0 0
  %1553 = vmatpush1.bf16.msra.mxu0 %v1081
  %1554 = vmatprep.mubr.bf16.mxu0 %v357
  %1555 = vmatmul.mubr.bf16.gmra.mrb[0].mxu0 %v356
  %v1556 = vpop.f32.mrb[0].mxu0
  %v1557 = vadd.f32 %v1517, %v1556
  %v1558 = vpop.f32.mrb[0].mxu0
  %v1559 = vpop.f32.mrb[0].mxu0
  %v1560 = vpop.f32.mrb[0].mxu0
  %1561 = vdwg.mxu0
  %1562 = vmatprep.subr.bf16.mxu0 0
  %1563 = vmatpush1.bf16.msra.mxu0 %v1082
  %1564 = vmatprep.subr.bf16.mxu0 0
  %1565 = vmatpush1.bf16.msra.mxu0 %v1083
  %1566 = vmatprep.subr.bf16.mxu0 0
  %1567 = vmatpush1.bf16.msra.mxu0 %v1084
  %1568 = vmatprep.subr.bf16.mxu0 0
  %1569 = vmatpush1.bf16.msra.mxu0 %v1085
  %1570 = vmatprep.subr.bf16.mxu0 0
  %1571 = vmatpush1.bf16.msra.mxu0 %v1086
  %1572 = vmatprep.subr.bf16.mxu0 0
  %1573 = vmatpush1.bf16.msra.mxu0 %v1087
  %1574 = vmatprep.subr.bf16.mxu0 0
  %1575 = vmatpush1.bf16.msra.mxu0 %v1088
  %1576 = vmatprep.subr.bf16.mxu0 0
  %1577 = vmatpush1.bf16.msra.mxu0 %v1089
  %1578 = vmatprep.subr.bf16.mxu0 0
  %1579 = vmatpush1.bf16.msra.mxu0 %v1090
  %1580 = vmatprep.subr.bf16.mxu0 0
  %1581 = vmatpush1.bf16.msra.mxu0 %v1091
  %1582 = vmatprep.subr.bf16.mxu0 0
  %1583 = vmatpush1.bf16.msra.mxu0 %v1092
  %1584 = vmatprep.subr.bf16.mxu0 0
  %1585 = vmatpush1.bf16.msra.mxu0 %v1093
  %1586 = vmatprep.subr.bf16.mxu0 0
  %1587 = vmatpush1.bf16.msra.mxu0 %v1094
  %1588 = vmatprep.subr.bf16.mxu0 0
  %1589 = vmatpush1.bf16.msra.mxu0 %v1095
  %1590 = vmatprep.subr.bf16.mxu0 0
  %1591 = vmatpush1.bf16.msra.mxu0 %v1096
  %1592 = vmatprep.subr.bf16.mxu0 0
  %1593 = vmatpush1.bf16.msra.mxu0 %v1097
  %1594 = vmatprep.mubr.bf16.mxu0 %v359
  %1595 = vmatmul.mubr.bf16.gmra.mrb[0].mxu0 %v358
  %v1596 = vpop.f32.mrb[0].mxu0
  %v1597 = vadd.f32 %v1557, %v1596
  %v1598 = vpop.f32.mrb[0].mxu0
  %v1599 = vpop.f32.mrb[0].mxu0
  %v1600 = vpop.f32.mrb[0].mxu0
  %1601 = vdwg.mxu0
  %v1602 = vld [vmem:[%s2] sm:$0x1]
  %v1604 = vlaneseq
  %v1605 = vshrl.u32 %v1604, 7
  %v1606 = vsub.s32 0, %v1605
  %v1607 = vrot.slane %v1602, %v1606
  %v1609 = vmul.f32 %v1597, %v1607
  %v1610 = vld [vmem:[%s3] sm:$0x1]
  %v1612 = vlaneseq
  %v1613 = vshrl.u32 %v1612, 7
  %v1614 = vsub.s32 0, %v1613
  %v1615 = vrot.slane %v1610, %v1614
  %v1617 = vadd.f32 %v1609, %v1615
  %vm1618 = vcmp.ge.f32.partialorder %v1617, 0.0
  %v1619 = vmul.f32 %v1617, 0.01
  %v1620 = vsel %vm1618, %v1617, %v1619
  %1621 = vst [vmem:[%s4] sm:$0xff] %v1620
  // Predicated region
  $region18: #{feat_extraction_forward.25} parent=0 // pred_check
    _
  $region19: #{feat_extraction_forward.25} parent=0 // pred_check_branch
    %1623 = sbr.rel (0) target = $region21
  $region20: #{feat_extraction_forward.25} parent=0 // pred_region
    _
  $region21: #{feat_extraction_forward.25} parent=0 // pred_fallthru
    _
  // Predicated region
  $region22: #{feat_extraction_forward.25} parent=0 // pred_check
    _
  $region23: #{feat_extraction_forward.25} parent=0 // pred_check_branch
    %1625 = sbr.rel (0) target = $region25
  $region24: #{feat_extraction_forward.25} parent=0 // pred_region
    _
  $region25: #{feat_extraction_forward.25} parent=0 // pred_fallthru
    _

// kernel: feat_extraction_forward.26
$region0: #{feat_extraction_forward.26}
  #allocation0 [shape = 'u32[]', space=smem, size = 0x4, offset = 0x4, fixed_abs, tag = 'smem constant byte address 0x4 - core index']
  #allocation1 [shape = 'u32[144,128]{1,0:T(1,128)}', space=vmem, size = 0x12000, scoped, tag = 'internal scratch']
  %s0 = inlined_call_operand.vmem [shape: bf16[32,1152], index: 0, kind: input, shape index: {}]
  %s1 = inlined_call_operand.vmem [shape: bf16[1152,128], index: 1, kind: input, shape index: {}]
  %s2 = inlined_call_operand.vmem [shape: f32[1,128], index: 2, kind: input, shape index: {}]
  %s3 = inlined_call_operand.vmem [shape: f32[1,128], index: 3, kind: input, shape index: {}]
  %s4 = inlined_call_operand.vmem [shape: f32[32,128], index: 4, kind: output, shape index: {}]
  %s5 = sld [smem:[#allocation0]]
  $region26: #{feat_extraction_forward.26} parent=0
    _
  %s7 = ssub.s32 1, %s5
  %s8 = scalar_select 0, %s7, %s5
  // Predicated region
  $region2: #{feat_extraction_forward.26} parent=0 // pred_check
    _
  $region3: #{feat_extraction_forward.26} parent=0 // pred_check_branch
    %10 = sbr.rel (0) target = $region5
  $region4: #{feat_extraction_forward.26} parent=0 // pred_region
    _
  $region5: #{feat_extraction_forward.26} parent=0 // pred_fallthru
    _
  // Predicated region
  $region6: #{feat_extraction_forward.26} parent=0 // pred_check
    _
  $region7: #{feat_extraction_forward.26} parent=0 // pred_check_branch
    %12 = sbr.rel (0) target = $region9
  $region8: #{feat_extraction_forward.26} parent=0 // pred_region
    _
  $region9: #{feat_extraction_forward.26} parent=0 // pred_fallthru
    _
  // Predicated region
  $region10: #{feat_extraction_forward.26} parent=0 // pred_check
    _
  $region11: #{feat_extraction_forward.26} parent=0 // pred_check_branch
    %14 = sbr.rel (0) target = $region13
  $region12: #{feat_extraction_forward.26} parent=0 // pred_region
    _
  $region13: #{feat_extraction_forward.26} parent=0 // pred_fallthru
    _
  // Predicated region
  $region14: #{feat_extraction_forward.26} parent=0 // pred_check
    _
  $region15: #{feat_extraction_forward.26} parent=0 // pred_check_branch
    %16 = sbr.rel (0) target = $region17
  $region16: #{feat_extraction_forward.26} parent=0 // pred_region
    _
  $region17: #{feat_extraction_forward.26} parent=0 // pred_fallthru
    _
  %v18 = vld [vmem:[%s0] sm:$0xff]
  %v19 = vld [vmem:[%s0 + $0x8] sm:$0xff]
  %v20 = vld [vmem:[%s0 + $0x10] sm:$0xff]
  %v21 = vld [vmem:[%s0 + $0x18] sm:$0xff]
  %v22 = vld [vmem:[%s0 + $0x20] sm:$0xf]
  %v23 = vld [vmem:[%s0 + $0x24] sm:$0xff]
  %v24 = vld [vmem:[%s0 + $0x2c] sm:$0xff]
  %v25 = vld [vmem:[%s0 + $0x34] sm:$0xff]
  %v26 = vld [vmem:[%s0 + $0x3c] sm:$0xff]
  %v27 = vld [vmem:[%s0 + $0x44] sm:$0xf]
  %v28 = vld [vmem:[%s0 + $0x48] sm:$0xff]
  %v29 = vld [vmem:[%s0 + $0x50] sm:$0xff]
  %v30 = vld [vmem:[%s0 + $0x58] sm:$0xff]
  %v31 = vld [vmem:[%s0 + $0x60] sm:$0xff]
  %v32 = vld [vmem:[%s0 + $0x68] sm:$0xf]
  %v33 = vld [vmem:[%s0 + $0x6c] sm:$0xff]
  %v34 = vld [vmem:[%s0 + $0x74] sm:$0xff]
  %v35 = vld [vmem:[%s0 + $0x7c] sm:$0xff]
  %v36 = vld [vmem:[%s0 + $0x84] sm:$0xff]
  %v37 = vld [vmem:[%s0 + $0x8c] sm:$0xf]
  %v38 = vld [vmem:[%s1] sm:$0xf]
  %v39 = vld [vmem:[%s1 + $0x4] sm:$0xf]
  %v40 = vld [vmem:[%s1 + $0x8] sm:$0xf]
  %v41 = vld [vmem:[%s1 + $0xc] sm:$0xf]
  %v42 = vld [vmem:[%s1 + $0x10] sm:$0xf]
  %v43 = vld [vmem:[%s1 + $0x14] sm:$0xf]
  %v44 = vld [vmem:[%s1 + $0x18] sm:$0xf]
  %v45 = vld [vmem:[%s1 + $0x1c] sm:$0xf]
  %v46 = vld [vmem:[%s1 + $0x20] sm:$0xf]
  %v47 = vld [vmem:[%s1 + $0x24] sm:$0xf]
  %v48 = vld [vmem:[%s1 + $0x28] sm:$0xf]
  %v49 = vld [vmem:[%s1 + $0x2c] sm:$0xf]
  %v50 = vld [vmem:[%s1 + $0x30] sm:$0xf]
  %v51 = vld [vmem:[%s1 + $0x34] sm:$0xf]
  %v52 = vld [vmem:[%s1 + $0x38] sm:$0xf]
  %v53 = vld [vmem:[%s1 + $0x3c] sm:$0xf]
  %v54 = vld [vmem:[%s1 + $0x40] sm:$0xf]
  %v55 = vld [vmem:[%s1 + $0x44] sm:$0xf]
  %v56 = vld [vmem:[%s1 + $0x48] sm:$0xf]
  %v57 = vld [vmem:[%s1 + $0x4c] sm:$0xf]
  %v58 = vld [vmem:[%s1 + $0x50] sm:$0xf]
  %v59 = vld [vmem:[%s1 + $0x54] sm:$0xf]
  %v60 = vld [vmem:[%s1 + $0x58] sm:$0xf]
  %v61 = vld [vmem:[%s1 + $0x5c] sm:$0xf]
  %v62 = vld [vmem:[%s1 + $0x60] sm:$0xf]
  %v63 = vld [vmem:[%s1 + $0x64] sm:$0xf]
  %v64 = vld [vmem:[%s1 + $0x68] sm:$0xf]
  %v65 = vld [vmem:[%s1 + $0x6c] sm:$0xf]
  %v66 = vld [vmem:[%s1 + $0x70] sm:$0xf]
  %v67 = vld [vmem:[%s1 + $0x74] sm:$0xf]
  %v68 = vld [vmem:[%s1 + $0x78] sm:$0xf]
  %v69 = vld [vmem:[%s1 + $0x7c] sm:$0xf]
  %v70 = vld [vmem:[%s1 + $0x80] sm:$0xf]
  %v71 = vld [vmem:[%s1 + $0x84] sm:$0xf]
  %v72 = vld [vmem:[%s1 + $0x88] sm:$0xf]
  %v73 = vld [vmem:[%s1 + $0x8c] sm:$0xf]
  %v74 = vld [vmem:[%s1 + $0x90] sm:$0xf]
  %v75 = vld [vmem:[%s1 + $0x94] sm:$0xf]
  %v76 = vld [vmem:[%s1 + $0x98] sm:$0xf]
  %v77 = vld [vmem:[%s1 + $0x9c] sm:$0xf]
  %v78 = vld [vmem:[%s1 + $0xa0] sm:$0xf]
  %v79 = vld [vmem:[%s1 + $0xa4] sm:$0xf]
  %v80 = vld [vmem:[%s1 + $0xa8] sm:$0xf]
  %v81 = vld [vmem:[%s1 + $0xac] sm:$0xf]
  %v82 = vld [vmem:[%s1 + $0xb0] sm:$0xf]
  %v83 = vld [vmem:[%s1 + $0xb4] sm:$0xf]
  %v84 = vld [vmem:[%s1 + $0xb8] sm:$0xf]
  %v85 = vld [vmem:[%s1 + $0xbc] sm:$0xf]
  %v86 = vld [vmem:[%s1 + $0xc0] sm:$0xf]
  %v87 = vld [vmem:[%s1 + $0xc4] sm:$0xf]
  %v88 = vld [vmem:[%s1 + $0xc8] sm:$0xf]
  %v89 = vld [vmem:[%s1 + $0xcc] sm:$0xf]
  %v90 = vld [vmem:[%s1 + $0xd0] sm:$0xf]
  %v91 = vld [vmem:[%s1 + $0xd4] sm:$0xf]
  %v92 = vld [vmem:[%s1 + $0xd8] sm:$0xf]
  %v93 = vld [vmem:[%s1 + $0xdc] sm:$0xf]
  %v94 = vld [vmem:[%s1 + $0xe0] sm:$0xf]
  %v95 = vld [vmem:[%s1 + $0xe4] sm:$0xf]
  %v96 = vld [vmem:[%s1 + $0xe8] sm:$0xf]
  %v97 = vld [vmem:[%s1 + $0xec] sm:$0xf]
  %v98 = vld [vmem:[%s1 + $0xf0] sm:$0xf]
  %v99 = vld [vmem:[%s1 + $0xf4] sm:$0xf]
  %v100 = vld [vmem:[%s1 + $0xf8] sm:$0xf]
  %v101 = vld [vmem:[%s1 + $0xfc] sm:$0xf]
  %v102 = vld [vmem:[%s1 + $0x100] sm:$0xf]
  %v103 = vld [vmem:[%s1 + $0x104] sm:$0xf]
  %v104 = vld [vmem:[%s1 + $0x108] sm:$0xf]
  %v105 = vld [vmem:[%s1 + $0x10c] sm:$0xf]
  %v106 = vld [vmem:[%s1 + $0x110] sm:$0xf]
  %v107 = vld [vmem:[%s1 + $0x114] sm:$0xf]
  %v108 = vld [vmem:[%s1 + $0x118] sm:$0xf]
  %v109 = vld [vmem:[%s1 + $0x11c] sm:$0xf]
  %v110 = vld [vmem:[%s1 + $0x120] sm:$0xf]
  %v111 = vld [vmem:[%s1 + $0x124] sm:$0xf]
  %v112 = vld [vmem:[%s1 + $0x128] sm:$0xf]
  %v113 = vld [vmem:[%s1 + $0x12c] sm:$0xf]
  %v114 = vld [vmem:[%s1 + $0x130] sm:$0xf]
  %v115 = vld [vmem:[%s1 + $0x134] sm:$0xf]
  %v116 = vld [vmem:[%s1 + $0x138] sm:$0xf]
  %v117 = vld [vmem:[%s1 + $0x13c] sm:$0xf]
  %v118 = vld [vmem:[%s1 + $0x140] sm:$0xf]
  %v119 = vld [vmem:[%s1 + $0x144] sm:$0xf]
  %v120 = vld [vmem:[%s1 + $0x148] sm:$0xf]
  %v121 = vld [vmem:[%s1 + $0x14c] sm:$0xf]
  %v122 = vld [vmem:[%s1 + $0x150] sm:$0xf]
  %v123 = vld [vmem:[%s1 + $0x154] sm:$0xf]
  %v124 = vld [vmem:[%s1 + $0x158] sm:$0xf]
  %v125 = vld [vmem:[%s1 + $0x15c] sm:$0xf]
  %v126 = vld [vmem:[%s1 + $0x160] sm:$0xf]
  %v127 = vld [vmem:[%s1 + $0x164] sm:$0xf]
  %v128 = vld [vmem:[%s1 + $0x168] sm:$0xf]
  %v129 = vld [vmem:[%s1 + $0x16c] sm:$0xf]
  %v130 = vld [vmem:[%s1 + $0x170] sm:$0xf]
  %v131 = vld [vmem:[%s1 + $0x174] sm:$0xf]
  %v132 = vld [vmem:[%s1 + $0x178] sm:$0xf]
  %v133 = vld [vmem:[%s1 + $0x17c] sm:$0xf]
  %v134 = vld [vmem:[%s1 + $0x180] sm:$0xf]
  %v135 = vld [vmem:[%s1 + $0x184] sm:$0xf]
  %v136 = vld [vmem:[%s1 + $0x188] sm:$0xf]
  %v137 = vld [vmem:[%s1 + $0x18c] sm:$0xf]
  %v138 = vld [vmem:[%s1 + $0x190] sm:$0xf]
  %v139 = vld [vmem:[%s1 + $0x194] sm:$0xf]
  %v140 = vld [vmem:[%s1 + $0x198] sm:$0xf]
  %v141 = vld [vmem:[%s1 + $0x19c] sm:$0xf]
  %v142 = vld [vmem:[%s1 + $0x1a0] sm:$0xf]
  %v143 = vld [vmem:[%s1 + $0x1a4] sm:$0xf]
  %v144 = vld [vmem:[%s1 + $0x1a8] sm:$0xf]
  %v145 = vld [vmem:[%s1 + $0x1ac] sm:$0xf]
  %v146 = vld [vmem:[%s1 + $0x1b0] sm:$0xf]
  %v147 = vld [vmem:[%s1 + $0x1b4] sm:$0xf]
  %v148 = vld [vmem:[%s1 + $0x1b8] sm:$0xf]
  %v149 = vld [vmem:[%s1 + $0x1bc] sm:$0xf]
  %v150 = vld [vmem:[%s1 + $0x1c0] sm:$0xf]
  %v151 = vld [vmem:[%s1 + $0x1c4] sm:$0xf]
  %v152 = vld [vmem:[%s1 + $0x1c8] sm:$0xf]
  %v153 = vld [vmem:[%s1 + $0x1cc] sm:$0xf]
  %v154 = vld [vmem:[%s1 + $0x1d0] sm:$0xf]
  %v155 = vld [vmem:[%s1 + $0x1d4] sm:$0xf]
  %v156 = vld [vmem:[%s1 + $0x1d8] sm:$0xf]
  %v157 = vld [vmem:[%s1 + $0x1dc] sm:$0xf]
  %v158 = vld [vmem:[%s1 + $0x1e0] sm:$0xf]
  %v159 = vld [vmem:[%s1 + $0x1e4] sm:$0xf]
  %v160 = vld [vmem:[%s1 + $0x1e8] sm:$0xf]
  %v161 = vld [vmem:[%s1 + $0x1ec] sm:$0xf]
  %v162 = vld [vmem:[%s1 + $0x1f0] sm:$0xf]
  %v163 = vld [vmem:[%s1 + $0x1f4] sm:$0xf]
  %v164 = vld [vmem:[%s1 + $0x1f8] sm:$0xf]
  %v165 = vld [vmem:[%s1 + $0x1fc] sm:$0xf]
  %v166 = vld [vmem:[%s1 + $0x200] sm:$0xf]
  %v167 = vld [vmem:[%s1 + $0x204] sm:$0xf]
  %v168 = vld [vmem:[%s1 + $0x208] sm:$0xf]
  %v169 = vld [vmem:[%s1 + $0x20c] sm:$0xf]
  %v170 = vld [vmem:[%s1 + $0x210] sm:$0xf]
  %v171 = vld [vmem:[%s1 + $0x214] sm:$0xf]
  %v172 = vld [vmem:[%s1 + $0x218] sm:$0xf]
  %v173 = vld [vmem:[%s1 + $0x21c] sm:$0xf]
  %v174 = vld [vmem:[%s1 + $0x220] sm:$0xf]
  %v175 = vld [vmem:[%s1 + $0x224] sm:$0xf]
  %v176 = vld [vmem:[%s1 + $0x228] sm:$0xf]
  %v177 = vld [vmem:[%s1 + $0x22c] sm:$0xf]
  %v178 = vld [vmem:[%s1 + $0x230] sm:$0xf]
  %v179 = vld [vmem:[%s1 + $0x234] sm:$0xf]
  %v180 = vld [vmem:[%s1 + $0x238] sm:$0xf]
  %v181 = vld [vmem:[%s1 + $0x23c] sm:$0xf]
  %v202 = vunpack.c.l.b16 %v18
  %v203 = vunpack.c.h.b16 %v18
  %v204 = vunpack.c.l.b16 %v19
  %v205 = vunpack.c.h.b16 %v19
  %v206 = vunpack.c.l.b16 %v20
  %v207 = vunpack.c.h.b16 %v20
  %v208 = vunpack.c.l.b16 %v21
  %v209 = vunpack.c.h.b16 %v21
  %v210 = vunpack.c.l.b16 %v22
  %v211 = vunpack.c.l.b16 %v23
  %v212 = vunpack.c.h.b16 %v23
  %v213 = vunpack.c.l.b16 %v24
  %v214 = vunpack.c.h.b16 %v24
  %v215 = vunpack.c.l.b16 %v25
  %v216 = vunpack.c.h.b16 %v25
  %v217 = vunpack.c.l.b16 %v26
  %v218 = vunpack.c.h.b16 %v26
  %v219 = vunpack.c.l.b16 %v27
  %v220 = vunpack.c.l.b16 %v28
  %v221 = vunpack.c.h.b16 %v28
  %v222 = vunpack.c.l.b16 %v29
  %v223 = vunpack.c.h.b16 %v29
  %v224 = vunpack.c.l.b16 %v30
  %v225 = vunpack.c.h.b16 %v30
  %v226 = vunpack.c.l.b16 %v31
  %v227 = vunpack.c.h.b16 %v31
  %v228 = vunpack.c.l.b16 %v32
  %v229 = vunpack.c.l.b16 %v33
  %v230 = vunpack.c.h.b16 %v33
  %v231 = vunpack.c.l.b16 %v34
  %v232 = vunpack.c.h.b16 %v34
  %v233 = vunpack.c.l.b16 %v35
  %v234 = vunpack.c.h.b16 %v35
  %v235 = vunpack.c.l.b16 %v36
  %v236 = vunpack.c.h.b16 %v36
  %v237 = vunpack.c.l.b16 %v37
  %v238 = vpack.c.b16 %v211, %v202
  %v239 = vpack.c.b16 %v212, %v203
  %v240 = vpack.c.b16 %v213, %v204
  %v241 = vpack.c.b16 %v214, %v205
  %v242 = vpack.c.b16 %v215, %v206
  %v243 = vpack.c.b16 %v216, %v207
  %v244 = vpack.c.b16 %v217, %v208
  %v245 = vpack.c.b16 %v218, %v209
  %v246 = vpack.c.b16 %v219, %v210
  %v247 = vpack.c.b16 %v229, %v220
  %v248 = vpack.c.b16 %v230, %v221
  %v249 = vpack.c.b16 %v231, %v222
  %v250 = vpack.c.b16 %v232, %v223
  %v251 = vpack.c.b16 %v233, %v224
  %v252 = vpack.c.b16 %v234, %v225
  %v253 = vpack.c.b16 %v235, %v226
  %v254 = vpack.c.b16 %v236, %v227
  %v255 = vpack.c.b16 %v237, %v228
  %v418 = vunpack.c.l.b16 %v38
  %v419 = vunpack.c.l.b16 %v39
  %v420 = vunpack.c.l.b16 %v40
  %v421 = vunpack.c.l.b16 %v41
  %v422 = vunpack.c.l.b16 %v42
  %v423 = vunpack.c.l.b16 %v43
  %v424 = vunpack.c.l.b16 %v44
  %v425 = vunpack.c.l.b16 %v45
  %v426 = vunpack.c.l.b16 %v46
  %v427 = vunpack.c.l.b16 %v47
  %v428 = vunpack.c.l.b16 %v48
  %v429 = vunpack.c.l.b16 %v49
  %v430 = vunpack.c.l.b16 %v50
  %v431 = vunpack.c.l.b16 %v51
  %v432 = vunpack.c.l.b16 %v52
  %v433 = vunpack.c.l.b16 %v53
  %v434 = vunpack.c.l.b16 %v54
  %v435 = vunpack.c.l.b16 %v55
  %v436 = vunpack.c.l.b16 %v56
  %v437 = vunpack.c.l.b16 %v57
  %v438 = vunpack.c.l.b16 %v58
  %v439 = vunpack.c.l.b16 %v59
  %v440 = vunpack.c.l.b16 %v60
  %v441 = vunpack.c.l.b16 %v61
  %v442 = vunpack.c.l.b16 %v62
  %v443 = vunpack.c.l.b16 %v63
  %v444 = vunpack.c.l.b16 %v64
  %v445 = vunpack.c.l.b16 %v65
  %v446 = vunpack.c.l.b16 %v66
  %v447 = vunpack.c.l.b16 %v67
  %v448 = vunpack.c.l.b16 %v68
  %v449 = vunpack.c.l.b16 %v69
  %v450 = vunpack.c.l.b16 %v70
  %v451 = vunpack.c.l.b16 %v71
  %v452 = vunpack.c.l.b16 %v72
  %v453 = vunpack.c.l.b16 %v73
  %v454 = vunpack.c.l.b16 %v74
  %v455 = vunpack.c.l.b16 %v75
  %v456 = vunpack.c.l.b16 %v76
  %v457 = vunpack.c.l.b16 %v77
  %v458 = vunpack.c.l.b16 %v78
  %v459 = vunpack.c.l.b16 %v79
  %v460 = vunpack.c.l.b16 %v80
  %v461 = vunpack.c.l.b16 %v81
  %v462 = vunpack.c.l.b16 %v82
  %v463 = vunpack.c.l.b16 %v83
  %v464 = vunpack.c.l.b16 %v84
  %v465 = vunpack.c.l.b16 %v85
  %v466 = vunpack.c.l.b16 %v86
  %v467 = vunpack.c.l.b16 %v87
  %v468 = vunpack.c.l.b16 %v88
  %v469 = vunpack.c.l.b16 %v89
  %v470 = vunpack.c.l.b16 %v90
  %v471 = vunpack.c.l.b16 %v91
  %v472 = vunpack.c.l.b16 %v92
  %v473 = vunpack.c.l.b16 %v93
  %v474 = vunpack.c.l.b16 %v94
  %v475 = vunpack.c.l.b16 %v95
  %v476 = vunpack.c.l.b16 %v96
  %v477 = vunpack.c.l.b16 %v97
  %v478 = vunpack.c.l.b16 %v98
  %v479 = vunpack.c.l.b16 %v99
  %v480 = vunpack.c.l.b16 %v100
  %v481 = vunpack.c.l.b16 %v101
  %v482 = vunpack.c.l.b16 %v102
  %v483 = vunpack.c.l.b16 %v103
  %v484 = vunpack.c.l.b16 %v104
  %v485 = vunpack.c.l.b16 %v105
  %v486 = vunpack.c.l.b16 %v106
  %v487 = vunpack.c.l.b16 %v107
  %v488 = vunpack.c.l.b16 %v108
  %v489 = vunpack.c.l.b16 %v109
  %v490 = vunpack.c.l.b16 %v110
  %v491 = vunpack.c.l.b16 %v111
  %v492 = vunpack.c.l.b16 %v112
  %v493 = vunpack.c.l.b16 %v113
  %v494 = vunpack.c.l.b16 %v114
  %v495 = vunpack.c.l.b16 %v115
  %v496 = vunpack.c.l.b16 %v116
  %v497 = vunpack.c.l.b16 %v117
  %v498 = vunpack.c.l.b16 %v118
  %v499 = vunpack.c.l.b16 %v119
  %v500 = vunpack.c.l.b16 %v120
  %v501 = vunpack.c.l.b16 %v121
  %v502 = vunpack.c.l.b16 %v122
  %v503 = vunpack.c.l.b16 %v123
  %v504 = vunpack.c.l.b16 %v124
  %v505 = vunpack.c.l.b16 %v125
  %v506 = vunpack.c.l.b16 %v126
  %v507 = vunpack.c.l.b16 %v127
  %v508 = vunpack.c.l.b16 %v128
  %v509 = vunpack.c.l.b16 %v129
  %v510 = vunpack.c.l.b16 %v130
  %v511 = vunpack.c.l.b16 %v131
  %v512 = vunpack.c.l.b16 %v132
  %v513 = vunpack.c.l.b16 %v133
  %v514 = vunpack.c.l.b16 %v134
  %v515 = vunpack.c.l.b16 %v135
  %v516 = vunpack.c.l.b16 %v136
  %v517 = vunpack.c.l.b16 %v137
  %v518 = vunpack.c.l.b16 %v138
  %v519 = vunpack.c.l.b16 %v139
  %v520 = vunpack.c.l.b16 %v140
  %v521 = vunpack.c.l.b16 %v141
  %v522 = vunpack.c.l.b16 %v142
  %v523 = vunpack.c.l.b16 %v143
  %v524 = vunpack.c.l.b16 %v144
  %v525 = vunpack.c.l.b16 %v145
  %v526 = vunpack.c.l.b16 %v146
  %v527 = vunpack.c.l.b16 %v147
  %v528 = vunpack.c.l.b16 %v148
  %v529 = vunpack.c.l.b16 %v149
  %v530 = vunpack.c.l.b16 %v150
  %v531 = vunpack.c.l.b16 %v151
  %v532 = vunpack.c.l.b16 %v152
  %v533 = vunpack.c.l.b16 %v153
  %v534 = vunpack.c.l.b16 %v154
  %v535 = vunpack.c.l.b16 %v155
  %v536 = vunpack.c.l.b16 %v156
  %v537 = vunpack.c.l.b16 %v157
  %v538 = vunpack.c.l.b16 %v158
  %v539 = vunpack.c.l.b16 %v159
  %v540 = vunpack.c.l.b16 %v160
  %v541 = vunpack.c.l.b16 %v161
  %v542 = vunpack.c.l.b16 %v162
  %v543 = vunpack.c.l.b16 %v163
  %v544 = vunpack.c.l.b16 %v164
  %v545 = vunpack.c.l.b16 %v165
  %v546 = vunpack.c.l.b16 %v166
  %v547 = vunpack.c.l.b16 %v167
  %v548 = vunpack.c.l.b16 %v168
  %v549 = vunpack.c.l.b16 %v169
  %v550 = vunpack.c.l.b16 %v170
  %v551 = vunpack.c.l.b16 %v171
  %v552 = vunpack.c.l.b16 %v172
  %v553 = vunpack.c.l.b16 %v173
  %v554 = vunpack.c.l.b16 %v174
  %v555 = vunpack.c.l.b16 %v175
  %v556 = vunpack.c.l.b16 %v176
  %v557 = vunpack.c.l.b16 %v177
  %v558 = vunpack.c.l.b16 %v178
  %v559 = vunpack.c.l.b16 %v179
  %v560 = vunpack.c.l.b16 %v180
  %v561 = vunpack.c.l.b16 %v181
  %v562 = vpack.c.b16 %v419, %v418
  %v563 = vpack.c.b16 %v421, %v420
  %v564 = vpack.c.b16 %v423, %v422
  %v565 = vpack.c.b16 %v425, %v424
  %v566 = vpack.c.b16 %v427, %v426
  %v567 = vpack.c.b16 %v429, %v428
  %v568 = vpack.c.b16 %v431, %v430
  %v569 = vpack.c.b16 %v433, %v432
  %v570 = vpack.c.b16 %v435, %v434
  %v571 = vpack.c.b16 %v437, %v436
  %v572 = vpack.c.b16 %v439, %v438
  %v573 = vpack.c.b16 %v441, %v440
  %v574 = vpack.c.b16 %v443, %v442
  %v575 = vpack.c.b16 %v445, %v444
  %v576 = vpack.c.b16 %v447, %v446
  %v577 = vpack.c.b16 %v449, %v448
  %v578 = vpack.c.b16 %v451, %v450
  %v579 = vpack.c.b16 %v453, %v452
  %v580 = vpack.c.b16 %v455, %v454
  %v581 = vpack.c.b16 %v457, %v456
  %v582 = vpack.c.b16 %v459, %v458
  %v583 = vpack.c.b16 %v461, %v460
  %v584 = vpack.c.b16 %v463, %v462
  %v585 = vpack.c.b16 %v465, %v464
  %v586 = vpack.c.b16 %v467, %v466
  %v587 = vpack.c.b16 %v469, %v468
  %v588 = vpack.c.b16 %v471, %v470
  %v589 = vpack.c.b16 %v473, %v472
  %v590 = vpack.c.b16 %v475, %v474
  %v591 = vpack.c.b16 %v477, %v476
  %v592 = vpack.c.b16 %v479, %v478
  %v593 = vpack.c.b16 %v481, %v480
  %v594 = vpack.c.b16 %v483, %v482
  %v595 = vpack.c.b16 %v485, %v484
  %v596 = vpack.c.b16 %v487, %v486
  %v597 = vpack.c.b16 %v489, %v488
  %v598 = vpack.c.b16 %v491, %v490
  %v599 = vpack.c.b16 %v493, %v492
  %v600 = vpack.c.b16 %v495, %v494
  %v601 = vpack.c.b16 %v497, %v496
  %v602 = vpack.c.b16 %v499, %v498
  %v603 = vpack.c.b16 %v501, %v500
  %v604 = vpack.c.b16 %v503, %v502
  %v605 = vpack.c.b16 %v505, %v504
  %v606 = vpack.c.b16 %v507, %v506
  %v607 = vpack.c.b16 %v509, %v508
  %v608 = vpack.c.b16 %v511, %v510
  %v609 = vpack.c.b16 %v513, %v512
  %v610 = vpack.c.b16 %v515, %v514
  %v611 = vpack.c.b16 %v517, %v516
  %v612 = vpack.c.b16 %v519, %v518
  %v613 = vpack.c.b16 %v521, %v520
  %v614 = vpack.c.b16 %v523, %v522
  %v615 = vpack.c.b16 %v525, %v524
  %v616 = vpack.c.b16 %v527, %v526
  %v617 = vpack.c.b16 %v529, %v528
  %v618 = vpack.c.b16 %v531, %v530
  %v619 = vpack.c.b16 %v533, %v532
  %v620 = vpack.c.b16 %v535, %v534
  %v621 = vpack.c.b16 %v537, %v536
  %v622 = vpack.c.b16 %v539, %v538
  %v623 = vpack.c.b16 %v541, %v540
  %v624 = vpack.c.b16 %v543, %v542
  %v625 = vpack.c.b16 %v545, %v544
  %v626 = vpack.c.b16 %v547, %v546
  %v627 = vpack.c.b16 %v549, %v548
  %v628 = vpack.c.b16 %v551, %v550
  %v629 = vpack.c.b16 %v553, %v552
  %v630 = vpack.c.b16 %v555, %v554
  %v631 = vpack.c.b16 %v557, %v556
  %v632 = vpack.c.b16 %v559, %v558
  %v633 = vpack.c.b16 %v561, %v560
  %706 = vmatprep.subr.bf16.mxu0 0
  %707 = vmatpush1.bf16.msra.mxu0 %v562
  %708 = vmatprep.subr.bf16.mxu0 0
  %709 = vmatpush1.bf16.msra.mxu0 %v563
  %710 = vmatprep.subr.bf16.mxu0 0
  %711 = vmatpush1.bf16.msra.mxu0 %v564
  %712 = vmatprep.subr.bf16.mxu0 0
  %713 = vmatpush1.bf16.msra.mxu0 %v565
  %714 = vmatprep.subr.bf16.mxu0 0
  %715 = vmatpush1.bf16.msra.mxu0 %v566
  %716 = vmatprep.subr.bf16.mxu0 0
  %717 = vmatpush1.bf16.msra.mxu0 %v567
  %718 = vmatprep.subr.bf16.mxu0 0
  %719 = vmatpush1.bf16.msra.mxu0 %v568
  %720 = vmatprep.subr.bf16.mxu0 0
  %721 = vmatpush1.bf16.msra.mxu0 %v569
  %722 = vmatprep.subr.bf16.mxu0 0
  %723 = vmatpush1.bf16.msra.mxu0 %v570
  %724 = vmatprep.subr.bf16.mxu0 0
  %725 = vmatpush1.bf16.msra.mxu0 %v571
  %726 = vmatprep.subr.bf16.mxu0 0
  %727 = vmatpush1.bf16.msra.mxu0 %v572
  %728 = vmatprep.subr.bf16.mxu0 0
  %729 = vmatpush1.bf16.msra.mxu0 %v573
  %730 = vmatprep.subr.bf16.mxu0 0
  %731 = vmatpush1.bf16.msra.mxu0 %v574
  %732 = vmatprep.subr.bf16.mxu0 0
  %733 = vmatpush1.bf16.msra.mxu0 %v575
  %734 = vmatprep.subr.bf16.mxu0 0
  %735 = vmatpush1.bf16.msra.mxu0 %v576
  %736 = vmatprep.subr.bf16.mxu0 0
  %737 = vmatpush1.bf16.msra.mxu0 %v577
  %738 = vmatprep.mubr.bf16.mxu0 %v239
  %739 = vmatmul.mubr.bf16.gmra.mrb[0].mxu0 %v238
  %v740 = vpop.f32.mrb[0].mxu0
  %v741 = vadd.f32 0.0, %v740
  %v742 = vpop.f32.mrb[0].mxu0
  %v743 = vpop.f32.mrb[0].mxu0
  %v744 = vadd.f32 0.0, %v743
  %v745 = vpop.f32.mrb[0].mxu0
  %746 = vmatprep.mubr.bf16.mxu0 %v248
  %747 = vmatmul.mubr.bf16.gmra.mrb[0].mxu0 %v247
  %v748 = vpop.f32.mrb[0].mxu0
  %v749 = vadd.f32 0.0, %v748
  %v750 = vpop.f32.mrb[0].mxu0
  %v751 = vpop.f32.mrb[0].mxu0
  %v752 = vadd.f32 0.0, %v751
  %v753 = vpop.f32.mrb[0].mxu0
  %754 = vdwg.mxu0
  %755 = vmatprep.subr.bf16.mxu0 0
  %756 = vmatpush1.bf16.msra.mxu0 %v578
  %757 = vmatprep.subr.bf16.mxu0 0
  %758 = vmatpush1.bf16.msra.mxu0 %v579
  %759 = vmatprep.subr.bf16.mxu0 0
  %760 = vmatpush1.bf16.msra.mxu0 %v580
  %761 = vmatprep.subr.bf16.mxu0 0
  %762 = vmatpush1.bf16.msra.mxu0 %v581
  %763 = vmatprep.subr.bf16.mxu0 0
  %764 = vmatpush1.bf16.msra.mxu0 %v582
  %765 = vmatprep.subr.bf16.mxu0 0
  %766 = vmatpush1.bf16.msra.mxu0 %v583
  %767 = vmatprep.subr.bf16.mxu0 0
  %768 = vmatpush1.bf16.msra.mxu0 %v584
  %769 = vmatprep.subr.bf16.mxu0 0
  %770 = vmatpush1.bf16.msra.mxu0 %v585
  %771 = vmatprep.subr.bf16.mxu0 0
  %772 = vmatpush1.bf16.msra.mxu0 %v586
  %773 = vmatprep.subr.bf16.mxu0 0
  %774 = vmatpush1.bf16.msra.mxu0 %v587
  %775 = vmatprep.subr.bf16.mxu0 0
  %776 = vmatpush1.bf16.msra.mxu0 %v588
  %777 = vmatprep.subr.bf16.mxu0 0
  %778 = vmatpush1.bf16.msra.mxu0 %v589
  %779 = vmatprep.subr.bf16.mxu0 0
  %780 = vmatpush1.bf16.msra.mxu0 %v590
  %781 = vmatprep.subr.bf16.mxu0 0
  %782 = vmatpush1.bf16.msra.mxu0 %v591
  %783 = vmatprep.subr.bf16.mxu0 0
  %784 = vmatpush1.bf16.msra.mxu0 %v592
  %785 = vmatprep.subr.bf16.mxu0 0
  %786 = vmatpush1.bf16.msra.mxu0 %v593
  %787 = vmatprep.mubr.bf16.mxu0 %v241
  %788 = vmatmul.mubr.bf16.gmra.mrb[0].mxu0 %v240
  %v789 = vpop.f32.mrb[0].mxu0
  %v790 = vadd.f32 %v741, %v789
  %v791 = vpop.f32.mrb[0].mxu0
  %v792 = vpop.f32.mrb[0].mxu0
  %v793 = vadd.f32 %v744, %v792
  %v794 = vpop.f32.mrb[0].mxu0
  %795 = vmatprep.mubr.bf16.mxu0 %v250
  %796 = vmatmul.mubr.bf16.gmra.mrb[0].mxu0 %v249
  %v797 = vpop.f32.mrb[0].mxu0
  %v798 = vadd.f32 %v749, %v797
  %v799 = vpop.f32.mrb[0].mxu0
  %v800 = vpop.f32.mrb[0].mxu0
  %v801 = vadd.f32 %v752, %v800
  %v802 = vpop.f32.mrb[0].mxu0
  %803 = vdwg.mxu0
  %804 = vmatprep.subr.bf16.mxu0 0
  %805 = vmatpush1.bf16.msra.mxu0 %v594
  %806 = vmatprep.subr.bf16.mxu0 0
  %807 = vmatpush1.bf16.msra.mxu0 %v595
  %808 = vmatprep.subr.bf16.mxu0 0
  %809 = vmatpush1.bf16.msra.mxu0 %v596
  %810 = vmatprep.subr.bf16.mxu0 0
  %811 = vmatpush1.bf16.msra.mxu0 %v597
  %812 = vmatprep.subr.bf16.mxu0 0
  %813 = vmatpush1.bf16.msra.mxu0 %v598
  %814 = vmatprep.subr.bf16.mxu0 0
  %815 = vmatpush1.bf16.msra.mxu0 %v599
  %816 = vmatprep.subr.bf16.mxu0 0
  %817 = vmatpush1.bf16.msra.mxu0 %v600
  %818 = vmatprep.subr.bf16.mxu0 0
  %819 = vmatpush1.bf16.msra.mxu0 %v601
  %820 = vmatprep.subr.bf16.mxu0 0
  %821 = vmatpush1.bf16.msra.mxu0 %v602
  %822 = vmatprep.subr.bf16.mxu0 0
  %823 = vmatpush1.bf16.msra.mxu0 %v603
  %824 = vmatprep.subr.bf16.mxu0 0
  %825 = vmatpush1.bf16.msra.mxu0 %v604
  %826 = vmatprep.subr.bf16.mxu0 0
  %827 = vmatpush1.bf16.msra.mxu0 %v605
  %828 = vmatprep.subr.bf16.mxu0 0
  %829 = vmatpush1.bf16.msra.mxu0 %v606
  %830 = vmatprep.subr.bf16.mxu0 0
  %831 = vmatpush1.bf16.msra.mxu0 %v607
  %832 = vmatprep.subr.bf16.mxu0 0
  %833 = vmatpush1.bf16.msra.mxu0 %v608
  %834 = vmatprep.subr.bf16.mxu0 0
  %835 = vmatpush1.bf16.msra.mxu0 %v609
  %836 = vmatprep.mubr.bf16.mxu0 %v243
  %837 = vmatmul.mubr.bf16.gmra.mrb[0].mxu0 %v242
  %v838 = vpop.f32.mrb[0].mxu0
  %v839 = vadd.f32 %v790, %v838
  %v840 = vpop.f32.mrb[0].mxu0
  %v841 = vpop.f32.mrb[0].mxu0
  %v842 = vadd.f32 %v793, %v841
  %v843 = vpop.f32.mrb[0].mxu0
  %844 = vmatprep.mubr.bf16.mxu0 %v252
  %845 = vmatmul.mubr.bf16.gmra.mrb[0].mxu0 %v251
  %v846 = vpop.f32.mrb[0].mxu0
  %v847 = vadd.f32 %v798, %v846
  %v848 = vpop.f32.mrb[0].mxu0
  %v849 = vpop.f32.mrb[0].mxu0
  %v850 = vadd.f32 %v801, %v849
  %v851 = vpop.f32.mrb[0].mxu0
  %852 = vdwg.mxu0
  %853 = vmatprep.subr.bf16.mxu0 0
  %854 = vmatpush1.bf16.msra.mxu0 %v610
  %855 = vmatprep.subr.bf16.mxu0 0
  %856 = vmatpush1.bf16.msra.mxu0 %v611
  %857 = vmatprep.subr.bf16.mxu0 0
  %858 = vmatpush1.bf16.msra.mxu0 %v612
  %859 = vmatprep.subr.bf16.mxu0 0
  %860 = vmatpush1.bf16.msra.mxu0 %v613
  %861 = vmatprep.subr.bf16.mxu0 0
  %862 = vmatpush1.bf16.msra.mxu0 %v614
  %863 = vmatprep.subr.bf16.mxu0 0
  %864 = vmatpush1.bf16.msra.mxu0 %v615
  %865 = vmatprep.subr.bf16.mxu0 0
  %866 = vmatpush1.bf16.msra.mxu0 %v616
  %867 = vmatprep.subr.bf16.mxu0 0
  %868 = vmatpush1.bf16.msra.mxu0 %v617
  %869 = vmatprep.subr.bf16.mxu0 0
  %870 = vmatpush1.bf16.msra.mxu0 %v618
  %871 = vmatprep.subr.bf16.mxu0 0
  %872 = vmatpush1.bf16.msra.mxu0 %v619
  %873 = vmatprep.subr.bf16.mxu0 0
  %874 = vmatpush1.bf16.msra.mxu0 %v620
  %875 = vmatprep.subr.bf16.mxu0 0
  %876 = vmatpush1.bf16.msra.mxu0 %v621
  %877 = vmatprep.subr.bf16.mxu0 0
  %878 = vmatpush1.bf16.msra.mxu0 %v622
  %879 = vmatprep.subr.bf16.mxu0 0
  %880 = vmatpush1.bf16.msra.mxu0 %v623
  %881 = vmatprep.subr.bf16.mxu0 0
  %882 = vmatpush1.bf16.msra.mxu0 %v624
  %883 = vmatprep.subr.bf16.mxu0 0
  %884 = vmatpush1.bf16.msra.mxu0 %v625
  %885 = vmatprep.mubr.bf16.mxu0 %v245
  %886 = vmatmul.mubr.bf16.gmra.mrb[0].mxu0 %v244
  %v887 = vpop.f32.mrb[0].mxu0
  %v888 = vadd.f32 %v839, %v887
  %v889 = vpop.f32.mrb[0].mxu0
  %v890 = vpop.f32.mrb[0].mxu0
  %v891 = vadd.f32 %v842, %v890
  %v892 = vpop.f32.mrb[0].mxu0
  %893 = vmatprep.mubr.bf16.mxu0 %v254
  %894 = vmatmul.mubr.bf16.gmra.mrb[0].mxu0 %v253
  %v895 = vpop.f32.mrb[0].mxu0
  %v896 = vadd.f32 %v847, %v895
  %v897 = vpop.f32.mrb[0].mxu0
  %v898 = vpop.f32.mrb[0].mxu0
  %v899 = vadd.f32 %v850, %v898
  %v900 = vpop.f32.mrb[0].mxu0
  %901 = vdwg.mxu0
  %902 = vmatprep.subr.bf16.mxu0 0
  %903 = vmatpush1.bf16.msra.mxu0 %v626
  %904 = vmatprep.subr.bf16.mxu0 0
  %905 = vmatpush1.bf16.msra.mxu0 %v627
  %906 = vmatprep.subr.bf16.mxu0 0
  %907 = vmatpush1.bf16.msra.mxu0 %v628
  %908 = vmatprep.subr.bf16.mxu0 0
  %909 = vmatpush1.bf16.msra.mxu0 %v629
  %910 = vmatprep.subr.bf16.mxu0 0
  %911 = vmatpush1.bf16.msra.mxu0 %v630
  %912 = vmatprep.subr.bf16.mxu0 0
  %913 = vmatpush1.bf16.msra.mxu0 %v631
  %914 = vmatprep.subr.bf16.mxu0 0
  %915 = vmatpush1.bf16.msra.mxu0 %v632
  %916 = vmatprep.subr.bf16.mxu0 0
  %917 = vmatpush1.bf16.msra.mxu0 %v633
  %918 = vmatprep.subr.bf16.mxu0 0
  %919 = vmatpush1.bf16.msra.mxu0 0
  %920 = vmatprep.subr.bf16.mxu0 0
  %921 = vmatpush1.bf16.msra.mxu0 0
  %922 = vmatprep.subr.bf16.mxu0 0
  %923 = vmatpush1.bf16.msra.mxu0 0
  %924 = vmatprep.subr.bf16.mxu0 0
  %925 = vmatpush1.bf16.msra.mxu0 0
  %926 = vmatprep.subr.bf16.mxu0 0
  %927 = vmatpush1.bf16.msra.mxu0 0
  %928 = vmatprep.subr.bf16.mxu0 0
  %929 = vmatpush1.bf16.msra.mxu0 0
  %930 = vmatprep.subr.bf16.mxu0 0
  %931 = vmatpush1.bf16.msra.mxu0 0
  %932 = vmatprep.subr.bf16.mxu0 0
  %933 = vmatpush1.bf16.msra.mxu0 0
  %934 = vmatprep.mubr.bf16.mxu0 0
  %935 = vmatmul.mubr.bf16.gmra.mrb[0].mxu0 %v246
  %v936 = vpop.f32.mrb[0].mxu0
  %v937 = vadd.f32 %v888, %v936
  %v938 = vpop.f32.mrb[0].mxu0
  %v939 = vpop.f32.mrb[0].mxu0
  %v940 = vadd.f32 %v891, %v939
  %v941 = vpop.f32.mrb[0].mxu0
  %942 = vmatprep.mubr.bf16.mxu0 0
  %943 = vmatmul.mubr.bf16.gmra.mrb[0].mxu0 %v255
  %v944 = vpop.f32.mrb[0].mxu0
  %v945 = vadd.f32 %v896, %v944
  %v946 = vpop.f32.mrb[0].mxu0
  %v947 = vpop.f32.mrb[0].mxu0
  %v948 = vadd.f32 %v899, %v947
  %v949 = vpop.f32.mrb[0].mxu0
  %950 = vdwg.mxu0
  %v951 = vld [vmem:[%s2] sm:$0x1]
  %v953 = vlaneseq
  %v954 = vshrl.u32 %v953, 7
  %v955 = vsub.s32 0, %v954
  %v956 = vrot.slane %v951, %v955
  %v958 = vmul.f32 %v937, %v956
  %v959 = vmul.f32 %v940, %v956
  %v960 = vmul.f32 %v945, %v956
  %v961 = vmul.f32 %v948, %v956
  %v962 = vld [vmem:[%s3] sm:$0x1]
  %v964 = vlaneseq
  %v965 = vshrl.u32 %v964, 7
  %v966 = vsub.s32 0, %v965
  %v967 = vrot.slane %v962, %v966
  %v969 = vadd.f32 %v958, %v967
  %v970 = vadd.f32 %v959, %v967
  %v971 = vadd.f32 %v960, %v967
  %v972 = vadd.f32 %v961, %v967
  %vm973 = vcmp.ge.f32.partialorder %v969, 0.0
  %vm974 = vcmp.ge.f32.partialorder %v970, 0.0
  %vm975 = vcmp.ge.f32.partialorder %v971, 0.0
  %vm976 = vcmp.ge.f32.partialorder %v972, 0.0
  %v977 = vmul.f32 %v969, 0.01
  %v978 = vmul.f32 %v970, 0.01
  %v979 = vmul.f32 %v971, 0.01
  %v980 = vmul.f32 %v972, 0.01
  %v981 = vsel %vm973, %v969, %v977
  %v982 = vsel %vm974, %v970, %v978
  %v983 = vsel %vm975, %v971, %v979
  %v984 = vsel %vm976, %v972, %v980
  %985 = vst [vmem:[%s4] sm:$0xff] %v981
  %986 = vst [vmem:[%s4 + $0x8] sm:$0xff] %v982
  %987 = vst [vmem:[%s4 + $0x10] sm:$0xff] %v983
  %988 = vst [vmem:[%s4 + $0x18] sm:$0xff] %v984
  // Predicated region
  $region18: #{feat_extraction_forward.26} parent=0 // pred_check
    _
  $region19: #{feat_extraction_forward.26} parent=0 // pred_check_branch
    %990 = sbr.rel (0) target = $region21
  $region20: #{feat_extraction_forward.26} parent=0 // pred_region
    _
  $region21: #{feat_extraction_forward.26} parent=0 // pred_fallthru
    _
  // Predicated region
  $region22: #{feat_extraction_forward.26} parent=0 // pred_check
    _
  $region23: #{feat_extraction_forward.26} parent=0 // pred_check_branch
    %992 = sbr.rel (0) target = $region25
  $region24: #{feat_extraction_forward.26} parent=0 // pred_region
    _
  $region25: #{feat_extraction_forward.26} parent=0 // pred_fallthru
    _

// kernel: feat_extraction_forward.28
$region0: #{feat_extraction_forward.28}
  #allocation0 [shape = 'u32[]', space=smem, size = 0x4, offset = 0x4, fixed_abs, tag = 'smem constant byte address 0x4 - core index']
  #allocation1 [shape = 'u32[144,128]{1,0:T(1,128)}', space=vmem, size = 0x12000, scoped, tag = 'internal scratch']
  %s0 = inlined_call_operand.vmem [shape: bf16[128,576], index: 0, kind: input, shape index: {}]
  %s1 = inlined_call_operand.vmem [shape: bf16[576,128], index: 1, kind: input, shape index: {}]
  %s2 = inlined_call_operand.vmem [shape: f32[1,128], index: 2, kind: input, shape index: {}]
  %s3 = inlined_call_operand.vmem [shape: f32[1,128], index: 3, kind: input, shape index: {}]
  %s4 = inlined_call_operand.vmem [shape: f32[128,128], index: 4, kind: output, shape index: {}]
  %s5 = sld [smem:[#allocation0]]
  $region26: #{feat_extraction_forward.28} parent=0
    _
  %s7 = ssub.s32 1, %s5
  %s8 = scalar_select 0, %s7, %s5
  // Predicated region
  $region2: #{feat_extraction_forward.28} parent=0 // pred_check
    _
  $region3: #{feat_extraction_forward.28} parent=0 // pred_check_branch
    %10 = sbr.rel (0) target = $region5
  $region4: #{feat_extraction_forward.28} parent=0 // pred_region
    _
  $region5: #{feat_extraction_forward.28} parent=0 // pred_fallthru
    _
  // Predicated region
  $region6: #{feat_extraction_forward.28} parent=0 // pred_check
    _
  $region7: #{feat_extraction_forward.28} parent=0 // pred_check_branch
    %12 = sbr.rel (0) target = $region9
  $region8: #{feat_extraction_forward.28} parent=0 // pred_region
    _
  $region9: #{feat_extraction_forward.28} parent=0 // pred_fallthru
    _
  // Predicated region
  $region10: #{feat_extraction_forward.28} parent=0 // pred_check
    _
  $region11: #{feat_extraction_forward.28} parent=0 // pred_check_branch
    %14 = sbr.rel (0) target = $region13
  $region12: #{feat_extraction_forward.28} parent=0 // pred_region
    _
  $region13: #{feat_extraction_forward.28} parent=0 // pred_fallthru
    _
  // Predicated region
  $region14: #{feat_extraction_forward.28} parent=0 // pred_check
    _
  $region15: #{feat_extraction_forward.28} parent=0 // pred_check_branch
    %16 = sbr.rel (0) target = $region17
  $region16: #{feat_extraction_forward.28} parent=0 // pred_region
    _
  $region17: #{feat_extraction_forward.28} parent=0 // pred_fallthru
    _
  %v18 = vld [vmem:[%s0] sm:$0xff]
  %v19 = vld [vmem:[%s0 + $0x8] sm:$0xff]
  %v20 = vld [vmem:[%s0 + $0x10] sm:$0xf]
  %v21 = vld [vmem:[%s0 + $0x14] sm:$0xff]
  %v22 = vld [vmem:[%s0 + $0x1c] sm:$0xff]
  %v23 = vld [vmem:[%s0 + $0x24] sm:$0xf]
  %v24 = vld [vmem:[%s0 + $0x28] sm:$0xff]
  %v25 = vld [vmem:[%s0 + $0x30] sm:$0xff]
  %v26 = vld [vmem:[%s0 + $0x38] sm:$0xf]
  %v27 = vld [vmem:[%s0 + $0x3c] sm:$0xff]
  %v28 = vld [vmem:[%s0 + $0x44] sm:$0xff]
  %v29 = vld [vmem:[%s0 + $0x4c] sm:$0xf]
  %v30 = vld [vmem:[%s0 + $0x50] sm:$0xff]
  %v31 = vld [vmem:[%s0 + $0x58] sm:$0xff]
  %v32 = vld [vmem:[%s0 + $0x60] sm:$0xf]
  %v33 = vld [vmem:[%s0 + $0x64] sm:$0xff]
  %v34 = vld [vmem:[%s0 + $0x6c] sm:$0xff]
  %v35 = vld [vmem:[%s0 + $0x74] sm:$0xf]
  %v36 = vld [vmem:[%s0 + $0x78] sm:$0xff]
  %v37 = vld [vmem:[%s0 + $0x80] sm:$0xff]
  %v38 = vld [vmem:[%s0 + $0x88] sm:$0xf]
  %v39 = vld [vmem:[%s0 + $0x8c] sm:$0xff]
  %v40 = vld [vmem:[%s0 + $0x94] sm:$0xff]
  %v41 = vld [vmem:[%s0 + $0x9c] sm:$0xf]
  %v42 = vld [vmem:[%s0 + $0xa0] sm:$0xff]
  %v43 = vld [vmem:[%s0 + $0xa8] sm:$0xff]
  %v44 = vld [vmem:[%s0 + $0xb0] sm:$0xf]
  %v45 = vld [vmem:[%s0 + $0xb4] sm:$0xff]
  %v46 = vld [vmem:[%s0 + $0xbc] sm:$0xff]
  %v47 = vld [vmem:[%s0 + $0xc4] sm:$0xf]
  %v48 = vld [vmem:[%s0 + $0xc8] sm:$0xff]
  %v49 = vld [vmem:[%s0 + $0xd0] sm:$0xff]
  %v50 = vld [vmem:[%s0 + $0xd8] sm:$0xf]
  %v51 = vld [vmem:[%s0 + $0xdc] sm:$0xff]
  %v52 = vld [vmem:[%s0 + $0xe4] sm:$0xff]
  %v53 = vld [vmem:[%s0 + $0xec] sm:$0xf]
  %v54 = vld [vmem:[%s0 + $0xf0] sm:$0xff]
  %v55 = vld [vmem:[%s0 + $0xf8] sm:$0xff]
  %v56 = vld [vmem:[%s0 + $0x100] sm:$0xf]
  %v57 = vld [vmem:[%s0 + $0x104] sm:$0xff]
  %v58 = vld [vmem:[%s0 + $0x10c] sm:$0xff]
  %v59 = vld [vmem:[%s0 + $0x114] sm:$0xf]
  %v60 = vld [vmem:[%s0 + $0x118] sm:$0xff]
  %v61 = vld [vmem:[%s0 + $0x120] sm:$0xff]
  %v62 = vld [vmem:[%s0 + $0x128] sm:$0xf]
  %v63 = vld [vmem:[%s0 + $0x12c] sm:$0xff]
  %v64 = vld [vmem:[%s0 + $0x134] sm:$0xff]
  %v65 = vld [vmem:[%s0 + $0x13c] sm:$0xf]
  %v66 = vld [vmem:[%s1] sm:$0xf]
  %v67 = vld [vmem:[%s1 + $0x4] sm:$0xf]
  %v68 = vld [vmem:[%s1 + $0x8] sm:$0xf]
  %v69 = vld [vmem:[%s1 + $0xc] sm:$0xf]
  %v70 = vld [vmem:[%s1 + $0x10] sm:$0xf]
  %v71 = vld [vmem:[%s1 + $0x14] sm:$0xf]
  %v72 = vld [vmem:[%s1 + $0x18] sm:$0xf]
  %v73 = vld [vmem:[%s1 + $0x1c] sm:$0xf]
  %v74 = vld [vmem:[%s1 + $0x20] sm:$0xf]
  %v75 = vld [vmem:[%s1 + $0x24] sm:$0xf]
  %v76 = vld [vmem:[%s1 + $0x28] sm:$0xf]
  %v77 = vld [vmem:[%s1 + $0x2c] sm:$0xf]
  %v78 = vld [vmem:[%s1 + $0x30] sm:$0xf]
  %v79 = vld [vmem:[%s1 + $0x34] sm:$0xf]
  %v80 = vld [vmem:[%s1 + $0x38] sm:$0xf]
  %v81 = vld [vmem:[%s1 + $0x3c] sm:$0xf]
  %v82 = vld [vmem:[%s1 + $0x40] sm:$0xf]
  %v83 = vld [vmem:[%s1 + $0x44] sm:$0xf]
  %v84 = vld [vmem:[%s1 + $0x48] sm:$0xf]
  %v85 = vld [vmem:[%s1 + $0x4c] sm:$0xf]
  %v86 = vld [vmem:[%s1 + $0x50] sm:$0xf]
  %v87 = vld [vmem:[%s1 + $0x54] sm:$0xf]
  %v88 = vld [vmem:[%s1 + $0x58] sm:$0xf]
  %v89 = vld [vmem:[%s1 + $0x5c] sm:$0xf]
  %v90 = vld [vmem:[%s1 + $0x60] sm:$0xf]
  %v91 = vld [vmem:[%s1 + $0x64] sm:$0xf]
  %v92 = vld [vmem:[%s1 + $0x68] sm:$0xf]
  %v93 = vld [vmem:[%s1 + $0x6c] sm:$0xf]
  %v94 = vld [vmem:[%s1 + $0x70] sm:$0xf]
  %v95 = vld [vmem:[%s1 + $0x74] sm:$0xf]
  %v96 = vld [vmem:[%s1 + $0x78] sm:$0xf]
  %v97 = vld [vmem:[%s1 + $0x7c] sm:$0xf]
  %v98 = vld [vmem:[%s1 + $0x80] sm:$0xf]
  %v99 = vld [vmem:[%s1 + $0x84] sm:$0xf]
  %v100 = vld [vmem:[%s1 + $0x88] sm:$0xf]
  %v101 = vld [vmem:[%s1 + $0x8c] sm:$0xf]
  %v102 = vld [vmem:[%s1 + $0x90] sm:$0xf]
  %v103 = vld [vmem:[%s1 + $0x94] sm:$0xf]
  %v104 = vld [vmem:[%s1 + $0x98] sm:$0xf]
  %v105 = vld [vmem:[%s1 + $0x9c] sm:$0xf]
  %v106 = vld [vmem:[%s1 + $0xa0] sm:$0xf]
  %v107 = vld [vmem:[%s1 + $0xa4] sm:$0xf]
  %v108 = vld [vmem:[%s1 + $0xa8] sm:$0xf]
  %v109 = vld [vmem:[%s1 + $0xac] sm:$0xf]
  %v110 = vld [vmem:[%s1 + $0xb0] sm:$0xf]
  %v111 = vld [vmem:[%s1 + $0xb4] sm:$0xf]
  %v112 = vld [vmem:[%s1 + $0xb8] sm:$0xf]
  %v113 = vld [vmem:[%s1 + $0xbc] sm:$0xf]
  %v114 = vld [vmem:[%s1 + $0xc0] sm:$0xf]
  %v115 = vld [vmem:[%s1 + $0xc4] sm:$0xf]
  %v116 = vld [vmem:[%s1 + $0xc8] sm:$0xf]
  %v117 = vld [vmem:[%s1 + $0xcc] sm:$0xf]
  %v118 = vld [vmem:[%s1 + $0xd0] sm:$0xf]
  %v119 = vld [vmem:[%s1 + $0xd4] sm:$0xf]
  %v120 = vld [vmem:[%s1 + $0xd8] sm:$0xf]
  %v121 = vld [vmem:[%s1 + $0xdc] sm:$0xf]
  %v122 = vld [vmem:[%s1 + $0xe0] sm:$0xf]
  %v123 = vld [vmem:[%s1 + $0xe4] sm:$0xf]
  %v124 = vld [vmem:[%s1 + $0xe8] sm:$0xf]
  %v125 = vld [vmem:[%s1 + $0xec] sm:$0xf]
  %v126 = vld [vmem:[%s1 + $0xf0] sm:$0xf]
  %v127 = vld [vmem:[%s1 + $0xf4] sm:$0xf]
  %v128 = vld [vmem:[%s1 + $0xf8] sm:$0xf]
  %v129 = vld [vmem:[%s1 + $0xfc] sm:$0xf]
  %v130 = vld [vmem:[%s1 + $0x100] sm:$0xf]
  %v131 = vld [vmem:[%s1 + $0x104] sm:$0xf]
  %v132 = vld [vmem:[%s1 + $0x108] sm:$0xf]
  %v133 = vld [vmem:[%s1 + $0x10c] sm:$0xf]
  %v134 = vld [vmem:[%s1 + $0x110] sm:$0xf]
  %v135 = vld [vmem:[%s1 + $0x114] sm:$0xf]
  %v136 = vld [vmem:[%s1 + $0x118] sm:$0xf]
  %v137 = vld [vmem:[%s1 + $0x11c] sm:$0xf]
  %v186 = vunpack.c.l.b16 %v18
  %v187 = vunpack.c.h.b16 %v18
  %v188 = vunpack.c.l.b16 %v19
  %v189 = vunpack.c.h.b16 %v19
  %v190 = vunpack.c.l.b16 %v20
  %v191 = vunpack.c.l.b16 %v21
  %v192 = vunpack.c.h.b16 %v21
  %v193 = vunpack.c.l.b16 %v22
  %v194 = vunpack.c.h.b16 %v22
  %v195 = vunpack.c.l.b16 %v23
  %v196 = vunpack.c.l.b16 %v24
  %v197 = vunpack.c.h.b16 %v24
  %v198 = vunpack.c.l.b16 %v25
  %v199 = vunpack.c.h.b16 %v25
  %v200 = vunpack.c.l.b16 %v26
  %v201 = vunpack.c.l.b16 %v27
  %v202 = vunpack.c.h.b16 %v27
  %v203 = vunpack.c.l.b16 %v28
  %v204 = vunpack.c.h.b16 %v28
  %v205 = vunpack.c.l.b16 %v29
  %v206 = vunpack.c.l.b16 %v30
  %v207 = vunpack.c.h.b16 %v30
  %v208 = vunpack.c.l.b16 %v31
  %v209 = vunpack.c.h.b16 %v31
  %v210 = vunpack.c.l.b16 %v32
  %v211 = vunpack.c.l.b16 %v33
  %v212 = vunpack.c.h.b16 %v33
  %v213 = vunpack.c.l.b16 %v34
  %v214 = vunpack.c.h.b16 %v34
  %v215 = vunpack.c.l.b16 %v35
  %v216 = vunpack.c.l.b16 %v36
  %v217 = vunpack.c.h.b16 %v36
  %v218 = vunpack.c.l.b16 %v37
  %v219 = vunpack.c.h.b16 %v37
  %v220 = vunpack.c.l.b16 %v38
  %v221 = vunpack.c.l.b16 %v39
  %v222 = vunpack.c.h.b16 %v39
  %v223 = vunpack.c.l.b16 %v40
  %v224 = vunpack.c.h.b16 %v40
  %v225 = vunpack.c.l.b16 %v41
  %v226 = vunpack.c.l.b16 %v42
  %v227 = vunpack.c.h.b16 %v42
  %v228 = vunpack.c.l.b16 %v43
  %v229 = vunpack.c.h.b16 %v43
  %v230 = vunpack.c.l.b16 %v44
  %v231 = vunpack.c.l.b16 %v45
  %v232 = vunpack.c.h.b16 %v45
  %v233 = vunpack.c.l.b16 %v46
  %v234 = vunpack.c.h.b16 %v46
  %v235 = vunpack.c.l.b16 %v47
  %v236 = vunpack.c.l.b16 %v48
  %v237 = vunpack.c.h.b16 %v48
  %v238 = vunpack.c.l.b16 %v49
  %v239 = vunpack.c.h.b16 %v49
  %v240 = vunpack.c.l.b16 %v50
  %v241 = vunpack.c.l.b16 %v51
  %v242 = vunpack.c.h.b16 %v51
  %v243 = vunpack.c.l.b16 %v52
  %v244 = vunpack.c.h.b16 %v52
  %v245 = vunpack.c.l.b16 %v53
  %v246 = vunpack.c.l.b16 %v54
  %v247 = vunpack.c.h.b16 %v54
  %v248 = vunpack.c.l.b16 %v55
  %v249 = vunpack.c.h.b16 %v55
  %v250 = vunpack.c.l.b16 %v56
  %v251 = vunpack.c.l.b16 %v57
  %v252 = vunpack.c.h.b16 %v57
  %v253 = vunpack.c.l.b16 %v58
  %v254 = vunpack.c.h.b16 %v58
  %v255 = vunpack.c.l.b16 %v59
  %v256 = vunpack.c.l.b16 %v60
  %v257 = vunpack.c.h.b16 %v60
  %v258 = vunpack.c.l.b16 %v61
  %v259 = vunpack.c.h.b16 %v61
  %v260 = vunpack.c.l.b16 %v62
  %v261 = vunpack.c.l.b16 %v63
  %v262 = vunpack.c.h.b16 %v63
  %v263 = vunpack.c.l.b16 %v64
  %v264 = vunpack.c.h.b16 %v64
  %v265 = vunpack.c.l.b16 %v65
  %v266 = vpack.c.b16 %v191, %v186
  %v267 = vpack.c.b16 %v192, %v187
  %v268 = vpack.c.b16 %v193, %v188
  %v269 = vpack.c.b16 %v194, %v189
  %v270 = vpack.c.b16 %v195, %v190
  %v271 = vpack.c.b16 %v201, %v196
  %v272 = vpack.c.b16 %v202, %v197
  %v273 = vpack.c.b16 %v203, %v198
  %v274 = vpack.c.b16 %v204, %v199
  %v275 = vpack.c.b16 %v205, %v200
  %v276 = vpack.c.b16 %v211, %v206
  %v277 = vpack.c.b16 %v212, %v207
  %v278 = vpack.c.b16 %v213, %v208
  %v279 = vpack.c.b16 %v214, %v209
  %v280 = vpack.c.b16 %v215, %v210
  %v281 = vpack.c.b16 %v221, %v216
  %v282 = vpack.c.b16 %v222, %v217
  %v283 = vpack.c.b16 %v223, %v218
  %v284 = vpack.c.b16 %v224, %v219
  %v285 = vpack.c.b16 %v225, %v220
  %v286 = vpack.c.b16 %v231, %v226
  %v287 = vpack.c.b16 %v232, %v227
  %v288 = vpack.c.b16 %v233, %v228
  %v289 = vpack.c.b16 %v234, %v229
  %v290 = vpack.c.b16 %v235, %v230
  %v291 = vpack.c.b16 %v241, %v236
  %v292 = vpack.c.b16 %v242, %v237
  %v293 = vpack.c.b16 %v243, %v238
  %v294 = vpack.c.b16 %v244, %v239
  %v295 = vpack.c.b16 %v245, %v240
  %v296 = vpack.c.b16 %v251, %v246
  %v297 = vpack.c.b16 %v252, %v247
  %v298 = vpack.c.b16 %v253, %v248
  %v299 = vpack.c.b16 %v254, %v249
  %v300 = vpack.c.b16 %v255, %v250
  %v301 = vpack.c.b16 %v261, %v256
  %v302 = vpack.c.b16 %v262, %v257
  %v303 = vpack.c.b16 %v263, %v258
  %v304 = vpack.c.b16 %v264, %v259
  %v305 = vpack.c.b16 %v265, %v260
  %v410 = vunpack.c.l.b16 %v66
  %v411 = vunpack.c.l.b16 %v67
  %v412 = vunpack.c.l.b16 %v68
  %v413 = vunpack.c.l.b16 %v69
  %v414 = vunpack.c.l.b16 %v70
  %v415 = vunpack.c.l.b16 %v71
  %v416 = vunpack.c.l.b16 %v72
  %v417 = vunpack.c.l.b16 %v73
  %v418 = vunpack.c.l.b16 %v74
  %v419 = vunpack.c.l.b16 %v75
  %v420 = vunpack.c.l.b16 %v76
  %v421 = vunpack.c.l.b16 %v77
  %v422 = vunpack.c.l.b16 %v78
  %v423 = vunpack.c.l.b16 %v79
  %v424 = vunpack.c.l.b16 %v80
  %v425 = vunpack.c.l.b16 %v81
  %v426 = vunpack.c.l.b16 %v82
  %v427 = vunpack.c.l.b16 %v83
  %v428 = vunpack.c.l.b16 %v84
  %v429 = vunpack.c.l.b16 %v85
  %v430 = vunpack.c.l.b16 %v86
  %v431 = vunpack.c.l.b16 %v87
  %v432 = vunpack.c.l.b16 %v88
  %v433 = vunpack.c.l.b16 %v89
  %v434 = vunpack.c.l.b16 %v90
  %v435 = vunpack.c.l.b16 %v91
  %v436 = vunpack.c.l.b16 %v92
  %v437 = vunpack.c.l.b16 %v93
  %v438 = vunpack.c.l.b16 %v94
  %v439 = vunpack.c.l.b16 %v95
  %v440 = vunpack.c.l.b16 %v96
  %v441 = vunpack.c.l.b16 %v97
  %v442 = vunpack.c.l.b16 %v98
  %v443 = vunpack.c.l.b16 %v99
  %v444 = vunpack.c.l.b16 %v100
  %v445 = vunpack.c.l.b16 %v101
  %v446 = vunpack.c.l.b16 %v102
  %v447 = vunpack.c.l.b16 %v103
  %v448 = vunpack.c.l.b16 %v104
  %v449 = vunpack.c.l.b16 %v105
  %v450 = vunpack.c.l.b16 %v106
  %v451 = vunpack.c.l.b16 %v107
  %v452 = vunpack.c.l.b16 %v108
  %v453 = vunpack.c.l.b16 %v109
  %v454 = vunpack.c.l.b16 %v110
  %v455 = vunpack.c.l.b16 %v111
  %v456 = vunpack.c.l.b16 %v112
  %v457 = vunpack.c.l.b16 %v113
  %v458 = vunpack.c.l.b16 %v114
  %v459 = vunpack.c.l.b16 %v115
  %v460 = vunpack.c.l.b16 %v116
  %v461 = vunpack.c.l.b16 %v117
  %v462 = vunpack.c.l.b16 %v118
  %v463 = vunpack.c.l.b16 %v119
  %v464 = vunpack.c.l.b16 %v120
  %v465 = vunpack.c.l.b16 %v121
  %v466 = vunpack.c.l.b16 %v122
  %v467 = vunpack.c.l.b16 %v123
  %v468 = vunpack.c.l.b16 %v124
  %v469 = vunpack.c.l.b16 %v125
  %v470 = vunpack.c.l.b16 %v126
  %v471 = vunpack.c.l.b16 %v127
  %v472 = vunpack.c.l.b16 %v128
  %v473 = vunpack.c.l.b16 %v129
  %v474 = vunpack.c.l.b16 %v130
  %v475 = vunpack.c.l.b16 %v131
  %v476 = vunpack.c.l.b16 %v132
  %v477 = vunpack.c.l.b16 %v133
  %v478 = vunpack.c.l.b16 %v134
  %v479 = vunpack.c.l.b16 %v135
  %v480 = vunpack.c.l.b16 %v136
  %v481 = vunpack.c.l.b16 %v137
  %v482 = vpack.c.b16 %v411, %v410
  %v483 = vpack.c.b16 %v413, %v412
  %v484 = vpack.c.b16 %v415, %v414
  %v485 = vpack.c.b16 %v417, %v416
  %v486 = vpack.c.b16 %v419, %v418
  %v487 = vpack.c.b16 %v421, %v420
  %v488 = vpack.c.b16 %v423, %v422
  %v489 = vpack.c.b16 %v425, %v424
  %v490 = vpack.c.b16 %v427, %v426
  %v491 = vpack.c.b16 %v429, %v428
  %v492 = vpack.c.b16 %v431, %v430
  %v493 = vpack.c.b16 %v433, %v432
  %v494 = vpack.c.b16 %v435, %v434
  %v495 = vpack.c.b16 %v437, %v436
  %v496 = vpack.c.b16 %v439, %v438
  %v497 = vpack.c.b16 %v441, %v440
  %v498 = vpack.c.b16 %v443, %v442
  %v499 = vpack.c.b16 %v445, %v444
  %v500 = vpack.c.b16 %v447, %v446
  %v501 = vpack.c.b16 %v449, %v448
  %v502 = vpack.c.b16 %v451, %v450
  %v503 = vpack.c.b16 %v453, %v452
  %v504 = vpack.c.b16 %v455, %v454
  %v505 = vpack.c.b16 %v457, %v456
  %v506 = vpack.c.b16 %v459, %v458
  %v507 = vpack.c.b16 %v461, %v460
  %v508 = vpack.c.b16 %v463, %v462
  %v509 = vpack.c.b16 %v465, %v464
  %v510 = vpack.c.b16 %v467, %v466
  %v511 = vpack.c.b16 %v469, %v468
  %v512 = vpack.c.b16 %v471, %v470
  %v513 = vpack.c.b16 %v473, %v472
  %v514 = vpack.c.b16 %v475, %v474
  %v515 = vpack.c.b16 %v477, %v476
  %v516 = vpack.c.b16 %v479, %v478
  %v517 = vpack.c.b16 %v481, %v480
  %vm554 = vcmask 523264
  %v556 = vsel %vm554, %v270, 0
  %v559 = vsel %vm554, %v275, 0
  %v562 = vsel %vm554, %v280, 0
  %v565 = vsel %vm554, %v285, 0
  %v568 = vsel %vm554, %v290, 0
  %v571 = vsel %vm554, %v295, 0
  %v574 = vsel %vm554, %v300, 0
  %v577 = vsel %vm554, %v305, 0
  %579 = vmatprep.subr.bf16.mxu0 0
  %580 = vmatpush1.bf16.msra.mxu0 %v482
  %581 = vmatprep.subr.bf16.mxu0 0
  %582 = vmatpush1.bf16.msra.mxu0 %v483
  %583 = vmatprep.subr.bf16.mxu0 0
  %584 = vmatpush1.bf16.msra.mxu0 %v484
  %585 = vmatprep.subr.bf16.mxu0 0
  %586 = vmatpush1.bf16.msra.mxu0 %v485
  %587 = vmatprep.subr.bf16.mxu0 0
  %588 = vmatpush1.bf16.msra.mxu0 %v486
  %589 = vmatprep.subr.bf16.mxu0 0
  %590 = vmatpush1.bf16.msra.mxu0 %v487
  %591 = vmatprep.subr.bf16.mxu0 0
  %592 = vmatpush1.bf16.msra.mxu0 %v488
  %593 = vmatprep.subr.bf16.mxu0 0
  %594 = vmatpush1.bf16.msra.mxu0 %v489
  %595 = vmatprep.subr.bf16.mxu0 0
  %596 = vmatpush1.bf16.msra.mxu0 %v490
  %597 = vmatprep.subr.bf16.mxu0 0
  %598 = vmatpush1.bf16.msra.mxu0 %v491
  %599 = vmatprep.subr.bf16.mxu0 0
  %600 = vmatpush1.bf16.msra.mxu0 %v492
  %601 = vmatprep.subr.bf16.mxu0 0
  %602 = vmatpush1.bf16.msra.mxu0 %v493
  %603 = vmatprep.subr.bf16.mxu0 0
  %604 = vmatpush1.bf16.msra.mxu0 %v494
  %605 = vmatprep.subr.bf16.mxu0 0
  %606 = vmatpush1.bf16.msra.mxu0 %v495
  %607 = vmatprep.subr.bf16.mxu0 0
  %608 = vmatpush1.bf16.msra.mxu0 %v496
  %609 = vmatprep.subr.bf16.mxu0 0
  %610 = vmatpush1.bf16.msra.mxu0 %v497
  %611 = vmatprep.mubr.bf16.mxu0 %v267
  %612 = vmatmul.mubr.bf16.gmra.mrb[0].mxu0 %v266
  %v613 = vpop.f32.mrb[0].mxu0
  %v614 = vadd.f32 0.0, %v613
  %v615 = vpop.f32.mrb[0].mxu0
  %v616 = vpop.f32.mrb[0].mxu0
  %v617 = vadd.f32 0.0, %v616
  %v618 = vpop.f32.mrb[0].mxu0
  %619 = vmatprep.mubr.bf16.mxu0 %v272
  %620 = vmatmul.mubr.bf16.gmra.mrb[0].mxu0 %v271
  %v621 = vpop.f32.mrb[0].mxu0
  %v622 = vadd.f32 0.0, %v621
  %v623 = vpop.f32.mrb[0].mxu0
  %v624 = vpop.f32.mrb[0].mxu0
  %v625 = vadd.f32 0.0, %v624
  %v626 = vpop.f32.mrb[0].mxu0
  %627 = vmatprep.mubr.bf16.mxu0 %v277
  %628 = vmatmul.mubr.bf16.gmra.mrb[0].mxu0 %v276
  %v629 = vpop.f32.mrb[0].mxu0
  %v630 = vadd.f32 0.0, %v629
  %v631 = vpop.f32.mrb[0].mxu0
  %v632 = vpop.f32.mrb[0].mxu0
  %v633 = vadd.f32 0.0, %v632
  %v634 = vpop.f32.mrb[0].mxu0
  %635 = vmatprep.mubr.bf16.mxu0 %v282
  %636 = vmatmul.mubr.bf16.gmra.mrb[0].mxu0 %v281
  %v637 = vpop.f32.mrb[0].mxu0
  %v638 = vadd.f32 0.0, %v637
  %v639 = vpop.f32.mrb[0].mxu0
  %v640 = vpop.f32.mrb[0].mxu0
  %v641 = vadd.f32 0.0, %v640
  %v642 = vpop.f32.mrb[0].mxu0
  %643 = vmatprep.mubr.bf16.mxu0 %v287
  %644 = vmatmul.mubr.bf16.gmra.mrb[0].mxu0 %v286
  %v645 = vpop.f32.mrb[0].mxu0
  %v646 = vadd.f32 0.0, %v645
  %v647 = vpop.f32.mrb[0].mxu0
  %v648 = vpop.f32.mrb[0].mxu0
  %v649 = vadd.f32 0.0, %v648
  %v650 = vpop.f32.mrb[0].mxu0
  %651 = vmatprep.mubr.bf16.mxu0 %v292
  %652 = vmatmul.mubr.bf16.gmra.mrb[0].mxu0 %v291
  %v653 = vpop.f32.mrb[0].mxu0
  %v654 = vadd.f32 0.0, %v653
  %v655 = vpop.f32.mrb[0].mxu0
  %v656 = vpop.f32.mrb[0].mxu0
  %v657 = vadd.f32 0.0, %v656
  %v658 = vpop.f32.mrb[0].mxu0
  %659 = vmatprep.mubr.bf16.mxu0 %v297
  %660 = vmatmul.mubr.bf16.gmra.mrb[0].mxu0 %v296
  %v661 = vpop.f32.mrb[0].mxu0
  %v662 = vadd.f32 0.0, %v661
  %v663 = vpop.f32.mrb[0].mxu0
  %v664 = vpop.f32.mrb[0].mxu0
  %v665 = vadd.f32 0.0, %v664
  %v666 = vpop.f32.mrb[0].mxu0
  %667 = vmatprep.mubr.bf16.mxu0 %v302
  %668 = vmatmul.mubr.bf16.gmra.mrb[0].mxu0 %v301
  %v669 = vpop.f32.mrb[0].mxu0
  %v670 = vadd.f32 0.0, %v669
  %v671 = vpop.f32.mrb[0].mxu0
  %v672 = vpop.f32.mrb[0].mxu0
  %v673 = vadd.f32 0.0, %v672
  %v674 = vpop.f32.mrb[0].mxu0
  %675 = vdwg.mxu0
  %676 = vmatprep.subr.bf16.mxu0 0
  %677 = vmatpush1.bf16.msra.mxu0 %v498
  %678 = vmatprep.subr.bf16.mxu0 0
  %679 = vmatpush1.bf16.msra.mxu0 %v499
  %680 = vmatprep.subr.bf16.mxu0 0
  %681 = vmatpush1.bf16.msra.mxu0 %v500
  %682 = vmatprep.subr.bf16.mxu0 0
  %683 = vmatpush1.bf16.msra.mxu0 %v501
  %684 = vmatprep.subr.bf16.mxu0 0
  %685 = vmatpush1.bf16.msra.mxu0 %v502
  %686 = vmatprep.subr.bf16.mxu0 0
  %687 = vmatpush1.bf16.msra.mxu0 %v503
  %688 = vmatprep.subr.bf16.mxu0 0
  %689 = vmatpush1.bf16.msra.mxu0 %v504
  %690 = vmatprep.subr.bf16.mxu0 0
  %691 = vmatpush1.bf16.msra.mxu0 %v505
  %692 = vmatprep.subr.bf16.mxu0 0
  %693 = vmatpush1.bf16.msra.mxu0 %v506
  %694 = vmatprep.subr.bf16.mxu0 0
  %695 = vmatpush1.bf16.msra.mxu0 %v507
  %696 = vmatprep.subr.bf16.mxu0 0
  %697 = vmatpush1.bf16.msra.mxu0 %v508
  %698 = vmatprep.subr.bf16.mxu0 0
  %699 = vmatpush1.bf16.msra.mxu0 %v509
  %700 = vmatprep.subr.bf16.mxu0 0
  %701 = vmatpush1.bf16.msra.mxu0 %v510
  %702 = vmatprep.subr.bf16.mxu0 0
  %703 = vmatpush1.bf16.msra.mxu0 %v511
  %704 = vmatprep.subr.bf16.mxu0 0
  %705 = vmatpush1.bf16.msra.mxu0 %v512
  %706 = vmatprep.subr.bf16.mxu0 0
  %707 = vmatpush1.bf16.msra.mxu0 %v513
  %708 = vmatprep.mubr.bf16.mxu0 %v269
  %709 = vmatmul.mubr.bf16.gmra.mrb[0].mxu0 %v268
  %v710 = vpop.f32.mrb[0].mxu0
  %v711 = vadd.f32 %v614, %v710
  %v712 = vpop.f32.mrb[0].mxu0
  %v713 = vpop.f32.mrb[0].mxu0
  %v714 = vadd.f32 %v617, %v713
  %v715 = vpop.f32.mrb[0].mxu0
  %716 = vmatprep.mubr.bf16.mxu0 %v274
  %717 = vmatmul.mubr.bf16.gmra.mrb[0].mxu0 %v273
  %v718 = vpop.f32.mrb[0].mxu0
  %v719 = vadd.f32 %v622, %v718
  %v720 = vpop.f32.mrb[0].mxu0
  %v721 = vpop.f32.mrb[0].mxu0
  %v722 = vadd.f32 %v625, %v721
  %v723 = vpop.f32.mrb[0].mxu0
  %724 = vmatprep.mubr.bf16.mxu0 %v279
  %725 = vmatmul.mubr.bf16.gmra.mrb[0].mxu0 %v278
  %v726 = vpop.f32.mrb[0].mxu0
  %v727 = vadd.f32 %v630, %v726
  %v728 = vpop.f32.mrb[0].mxu0
  %v729 = vpop.f32.mrb[0].mxu0
  %v730 = vadd.f32 %v633, %v729
  %v731 = vpop.f32.mrb[0].mxu0
  %732 = vmatprep.mubr.bf16.mxu0 %v284
  %733 = vmatmul.mubr.bf16.gmra.mrb[0].mxu0 %v283
  %v734 = vpop.f32.mrb[0].mxu0
  %v735 = vadd.f32 %v638, %v734
  %v736 = vpop.f32.mrb[0].mxu0
  %v737 = vpop.f32.mrb[0].mxu0
  %v738 = vadd.f32 %v641, %v737
  %v739 = vpop.f32.mrb[0].mxu0
  %740 = vmatprep.mubr.bf16.mxu0 %v289
  %741 = vmatmul.mubr.bf16.gmra.mrb[0].mxu0 %v288
  %v742 = vpop.f32.mrb[0].mxu0
  %v743 = vadd.f32 %v646, %v742
  %v744 = vpop.f32.mrb[0].mxu0
  %v745 = vpop.f32.mrb[0].mxu0
  %v746 = vadd.f32 %v649, %v745
  %v747 = vpop.f32.mrb[0].mxu0
  %748 = vmatprep.mubr.bf16.mxu0 %v294
  %749 = vmatmul.mubr.bf16.gmra.mrb[0].mxu0 %v293
  %v750 = vpop.f32.mrb[0].mxu0
  %v751 = vadd.f32 %v654, %v750
  %v752 = vpop.f32.mrb[0].mxu0
  %v753 = vpop.f32.mrb[0].mxu0
  %v754 = vadd.f32 %v657, %v753
  %v755 = vpop.f32.mrb[0].mxu0
  %756 = vmatprep.mubr.bf16.mxu0 %v299
  %757 = vmatmul.mubr.bf16.gmra.mrb[0].mxu0 %v298
  %v758 = vpop.f32.mrb[0].mxu0
  %v759 = vadd.f32 %v662, %v758
  %v760 = vpop.f32.mrb[0].mxu0
  %v761 = vpop.f32.mrb[0].mxu0
  %v762 = vadd.f32 %v665, %v761
  %v763 = vpop.f32.mrb[0].mxu0
  %764 = vmatprep.mubr.bf16.mxu0 %v304
  %765 = vmatmul.mubr.bf16.gmra.mrb[0].mxu0 %v303
  %v766 = vpop.f32.mrb[0].mxu0
  %v767 = vadd.f32 %v670, %v766
  %v768 = vpop.f32.mrb[0].mxu0
  %v769 = vpop.f32.mrb[0].mxu0
  %v770 = vadd.f32 %v673, %v769
  %v771 = vpop.f32.mrb[0].mxu0
  %772 = vdwg.mxu0
  %773 = vmatprep.subr.bf16.mxu0 0
  %774 = vmatpush1.bf16.msra.mxu0 %v514
  %775 = vmatprep.subr.bf16.mxu0 0
  %776 = vmatpush1.bf16.msra.mxu0 %v515
  %777 = vmatprep.subr.bf16.mxu0 0
  %778 = vmatpush1.bf16.msra.mxu0 %v516
  %779 = vmatprep.subr.bf16.mxu0 0
  %780 = vmatpush1.bf16.msra.mxu0 %v517
  %781 = vmatprep.subr.bf16.mxu0 0
  %782 = vmatpush1.bf16.msra.mxu0 0
  %783 = vmatprep.subr.bf16.mxu0 0
  %784 = vmatpush1.bf16.msra.mxu0 0
  %785 = vmatprep.subr.bf16.mxu0 0
  %786 = vmatpush1.bf16.msra.mxu0 0
  %787 = vmatprep.subr.bf16.mxu0 0
  %788 = vmatpush1.bf16.msra.mxu0 0
  %789 = vmatprep.subr.bf16.mxu0 0
  %790 = vmatpush1.bf16.msra.mxu0 0
  %791 = vmatprep.subr.bf16.mxu0 0
  %792 = vmatpush1.bf16.msra.mxu0 0
  %793 = vmatprep.subr.bf16.mxu0 0
  %794 = vmatpush1.bf16.msra.mxu0 0
  %795 = vmatprep.subr.bf16.mxu0 0
  %796 = vmatpush1.bf16.msra.mxu0 0
  %797 = vmatprep.subr.bf16.mxu0 0
  %798 = vmatpush1.bf16.msra.mxu0 0
  %799 = vmatprep.subr.bf16.mxu0 0
  %800 = vmatpush1.bf16.msra.mxu0 0
  %801 = vmatprep.subr.bf16.mxu0 0
  %802 = vmatpush1.bf16.msra.mxu0 0
  %803 = vmatprep.subr.bf16.mxu0 0
  %804 = vmatpush1.bf16.msra.mxu0 0
  %805 = vmatprep.mubr.bf16.mxu0 0
  %806 = vmatmul.mubr.bf16.gmra.mrb[0].mxu0 %v556
  %v807 = vpop.f32.mrb[0].mxu0
  %v808 = vadd.f32 %v711, %v807
  %v809 = vpop.f32.mrb[0].mxu0
  %v810 = vpop.f32.mrb[0].mxu0
  %v811 = vadd.f32 %v714, %v810
  %v812 = vpop.f32.mrb[0].mxu0
  %813 = vmatprep.mubr.bf16.mxu0 0
  %814 = vmatmul.mubr.bf16.gmra.mrb[0].mxu0 %v559
  %v815 = vpop.f32.mrb[0].mxu0
  %v816 = vadd.f32 %v719, %v815
  %v817 = vpop.f32.mrb[0].mxu0
  %v818 = vpop.f32.mrb[0].mxu0
  %v819 = vadd.f32 %v722, %v818
  %v820 = vpop.f32.mrb[0].mxu0
  %821 = vmatprep.mubr.bf16.mxu0 0
  %822 = vmatmul.mubr.bf16.gmra.mrb[0].mxu0 %v562
  %v823 = vpop.f32.mrb[0].mxu0
  %v824 = vadd.f32 %v727, %v823
  %v825 = vpop.f32.mrb[0].mxu0
  %v826 = vpop.f32.mrb[0].mxu0
  %v827 = vadd.f32 %v730, %v826
  %v828 = vpop.f32.mrb[0].mxu0
  %829 = vmatprep.mubr.bf16.mxu0 0
  %830 = vmatmul.mubr.bf16.gmra.mrb[0].mxu0 %v565
  %v831 = vpop.f32.mrb[0].mxu0
  %v832 = vadd.f32 %v735, %v831
  %v833 = vpop.f32.mrb[0].mxu0
  %v834 = vpop.f32.mrb[0].mxu0
  %v835 = vadd.f32 %v738, %v834
  %v836 = vpop.f32.mrb[0].mxu0
  %837 = vmatprep.mubr.bf16.mxu0 0
  %838 = vmatmul.mubr.bf16.gmra.mrb[0].mxu0 %v568
  %v839 = vpop.f32.mrb[0].mxu0
  %v840 = vadd.f32 %v743, %v839
  %v841 = vpop.f32.mrb[0].mxu0
  %v842 = vpop.f32.mrb[0].mxu0
  %v843 = vadd.f32 %v746, %v842
  %v844 = vpop.f32.mrb[0].mxu0
  %845 = vmatprep.mubr.bf16.mxu0 0
  %846 = vmatmul.mubr.bf16.gmra.mrb[0].mxu0 %v571
  %v847 = vpop.f32.mrb[0].mxu0
  %v848 = vadd.f32 %v751, %v847
  %v849 = vpop.f32.mrb[0].mxu0
  %v850 = vpop.f32.mrb[0].mxu0
  %v851 = vadd.f32 %v754, %v850
  %v852 = vpop.f32.mrb[0].mxu0
  %853 = vmatprep.mubr.bf16.mxu0 0
  %854 = vmatmul.mubr.bf16.gmra.mrb[0].mxu0 %v574
  %v855 = vpop.f32.mrb[0].mxu0
  %v856 = vadd.f32 %v759, %v855
  %v857 = vpop.f32.mrb[0].mxu0
  %v858 = vpop.f32.mrb[0].mxu0
  %v859 = vadd.f32 %v762, %v858
  %v860 = vpop.f32.mrb[0].mxu0
  %861 = vmatprep.mubr.bf16.mxu0 0
  %862 = vmatmul.mubr.bf16.gmra.mrb[0].mxu0 %v577
  %v863 = vpop.f32.mrb[0].mxu0
  %v864 = vadd.f32 %v767, %v863
  %v865 = vpop.f32.mrb[0].mxu0
  %v866 = vpop.f32.mrb[0].mxu0
  %v867 = vadd.f32 %v770, %v866
  %v868 = vpop.f32.mrb[0].mxu0
  %869 = vdwg.mxu0
  %v870 = vld [vmem:[%s2] sm:$0x1]
  %v872 = vlaneseq
  %v873 = vshrl.u32 %v872, 7
  %v874 = vsub.s32 0, %v873
  %v875 = vrot.slane %v870, %v874
  %v877 = vmul.f32 %v808, %v875
  %v878 = vmul.f32 %v811, %v875
  %v879 = vmul.f32 %v816, %v875
  %v880 = vmul.f32 %v819, %v875
  %v881 = vmul.f32 %v824, %v875
  %v882 = vmul.f32 %v827, %v875
  %v883 = vmul.f32 %v832, %v875
  %v884 = vmul.f32 %v835, %v875
  %v885 = vmul.f32 %v840, %v875
  %v886 = vmul.f32 %v843, %v875
  %v887 = vmul.f32 %v848, %v875
  %v888 = vmul.f32 %v851, %v875
  %v889 = vmul.f32 %v856, %v875
  %v890 = vmul.f32 %v859, %v875
  %v891 = vmul.f32 %v864, %v875
  %v892 = vmul.f32 %v867, %v875
  %v893 = vld [vmem:[%s3] sm:$0x1]
  %v895 = vlaneseq
  %v896 = vshrl.u32 %v895, 7
  %v897 = vsub.s32 0, %v896
  %v898 = vrot.slane %v893, %v897
  %v900 = vadd.f32 %v877, %v898
  %v901 = vadd.f32 %v878, %v898
  %v902 = vadd.f32 %v879, %v898
  %v903 = vadd.f32 %v880, %v898
  %v904 = vadd.f32 %v881, %v898
  %v905 = vadd.f32 %v882, %v898
  %v906 = vadd.f32 %v883, %v898
  %v907 = vadd.f32 %v884, %v898
  %v908 = vadd.f32 %v885, %v898
  %v909 = vadd.f32 %v886, %v898
  %v910 = vadd.f32 %v887, %v898
  %v911 = vadd.f32 %v888, %v898
  %v912 = vadd.f32 %v889, %v898
  %v913 = vadd.f32 %v890, %v898
  %v914 = vadd.f32 %v891, %v898
  %v915 = vadd.f32 %v892, %v898
  %vm916 = vcmp.ge.f32.partialorder %v900, 0.0
  %vm917 = vcmp.ge.f32.partialorder %v901, 0.0
  %vm918 = vcmp.ge.f32.partialorder %v902, 0.0
  %vm919 = vcmp.ge.f32.partialorder %v903, 0.0
  %vm920 = vcmp.ge.f32.partialorder %v904, 0.0
  %vm921 = vcmp.ge.f32.partialorder %v905, 0.0
  %vm922 = vcmp.ge.f32.partialorder %v906, 0.0
  %vm923 = vcmp.ge.f32.partialorder %v907, 0.0
  %vm924 = vcmp.ge.f32.partialorder %v908, 0.0
  %vm925 = vcmp.ge.f32.partialorder %v909, 0.0
  %vm926 = vcmp.ge.f32.partialorder %v910, 0.0
  %vm927 = vcmp.ge.f32.partialorder %v911, 0.0
  %vm928 = vcmp.ge.f32.partialorder %v912, 0.0
  %vm929 = vcmp.ge.f32.partialorder %v913, 0.0
  %vm930 = vcmp.ge.f32.partialorder %v914, 0.0
  %vm931 = vcmp.ge.f32.partialorder %v915, 0.0
  %v932 = vmul.f32 %v900, 0.01
  %v933 = vmul.f32 %v901, 0.01
  %v934 = vmul.f32 %v902, 0.01
  %v935 = vmul.f32 %v903, 0.01
  %v936 = vmul.f32 %v904, 0.01
  %v937 = vmul.f32 %v905, 0.01
  %v938 = vmul.f32 %v906, 0.01
  %v939 = vmul.f32 %v907, 0.01
  %v940 = vmul.f32 %v908, 0.01
  %v941 = vmul.f32 %v909, 0.01
  %v942 = vmul.f32 %v910, 0.01
  %v943 = vmul.f32 %v911, 0.01
  %v944 = vmul.f32 %v912, 0.01
  %v945 = vmul.f32 %v913, 0.01
  %v946 = vmul.f32 %v914, 0.01
  %v947 = vmul.f32 %v915, 0.01
  %v948 = vsel %vm916, %v900, %v932
  %v949 = vsel %vm917, %v901, %v933
  %v950 = vsel %vm918, %v902, %v934
  %v951 = vsel %vm919, %v903, %v935
  %v952 = vsel %vm920, %v904, %v936
  %v953 = vsel %vm921, %v905, %v937
  %v954 = vsel %vm922, %v906, %v938
  %v955 = vsel %vm923, %v907, %v939
  %v956 = vsel %vm924, %v908, %v940
  %v957 = vsel %vm925, %v909, %v941
  %v958 = vsel %vm926, %v910, %v942
  %v959 = vsel %vm927, %v911, %v943
  %v960 = vsel %vm928, %v912, %v944
  %v961 = vsel %vm929, %v913, %v945
  %v962 = vsel %vm930, %v914, %v946
  %v963 = vsel %vm931, %v915, %v947
  %964 = vst [vmem:[%s4] sm:$0xff] %v948
  %965 = vst [vmem:[%s4 + $0x8] sm:$0xff] %v949
  %966 = vst [vmem:[%s4 + $0x10] sm:$0xff] %v950
  %967 = vst [vmem:[%s4 + $0x18] sm:$0xff] %v951
  %968 = vst [vmem:[%s4 + $0x20] sm:$0xff] %v952
  %969 = vst [vmem:[%s4 + $0x28] sm:$0xff] %v953
  %970 = vst [vmem:[%s4 + $0x30] sm:$0xff] %v954
  %971 = vst [vmem:[%s4 + $0x38] sm:$0xff] %v955
  %972 = vst [vmem:[%s4 + $0x40] sm:$0xff] %v956
  %973 = vst [vmem:[%s4 + $0x48] sm:$0xff] %v957
  %974 = vst [vmem:[%s4 + $0x50] sm:$0xff] %v958
  %975 = vst [vmem:[%s4 + $0x58] sm:$0xff] %v959
  %976 = vst [vmem:[%s4 + $0x60] sm:$0xff] %v960
  %977 = vst [vmem:[%s4 + $0x68] sm:$0xff] %v961
  %978 = vst [vmem:[%s4 + $0x70] sm:$0xff] %v962
  %979 = vst [vmem:[%s4 + $0x78] sm:$0xff] %v963
  // Predicated region
  $region18: #{feat_extraction_forward.28} parent=0 // pred_check
    _
  $region19: #{feat_extraction_forward.28} parent=0 // pred_check_branch
    %981 = sbr.rel (0) target = $region21
  $region20: #{feat_extraction_forward.28} parent=0 // pred_region
    _
  $region21: #{feat_extraction_forward.28} parent=0 // pred_fallthru
    _
  // Predicated region
  $region22: #{feat_extraction_forward.28} parent=0 // pred_check
    _
  $region23: #{feat_extraction_forward.28} parent=0 // pred_check_branch
    %983 = sbr.rel (0) target = $region25
  $region24: #{feat_extraction_forward.28} parent=0 // pred_region
    _
  $region25: #{feat_extraction_forward.28} parent=0 // pred_fallthru
    _

// kernel: feat_extraction_forward.30
$region0: #{feat_extraction_forward.30}
  #allocation0 [shape = 'u32[]', space=smem, size = 0x4, offset = 0x4, fixed_abs, tag = 'smem constant byte address 0x4 - core index']
  #allocation1 [shape = 'u32[144,128]{1,0:T(1,128)}', space=vmem, size = 0x12000, scoped, tag = 'internal scratch']
  %s0 = inlined_call_operand.vmem [shape: bf16[512,288], index: 0, kind: input, shape index: {}]
  %s1 = inlined_call_operand.vmem [shape: bf16[288,128], index: 1, kind: input, shape index: {}]
  %s2 = inlined_call_operand.vmem [shape: f32[1,128], index: 2, kind: input, shape index: {}]
  %s3 = inlined_call_operand.vmem [shape: f32[1,128], index: 3, kind: input, shape index: {}]
  %s4 = inlined_call_operand.vmem [shape: f32[512,128], index: 4, kind: output, shape index: {}]
  %s5 = sld [smem:[#allocation0]]
  $region26: #{feat_extraction_forward.30} parent=0
    _
  %s7 = ssub.s32 1, %s5
  %s8 = scalar_select 0, %s7, %s5
  // Predicated region
  $region2: #{feat_extraction_forward.30} parent=0 // pred_check
    _
  $region3: #{feat_extraction_forward.30} parent=0 // pred_check_branch
    %10 = sbr.rel (0) target = $region5
  $region4: #{feat_extraction_forward.30} parent=0 // pred_region
    _
  $region5: #{feat_extraction_forward.30} parent=0 // pred_fallthru
    _
  // Predicated region
  $region6: #{feat_extraction_forward.30} parent=0 // pred_check
    _
  $region7: #{feat_extraction_forward.30} parent=0 // pred_check_branch
    %12 = sbr.rel (0) target = $region9
  $region8: #{feat_extraction_forward.30} parent=0 // pred_region
    _
  $region9: #{feat_extraction_forward.30} parent=0 // pred_fallthru
    _
  // Predicated region
  $region10: #{feat_extraction_forward.30} parent=0 // pred_check
    _
  $region11: #{feat_extraction_forward.30} parent=0 // pred_check_branch
    %14 = sbr.rel (0) target = $region13
  $region12: #{feat_extraction_forward.30} parent=0 // pred_region
    _
  $region13: #{feat_extraction_forward.30} parent=0 // pred_fallthru
    _
  // Predicated region
  $region14: #{feat_extraction_forward.30} parent=0 // pred_check
    _
  $region15: #{feat_extraction_forward.30} parent=0 // pred_check_branch
    %16 = sbr.rel (0) target = $region17
  $region16: #{feat_extraction_forward.30} parent=0 // pred_region
    _
  $region17: #{feat_extraction_forward.30} parent=0 // pred_fallthru
    _
  %v18 = vld [vmem:[%s0] sm:$0xff]
  %v19 = vld [vmem:[%s0 + $0x8] sm:$0xf]
  %v20 = vld [vmem:[%s0 + $0xc] sm:$0xff]
  %v21 = vld [vmem:[%s0 + $0x14] sm:$0xf]
  %v22 = vld [vmem:[%s0 + $0x18] sm:$0xff]
  %v23 = vld [vmem:[%s0 + $0x20] sm:$0xf]
  %v24 = vld [vmem:[%s0 + $0x24] sm:$0xff]
  %v25 = vld [vmem:[%s0 + $0x2c] sm:$0xf]
  %v26 = vld [vmem:[%s0 + $0x30] sm:$0xff]
  %v27 = vld [vmem:[%s0 + $0x38] sm:$0xf]
  %v28 = vld [vmem:[%s0 + $0x3c] sm:$0xff]
  %v29 = vld [vmem:[%s0 + $0x44] sm:$0xf]
  %v30 = vld [vmem:[%s0 + $0x48] sm:$0xff]
  %v31 = vld [vmem:[%s0 + $0x50] sm:$0xf]
  %v32 = vld [vmem:[%s0 + $0x54] sm:$0xff]
  %v33 = vld [vmem:[%s0 + $0x5c] sm:$0xf]
  %v34 = vld [vmem:[%s0 + $0x60] sm:$0xff]
  %v35 = vld [vmem:[%s0 + $0x68] sm:$0xf]
  %v36 = vld [vmem:[%s0 + $0x6c] sm:$0xff]
  %v37 = vld [vmem:[%s0 + $0x74] sm:$0xf]
  %v38 = vld [vmem:[%s0 + $0x78] sm:$0xff]
  %v39 = vld [vmem:[%s0 + $0x80] sm:$0xf]
  %v40 = vld [vmem:[%s0 + $0x84] sm:$0xff]
  %v41 = vld [vmem:[%s0 + $0x8c] sm:$0xf]
  %v42 = vld [vmem:[%s0 + $0x90] sm:$0xff]
  %v43 = vld [vmem:[%s0 + $0x98] sm:$0xf]
  %v44 = vld [vmem:[%s0 + $0x9c] sm:$0xff]
  %v45 = vld [vmem:[%s0 + $0xa4] sm:$0xf]
  %v46 = vld [vmem:[%s0 + $0xa8] sm:$0xff]
  %v47 = vld [vmem:[%s0 + $0xb0] sm:$0xf]
  %v48 = vld [vmem:[%s0 + $0xb4] sm:$0xff]
  %v49 = vld [vmem:[%s0 + $0xbc] sm:$0xf]
  %v50 = vld [vmem:[%s0 + $0xc0] sm:$0xff]
  %v51 = vld [vmem:[%s0 + $0xc8] sm:$0xf]
  %v52 = vld [vmem:[%s0 + $0xcc] sm:$0xff]
  %v53 = vld [vmem:[%s0 + $0xd4] sm:$0xf]
  %v54 = vld [vmem:[%s0 + $0xd8] sm:$0xff]
  %v55 = vld [vmem:[%s0 + $0xe0] sm:$0xf]
  %v56 = vld [vmem:[%s0 + $0xe4] sm:$0xff]
  %v57 = vld [vmem:[%s0 + $0xec] sm:$0xf]
  %v58 = vld [vmem:[%s0 + $0xf0] sm:$0xff]
  %v59 = vld [vmem:[%s0 + $0xf8] sm:$0xf]
  %v60 = vld [vmem:[%s0 + $0xfc] sm:$0xff]
  %v61 = vld [vmem:[%s0 + $0x104] sm:$0xf]
  %v62 = vld [vmem:[%s0 + $0x108] sm:$0xff]
  %v63 = vld [vmem:[%s0 + $0x110] sm:$0xf]
  %v64 = vld [vmem:[%s0 + $0x114] sm:$0xff]
  %v65 = vld [vmem:[%s0 + $0x11c] sm:$0xf]
  %v66 = vld [vmem:[%s0 + $0x120] sm:$0xff]
  %v67 = vld [vmem:[%s0 + $0x128] sm:$0xf]
  %v68 = vld [vmem:[%s0 + $0x12c] sm:$0xff]
  %v69 = vld [vmem:[%s0 + $0x134] sm:$0xf]
  %v70 = vld [vmem:[%s0 + $0x138] sm:$0xff]
  %v71 = vld [vmem:[%s0 + $0x140] sm:$0xf]
  %v72 = vld [vmem:[%s0 + $0x144] sm:$0xff]
  %v73 = vld [vmem:[%s0 + $0x14c] sm:$0xf]
  %v74 = vld [vmem:[%s0 + $0x150] sm:$0xff]
  %v75 = vld [vmem:[%s0 + $0x158] sm:$0xf]
  %v76 = vld [vmem:[%s0 + $0x15c] sm:$0xff]
  %v77 = vld [vmem:[%s0 + $0x164] sm:$0xf]
  %v78 = vld [vmem:[%s0 + $0x168] sm:$0xff]
  %v79 = vld [vmem:[%s0 + $0x170] sm:$0xf]
  %v80 = vld [vmem:[%s0 + $0x174] sm:$0xff]
  %v81 = vld [vmem:[%s0 + $0x17c] sm:$0xf]
  %v82 = vld [vmem:[%s0 + $0x180] sm:$0xff]
  %v83 = vld [vmem:[%s0 + $0x188] sm:$0xf]
  %v84 = vld [vmem:[%s0 + $0x18c] sm:$0xff]
  %v85 = vld [vmem:[%s0 + $0x194] sm:$0xf]
  %v86 = vld [vmem:[%s0 + $0x198] sm:$0xff]
  %v87 = vld [vmem:[%s0 + $0x1a0] sm:$0xf]
  %v88 = vld [vmem:[%s0 + $0x1a4] sm:$0xff]
  %v89 = vld [vmem:[%s0 + $0x1ac] sm:$0xf]
  %v90 = vld [vmem:[%s0 + $0x1b0] sm:$0xff]
  %v91 = vld [vmem:[%s0 + $0x1b8] sm:$0xf]
  %v92 = vld [vmem:[%s0 + $0x1bc] sm:$0xff]
  %v93 = vld [vmem:[%s0 + $0x1c4] sm:$0xf]
  %v94 = vld [vmem:[%s0 + $0x1c8] sm:$0xff]
  %v95 = vld [vmem:[%s0 + $0x1d0] sm:$0xf]
  %v96 = vld [vmem:[%s0 + $0x1d4] sm:$0xff]
  %v97 = vld [vmem:[%s0 + $0x1dc] sm:$0xf]
  %v98 = vld [vmem:[%s0 + $0x1e0] sm:$0xff]
  %v99 = vld [vmem:[%s0 + $0x1e8] sm:$0xf]
  %v100 = vld [vmem:[%s0 + $0x1ec] sm:$0xff]
  %v101 = vld [vmem:[%s0 + $0x1f4] sm:$0xf]
  %v102 = vld [vmem:[%s0 + $0x1f8] sm:$0xff]
  %v103 = vld [vmem:[%s0 + $0x200] sm:$0xf]
  %v104 = vld [vmem:[%s0 + $0x204] sm:$0xff]
  %v105 = vld [vmem:[%s0 + $0x20c] sm:$0xf]
  %v106 = vld [vmem:[%s0 + $0x210] sm:$0xff]
  %v107 = vld [vmem:[%s0 + $0x218] sm:$0xf]
  %v108 = vld [vmem:[%s0 + $0x21c] sm:$0xff]
  %v109 = vld [vmem:[%s0 + $0x224] sm:$0xf]
  %v110 = vld [vmem:[%s0 + $0x228] sm:$0xff]
  %v111 = vld [vmem:[%s0 + $0x230] sm:$0xf]
  %v112 = vld [vmem:[%s0 + $0x234] sm:$0xff]
  %v113 = vld [vmem:[%s0 + $0x23c] sm:$0xf]
  %v114 = vld [vmem:[%s0 + $0x240] sm:$0xff]
  %v115 = vld [vmem:[%s0 + $0x248] sm:$0xf]
  %v116 = vld [vmem:[%s0 + $0x24c] sm:$0xff]
  %v117 = vld [vmem:[%s0 + $0x254] sm:$0xf]
  %v118 = vld [vmem:[%s0 + $0x258] sm:$0xff]
  %v119 = vld [vmem:[%s0 + $0x260] sm:$0xf]
  %v120 = vld [vmem:[%s0 + $0x264] sm:$0xff]
  %v121 = vld [vmem:[%s0 + $0x26c] sm:$0xf]
  %v122 = vld [vmem:[%s0 + $0x270] sm:$0xff]
  %v123 = vld [vmem:[%s0 + $0x278] sm:$0xf]
  %v124 = vld [vmem:[%s0 + $0x27c] sm:$0xff]
  %v125 = vld [vmem:[%s0 + $0x284] sm:$0xf]
  %v126 = vld [vmem:[%s0 + $0x288] sm:$0xff]
  %v127 = vld [vmem:[%s0 + $0x290] sm:$0xf]
  %v128 = vld [vmem:[%s0 + $0x294] sm:$0xff]
  %v129 = vld [vmem:[%s0 + $0x29c] sm:$0xf]
  %v130 = vld [vmem:[%s0 + $0x2a0] sm:$0xff]
  %v131 = vld [vmem:[%s0 + $0x2a8] sm:$0xf]
  %v132 = vld [vmem:[%s0 + $0x2ac] sm:$0xff]
  %v133 = vld [vmem:[%s0 + $0x2b4] sm:$0xf]
  %v134 = vld [vmem:[%s0 + $0x2b8] sm:$0xff]
  %v135 = vld [vmem:[%s0 + $0x2c0] sm:$0xf]
  %v136 = vld [vmem:[%s0 + $0x2c4] sm:$0xff]
  %v137 = vld [vmem:[%s0 + $0x2cc] sm:$0xf]
  %v138 = vld [vmem:[%s0 + $0x2d0] sm:$0xff]
  %v139 = vld [vmem:[%s0 + $0x2d8] sm:$0xf]
  %v140 = vld [vmem:[%s0 + $0x2dc] sm:$0xff]
  %v141 = vld [vmem:[%s0 + $0x2e4] sm:$0xf]
  %v142 = vld [vmem:[%s0 + $0x2e8] sm:$0xff]
  %v143 = vld [vmem:[%s0 + $0x2f0] sm:$0xf]
  %v144 = vld [vmem:[%s0 + $0x2f4] sm:$0xff]
  %v145 = vld [vmem:[%s0 + $0x2fc] sm:$0xf]
  %v146 = vld [vmem:[%s1] sm:$0xf]
  %v147 = vld [vmem:[%s1 + $0x4] sm:$0xf]
  %v148 = vld [vmem:[%s1 + $0x8] sm:$0xf]
  %v149 = vld [vmem:[%s1 + $0xc] sm:$0xf]
  %v150 = vld [vmem:[%s1 + $0x10] sm:$0xf]
  %v151 = vld [vmem:[%s1 + $0x14] sm:$0xf]
  %v152 = vld [vmem:[%s1 + $0x18] sm:$0xf]
  %v153 = vld [vmem:[%s1 + $0x1c] sm:$0xf]
  %v154 = vld [vmem:[%s1 + $0x20] sm:$0xf]
  %v155 = vld [vmem:[%s1 + $0x24] sm:$0xf]
  %v156 = vld [vmem:[%s1 + $0x28] sm:$0xf]
  %v157 = vld [vmem:[%s1 + $0x2c] sm:$0xf]
  %v158 = vld [vmem:[%s1 + $0x30] sm:$0xf]
  %v159 = vld [vmem:[%s1 + $0x34] sm:$0xf]
  %v160 = vld [vmem:[%s1 + $0x38] sm:$0xf]
  %v161 = vld [vmem:[%s1 + $0x3c] sm:$0xf]
  %v162 = vld [vmem:[%s1 + $0x40] sm:$0xf]
  %v163 = vld [vmem:[%s1 + $0x44] sm:$0xf]
  %v164 = vld [vmem:[%s1 + $0x48] sm:$0xf]
  %v165 = vld [vmem:[%s1 + $0x4c] sm:$0xf]
  %v166 = vld [vmem:[%s1 + $0x50] sm:$0xf]
  %v167 = vld [vmem:[%s1 + $0x54] sm:$0xf]
  %v168 = vld [vmem:[%s1 + $0x58] sm:$0xf]
  %v169 = vld [vmem:[%s1 + $0x5c] sm:$0xf]
  %v170 = vld [vmem:[%s1 + $0x60] sm:$0xf]
  %v171 = vld [vmem:[%s1 + $0x64] sm:$0xf]
  %v172 = vld [vmem:[%s1 + $0x68] sm:$0xf]
  %v173 = vld [vmem:[%s1 + $0x6c] sm:$0xf]
  %v174 = vld [vmem:[%s1 + $0x70] sm:$0xf]
  %v175 = vld [vmem:[%s1 + $0x74] sm:$0xf]
  %v176 = vld [vmem:[%s1 + $0x78] sm:$0xf]
  %v177 = vld [vmem:[%s1 + $0x7c] sm:$0xf]
  %v178 = vld [vmem:[%s1 + $0x80] sm:$0xf]
  %v179 = vld [vmem:[%s1 + $0x84] sm:$0xf]
  %v180 = vld [vmem:[%s1 + $0x88] sm:$0xf]
  %v181 = vld [vmem:[%s1 + $0x8c] sm:$0xf]
  %v310 = vunpack.c.l.b16 %v18
  %v311 = vunpack.c.h.b16 %v18
  %v312 = vunpack.c.l.b16 %v19
  %v313 = vunpack.c.l.b16 %v20
  %v314 = vunpack.c.h.b16 %v20
  %v315 = vunpack.c.l.b16 %v21
  %v316 = vunpack.c.l.b16 %v22
  %v317 = vunpack.c.h.b16 %v22
  %v318 = vunpack.c.l.b16 %v23
  %v319 = vunpack.c.l.b16 %v24
  %v320 = vunpack.c.h.b16 %v24
  %v321 = vunpack.c.l.b16 %v25
  %v322 = vunpack.c.l.b16 %v26
  %v323 = vunpack.c.h.b16 %v26
  %v324 = vunpack.c.l.b16 %v27
  %v325 = vunpack.c.l.b16 %v28
  %v326 = vunpack.c.h.b16 %v28
  %v327 = vunpack.c.l.b16 %v29
  %v328 = vunpack.c.l.b16 %v30
  %v329 = vunpack.c.h.b16 %v30
  %v330 = vunpack.c.l.b16 %v31
  %v331 = vunpack.c.l.b16 %v32
  %v332 = vunpack.c.h.b16 %v32
  %v333 = vunpack.c.l.b16 %v33
  %v334 = vunpack.c.l.b16 %v34
  %v335 = vunpack.c.h.b16 %v34
  %v336 = vunpack.c.l.b16 %v35
  %v337 = vunpack.c.l.b16 %v36
  %v338 = vunpack.c.h.b16 %v36
  %v339 = vunpack.c.l.b16 %v37
  %v340 = vunpack.c.l.b16 %v38
  %v341 = vunpack.c.h.b16 %v38
  %v342 = vunpack.c.l.b16 %v39
  %v343 = vunpack.c.l.b16 %v40
  %v344 = vunpack.c.h.b16 %v40
  %v345 = vunpack.c.l.b16 %v41
  %v346 = vunpack.c.l.b16 %v42
  %v347 = vunpack.c.h.b16 %v42
  %v348 = vunpack.c.l.b16 %v43
  %v349 = vunpack.c.l.b16 %v44
  %v350 = vunpack.c.h.b16 %v44
  %v351 = vunpack.c.l.b16 %v45
  %v352 = vunpack.c.l.b16 %v46
  %v353 = vunpack.c.h.b16 %v46
  %v354 = vunpack.c.l.b16 %v47
  %v355 = vunpack.c.l.b16 %v48
  %v356 = vunpack.c.h.b16 %v48
  %v357 = vunpack.c.l.b16 %v49
  %v358 = vunpack.c.l.b16 %v50
  %v359 = vunpack.c.h.b16 %v50
  %v360 = vunpack.c.l.b16 %v51
  %v361 = vunpack.c.l.b16 %v52
  %v362 = vunpack.c.h.b16 %v52
  %v363 = vunpack.c.l.b16 %v53
  %v364 = vunpack.c.l.b16 %v54
  %v365 = vunpack.c.h.b16 %v54
  %v366 = vunpack.c.l.b16 %v55
  %v367 = vunpack.c.l.b16 %v56
  %v368 = vunpack.c.h.b16 %v56
  %v369 = vunpack.c.l.b16 %v57
  %v370 = vunpack.c.l.b16 %v58
  %v371 = vunpack.c.h.b16 %v58
  %v372 = vunpack.c.l.b16 %v59
  %v373 = vunpack.c.l.b16 %v60
  %v374 = vunpack.c.h.b16 %v60
  %v375 = vunpack.c.l.b16 %v61
  %v376 = vunpack.c.l.b16 %v62
  %v377 = vunpack.c.h.b16 %v62
  %v378 = vunpack.c.l.b16 %v63
  %v379 = vunpack.c.l.b16 %v64
  %v380 = vunpack.c.h.b16 %v64
  %v381 = vunpack.c.l.b16 %v65
  %v382 = vunpack.c.l.b16 %v66
  %v383 = vunpack.c.h.b16 %v66
  %v384 = vunpack.c.l.b16 %v67
  %v385 = vunpack.c.l.b16 %v68
  %v386 = vunpack.c.h.b16 %v68
  %v387 = vunpack.c.l.b16 %v69
  %v388 = vunpack.c.l.b16 %v70
  %v389 = vunpack.c.h.b16 %v70
  %v390 = vunpack.c.l.b16 %v71
  %v391 = vunpack.c.l.b16 %v72
  %v392 = vunpack.c.h.b16 %v72
  %v393 = vunpack.c.l.b16 %v73
  %v394 = vunpack.c.l.b16 %v74
  %v395 = vunpack.c.h.b16 %v74
  %v396 = vunpack.c.l.b16 %v75
  %v397 = vunpack.c.l.b16 %v76
  %v398 = vunpack.c.h.b16 %v76
  %v399 = vunpack.c.l.b16 %v77
  %v400 = vunpack.c.l.b16 %v78
  %v401 = vunpack.c.h.b16 %v78
  %v402 = vunpack.c.l.b16 %v79
  %v403 = vunpack.c.l.b16 %v80
  %v404 = vunpack.c.h.b16 %v80
  %v405 = vunpack.c.l.b16 %v81
  %v406 = vunpack.c.l.b16 %v82
  %v407 = vunpack.c.h.b16 %v82
  %v408 = vunpack.c.l.b16 %v83
  %v409 = vunpack.c.l.b16 %v84
  %v410 = vunpack.c.h.b16 %v84
  %v411 = vunpack.c.l.b16 %v85
  %v412 = vunpack.c.l.b16 %v86
  %v413 = vunpack.c.h.b16 %v86
  %v414 = vunpack.c.l.b16 %v87
  %v415 = vunpack.c.l.b16 %v88
  %v416 = vunpack.c.h.b16 %v88
  %v417 = vunpack.c.l.b16 %v89
  %v418 = vunpack.c.l.b16 %v90
  %v419 = vunpack.c.h.b16 %v90
  %v420 = vunpack.c.l.b16 %v91
  %v421 = vunpack.c.l.b16 %v92
  %v422 = vunpack.c.h.b16 %v92
  %v423 = vunpack.c.l.b16 %v93
  %v424 = vunpack.c.l.b16 %v94
  %v425 = vunpack.c.h.b16 %v94
  %v426 = vunpack.c.l.b16 %v95
  %v427 = vunpack.c.l.b16 %v96
  %v428 = vunpack.c.h.b16 %v96
  %v429 = vunpack.c.l.b16 %v97
  %v430 = vunpack.c.l.b16 %v98
  %v431 = vunpack.c.h.b16 %v98
  %v432 = vunpack.c.l.b16 %v99
  %v433 = vunpack.c.l.b16 %v100
  %v434 = vunpack.c.h.b16 %v100
  %v435 = vunpack.c.l.b16 %v101
  %v436 = vunpack.c.l.b16 %v102
  %v437 = vunpack.c.h.b16 %v102
  %v438 = vunpack.c.l.b16 %v103
  %v439 = vunpack.c.l.b16 %v104
  %v440 = vunpack.c.h.b16 %v104
  %v441 = vunpack.c.l.b16 %v105
  %v442 = vunpack.c.l.b16 %v106
  %v443 = vunpack.c.h.b16 %v106
  %v444 = vunpack.c.l.b16 %v107
  %v445 = vunpack.c.l.b16 %v108
  %v446 = vunpack.c.h.b16 %v108
  %v447 = vunpack.c.l.b16 %v109
  %v448 = vunpack.c.l.b16 %v110
  %v449 = vunpack.c.h.b16 %v110
  %v450 = vunpack.c.l.b16 %v111
  %v451 = vunpack.c.l.b16 %v112
  %v452 = vunpack.c.h.b16 %v112
  %v453 = vunpack.c.l.b16 %v113
  %v454 = vunpack.c.l.b16 %v114
  %v455 = vunpack.c.h.b16 %v114
  %v456 = vunpack.c.l.b16 %v115
  %v457 = vunpack.c.l.b16 %v116
  %v458 = vunpack.c.h.b16 %v116
  %v459 = vunpack.c.l.b16 %v117
  %v460 = vunpack.c.l.b16 %v118
  %v461 = vunpack.c.h.b16 %v118
  %v462 = vunpack.c.l.b16 %v119
  %v463 = vunpack.c.l.b16 %v120
  %v464 = vunpack.c.h.b16 %v120
  %v465 = vunpack.c.l.b16 %v121
  %v466 = vunpack.c.l.b16 %v122
  %v467 = vunpack.c.h.b16 %v122
  %v468 = vunpack.c.l.b16 %v123
  %v469 = vunpack.c.l.b16 %v124
  %v470 = vunpack.c.h.b16 %v124
  %v471 = vunpack.c.l.b16 %v125
  %v472 = vunpack.c.l.b16 %v126
  %v473 = vunpack.c.h.b16 %v126
  %v474 = vunpack.c.l.b16 %v127
  %v475 = vunpack.c.l.b16 %v128
  %v476 = vunpack.c.h.b16 %v128
  %v477 = vunpack.c.l.b16 %v129
  %v478 = vunpack.c.l.b16 %v130
  %v479 = vunpack.c.h.b16 %v130
  %v480 = vunpack.c.l.b16 %v131
  %v481 = vunpack.c.l.b16 %v132
  %v482 = vunpack.c.h.b16 %v132
  %v483 = vunpack.c.l.b16 %v133
  %v484 = vunpack.c.l.b16 %v134
  %v485 = vunpack.c.h.b16 %v134
  %v486 = vunpack.c.l.b16 %v135
  %v487 = vunpack.c.l.b16 %v136
  %v488 = vunpack.c.h.b16 %v136
  %v489 = vunpack.c.l.b16 %v137
  %v490 = vunpack.c.l.b16 %v138
  %v491 = vunpack.c.h.b16 %v138
  %v492 = vunpack.c.l.b16 %v139
  %v493 = vunpack.c.l.b16 %v140
  %v494 = vunpack.c.h.b16 %v140
  %v495 = vunpack.c.l.b16 %v141
  %v496 = vunpack.c.l.b16 %v142
  %v497 = vunpack.c.h.b16 %v142
  %v498 = vunpack.c.l.b16 %v143
  %v499 = vunpack.c.l.b16 %v144
  %v500 = vunpack.c.h.b16 %v144
  %v501 = vunpack.c.l.b16 %v145
  %v502 = vpack.c.b16 %v313, %v310
  %v503 = vpack.c.b16 %v314, %v311
  %v504 = vpack.c.b16 %v315, %v312
  %v505 = vpack.c.b16 %v319, %v316
  %v506 = vpack.c.b16 %v320, %v317
  %v507 = vpack.c.b16 %v321, %v318
  %v508 = vpack.c.b16 %v325, %v322
  %v509 = vpack.c.b16 %v326, %v323
  %v510 = vpack.c.b16 %v327, %v324
  %v511 = vpack.c.b16 %v331, %v328
  %v512 = vpack.c.b16 %v332, %v329
  %v513 = vpack.c.b16 %v333, %v330
  %v514 = vpack.c.b16 %v337, %v334
  %v515 = vpack.c.b16 %v338, %v335
  %v516 = vpack.c.b16 %v339, %v336
  %v517 = vpack.c.b16 %v343, %v340
  %v518 = vpack.c.b16 %v344, %v341
  %v519 = vpack.c.b16 %v345, %v342
  %v520 = vpack.c.b16 %v349, %v346
  %v521 = vpack.c.b16 %v350, %v347
  %v522 = vpack.c.b16 %v351, %v348
  %v523 = vpack.c.b16 %v355, %v352
  %v524 = vpack.c.b16 %v356, %v353
  %v525 = vpack.c.b16 %v357, %v354
  %v526 = vpack.c.b16 %v361, %v358
  %v527 = vpack.c.b16 %v362, %v359
  %v528 = vpack.c.b16 %v363, %v360
  %v529 = vpack.c.b16 %v367, %v364
  %v530 = vpack.c.b16 %v368, %v365
  %v531 = vpack.c.b16 %v369, %v366
  %v532 = vpack.c.b16 %v373, %v370
  %v533 = vpack.c.b16 %v374, %v371
  %v534 = vpack.c.b16 %v375, %v372
  %v535 = vpack.c.b16 %v379, %v376
  %v536 = vpack.c.b16 %v380, %v377
  %v537 = vpack.c.b16 %v381, %v378
  %v538 = vpack.c.b16 %v385, %v382
  %v539 = vpack.c.b16 %v386, %v383
  %v540 = vpack.c.b16 %v387, %v384
  %v541 = vpack.c.b16 %v391, %v388
  %v542 = vpack.c.b16 %v392, %v389
  %v543 = vpack.c.b16 %v393, %v390
  %v544 = vpack.c.b16 %v397, %v394
  %v545 = vpack.c.b16 %v398, %v395
  %v546 = vpack.c.b16 %v399, %v396
  %v547 = vpack.c.b16 %v403, %v400
  %v548 = vpack.c.b16 %v404, %v401
  %v549 = vpack.c.b16 %v405, %v402
  %v550 = vpack.c.b16 %v409, %v406
  %v551 = vpack.c.b16 %v410, %v407
  %v552 = vpack.c.b16 %v411, %v408
  %v553 = vpack.c.b16 %v415, %v412
  %v554 = vpack.c.b16 %v416, %v413
  %v555 = vpack.c.b16 %v417, %v414
  %v556 = vpack.c.b16 %v421, %v418
  %v557 = vpack.c.b16 %v422, %v419
  %v558 = vpack.c.b16 %v423, %v420
  %v559 = vpack.c.b16 %v427, %v424
  %v560 = vpack.c.b16 %v428, %v425
  %v561 = vpack.c.b16 %v429, %v426
  %v562 = vpack.c.b16 %v433, %v430
  %v563 = vpack.c.b16 %v434, %v431
  %v564 = vpack.c.b16 %v435, %v432
  %v565 = vpack.c.b16 %v439, %v436
  %v566 = vpack.c.b16 %v440, %v437
  %v567 = vpack.c.b16 %v441, %v438
  %v568 = vpack.c.b16 %v445, %v442
  %v569 = vpack.c.b16 %v446, %v443
  %v570 = vpack.c.b16 %v447, %v444
  %v571 = vpack.c.b16 %v451, %v448
  %v572 = vpack.c.b16 %v452, %v449
  %v573 = vpack.c.b16 %v453, %v450
  %v574 = vpack.c.b16 %v457, %v454
  %v575 = vpack.c.b16 %v458, %v455
  %v576 = vpack.c.b16 %v459, %v456
  %v577 = vpack.c.b16 %v463, %v460
  %v578 = vpack.c.b16 %v464, %v461
  %v579 = vpack.c.b16 %v465, %v462
  %v580 = vpack.c.b16 %v469, %v466
  %v581 = vpack.c.b16 %v470, %v467
  %v582 = vpack.c.b16 %v471, %v468
  %v583 = vpack.c.b16 %v475, %v472
  %v584 = vpack.c.b16 %v476, %v473
  %v585 = vpack.c.b16 %v477, %v474
  %v586 = vpack.c.b16 %v481, %v478
  %v587 = vpack.c.b16 %v482, %v479
  %v588 = vpack.c.b16 %v483, %v480
  %v589 = vpack.c.b16 %v487, %v484
  %v590 = vpack.c.b16 %v488, %v485
  %v591 = vpack.c.b16 %v489, %v486
  %v592 = vpack.c.b16 %v493, %v490
  %v593 = vpack.c.b16 %v494, %v491
  %v594 = vpack.c.b16 %v495, %v492
  %v595 = vpack.c.b16 %v499, %v496
  %v596 = vpack.c.b16 %v500, %v497
  %v597 = vpack.c.b16 %v501, %v498
  %v698 = vunpack.c.l.b16 %v146
  %v699 = vunpack.c.l.b16 %v147
  %v700 = vunpack.c.l.b16 %v148
  %v701 = vunpack.c.l.b16 %v149
  %v702 = vunpack.c.l.b16 %v150
  %v703 = vunpack.c.l.b16 %v151
  %v704 = vunpack.c.l.b16 %v152
  %v705 = vunpack.c.l.b16 %v153
  %v706 = vunpack.c.l.b16 %v154
  %v707 = vunpack.c.l.b16 %v155
  %v708 = vunpack.c.l.b16 %v156
  %v709 = vunpack.c.l.b16 %v157
  %v710 = vunpack.c.l.b16 %v158
  %v711 = vunpack.c.l.b16 %v159
  %v712 = vunpack.c.l.b16 %v160
  %v713 = vunpack.c.l.b16 %v161
  %v714 = vunpack.c.l.b16 %v162
  %v715 = vunpack.c.l.b16 %v163
  %v716 = vunpack.c.l.b16 %v164
  %v717 = vunpack.c.l.b16 %v165
  %v718 = vunpack.c.l.b16 %v166
  %v719 = vunpack.c.l.b16 %v167
  %v720 = vunpack.c.l.b16 %v168
  %v721 = vunpack.c.l.b16 %v169
  %v722 = vunpack.c.l.b16 %v170
  %v723 = vunpack.c.l.b16 %v171
  %v724 = vunpack.c.l.b16 %v172
  %v725 = vunpack.c.l.b16 %v173
  %v726 = vunpack.c.l.b16 %v174
  %v727 = vunpack.c.l.b16 %v175
  %v728 = vunpack.c.l.b16 %v176
  %v729 = vunpack.c.l.b16 %v177
  %v730 = vunpack.c.l.b16 %v178
  %v731 = vunpack.c.l.b16 %v179
  %v732 = vunpack.c.l.b16 %v180
  %v733 = vunpack.c.l.b16 %v181
  %v734 = vpack.c.b16 %v699, %v698
  %v735 = vpack.c.b16 %v701, %v700
  %v736 = vpack.c.b16 %v703, %v702
  %v737 = vpack.c.b16 %v705, %v704
  %v738 = vpack.c.b16 %v707, %v706
  %v739 = vpack.c.b16 %v709, %v708
  %v740 = vpack.c.b16 %v711, %v710
  %v741 = vpack.c.b16 %v713, %v712
  %v742 = vpack.c.b16 %v715, %v714
  %v743 = vpack.c.b16 %v717, %v716
  %v744 = vpack.c.b16 %v719, %v718
  %v745 = vpack.c.b16 %v721, %v720
  %v746 = vpack.c.b16 %v723, %v722
  %v747 = vpack.c.b16 %v725, %v724
  %v748 = vpack.c.b16 %v727, %v726
  %v749 = vpack.c.b16 %v729, %v728
  %v750 = vpack.c.b16 %v731, %v730
  %v751 = vpack.c.b16 %v733, %v732
  %vm770 = vcmask 261120
  %v772 = vsel %vm770, %v504, 0
  %v775 = vsel %vm770, %v507, 0
  %v778 = vsel %vm770, %v510, 0
  %v781 = vsel %vm770, %v513, 0
  %v784 = vsel %vm770, %v516, 0
  %v787 = vsel %vm770, %v519, 0
  %v790 = vsel %vm770, %v522, 0
  %v793 = vsel %vm770, %v525, 0
  %v796 = vsel %vm770, %v528, 0
  %v799 = vsel %vm770, %v531, 0
  %v802 = vsel %vm770, %v534, 0
  %v805 = vsel %vm770, %v537, 0
  %v808 = vsel %vm770, %v540, 0
  %v811 = vsel %vm770, %v543, 0
  %v814 = vsel %vm770, %v546, 0
  %v817 = vsel %vm770, %v549, 0
  %v820 = vsel %vm770, %v552, 0
  %v823 = vsel %vm770, %v555, 0
  %v826 = vsel %vm770, %v558, 0
  %v829 = vsel %vm770, %v561, 0
  %v832 = vsel %vm770, %v564, 0
  %v835 = vsel %vm770, %v567, 0
  %v838 = vsel %vm770, %v570, 0
  %v841 = vsel %vm770, %v573, 0
  %v844 = vsel %vm770, %v576, 0
  %v847 = vsel %vm770, %v579, 0
  %v850 = vsel %vm770, %v582, 0
  %v853 = vsel %vm770, %v585, 0
  %v856 = vsel %vm770, %v588, 0
  %v859 = vsel %vm770, %v591, 0
  %v862 = vsel %vm770, %v594, 0
  %v865 = vsel %vm770, %v597, 0
  %867 = vmatprep.subr.bf16.mxu0 0
  %868 = vmatpush1.bf16.msra.mxu0 %v734
  %869 = vmatprep.subr.bf16.mxu0 0
  %870 = vmatpush1.bf16.msra.mxu0 %v735
  %871 = vmatprep.subr.bf16.mxu0 0
  %872 = vmatpush1.bf16.msra.mxu0 %v736
  %873 = vmatprep.subr.bf16.mxu0 0
  %874 = vmatpush1.bf16.msra.mxu0 %v737
  %875 = vmatprep.subr.bf16.mxu0 0
  %876 = vmatpush1.bf16.msra.mxu0 %v738
  %877 = vmatprep.subr.bf16.mxu0 0
  %878 = vmatpush1.bf16.msra.mxu0 %v739
  %879 = vmatprep.subr.bf16.mxu0 0
  %880 = vmatpush1.bf16.msra.mxu0 %v740
  %881 = vmatprep.subr.bf16.mxu0 0
  %882 = vmatpush1.bf16.msra.mxu0 %v741
  %883 = vmatprep.subr.bf16.mxu0 0
  %884 = vmatpush1.bf16.msra.mxu0 %v742
  %885 = vmatprep.subr.bf16.mxu0 0
  %886 = vmatpush1.bf16.msra.mxu0 %v743
  %887 = vmatprep.subr.bf16.mxu0 0
  %888 = vmatpush1.bf16.msra.mxu0 %v744
  %889 = vmatprep.subr.bf16.mxu0 0
  %890 = vmatpush1.bf16.msra.mxu0 %v745
  %891 = vmatprep.subr.bf16.mxu0 0
  %892 = vmatpush1.bf16.msra.mxu0 %v746
  %893 = vmatprep.subr.bf16.mxu0 0
  %894 = vmatpush1.bf16.msra.mxu0 %v747
  %895 = vmatprep.subr.bf16.mxu0 0
  %896 = vmatpush1.bf16.msra.mxu0 %v748
  %897 = vmatprep.subr.bf16.mxu0 0
  %898 = vmatpush1.bf16.msra.mxu0 %v749
  %899 = vmatprep.mubr.bf16.mxu0 %v503
  %900 = vmatmul.mubr.bf16.gmra.mrb[0].mxu0 %v502
  %v901 = vpop.f32.mrb[0].mxu0
  %v902 = vadd.f32 0.0, %v901
  %v903 = vpop.f32.mrb[0].mxu0
  %v904 = vpop.f32.mrb[0].mxu0
  %v905 = vadd.f32 0.0, %v904
  %v906 = vpop.f32.mrb[0].mxu0
  %907 = vmatprep.mubr.bf16.mxu0 %v506
  %908 = vmatmul.mubr.bf16.gmra.mrb[0].mxu0 %v505
  %v909 = vpop.f32.mrb[0].mxu0
  %v910 = vadd.f32 0.0, %v909
  %v911 = vpop.f32.mrb[0].mxu0
  %v912 = vpop.f32.mrb[0].mxu0
  %v913 = vadd.f32 0.0, %v912
  %v914 = vpop.f32.mrb[0].mxu0
  %915 = vmatprep.mubr.bf16.mxu0 %v509
  %916 = vmatmul.mubr.bf16.gmra.mrb[0].mxu0 %v508
  %v917 = vpop.f32.mrb[0].mxu0
  %v918 = vadd.f32 0.0, %v917
  %v919 = vpop.f32.mrb[0].mxu0
  %v920 = vpop.f32.mrb[0].mxu0
  %v921 = vadd.f32 0.0, %v920
  %v922 = vpop.f32.mrb[0].mxu0
  %923 = vmatprep.mubr.bf16.mxu0 %v512
  %924 = vmatmul.mubr.bf16.gmra.mrb[0].mxu0 %v511
  %v925 = vpop.f32.mrb[0].mxu0
  %v926 = vadd.f32 0.0, %v925
  %v927 = vpop.f32.mrb[0].mxu0
  %v928 = vpop.f32.mrb[0].mxu0
  %v929 = vadd.f32 0.0, %v928
  %v930 = vpop.f32.mrb[0].mxu0
  %931 = vmatprep.mubr.bf16.mxu0 %v515
  %932 = vmatmul.mubr.bf16.gmra.mrb[0].mxu0 %v514
  %v933 = vpop.f32.mrb[0].mxu0
  %v934 = vadd.f32 0.0, %v933
  %v935 = vpop.f32.mrb[0].mxu0
  %v936 = vpop.f32.mrb[0].mxu0
  %v937 = vadd.f32 0.0, %v936
  %v938 = vpop.f32.mrb[0].mxu0
  %939 = vmatprep.mubr.bf16.mxu0 %v518
  %940 = vmatmul.mubr.bf16.gmra.mrb[0].mxu0 %v517
  %v941 = vpop.f32.mrb[0].mxu0
  %v942 = vadd.f32 0.0, %v941
  %v943 = vpop.f32.mrb[0].mxu0
  %v944 = vpop.f32.mrb[0].mxu0
  %v945 = vadd.f32 0.0, %v944
  %v946 = vpop.f32.mrb[0].mxu0
  %947 = vmatprep.mubr.bf16.mxu0 %v521
  %948 = vmatmul.mubr.bf16.gmra.mrb[0].mxu0 %v520
  %v949 = vpop.f32.mrb[0].mxu0
  %v950 = vadd.f32 0.0, %v949
  %v951 = vpop.f32.mrb[0].mxu0
  %v952 = vpop.f32.mrb[0].mxu0
  %v953 = vadd.f32 0.0, %v952
  %v954 = vpop.f32.mrb[0].mxu0
  %955 = vmatprep.mubr.bf16.mxu0 %v524
  %956 = vmatmul.mubr.bf16.gmra.mrb[0].mxu0 %v523
  %v957 = vpop.f32.mrb[0].mxu0
  %v958 = vadd.f32 0.0, %v957
  %v959 = vpop.f32.mrb[0].mxu0
  %v960 = vpop.f32.mrb[0].mxu0
  %v961 = vadd.f32 0.0, %v960
  %v962 = vpop.f32.mrb[0].mxu0
  %963 = vmatprep.mubr.bf16.mxu0 %v527
  %964 = vmatmul.mubr.bf16.gmra.mrb[0].mxu0 %v526
  %v965 = vpop.f32.mrb[0].mxu0
  %v966 = vadd.f32 0.0, %v965
  %v967 = vpop.f32.mrb[0].mxu0
  %v968 = vpop.f32.mrb[0].mxu0
  %v969 = vadd.f32 0.0, %v968
  %v970 = vpop.f32.mrb[0].mxu0
  %971 = vmatprep.mubr.bf16.mxu0 %v530
  %972 = vmatmul.mubr.bf16.gmra.mrb[0].mxu0 %v529
  %v973 = vpop.f32.mrb[0].mxu0
  %v974 = vadd.f32 0.0, %v973
  %v975 = vpop.f32.mrb[0].mxu0
  %v976 = vpop.f32.mrb[0].mxu0
  %v977 = vadd.f32 0.0, %v976
  %v978 = vpop.f32.mrb[0].mxu0
  %979 = vmatprep.mubr.bf16.mxu0 %v533
  %980 = vmatmul.mubr.bf16.gmra.mrb[0].mxu0 %v532
  %v981 = vpop.f32.mrb[0].mxu0
  %v982 = vadd.f32 0.0, %v981
  %v983 = vpop.f32.mrb[0].mxu0
  %v984 = vpop.f32.mrb[0].mxu0
  %v985 = vadd.f32 0.0, %v984
  %v986 = vpop.f32.mrb[0].mxu0
  %987 = vmatprep.mubr.bf16.mxu0 %v536
  %988 = vmatmul.mubr.bf16.gmra.mrb[0].mxu0 %v535
  %v989 = vpop.f32.mrb[0].mxu0
  %v990 = vadd.f32 0.0, %v989
  %v991 = vpop.f32.mrb[0].mxu0
  %v992 = vpop.f32.mrb[0].mxu0
  %v993 = vadd.f32 0.0, %v992
  %v994 = vpop.f32.mrb[0].mxu0
  %995 = vmatprep.mubr.bf16.mxu0 %v539
  %996 = vmatmul.mubr.bf16.gmra.mrb[0].mxu0 %v538
  %v997 = vpop.f32.mrb[0].mxu0
  %v998 = vadd.f32 0.0, %v997
  %v999 = vpop.f32.mrb[0].mxu0
  %v1000 = vpop.f32.mrb[0].mxu0
  %v1001 = vadd.f32 0.0, %v1000
  %v1002 = vpop.f32.mrb[0].mxu0
  %1003 = vmatprep.mubr.bf16.mxu0 %v542
  %1004 = vmatmul.mubr.bf16.gmra.mrb[0].mxu0 %v541
  %v1005 = vpop.f32.mrb[0].mxu0
  %v1006 = vadd.f32 0.0, %v1005
  %v1007 = vpop.f32.mrb[0].mxu0
  %v1008 = vpop.f32.mrb[0].mxu0
  %v1009 = vadd.f32 0.0, %v1008
  %v1010 = vpop.f32.mrb[0].mxu0
  %1011 = vmatprep.mubr.bf16.mxu0 %v545
  %1012 = vmatmul.mubr.bf16.gmra.mrb[0].mxu0 %v544
  %v1013 = vpop.f32.mrb[0].mxu0
  %v1014 = vadd.f32 0.0, %v1013
  %v1015 = vpop.f32.mrb[0].mxu0
  %v1016 = vpop.f32.mrb[0].mxu0
  %v1017 = vadd.f32 0.0, %v1016
  %v1018 = vpop.f32.mrb[0].mxu0
  %1019 = vmatprep.mubr.bf16.mxu0 %v548
  %1020 = vmatmul.mubr.bf16.gmra.mrb[0].mxu0 %v547
  %v1021 = vpop.f32.mrb[0].mxu0
  %v1022 = vadd.f32 0.0, %v1021
  %v1023 = vpop.f32.mrb[0].mxu0
  %v1024 = vpop.f32.mrb[0].mxu0
  %v1025 = vadd.f32 0.0, %v1024
  %v1026 = vpop.f32.mrb[0].mxu0
  %1027 = vmatprep.mubr.bf16.mxu0 %v551
  %1028 = vmatmul.mubr.bf16.gmra.mrb[0].mxu0 %v550
  %v1029 = vpop.f32.mrb[0].mxu0
  %v1030 = vadd.f32 0.0, %v1029
  %v1031 = vpop.f32.mrb[0].mxu0
  %v1032 = vpop.f32.mrb[0].mxu0
  %v1033 = vadd.f32 0.0, %v1032
  %v1034 = vpop.f32.mrb[0].mxu0
  %1035 = vmatprep.mubr.bf16.mxu0 %v554
  %1036 = vmatmul.mubr.bf16.gmra.mrb[0].mxu0 %v553
  %v1037 = vpop.f32.mrb[0].mxu0
  %v1038 = vadd.f32 0.0, %v1037
  %v1039 = vpop.f32.mrb[0].mxu0
  %v1040 = vpop.f32.mrb[0].mxu0
  %v1041 = vadd.f32 0.0, %v1040
  %v1042 = vpop.f32.mrb[0].mxu0
  %1043 = vmatprep.mubr.bf16.mxu0 %v557
  %1044 = vmatmul.mubr.bf16.gmra.mrb[0].mxu0 %v556
  %v1045 = vpop.f32.mrb[0].mxu0
  %v1046 = vadd.f32 0.0, %v1045
  %v1047 = vpop.f32.mrb[0].mxu0
  %v1048 = vpop.f32.mrb[0].mxu0
  %v1049 = vadd.f32 0.0, %v1048
  %v1050 = vpop.f32.mrb[0].mxu0
  %1051 = vmatprep.mubr.bf16.mxu0 %v560
  %1052 = vmatmul.mubr.bf16.gmra.mrb[0].mxu0 %v559
  %v1053 = vpop.f32.mrb[0].mxu0
  %v1054 = vadd.f32 0.0, %v1053
  %v1055 = vpop.f32.mrb[0].mxu0
  %v1056 = vpop.f32.mrb[0].mxu0
  %v1057 = vadd.f32 0.0, %v1056
  %v1058 = vpop.f32.mrb[0].mxu0
  %1059 = vmatprep.mubr.bf16.mxu0 %v563
  %1060 = vmatmul.mubr.bf16.gmra.mrb[0].mxu0 %v562
  %v1061 = vpop.f32.mrb[0].mxu0
  %v1062 = vadd.f32 0.0, %v1061
  %v1063 = vpop.f32.mrb[0].mxu0
  %v1064 = vpop.f32.mrb[0].mxu0
  %v1065 = vadd.f32 0.0, %v1064
  %v1066 = vpop.f32.mrb[0].mxu0
  %1067 = vmatprep.mubr.bf16.mxu0 %v566
  %1068 = vmatmul.mubr.bf16.gmra.mrb[0].mxu0 %v565
  %v1069 = vpop.f32.mrb[0].mxu0
  %v1070 = vadd.f32 0.0, %v1069
  %v1071 = vpop.f32.mrb[0].mxu0
  %v1072 = vpop.f32.mrb[0].mxu0
  %v1073 = vadd.f32 0.0, %v1072
  %v1074 = vpop.f32.mrb[0].mxu0
  %1075 = vmatprep.mubr.bf16.mxu0 %v569
  %1076 = vmatmul.mubr.bf16.gmra.mrb[0].mxu0 %v568
  %v1077 = vpop.f32.mrb[0].mxu0
  %v1078 = vadd.f32 0.0, %v1077
  %v1079 = vpop.f32.mrb[0].mxu0
  %v1080 = vpop.f32.mrb[0].mxu0
  %v1081 = vadd.f32 0.0, %v1080
  %v1082 = vpop.f32.mrb[0].mxu0
  %1083 = vmatprep.mubr.bf16.mxu0 %v572
  %1084 = vmatmul.mubr.bf16.gmra.mrb[0].mxu0 %v571
  %v1085 = vpop.f32.mrb[0].mxu0
  %v1086 = vadd.f32 0.0, %v1085
  %v1087 = vpop.f32.mrb[0].mxu0
  %v1088 = vpop.f32.mrb[0].mxu0
  %v1089 = vadd.f32 0.0, %v1088
  %v1090 = vpop.f32.mrb[0].mxu0
  %1091 = vmatprep.mubr.bf16.mxu0 %v575
  %1092 = vmatmul.mubr.bf16.gmra.mrb[0].mxu0 %v574
  %v1093 = vpop.f32.mrb[0].mxu0
  %v1094 = vadd.f32 0.0, %v1093
  %v1095 = vpop.f32.mrb[0].mxu0
  %v1096 = vpop.f32.mrb[0].mxu0
  %v1097 = vadd.f32 0.0, %v1096
  %v1098 = vpop.f32.mrb[0].mxu0
  %1099 = vmatprep.mubr.bf16.mxu0 %v578
  %1100 = vmatmul.mubr.bf16.gmra.mrb[0].mxu0 %v577
  %v1101 = vpop.f32.mrb[0].mxu0
  %v1102 = vadd.f32 0.0, %v1101
  %v1103 = vpop.f32.mrb[0].mxu0
  %v1104 = vpop.f32.mrb[0].mxu0
  %v1105 = vadd.f32 0.0, %v1104
  %v1106 = vpop.f32.mrb[0].mxu0
  %1107 = vmatprep.mubr.bf16.mxu0 %v581
  %1108 = vmatmul.mubr.bf16.gmra.mrb[0].mxu0 %v580
  %v1109 = vpop.f32.mrb[0].mxu0
  %v1110 = vadd.f32 0.0, %v1109
  %v1111 = vpop.f32.mrb[0].mxu0
  %v1112 = vpop.f32.mrb[0].mxu0
  %v1113 = vadd.f32 0.0, %v1112
  %v1114 = vpop.f32.mrb[0].mxu0
  %1115 = vmatprep.mubr.bf16.mxu0 %v584
  %1116 = vmatmul.mubr.bf16.gmra.mrb[0].mxu0 %v583
  %v1117 = vpop.f32.mrb[0].mxu0
  %v1118 = vadd.f32 0.0, %v1117
  %v1119 = vpop.f32.mrb[0].mxu0
  %v1120 = vpop.f32.mrb[0].mxu0
  %v1121 = vadd.f32 0.0, %v1120
  %v1122 = vpop.f32.mrb[0].mxu0
  %1123 = vmatprep.mubr.bf16.mxu0 %v587
  %1124 = vmatmul.mubr.bf16.gmra.mrb[0].mxu0 %v586
  %v1125 = vpop.f32.mrb[0].mxu0
  %v1126 = vadd.f32 0.0, %v1125
  %v1127 = vpop.f32.mrb[0].mxu0
  %v1128 = vpop.f32.mrb[0].mxu0
  %v1129 = vadd.f32 0.0, %v1128
  %v1130 = vpop.f32.mrb[0].mxu0
  %1131 = vmatprep.mubr.bf16.mxu0 %v590
  %1132 = vmatmul.mubr.bf16.gmra.mrb[0].mxu0 %v589
  %v1133 = vpop.f32.mrb[0].mxu0
  %v1134 = vadd.f32 0.0, %v1133
  %v1135 = vpop.f32.mrb[0].mxu0
  %v1136 = vpop.f32.mrb[0].mxu0
  %v1137 = vadd.f32 0.0, %v1136
  %v1138 = vpop.f32.mrb[0].mxu0
  %1139 = vmatprep.mubr.bf16.mxu0 %v593
  %1140 = vmatmul.mubr.bf16.gmra.mrb[0].mxu0 %v592
  %v1141 = vpop.f32.mrb[0].mxu0
  %v1142 = vadd.f32 0.0, %v1141
  %v1143 = vpop.f32.mrb[0].mxu0
  %v1144 = vpop.f32.mrb[0].mxu0
  %v1145 = vadd.f32 0.0, %v1144
  %v1146 = vpop.f32.mrb[0].mxu0
  %1147 = vmatprep.mubr.bf16.mxu0 %v596
  %1148 = vmatmul.mubr.bf16.gmra.mrb[0].mxu0 %v595
  %v1149 = vpop.f32.mrb[0].mxu0
  %v1150 = vadd.f32 0.0, %v1149
  %v1151 = vpop.f32.mrb[0].mxu0
  %v1152 = vpop.f32.mrb[0].mxu0
  %v1153 = vadd.f32 0.0, %v1152
  %v1154 = vpop.f32.mrb[0].mxu0
  %1155 = vdwg.mxu0
  %1156 = vmatprep.subr.bf16.mxu0 0
  %1157 = vmatpush1.bf16.msra.mxu0 %v750
  %1158 = vmatprep.subr.bf16.mxu0 0
  %1159 = vmatpush1.bf16.msra.mxu0 %v751
  %1160 = vmatprep.subr.bf16.mxu0 0
  %1161 = vmatpush1.bf16.msra.mxu0 0
  %1162 = vmatprep.subr.bf16.mxu0 0
  %1163 = vmatpush1.bf16.msra.mxu0 0
  %1164 = vmatprep.subr.bf16.mxu0 0
  %1165 = vmatpush1.bf16.msra.mxu0 0
  %1166 = vmatprep.subr.bf16.mxu0 0
  %1167 = vmatpush1.bf16.msra.mxu0 0
  %1168 = vmatprep.subr.bf16.mxu0 0
  %1169 = vmatpush1.bf16.msra.mxu0 0
  %1170 = vmatprep.subr.bf16.mxu0 0
  %1171 = vmatpush1.bf16.msra.mxu0 0
  %1172 = vmatprep.subr.bf16.mxu0 0
  %1173 = vmatpush1.bf16.msra.mxu0 0
  %1174 = vmatprep.subr.bf16.mxu0 0
  %1175 = vmatpush1.bf16.msra.mxu0 0
  %1176 = vmatprep.subr.bf16.mxu0 0
  %1177 = vmatpush1.bf16.msra.mxu0 0
  %1178 = vmatprep.subr.bf16.mxu0 0
  %1179 = vmatpush1.bf16.msra.mxu0 0
  %1180 = vmatprep.subr.bf16.mxu0 0
  %1181 = vmatpush1.bf16.msra.mxu0 0
  %1182 = vmatprep.subr.bf16.mxu0 0
  %1183 = vmatpush1.bf16.msra.mxu0 0
  %1184 = vmatprep.subr.bf16.mxu0 0
  %1185 = vmatpush1.bf16.msra.mxu0 0
  %1186 = vmatprep.subr.bf16.mxu0 0
  %1187 = vmatpush1.bf16.msra.mxu0 0
  %1188 = vmatprep.mubr.bf16.mxu0 0
  %1189 = vmatmul.mubr.bf16.gmra.mrb[0].mxu0 %v772
  %v1190 = vpop.f32.mrb[0].mxu0
  %v1191 = vadd.f32 %v902, %v1190
  %v1192 = vpop.f32.mrb[0].mxu0
  %v1193 = vpop.f32.mrb[0].mxu0
  %v1194 = vadd.f32 %v905, %v1193
  %v1195 = vpop.f32.mrb[0].mxu0
  %1196 = vmatprep.mubr.bf16.mxu0 0
  %1197 = vmatmul.mubr.bf16.gmra.mrb[0].mxu0 %v775
  %v1198 = vpop.f32.mrb[0].mxu0
  %v1199 = vadd.f32 %v910, %v1198
  %v1200 = vpop.f32.mrb[0].mxu0
  %v1201 = vpop.f32.mrb[0].mxu0
  %v1202 = vadd.f32 %v913, %v1201
  %v1203 = vpop.f32.mrb[0].mxu0
  %1204 = vmatprep.mubr.bf16.mxu0 0
  %1205 = vmatmul.mubr.bf16.gmra.mrb[0].mxu0 %v778
  %v1206 = vpop.f32.mrb[0].mxu0
  %v1207 = vadd.f32 %v918, %v1206
  %v1208 = vpop.f32.mrb[0].mxu0
  %v1209 = vpop.f32.mrb[0].mxu0
  %v1210 = vadd.f32 %v921, %v1209
  %v1211 = vpop.f32.mrb[0].mxu0
  %1212 = vmatprep.mubr.bf16.mxu0 0
  %1213 = vmatmul.mubr.bf16.gmra.mrb[0].mxu0 %v781
  %v1214 = vpop.f32.mrb[0].mxu0
  %v1215 = vadd.f32 %v926, %v1214
  %v1216 = vpop.f32.mrb[0].mxu0
  %v1217 = vpop.f32.mrb[0].mxu0
  %v1218 = vadd.f32 %v929, %v1217
  %v1219 = vpop.f32.mrb[0].mxu0
  %1220 = vmatprep.mubr.bf16.mxu0 0
  %1221 = vmatmul.mubr.bf16.gmra.mrb[0].mxu0 %v784
  %v1222 = vpop.f32.mrb[0].mxu0
  %v1223 = vadd.f32 %v934, %v1222
  %v1224 = vpop.f32.mrb[0].mxu0
  %v1225 = vpop.f32.mrb[0].mxu0
  %v1226 = vadd.f32 %v937, %v1225
  %v1227 = vpop.f32.mrb[0].mxu0
  %1228 = vmatprep.mubr.bf16.mxu0 0
  %1229 = vmatmul.mubr.bf16.gmra.mrb[0].mxu0 %v787
  %v1230 = vpop.f32.mrb[0].mxu0
  %v1231 = vadd.f32 %v942, %v1230
  %v1232 = vpop.f32.mrb[0].mxu0
  %v1233 = vpop.f32.mrb[0].mxu0
  %v1234 = vadd.f32 %v945, %v1233
  %v1235 = vpop.f32.mrb[0].mxu0
  %1236 = vmatprep.mubr.bf16.mxu0 0
  %1237 = vmatmul.mubr.bf16.gmra.mrb[0].mxu0 %v790
  %v1238 = vpop.f32.mrb[0].mxu0
  %v1239 = vadd.f32 %v950, %v1238
  %v1240 = vpop.f32.mrb[0].mxu0
  %v1241 = vpop.f32.mrb[0].mxu0
  %v1242 = vadd.f32 %v953, %v1241
  %v1243 = vpop.f32.mrb[0].mxu0
  %1244 = vmatprep.mubr.bf16.mxu0 0
  %1245 = vmatmul.mubr.bf16.gmra.mrb[0].mxu0 %v793
  %v1246 = vpop.f32.mrb[0].mxu0
  %v1247 = vadd.f32 %v958, %v1246
  %v1248 = vpop.f32.mrb[0].mxu0
  %v1249 = vpop.f32.mrb[0].mxu0
  %v1250 = vadd.f32 %v961, %v1249
  %v1251 = vpop.f32.mrb[0].mxu0
  %1252 = vmatprep.mubr.bf16.mxu0 0
  %1253 = vmatmul.mubr.bf16.gmra.mrb[0].mxu0 %v796
  %v1254 = vpop.f32.mrb[0].mxu0
  %v1255 = vadd.f32 %v966, %v1254
  %v1256 = vpop.f32.mrb[0].mxu0
  %v1257 = vpop.f32.mrb[0].mxu0
  %v1258 = vadd.f32 %v969, %v1257
  %v1259 = vpop.f32.mrb[0].mxu0
  %1260 = vmatprep.mubr.bf16.mxu0 0
  %1261 = vmatmul.mubr.bf16.gmra.mrb[0].mxu0 %v799
  %v1262 = vpop.f32.mrb[0].mxu0
  %v1263 = vadd.f32 %v974, %v1262
  %v1264 = vpop.f32.mrb[0].mxu0
  %v1265 = vpop.f32.mrb[0].mxu0
  %v1266 = vadd.f32 %v977, %v1265
  %v1267 = vpop.f32.mrb[0].mxu0
  %1268 = vmatprep.mubr.bf16.mxu0 0
  %1269 = vmatmul.mubr.bf16.gmra.mrb[0].mxu0 %v802
  %v1270 = vpop.f32.mrb[0].mxu0
  %v1271 = vadd.f32 %v982, %v1270
  %v1272 = vpop.f32.mrb[0].mxu0
  %v1273 = vpop.f32.mrb[0].mxu0
  %v1274 = vadd.f32 %v985, %v1273
  %v1275 = vpop.f32.mrb[0].mxu0
  %1276 = vmatprep.mubr.bf16.mxu0 0
  %1277 = vmatmul.mubr.bf16.gmra.mrb[0].mxu0 %v805
  %v1278 = vpop.f32.mrb[0].mxu0
  %v1279 = vadd.f32 %v990, %v1278
  %v1280 = vpop.f32.mrb[0].mxu0
  %v1281 = vpop.f32.mrb[0].mxu0
  %v1282 = vadd.f32 %v993, %v1281
  %v1283 = vpop.f32.mrb[0].mxu0
  %1284 = vmatprep.mubr.bf16.mxu0 0
  %1285 = vmatmul.mubr.bf16.gmra.mrb[0].mxu0 %v808
  %v1286 = vpop.f32.mrb[0].mxu0
  %v1287 = vadd.f32 %v998, %v1286
  %v1288 = vpop.f32.mrb[0].mxu0
  %v1289 = vpop.f32.mrb[0].mxu0
  %v1290 = vadd.f32 %v1001, %v1289
  %v1291 = vpop.f32.mrb[0].mxu0
  %1292 = vmatprep.mubr.bf16.mxu0 0
  %1293 = vmatmul.mubr.bf16.gmra.mrb[0].mxu0 %v811
  %v1294 = vpop.f32.mrb[0].mxu0
  %v1295 = vadd.f32 %v1006, %v1294
  %v1296 = vpop.f32.mrb[0].mxu0
  %v1297 = vpop.f32.mrb[0].mxu0
  %v1298 = vadd.f32 %v1009, %v1297
  %v1299 = vpop.f32.mrb[0].mxu0
  %1300 = vmatprep.mubr.bf16.mxu0 0
  %1301 = vmatmul.mubr.bf16.gmra.mrb[0].mxu0 %v814
  %v1302 = vpop.f32.mrb[0].mxu0
  %v1303 = vadd.f32 %v1014, %v1302
  %v1304 = vpop.f32.mrb[0].mxu0
  %v1305 = vpop.f32.mrb[0].mxu0
  %v1306 = vadd.f32 %v1017, %v1305
  %v1307 = vpop.f32.mrb[0].mxu0
  %1308 = vmatprep.mubr.bf16.mxu0 0
  %1309 = vmatmul.mubr.bf16.gmra.mrb[0].mxu0 %v817
  %v1310 = vpop.f32.mrb[0].mxu0
  %v1311 = vadd.f32 %v1022, %v1310
  %v1312 = vpop.f32.mrb[0].mxu0
  %v1313 = vpop.f32.mrb[0].mxu0
  %v1314 = vadd.f32 %v1025, %v1313
  %v1315 = vpop.f32.mrb[0].mxu0
  %1316 = vmatprep.mubr.bf16.mxu0 0
  %1317 = vmatmul.mubr.bf16.gmra.mrb[0].mxu0 %v820
  %v1318 = vpop.f32.mrb[0].mxu0
  %v1319 = vadd.f32 %v1030, %v1318
  %v1320 = vpop.f32.mrb[0].mxu0
  %v1321 = vpop.f32.mrb[0].mxu0
  %v1322 = vadd.f32 %v1033, %v1321
  %v1323 = vpop.f32.mrb[0].mxu0
  %1324 = vmatprep.mubr.bf16.mxu0 0
  %1325 = vmatmul.mubr.bf16.gmra.mrb[0].mxu0 %v823
  %v1326 = vpop.f32.mrb[0].mxu0
  %v1327 = vadd.f32 %v1038, %v1326
  %v1328 = vpop.f32.mrb[0].mxu0
  %v1329 = vpop.f32.mrb[0].mxu0
  %v1330 = vadd.f32 %v1041, %v1329
  %v1331 = vpop.f32.mrb[0].mxu0
  %1332 = vmatprep.mubr.bf16.mxu0 0
  %1333 = vmatmul.mubr.bf16.gmra.mrb[0].mxu0 %v826
  %v1334 = vpop.f32.mrb[0].mxu0
  %v1335 = vadd.f32 %v1046, %v1334
  %v1336 = vpop.f32.mrb[0].mxu0
  %v1337 = vpop.f32.mrb[0].mxu0
  %v1338 = vadd.f32 %v1049, %v1337
  %v1339 = vpop.f32.mrb[0].mxu0
  %1340 = vmatprep.mubr.bf16.mxu0 0
  %1341 = vmatmul.mubr.bf16.gmra.mrb[0].mxu0 %v829
  %v1342 = vpop.f32.mrb[0].mxu0
  %v1343 = vadd.f32 %v1054, %v1342
  %v1344 = vpop.f32.mrb[0].mxu0
  %v1345 = vpop.f32.mrb[0].mxu0
  %v1346 = vadd.f32 %v1057, %v1345
  %v1347 = vpop.f32.mrb[0].mxu0
  %1348 = vmatprep.mubr.bf16.mxu0 0
  %1349 = vmatmul.mubr.bf16.gmra.mrb[0].mxu0 %v832
  %v1350 = vpop.f32.mrb[0].mxu0
  %v1351 = vadd.f32 %v1062, %v1350
  %v1352 = vpop.f32.mrb[0].mxu0
  %v1353 = vpop.f32.mrb[0].mxu0
  %v1354 = vadd.f32 %v1065, %v1353
  %v1355 = vpop.f32.mrb[0].mxu0
  %1356 = vmatprep.mubr.bf16.mxu0 0
  %1357 = vmatmul.mubr.bf16.gmra.mrb[0].mxu0 %v835
  %v1358 = vpop.f32.mrb[0].mxu0
  %v1359 = vadd.f32 %v1070, %v1358
  %v1360 = vpop.f32.mrb[0].mxu0
  %v1361 = vpop.f32.mrb[0].mxu0
  %v1362 = vadd.f32 %v1073, %v1361
  %v1363 = vpop.f32.mrb[0].mxu0
  %1364 = vmatprep.mubr.bf16.mxu0 0
  %1365 = vmatmul.mubr.bf16.gmra.mrb[0].mxu0 %v838
  %v1366 = vpop.f32.mrb[0].mxu0
  %v1367 = vadd.f32 %v1078, %v1366
  %v1368 = vpop.f32.mrb[0].mxu0
  %v1369 = vpop.f32.mrb[0].mxu0
  %v1370 = vadd.f32 %v1081, %v1369
  %v1371 = vpop.f32.mrb[0].mxu0
  %1372 = vmatprep.mubr.bf16.mxu0 0
  %1373 = vmatmul.mubr.bf16.gmra.mrb[0].mxu0 %v841
  %v1374 = vpop.f32.mrb[0].mxu0
  %v1375 = vadd.f32 %v1086, %v1374
  %v1376 = vpop.f32.mrb[0].mxu0
  %v1377 = vpop.f32.mrb[0].mxu0
  %v1378 = vadd.f32 %v1089, %v1377
  %v1379 = vpop.f32.mrb[0].mxu0
  %1380 = vmatprep.mubr.bf16.mxu0 0
  %1381 = vmatmul.mubr.bf16.gmra.mrb[0].mxu0 %v844
  %v1382 = vpop.f32.mrb[0].mxu0
  %v1383 = vadd.f32 %v1094, %v1382
  %v1384 = vpop.f32.mrb[0].mxu0
  %v1385 = vpop.f32.mrb[0].mxu0
  %v1386 = vadd.f32 %v1097, %v1385
  %v1387 = vpop.f32.mrb[0].mxu0
  %1388 = vmatprep.mubr.bf16.mxu0 0
  %1389 = vmatmul.mubr.bf16.gmra.mrb[0].mxu0 %v847
  %v1390 = vpop.f32.mrb[0].mxu0
  %v1391 = vadd.f32 %v1102, %v1390
  %v1392 = vpop.f32.mrb[0].mxu0
  %v1393 = vpop.f32.mrb[0].mxu0
  %v1394 = vadd.f32 %v1105, %v1393
  %v1395 = vpop.f32.mrb[0].mxu0
  %1396 = vmatprep.mubr.bf16.mxu0 0
  %1397 = vmatmul.mubr.bf16.gmra.mrb[0].mxu0 %v850
  %v1398 = vpop.f32.mrb[0].mxu0
  %v1399 = vadd.f32 %v1110, %v1398
  %v1400 = vpop.f32.mrb[0].mxu0
  %v1401 = vpop.f32.mrb[0].mxu0
  %v1402 = vadd.f32 %v1113, %v1401
  %v1403 = vpop.f32.mrb[0].mxu0
  %1404 = vmatprep.mubr.bf16.mxu0 0
  %1405 = vmatmul.mubr.bf16.gmra.mrb[0].mxu0 %v853
  %v1406 = vpop.f32.mrb[0].mxu0
  %v1407 = vadd.f32 %v1118, %v1406
  %v1408 = vpop.f32.mrb[0].mxu0
  %v1409 = vpop.f32.mrb[0].mxu0
  %v1410 = vadd.f32 %v1121, %v1409
  %v1411 = vpop.f32.mrb[0].mxu0
  %1412 = vmatprep.mubr.bf16.mxu0 0
  %1413 = vmatmul.mubr.bf16.gmra.mrb[0].mxu0 %v856
  %v1414 = vpop.f32.mrb[0].mxu0
  %v1415 = vadd.f32 %v1126, %v1414
  %v1416 = vpop.f32.mrb[0].mxu0
  %v1417 = vpop.f32.mrb[0].mxu0
  %v1418 = vadd.f32 %v1129, %v1417
  %v1419 = vpop.f32.mrb[0].mxu0
  %1420 = vmatprep.mubr.bf16.mxu0 0
  %1421 = vmatmul.mubr.bf16.gmra.mrb[0].mxu0 %v859
  %v1422 = vpop.f32.mrb[0].mxu0
  %v1423 = vadd.f32 %v1134, %v1422
  %v1424 = vpop.f32.mrb[0].mxu0
  %v1425 = vpop.f32.mrb[0].mxu0
  %v1426 = vadd.f32 %v1137, %v1425
  %v1427 = vpop.f32.mrb[0].mxu0
  %1428 = vmatprep.mubr.bf16.mxu0 0
  %1429 = vmatmul.mubr.bf16.gmra.mrb[0].mxu0 %v862
  %v1430 = vpop.f32.mrb[0].mxu0
  %v1431 = vadd.f32 %v1142, %v1430
  %v1432 = vpop.f32.mrb[0].mxu0
  %v1433 = vpop.f32.mrb[0].mxu0
  %v1434 = vadd.f32 %v1145, %v1433
  %v1435 = vpop.f32.mrb[0].mxu0
  %1436 = vmatprep.mubr.bf16.mxu0 0
  %1437 = vmatmul.mubr.bf16.gmra.mrb[0].mxu0 %v865
  %v1438 = vpop.f32.mrb[0].mxu0
  %v1439 = vadd.f32 %v1150, %v1438
  %v1440 = vpop.f32.mrb[0].mxu0
  %v1441 = vpop.f32.mrb[0].mxu0
  %v1442 = vadd.f32 %v1153, %v1441
  %v1443 = vpop.f32.mrb[0].mxu0
  %1444 = vdwg.mxu0
  %v1445 = vld [vmem:[%s2] sm:$0x1]
  %v1447 = vlaneseq
  %v1448 = vshrl.u32 %v1447, 7
  %v1449 = vsub.s32 0, %v1448
  %v1450 = vrot.slane %v1445, %v1449
  %v1452 = vmul.f32 %v1191, %v1450
  %v1453 = vmul.f32 %v1194, %v1450
  %v1454 = vmul.f32 %v1199, %v1450
  %v1455 = vmul.f32 %v1202, %v1450
  %v1456 = vmul.f32 %v1207, %v1450
  %v1457 = vmul.f32 %v1210, %v1450
  %v1458 = vmul.f32 %v1215, %v1450
  %v1459 = vmul.f32 %v1218, %v1450
  %v1460 = vmul.f32 %v1223, %v1450
  %v1461 = vmul.f32 %v1226, %v1450
  %v1462 = vmul.f32 %v1231, %v1450
  %v1463 = vmul.f32 %v1234, %v1450
  %v1464 = vmul.f32 %v1239, %v1450
  %v1465 = vmul.f32 %v1242, %v1450
  %v1466 = vmul.f32 %v1247, %v1450
  %v1467 = vmul.f32 %v1250, %v1450
  %v1468 = vmul.f32 %v1255, %v1450
  %v1469 = vmul.f32 %v1258, %v1450
  %v1470 = vmul.f32 %v1263, %v1450
  %v1471 = vmul.f32 %v1266, %v1450
  %v1472 = vmul.f32 %v1271, %v1450
  %v1473 = vmul.f32 %v1274, %v1450
  %v1474 = vmul.f32 %v1279, %v1450
  %v1475 = vmul.f32 %v1282, %v1450
  %v1476 = vmul.f32 %v1287, %v1450
  %v1477 = vmul.f32 %v1290, %v1450
  %v1478 = vmul.f32 %v1295, %v1450
  %v1479 = vmul.f32 %v1298, %v1450
  %v1480 = vmul.f32 %v1303, %v1450
  %v1481 = vmul.f32 %v1306, %v1450
  %v1482 = vmul.f32 %v1311, %v1450
  %v1483 = vmul.f32 %v1314, %v1450
  %v1484 = vmul.f32 %v1319, %v1450
  %v1485 = vmul.f32 %v1322, %v1450
  %v1486 = vmul.f32 %v1327, %v1450
  %v1487 = vmul.f32 %v1330, %v1450
  %v1488 = vmul.f32 %v1335, %v1450
  %v1489 = vmul.f32 %v1338, %v1450
  %v1490 = vmul.f32 %v1343, %v1450
  %v1491 = vmul.f32 %v1346, %v1450
  %v1492 = vmul.f32 %v1351, %v1450
  %v1493 = vmul.f32 %v1354, %v1450
  %v1494 = vmul.f32 %v1359, %v1450
  %v1495 = vmul.f32 %v1362, %v1450
  %v1496 = vmul.f32 %v1367, %v1450
  %v1497 = vmul.f32 %v1370, %v1450
  %v1498 = vmul.f32 %v1375, %v1450
  %v1499 = vmul.f32 %v1378, %v1450
  %v1500 = vmul.f32 %v1383, %v1450
  %v1501 = vmul.f32 %v1386, %v1450
  %v1502 = vmul.f32 %v1391, %v1450
  %v1503 = vmul.f32 %v1394, %v1450
  %v1504 = vmul.f32 %v1399, %v1450
  %v1505 = vmul.f32 %v1402, %v1450
  %v1506 = vmul.f32 %v1407, %v1450
  %v1507 = vmul.f32 %v1410, %v1450
  %v1508 = vmul.f32 %v1415, %v1450
  %v1509 = vmul.f32 %v1418, %v1450
  %v1510 = vmul.f32 %v1423, %v1450
  %v1511 = vmul.f32 %v1426, %v1450
  %v1512 = vmul.f32 %v1431, %v1450
  %v1513 = vmul.f32 %v1434, %v1450
  %v1514 = vmul.f32 %v1439, %v1450
  %v1515 = vmul.f32 %v1442, %v1450
  %v1516 = vld [vmem:[%s3] sm:$0x1]
  %v1518 = vlaneseq
  %v1519 = vshrl.u32 %v1518, 7
  %v1520 = vsub.s32 0, %v1519
  %v1521 = vrot.slane %v1516, %v1520
  %v1523 = vadd.f32 %v1452, %v1521
  %v1524 = vadd.f32 %v1453, %v1521
  %v1525 = vadd.f32 %v1454, %v1521
  %v1526 = vadd.f32 %v1455, %v1521
  %v1527 = vadd.f32 %v1456, %v1521
  %v1528 = vadd.f32 %v1457, %v1521
  %v1529 = vadd.f32 %v1458, %v1521
  %v1530 = vadd.f32 %v1459, %v1521
  %v1531 = vadd.f32 %v1460, %v1521
  %v1532 = vadd.f32 %v1461, %v1521
  %v1533 = vadd.f32 %v1462, %v1521
  %v1534 = vadd.f32 %v1463, %v1521
  %v1535 = vadd.f32 %v1464, %v1521
  %v1536 = vadd.f32 %v1465, %v1521
  %v1537 = vadd.f32 %v1466, %v1521
  %v1538 = vadd.f32 %v1467, %v1521
  %v1539 = vadd.f32 %v1468, %v1521
  %v1540 = vadd.f32 %v1469, %v1521
  %v1541 = vadd.f32 %v1470, %v1521
  %v1542 = vadd.f32 %v1471, %v1521
  %v1543 = vadd.f32 %v1472, %v1521
  %v1544 = vadd.f32 %v1473, %v1521
  %v1545 = vadd.f32 %v1474, %v1521
  %v1546 = vadd.f32 %v1475, %v1521
  %v1547 = vadd.f32 %v1476, %v1521
  %v1548 = vadd.f32 %v1477, %v1521
  %v1549 = vadd.f32 %v1478, %v1521
  %v1550 = vadd.f32 %v1479, %v1521
  %v1551 = vadd.f32 %v1480, %v1521
  %v1552 = vadd.f32 %v1481, %v1521
  %v1553 = vadd.f32 %v1482, %v1521
  %v1554 = vadd.f32 %v1483, %v1521
  %v1555 = vadd.f32 %v1484, %v1521
  %v1556 = vadd.f32 %v1485, %v1521
  %v1557 = vadd.f32 %v1486, %v1521
  %v1558 = vadd.f32 %v1487, %v1521
  %v1559 = vadd.f32 %v1488, %v1521
  %v1560 = vadd.f32 %v1489, %v1521
  %v1561 = vadd.f32 %v1490, %v1521
  %v1562 = vadd.f32 %v1491, %v1521
  %v1563 = vadd.f32 %v1492, %v1521
  %v1564 = vadd.f32 %v1493, %v1521
  %v1565 = vadd.f32 %v1494, %v1521
  %v1566 = vadd.f32 %v1495, %v1521
  %v1567 = vadd.f32 %v1496, %v1521
  %v1568 = vadd.f32 %v1497, %v1521
  %v1569 = vadd.f32 %v1498, %v1521
  %v1570 = vadd.f32 %v1499, %v1521
  %v1571 = vadd.f32 %v1500, %v1521
  %v1572 = vadd.f32 %v1501, %v1521
  %v1573 = vadd.f32 %v1502, %v1521
  %v1574 = vadd.f32 %v1503, %v1521
  %v1575 = vadd.f32 %v1504, %v1521
  %v1576 = vadd.f32 %v1505, %v1521
  %v1577 = vadd.f32 %v1506, %v1521
  %v1578 = vadd.f32 %v1507, %v1521
  %v1579 = vadd.f32 %v1508, %v1521
  %v1580 = vadd.f32 %v1509, %v1521
  %v1581 = vadd.f32 %v1510, %v1521
  %v1582 = vadd.f32 %v1511, %v1521
  %v1583 = vadd.f32 %v1512, %v1521
  %v1584 = vadd.f32 %v1513, %v1521
  %v1585 = vadd.f32 %v1514, %v1521
  %v1586 = vadd.f32 %v1515, %v1521
  %vm1587 = vcmp.ge.f32.partialorder %v1523, 0.0
  %vm1588 = vcmp.ge.f32.partialorder %v1524, 0.0
  %vm1589 = vcmp.ge.f32.partialorder %v1525, 0.0
  %vm1590 = vcmp.ge.f32.partialorder %v1526, 0.0
  %vm1591 = vcmp.ge.f32.partialorder %v1527, 0.0
  %vm1592 = vcmp.ge.f32.partialorder %v1528, 0.0
  %vm1593 = vcmp.ge.f32.partialorder %v1529, 0.0
  %vm1594 = vcmp.ge.f32.partialorder %v1530, 0.0
  %vm1595 = vcmp.ge.f32.partialorder %v1531, 0.0
  %vm1596 = vcmp.ge.f32.partialorder %v1532, 0.0
  %vm1597 = vcmp.ge.f32.partialorder %v1533, 0.0
  %vm1598 = vcmp.ge.f32.partialorder %v1534, 0.0
  %vm1599 = vcmp.ge.f32.partialorder %v1535, 0.0
  %vm1600 = vcmp.ge.f32.partialorder %v1536, 0.0
  %vm1601 = vcmp.ge.f32.partialorder %v1537, 0.0
  %vm1602 = vcmp.ge.f32.partialorder %v1538, 0.0
  %vm1603 = vcmp.ge.f32.partialorder %v1539, 0.0
  %vm1604 = vcmp.ge.f32.partialorder %v1540, 0.0
  %vm1605 = vcmp.ge.f32.partialorder %v1541, 0.0
  %vm1606 = vcmp.ge.f32.partialorder %v1542, 0.0
  %vm1607 = vcmp.ge.f32.partialorder %v1543, 0.0
  %vm1608 = vcmp.ge.f32.partialorder %v1544, 0.0
  %vm1609 = vcmp.ge.f32.partialorder %v1545, 0.0
  %vm1610 = vcmp.ge.f32.partialorder %v1546, 0.0
  %vm1611 = vcmp.ge.f32.partialorder %v1547, 0.0
  %vm1612 = vcmp.ge.f32.partialorder %v1548, 0.0
  %vm1613 = vcmp.ge.f32.partialorder %v1549, 0.0
  %vm1614 = vcmp.ge.f32.partialorder %v1550, 0.0
  %vm1615 = vcmp.ge.f32.partialorder %v1551, 0.0
  %vm1616 = vcmp.ge.f32.partialorder %v1552, 0.0
  %vm1617 = vcmp.ge.f32.partialorder %v1553, 0.0
  %vm1618 = vcmp.ge.f32.partialorder %v1554, 0.0
  %vm1619 = vcmp.ge.f32.partialorder %v1555, 0.0
  %vm1620 = vcmp.ge.f32.partialorder %v1556, 0.0
  %vm1621 = vcmp.ge.f32.partialorder %v1557, 0.0
  %vm1622 = vcmp.ge.f32.partialorder %v1558, 0.0
  %vm1623 = vcmp.ge.f32.partialorder %v1559, 0.0
  %vm1624 = vcmp.ge.f32.partialorder %v1560, 0.0
  %vm1625 = vcmp.ge.f32.partialorder %v1561, 0.0
  %vm1626 = vcmp.ge.f32.partialorder %v1562, 0.0
  %vm1627 = vcmp.ge.f32.partialorder %v1563, 0.0
  %vm1628 = vcmp.ge.f32.partialorder %v1564, 0.0
  %vm1629 = vcmp.ge.f32.partialorder %v1565, 0.0
  %vm1630 = vcmp.ge.f32.partialorder %v1566, 0.0
  %vm1631 = vcmp.ge.f32.partialorder %v1567, 0.0
  %vm1632 = vcmp.ge.f32.partialorder %v1568, 0.0
  %vm1633 = vcmp.ge.f32.partialorder %v1569, 0.0
  %vm1634 = vcmp.ge.f32.partialorder %v1570, 0.0
  %vm1635 = vcmp.ge.f32.partialorder %v1571, 0.0
  %vm1636 = vcmp.ge.f32.partialorder %v1572, 0.0
  %vm1637 = vcmp.ge.f32.partialorder %v1573, 0.0
  %vm1638 = vcmp.ge.f32.partialorder %v1574, 0.0
  %vm1639 = vcmp.ge.f32.partialorder %v1575, 0.0
  %vm1640 = vcmp.ge.f32.partialorder %v1576, 0.0
  %vm1641 = vcmp.ge.f32.partialorder %v1577, 0.0
  %vm1642 = vcmp.ge.f32.partialorder %v1578, 0.0
  %vm1643 = vcmp.ge.f32.partialorder %v1579, 0.0
  %vm1644 = vcmp.ge.f32.partialorder %v1580, 0.0
  %vm1645 = vcmp.ge.f32.partialorder %v1581, 0.0
  %vm1646 = vcmp.ge.f32.partialorder %v1582, 0.0
  %vm1647 = vcmp.ge.f32.partialorder %v1583, 0.0
  %vm1648 = vcmp.ge.f32.partialorder %v1584, 0.0
  %vm1649 = vcmp.ge.f32.partialorder %v1585, 0.0
  %vm1650 = vcmp.ge.f32.partialorder %v1586, 0.0
  %v1651 = vmul.f32 %v1523, 0.01
  %v1652 = vmul.f32 %v1524, 0.01
  %v1653 = vmul.f32 %v1525, 0.01
  %v1654 = vmul.f32 %v1526, 0.01
  %v1655 = vmul.f32 %v1527, 0.01
  %v1656 = vmul.f32 %v1528, 0.01
  %v1657 = vmul.f32 %v1529, 0.01
  %v1658 = vmul.f32 %v1530, 0.01
  %v1659 = vmul.f32 %v1531, 0.01
  %v1660 = vmul.f32 %v1532, 0.01
  %v1661 = vmul.f32 %v1533, 0.01
  %v1662 = vmul.f32 %v1534, 0.01
  %v1663 = vmul.f32 %v1535, 0.01
  %v1664 = vmul.f32 %v1536, 0.01
  %v1665 = vmul.f32 %v1537, 0.01
  %v1666 = vmul.f32 %v1538, 0.01
  %v1667 = vmul.f32 %v1539, 0.01
  %v1668 = vmul.f32 %v1540, 0.01
  %v1669 = vmul.f32 %v1541, 0.01
  %v1670 = vmul.f32 %v1542, 0.01
  %v1671 = vmul.f32 %v1543, 0.01
  %v1672 = vmul.f32 %v1544, 0.01
  %v1673 = vmul.f32 %v1545, 0.01
  %v1674 = vmul.f32 %v1546, 0.01
  %v1675 = vmul.f32 %v1547, 0.01
  %v1676 = vmul.f32 %v1548, 0.01
  %v1677 = vmul.f32 %v1549, 0.01
  %v1678 = vmul.f32 %v1550, 0.01
  %v1679 = vmul.f32 %v1551, 0.01
  %v1680 = vmul.f32 %v1552, 0.01
  %v1681 = vmul.f32 %v1553, 0.01
  %v1682 = vmul.f32 %v1554, 0.01
  %v1683 = vmul.f32 %v1555, 0.01
  %v1684 = vmul.f32 %v1556, 0.01
  %v1685 = vmul.f32 %v1557, 0.01
  %v1686 = vmul.f32 %v1558, 0.01
  %v1687 = vmul.f32 %v1559, 0.01
  %v1688 = vmul.f32 %v1560, 0.01
  %v1689 = vmul.f32 %v1561, 0.01
  %v1690 = vmul.f32 %v1562, 0.01
  %v1691 = vmul.f32 %v1563, 0.01
  %v1692 = vmul.f32 %v1564, 0.01
  %v1693 = vmul.f32 %v1565, 0.01
  %v1694 = vmul.f32 %v1566, 0.01
  %v1695 = vmul.f32 %v1567, 0.01
  %v1696 = vmul.f32 %v1568, 0.01
  %v1697 = vmul.f32 %v1569, 0.01
  %v1698 = vmul.f32 %v1570, 0.01
  %v1699 = vmul.f32 %v1571, 0.01
  %v1700 = vmul.f32 %v1572, 0.01
  %v1701 = vmul.f32 %v1573, 0.01
  %v1702 = vmul.f32 %v1574, 0.01
  %v1703 = vmul.f32 %v1575, 0.01
  %v1704 = vmul.f32 %v1576, 0.01
  %v1705 = vmul.f32 %v1577, 0.01
  %v1706 = vmul.f32 %v1578, 0.01
  %v1707 = vmul.f32 %v1579, 0.01
  %v1708 = vmul.f32 %v1580, 0.01
  %v1709 = vmul.f32 %v1581, 0.01
  %v1710 = vmul.f32 %v1582, 0.01
  %v1711 = vmul.f32 %v1583, 0.01
  %v1712 = vmul.f32 %v1584, 0.01
  %v1713 = vmul.f32 %v1585, 0.01
  %v1714 = vmul.f32 %v1586, 0.01
  %v1715 = vsel %vm1587, %v1523, %v1651
  %v1716 = vsel %vm1588, %v1524, %v1652
  %v1717 = vsel %vm1589, %v1525, %v1653
  %v1718 = vsel %vm1590, %v1526, %v1654
  %v1719 = vsel %vm1591, %v1527, %v1655
  %v1720 = vsel %vm1592, %v1528, %v1656
  %v1721 = vsel %vm1593, %v1529, %v1657
  %v1722 = vsel %vm1594, %v1530, %v1658
  %v1723 = vsel %vm1595, %v1531, %v1659
  %v1724 = vsel %vm1596, %v1532, %v1660
  %v1725 = vsel %vm1597, %v1533, %v1661
  %v1726 = vsel %vm1598, %v1534, %v1662
  %v1727 = vsel %vm1599, %v1535, %v1663
  %v1728 = vsel %vm1600, %v1536, %v1664
  %v1729 = vsel %vm1601, %v1537, %v1665
  %v1730 = vsel %vm1602, %v1538, %v1666
  %v1731 = vsel %vm1603, %v1539, %v1667
  %v1732 = vsel %vm1604, %v1540, %v1668
  %v1733 = vsel %vm1605, %v1541, %v1669
  %v1734 = vsel %vm1606, %v1542, %v1670
  %v1735 = vsel %vm1607, %v1543, %v1671
  %v1736 = vsel %vm1608, %v1544, %v1672
  %v1737 = vsel %vm1609, %v1545, %v1673
  %v1738 = vsel %vm1610, %v1546, %v1674
  %v1739 = vsel %vm1611, %v1547, %v1675
  %v1740 = vsel %vm1612, %v1548, %v1676
  %v1741 = vsel %vm1613, %v1549, %v1677
  %v1742 = vsel %vm1614, %v1550, %v1678
  %v1743 = vsel %vm1615, %v1551, %v1679
  %v1744 = vsel %vm1616, %v1552, %v1680
  %v1745 = vsel %vm1617, %v1553, %v1681
  %v1746 = vsel %vm1618, %v1554, %v1682
  %v1747 = vsel %vm1619, %v1555, %v1683
  %v1748 = vsel %vm1620, %v1556, %v1684
  %v1749 = vsel %vm1621, %v1557, %v1685
  %v1750 = vsel %vm1622, %v1558, %v1686
  %v1751 = vsel %vm1623, %v1559, %v1687
  %v1752 = vsel %vm1624, %v1560, %v1688
  %v1753 = vsel %vm1625, %v1561, %v1689
  %v1754 = vsel %vm1626, %v1562, %v1690
  %v1755 = vsel %vm1627, %v1563, %v1691
  %v1756 = vsel %vm1628, %v1564, %v1692
  %v1757 = vsel %vm1629, %v1565, %v1693
  %v1758 = vsel %vm1630, %v1566, %v1694
  %v1759 = vsel %vm1631, %v1567, %v1695
  %v1760 = vsel %vm1632, %v1568, %v1696
  %v1761 = vsel %vm1633, %v1569, %v1697
  %v1762 = vsel %vm1634, %v1570, %v1698
  %v1763 = vsel %vm1635, %v1571, %v1699
  %v1764 = vsel %vm1636, %v1572, %v1700
  %v1765 = vsel %vm1637, %v1573, %v1701
  %v1766 = vsel %vm1638, %v1574, %v1702
  %v1767 = vsel %vm1639, %v1575, %v1703
  %v1768 = vsel %vm1640, %v1576, %v1704
  %v1769 = vsel %vm1641, %v1577, %v1705
  %v1770 = vsel %vm1642, %v1578, %v1706
  %v1771 = vsel %vm1643, %v1579, %v1707
  %v1772 = vsel %vm1644, %v1580, %v1708
  %v1773 = vsel %vm1645, %v1581, %v1709
  %v1774 = vsel %vm1646, %v1582, %v1710
  %v1775 = vsel %vm1647, %v1583, %v1711
  %v1776 = vsel %vm1648, %v1584, %v1712
  %v1777 = vsel %vm1649, %v1585, %v1713
  %v1778 = vsel %vm1650, %v1586, %v1714
  %1779 = vst [vmem:[%s4] sm:$0xff] %v1715
  %1780 = vst [vmem:[%s4 + $0x8] sm:$0xff] %v1716
  %1781 = vst [vmem:[%s4 + $0x10] sm:$0xff] %v1717
  %1782 = vst [vmem:[%s4 + $0x18] sm:$0xff] %v1718
  %1783 = vst [vmem:[%s4 + $0x20] sm:$0xff] %v1719
  %1784 = vst [vmem:[%s4 + $0x28] sm:$0xff] %v1720
  %1785 = vst [vmem:[%s4 + $0x30] sm:$0xff] %v1721
  %1786 = vst [vmem:[%s4 + $0x38] sm:$0xff] %v1722
  %1787 = vst [vmem:[%s4 + $0x40] sm:$0xff] %v1723
  %1788 = vst [vmem:[%s4 + $0x48] sm:$0xff] %v1724
  %1789 = vst [vmem:[%s4 + $0x50] sm:$0xff] %v1725
  %1790 = vst [vmem:[%s4 + $0x58] sm:$0xff] %v1726
  %1791 = vst [vmem:[%s4 + $0x60] sm:$0xff] %v1727
  %1792 = vst [vmem:[%s4 + $0x68] sm:$0xff] %v1728
  %1793 = vst [vmem:[%s4 + $0x70] sm:$0xff] %v1729
  %1794 = vst [vmem:[%s4 + $0x78] sm:$0xff] %v1730
  %1795 = vst [vmem:[%s4 + $0x80] sm:$0xff] %v1731
  %1796 = vst [vmem:[%s4 + $0x88] sm:$0xff] %v1732
  %1797 = vst [vmem:[%s4 + $0x90] sm:$0xff] %v1733
  %1798 = vst [vmem:[%s4 + $0x98] sm:$0xff] %v1734
  %1799 = vst [vmem:[%s4 + $0xa0] sm:$0xff] %v1735
  %1800 = vst [vmem:[%s4 + $0xa8] sm:$0xff] %v1736
  %1801 = vst [vmem:[%s4 + $0xb0] sm:$0xff] %v1737
  %1802 = vst [vmem:[%s4 + $0xb8] sm:$0xff] %v1738
  %1803 = vst [vmem:[%s4 + $0xc0] sm:$0xff] %v1739
  %1804 = vst [vmem:[%s4 + $0xc8] sm:$0xff] %v1740
  %1805 = vst [vmem:[%s4 + $0xd0] sm:$0xff] %v1741
  %1806 = vst [vmem:[%s4 + $0xd8] sm:$0xff] %v1742
  %1807 = vst [vmem:[%s4 + $0xe0] sm:$0xff] %v1743
  %1808 = vst [vmem:[%s4 + $0xe8] sm:$0xff] %v1744
  %1809 = vst [vmem:[%s4 + $0xf0] sm:$0xff] %v1745
  %1810 = vst [vmem:[%s4 + $0xf8] sm:$0xff] %v1746
  %1811 = vst [vmem:[%s4 + $0x100] sm:$0xff] %v1747
  %1812 = vst [vmem:[%s4 + $0x108] sm:$0xff] %v1748
  %1813 = vst [vmem:[%s4 + $0x110] sm:$0xff] %v1749
  %1814 = vst [vmem:[%s4 + $0x118] sm:$0xff] %v1750
  %1815 = vst [vmem:[%s4 + $0x120] sm:$0xff] %v1751
  %1816 = vst [vmem:[%s4 + $0x128] sm:$0xff] %v1752
  %1817 = vst [vmem:[%s4 + $0x130] sm:$0xff] %v1753
  %1818 = vst [vmem:[%s4 + $0x138] sm:$0xff] %v1754
  %1819 = vst [vmem:[%s4 + $0x140] sm:$0xff] %v1755
  %1820 = vst [vmem:[%s4 + $0x148] sm:$0xff] %v1756
  %1821 = vst [vmem:[%s4 + $0x150] sm:$0xff] %v1757
  %1822 = vst [vmem:[%s4 + $0x158] sm:$0xff] %v1758
  %1823 = vst [vmem:[%s4 + $0x160] sm:$0xff] %v1759
  %1824 = vst [vmem:[%s4 + $0x168] sm:$0xff] %v1760
  %1825 = vst [vmem:[%s4 + $0x170] sm:$0xff] %v1761
  %1826 = vst [vmem:[%s4 + $0x178] sm:$0xff] %v1762
  %1827 = vst [vmem:[%s4 + $0x180] sm:$0xff] %v1763
  %1828 = vst [vmem:[%s4 + $0x188] sm:$0xff] %v1764
  %1829 = vst [vmem:[%s4 + $0x190] sm:$0xff] %v1765
  %1830 = vst [vmem:[%s4 + $0x198] sm:$0xff] %v1766
  %1831 = vst [vmem:[%s4 + $0x1a0] sm:$0xff] %v1767
  %1832 = vst [vmem:[%s4 + $0x1a8] sm:$0xff] %v1768
  %1833 = vst [vmem:[%s4 + $0x1b0] sm:$0xff] %v1769
  %1834 = vst [vmem:[%s4 + $0x1b8] sm:$0xff] %v1770
  %1835 = vst [vmem:[%s4 + $0x1c0] sm:$0xff] %v1771
  %1836 = vst [vmem:[%s4 + $0x1c8] sm:$0xff] %v1772
  %1837 = vst [vmem:[%s4 + $0x1d0] sm:$0xff] %v1773
  %1838 = vst [vmem:[%s4 + $0x1d8] sm:$0xff] %v1774
  %1839 = vst [vmem:[%s4 + $0x1e0] sm:$0xff] %v1775
  %1840 = vst [vmem:[%s4 + $0x1e8] sm:$0xff] %v1776
  %1841 = vst [vmem:[%s4 + $0x1f0] sm:$0xff] %v1777
  %1842 = vst [vmem:[%s4 + $0x1f8] sm:$0xff] %v1778
  // Predicated region
  $region18: #{feat_extraction_forward.30} parent=0 // pred_check
    _
  $region19: #{feat_extraction_forward.30} parent=0 // pred_check_branch
    %1844 = sbr.rel (0) target = $region21
  $region20: #{feat_extraction_forward.30} parent=0 // pred_region
    _
  $region21: #{feat_extraction_forward.30} parent=0 // pred_fallthru
    _
  // Predicated region
  $region22: #{feat_extraction_forward.30} parent=0 // pred_check
    _
  $region23: #{feat_extraction_forward.30} parent=0 // pred_check_branch
    %1846 = sbr.rel (0) target = $region25
  $region24: #{feat_extraction_forward.30} parent=0 // pred_region
    _
  $region25: #{feat_extraction_forward.30} parent=0 // pred_fallthru
    _

</llo_original>
